<compile_context>
chip_gen: v7x
topology: tpu7x:2x2x1
jax: 0.10.0
libtpu: 0.0.40
codegen_flags: <defaults>
</compile_context>

<pallas_src>
import math
from functools import partial

import jax
import jax.numpy as jnp
from jax.experimental import pallas as pl
from jax.experimental.pallas import tpu as pltpu


def _gelu_exact(x):
    # PyTorch nn.GELU()/F.gelu default: exact (erf-based) GELU.
    return 0.5 * x * (1.0 + jax.lax.erf(x * (1.0 / math.sqrt(2.0))))


def _full_spec(shape):
    nd = len(shape)
    return pl.BlockSpec(shape, lambda i: (0,) * nd)


# ------------------------------ MaxPool2d(2), in-kernel --------------------------------
def _maxpool_kernel(x_ref, o_ref):
    x = x_ref[0]                                   # (H, W, C), C on lanes
    H, W, C = x.shape
    x = x.reshape(H, W // 2, 2, C)                 # last dim preserved -> cheap reshape
    a = jnp.maximum(x[:, :, 0], x[:, :, 1])        # max over W-pairs   (H, W/2, C)
    a = a.reshape(H // 2, 2, W // 2, C)
    o_ref[0] = jnp.maximum(a[:, 0], a[:, 1])       # max over H-pairs   (H/2, W/2, C)


def maxpool2x2_nhwc(x):
    # x: (N, H, W, C) -> (N, H//2, W//2, C).  Reads x exactly once.
    N, H, W, C = x.shape
    H2, W2 = H // 2, W // 2                        # PyTorch MaxPool2d(2) floors odd dims
    x = x[:, : 2 * H2, : 2 * W2, :]
    return pl.pallas_call(
        _maxpool_kernel,
        out_shape=jax.ShapeDtypeStruct((N, H2, W2, C), x.dtype),
        grid=(N,),
        in_specs=[pl.BlockSpec((1, 2 * H2, 2 * W2, C), lambda n: (n, 0, 0, 0))],
        out_specs=pl.BlockSpec((1, H2, W2, C), lambda n: (n, 0, 0, 0)),
        compiler_params=pltpu.CompilerParams(dimension_semantics=("parallel",)),
    )(x)


# ---------------- fused conv3x3 (pad=1, no bias) + GroupNorm(1,C) [+GELU/+res/+emb] -----
def _make_conv_gn_kernel(mode, eps):
    # mode: "gelu"      -> GELU(GN(conv(x)))                 (first conv of a DoubleConv)
    #       "res_gelu"  -> GELU(res + GN(conv(x)))           (2nd conv, residual DoubleConv)
    #       "emb"       -> GN(conv(x)) + emb                 (2nd conv of dc2 + emb/cond add)
    def kernel(*refs):
        if mode in ("res_gelu", "emb"):
            xp_ref, w_ref, g_ref, b_ref, e_ref, o_ref = refs
        else:
            xp_ref, w_ref, g_ref, b_ref, o_ref = refs
            e_ref = None

        _, Hp, Wp, C_in = xp_ref.shape             # padded sample block (1, H+2, W+2, C_in)
        H, W = Hp - 2, Wp - 2
        C_out = w_ref.shape[-1]

        xp = xp_ref[0]                             # (H+2, W+2, C_in) f32 in VMEM

        # im2col fused in VMEM: 9 shifted taps, each a bf16 MXU matmul, f32 accumulate.
        acc = None
        for tap_idx in range(9):
            dy, dx = divmod(tap_idx, 3)
            tap = xp[dy:dy + H, dx:dx + W, :].reshape(H * W, C_in).astype(jnp.bfloat16)
            d = jnp.dot(tap, w_ref[tap_idx], preferred_element_type=jnp.float32)
            acc = d if acc is None else acc + d    # (H*W, C_out) f32

        # GroupNorm(1, C): single pass (sum and sum-of-squares) over the whole slab.
        inv_n = 1.0 / float(H * W * C_out)
        s1 = jnp.sum(acc, keepdims=True)           # (1, 1)
        s2 = jnp.sum(acc * acc, keepdims=True)     # (1, 1)
        mean = s1 * inv_n
        var = jnp.maximum(s2 * inv_n - mean * mean, 0.0)
        y = (acc - mean) * jax.lax.rsqrt(var + eps)
        y = y * g_ref[...] + b_ref[...]            # (1, C_out) broadcast over pixels

        if mode == "gelu":
            y = _gelu_exact(y)
        elif mode == "res_gelu":
            res = e_ref[0].astype(jnp.float32).reshape(H * W, C_out)
            y = _gelu_exact(res + y)               # GELU(x + double_conv(x))
        elif mode == "emb":
            y = y + e_ref[0].astype(jnp.float32)   # (1, C_out) broadcast == .repeat(H,W)

        o_ref[0] = y.reshape(H, W, C_out).astype(o_ref.dtype)

    return kernel


def conv3x3_gn(x, w9, gamma, beta, *, mode="gelu", extra=None, eps=1e-5):
    # x: (N, H, W, C_in) NHWC; w9: (9, C_in, C_out) bf16 tap-major; gamma/beta: (1, C_out)
    N, H, W, C_in = x.shape
    C_out = w9.shape[-1]

    # TODO(synk): halo padding still done as one XLA pad copy in glue; could be fused
    # with a manual halo DMA for large production images.
    xp = jnp.pad(x, ((0, 0), (1, 1), (1, 1), (0, 0)))

    in_specs = [
        pl.BlockSpec((1, H + 2, W + 2, C_in), lambda n: (n, 0, 0, 0)),
        pl.BlockSpec((9, C_in, C_out), lambda n: (0, 0, 0)),
        pl.BlockSpec((1, C_out), lambda n: (0, 0)),
        pl.BlockSpec((1, C_out), lambda n: (0, 0)),
    ]
    args = [xp, w9, gamma, beta]
    if mode == "res_gelu":
        in_specs.append(pl.BlockSpec((1, H, W, C_out), lambda n: (n, 0, 0, 0)))
        args.append(extra)                          # residual: (N, H, W, C_out)
    elif mode == "emb":
        e = extra.reshape(N, 1, C_out)              # (N, C_out) -> (N, 1, C_out)
        in_specs.append(pl.BlockSpec((1, 1, C_out), lambda n: (n, 0, 0)))
        args.append(e)

    flops = 2 * N * H * W * 9 * C_in * C_out
    bytes_accessed = (xp.size + N * H * W * C_out) * 4 + w9.size * 2
    cost = pl.CostEstimate(flops=flops,
                           transcendentals=N * H * W * C_out,
                           bytes_accessed=bytes_accessed)

    return pl.pallas_call(
        _make_conv_gn_kernel(mode, eps),
        out_shape=jax.ShapeDtypeStruct((N, H, W, C_out), jnp.float32),
        grid=(N,),
        in_specs=in_specs,
        out_specs=pl.BlockSpec((1, H, W, C_out), lambda n: (n, 0, 0, 0)),
        compiler_params=pltpu.CompilerParams(
            dimension_semantics=("parallel",),          # per-sample -> megacore on v7x
            vmem_limit_bytes=48 * 1024 * 1024,          # explicit; headroom on v7x's 64 MiB
        ),
        cost_estimate=cost,
    )(*args)


# -------------------- fused SiLU->Linear (time) + SiLU->Linear (cond) -------------------
def _emb_kernel(t_ref, wt_ref, bt_ref, c_ref, wc_ref, bc_ref, o_ref):
    t = t_ref[...].astype(jnp.float32)
    c = c_ref[...].astype(jnp.float32)
    st = (t * jax.nn.sigmoid(t)).astype(jnp.bfloat16)       # SiLU, then bf16 for the MXU
    sc = (c * jax.nn.sigmoid(c)).astype(jnp.bfloat16)
    acc = jnp.dot(st, wt_ref[...], preferred_element_type=jnp.float32)
    acc = acc + jnp.dot(sc, wc_ref[...], preferred_element_type=jnp.float32)
    o_ref[...] = (acc + bt_ref[...] + bc_ref[...]).astype(o_ref.dtype)


def fused_embeddings(t, char_attr, params):
    # emb + cond_emb, both (B, C_out); summed once here and broadcast-added in the
    # final conv kernel (no standalone add_embeddings pass over the activation).
    B = t.shape[0]
    C_out = params["time_w"].shape[1]
    return pl.pallas_call(
        _emb_kernel,
        out_shape=jax.ShapeDtypeStruct((B, C_out), jnp.float32),
        grid=(1,),
        in_specs=[_full_spec(t.shape), _full_spec(params["time_w"].shape),
                  _full_spec(params["time_b"].shape),
                  _full_spec(char_attr.shape), _full_spec(params["cond_w"].shape),
                  _full_spec(params["cond_b"].shape)],
        out_specs=_full_spec((B, C_out)),
        compiler_params=pltpu.CompilerParams(dimension_semantics=("arbitrary",)),
    )(t, params["time_w"], params["time_b"], char_attr,
      params["cond_w"], params["cond_b"])


# ------------------------------------- Down ---------------------------------------------
def down_forward(params, x, t, char_attr):
    # x: (N, C_in, H, W) NCHW (PyTorch layout); t: (N, time_dim); char_attr: (N, cond_dim)
    x = jnp.transpose(x, (0, 2, 3, 1))                       # entry: NCHW -> NHWC (once)

    x = maxpool2x2_nhwc(x)                                   # (N, H/2, W/2, C_in)

    dc1 = params["dc1"]                                      # DoubleConv(in, in, residual)
    h = conv3x3_gn(x, dc1["w1"], dc1["g1"], dc1["b1"], mode="gelu")
    h = conv3x3_gn(h, dc1["w2"], dc1["g2"], dc1["b2"], mode="res_gelu", extra=x)

    emb = fused_embeddings(t, char_attr, params)             # (N, C_out) = emb + cond_emb

    dc2 = params["dc2"]                                      # DoubleConv(in, out)
    h = conv3x3_gn(h, dc2["w1"], dc2["g1"], dc2["b1"], mode="gelu")
    out = conv3x3_gn(h, dc2["w2"], dc2["g2"], dc2["b2"], mode="emb", extra=emb)

    return jnp.transpose(out, (0, 3, 1, 2))                  # exit: NHWC -> NCHW (once)


# ----------------------------------- parameters ------------------------------------------
def init_params(key, in_channels, out_channels, time_dim, char_attr_dim):
    # PyTorch layouts: Conv2d weight (C_out, C_in, 3, 3); Linear weight (C_out, D), bias (C_out,)
    ks = jax.random.split(key, 8)

    def conv_w(k, co, ci):
        return jax.random.normal(k, (co, ci, 3, 3), jnp.float32) * 0.1

    dc1 = dict(  # DoubleConv(in, in, residual=True): mid = in
        w1=conv_w(ks[0], in_channels, in_channels),
        g1=jnp.ones((in_channels,), jnp.float32), b1=jnp.zeros((in_channels,), jnp.float32),
        w2=conv_w(ks[1], in_channels, in_channels),
        g2=jnp.ones((in_channels,), jnp.float32), b2=jnp.zeros((in_channels,), jnp.float32),
    )
    dc2 = dict(  # DoubleConv(in, out): mid = out
        w1=conv_w(ks[2], out_channels, in_channels),
        g1=jnp.ones((out_channels,), jnp.float32), b1=jnp.zeros((out_channels,), jnp.float32),
        w2=conv_w(ks[3], out_channels, out_channels),
        g2=jnp.ones((out_channels,), jnp.float32), b2=jnp.zeros((out_channels,), jnp.float32),
    )
    return dict(
        dc1=dc1, dc2=dc2,
        time_w=jax.random.normal(ks[4], (out_channels, time_dim), jnp.float32) * 0.1,
        time_b=jax.random.normal(ks[5], (out_channels,), jnp.float32) * 0.01,
        cond_w=jax.random.normal(ks[6], (out_channels, char_attr_dim), jnp.float32) * 0.1,
        cond_b=jax.random.normal(ks[7], (out_channels,), jnp.float32) * 0.01,
    )


def prepare_params(p):
    # One-time conversion to kernel-friendly layouts (done once, not per forward):
    #   conv:   (C_out, C_in, 3, 3) -> (9, C_in, C_out) bf16, tap-major (MXU-ready)
    #   linear: (C_out, D)          -> (D, C_out)       bf16 ; bias -> (1, C_out) f32
    #   GN gamma/beta: (C,)         -> (1, C)           f32
    def conv_w(w):
        co, ci = w.shape[0], w.shape[1]
        return jnp.transpose(w, (2, 3, 1, 0)).reshape(9, ci, co).astype(jnp.bfloat16)

    def vec(v):
        return v.reshape(1, -1).astype(jnp.float32)

    def dc(d):
        return dict(w1=conv_w(d["w1"]), g1=vec(d["g1"]), b1=vec(d["b1"]),
                    w2=conv_w(d["w2"]), g2=vec(d["g2"]), b2=vec(d["b2"]))

    return dict(
        dc1=dc(p["dc1"]), dc2=dc(p["dc2"]),
        time_w=p["time_w"].T.astype(jnp.bfloat16), time_b=vec(p["time_b"]),
        cond_w=p["cond_w"].T.astype(jnp.bfloat16), cond_b=vec(p["cond_b"]),
    )


if __name__ == "__main__":
    key = jax.random.PRNGKey(0)
    N, C_in, C_out, H, W = 2, 4, 8, 16, 16
    time_dim, char_attr_dim = 32, 48   # small stand-ins for 256 / 12456

    kx, kt, kc, kp = jax.random.split(key, 4)
    x = jax.random.normal(kx, (N, C_in, H, W), jnp.float32)
    t = jax.random.normal(kt, (N, time_dim), jnp.float32)
    char_attr = jax.random.normal(kc, (N, char_attr_dim), jnp.float32)
    params = prepare_params(init_params(kp, C_in, C_out, time_dim, char_attr_dim))

    out = jax.jit(down_forward)(params, x, t, char_attr)
    jax.block_until_ready(out)
    assert out.shape == (N, C_out, H // 2, W // 2)
    assert bool(jnp.all(jnp.isfinite(out)))
    print("KERNEL_OK")
</pallas_src>

<mosaic_0001>
module attributes {stable_mosaic.version = 11 : i64} {
  func.func @_maxpool_kernel(%arg0: i32, %arg1: memref<1x16x16x4xf32, #tpu.memory_space<vmem>>, %arg2: memref<1x8x8x4xf32, #tpu.memory_space<vmem>>) attributes {dimension_semantics = [#tpu.dimension_semantics<parallel>], iteration_bounds = array<i64: 2>, scalar_prefetch = 0 : i64, scratch_operands = 0 : i64, tpu.core_type = #tpu.core_type<tc>, window_params = [{transform_indices = @transform_0, window_bounds = array<i64: 1, 16, 16, 4>}, {transform_indices = @transform_1, window_bounds = array<i64: 1, 8, 8, 4>}]} {
    %c0 = arith.constant 0 : index
    %c0_0 = arith.constant 0 : index
    %c0_1 = arith.constant 0 : index
    %c0_2 = arith.constant 0 : index
    %0 = vector.load %arg1[%c0, %c0_0, %c0_1, %c0_2] : memref<1x16x16x4xf32, #tpu.memory_space<vmem>>, vector<1x16x16x4xf32>
    %1 = vector.shape_cast %0 : vector<1x16x16x4xf32> to vector<16x16x4xf32>
    %2 = vector.shape_cast %1 : vector<16x16x4xf32> to vector<16x8x2x4xf32>
    %3 = vector.extract_strided_slice %2 {offsets = [0, 0, 0, 0], sizes = [16, 8, 1, 4], strides = [1, 1, 1, 1]} : vector<16x8x2x4xf32> to vector<16x8x1x4xf32>
    %4 = vector.shape_cast %3 : vector<16x8x1x4xf32> to vector<16x8x4xf32>
    %5 = vector.extract_strided_slice %2 {offsets = [0, 0, 1, 0], sizes = [16, 8, 1, 4], strides = [1, 1, 1, 1]} : vector<16x8x2x4xf32> to vector<16x8x1x4xf32>
    %6 = vector.shape_cast %5 : vector<16x8x1x4xf32> to vector<16x8x4xf32>
    %7 = arith.maximumf %4, %6 : vector<16x8x4xf32>
    %8 = vector.shape_cast %7 : vector<16x8x4xf32> to vector<8x2x8x4xf32>
    %9 = vector.extract_strided_slice %8 {offsets = [0, 0, 0, 0], sizes = [8, 1, 8, 4], strides = [1, 1, 1, 1]} : vector<8x2x8x4xf32> to vector<8x1x8x4xf32>
    %10 = vector.shape_cast %9 : vector<8x1x8x4xf32> to vector<8x8x4xf32>
    %11 = vector.extract_strided_slice %8 {offsets = [0, 1, 0, 0], sizes = [8, 1, 8, 4], strides = [1, 1, 1, 1]} : vector<8x2x8x4xf32> to vector<8x1x8x4xf32>
    %12 = vector.shape_cast %11 : vector<8x1x8x4xf32> to vector<8x8x4xf32>
    %13 = arith.maximumf %10, %12 : vector<8x8x4xf32>
    %c0_3 = arith.constant 0 : index
    %c0_4 = arith.constant 0 : index
    %c0_5 = arith.constant 0 : index
    %c0_6 = arith.constant 0 : index
    %14 = vector.load %arg2[%c0_3, %c0_4, %c0_5, %c0_6] : memref<1x8x8x4xf32, #tpu.memory_space<vmem>>, vector<1x8x8x4xf32>
    %15 = vector.shape_cast %14 : vector<1x8x8x4xf32> to vector<8x8x4xf32>
    %16 = vector.shape_cast %13 : vector<8x8x4xf32> to vector<1x8x8x4xf32>
    tpu.vector_store %arg2[%c0_3, %c0_4, %c0_5, %c0_6], %16 {strides = array<i32>} : memref<1x8x8x4xf32, #tpu.memory_space<vmem>>, vector<1x8x8x4xf32>,
    return
  }
  func.func @transform_0(%arg0: i32) -> (i32, i32, i32, i32) {
    %c0_i32 = arith.constant 0 : i32
    %c0_i32_0 = arith.constant 0 : i32
    %c0_i32_1 = arith.constant 0 : i32
    %c0_i32_2 = arith.constant 0 : i32
    return %arg0, %c0_i32, %c0_i32_0, %c0_i32_1 : i32, i32, i32, i32
  }
  func.func @transform_1(%arg0: i32) -> (i32, i32, i32, i32) {
    %c0_i32 = arith.constant 0 : i32
    %c0_i32_0 = arith.constant 0 : i32
    %c0_i32_1 = arith.constant 0 : i32
    %c0_i32_2 = arith.constant 0 : i32
    return %arg0, %c0_i32, %c0_i32_0, %c0_i32_1 : i32, i32, i32, i32
  }
}

module attributes {stable_mosaic.version = 11 : i64} {
  func.func @kernel(%arg0: i32, %arg1: memref<1x10x10x4xf32, #tpu.memory_space<vmem>>, %arg2: memref<9x4x4xbf16, #tpu.memory_space<vmem>>, %arg3: memref<1x4xf32, #tpu.memory_space<vmem>>, %arg4: memref<1x4xf32, #tpu.memory_space<vmem>>, %arg5: memref<1x8x8x4xf32, #tpu.memory_space<vmem>>, %arg6: memref<1x8x8x4xf32, #tpu.memory_space<vmem>>) attributes {dimension_semantics = [#tpu.dimension_semantics<parallel>], iteration_bounds = array<i64: 2>, scalar_prefetch = 0 : i64, scratch_operands = 0 : i64, tpu.core_type = #tpu.core_type<tc>, window_params = [{transform_indices = @transform_0, window_bounds = array<i64: 1, 10, 10, 4>}, {pipeline_mode = #tpu.pipeline_mode<synchronous>, transform_indices = @transform_1, window_bounds = array<i64: 9, 4, 4>}, {pipeline_mode = #tpu.pipeline_mode<synchronous>, transform_indices = @transform_2, window_bounds = array<i64: 1, 4>}, {pipeline_mode = #tpu.pipeline_mode<synchronous>, transform_indices = @transform_3, window_bounds = array<i64: 1, 4>}, {transform_indices = @transform_4, window_bounds = array<i64: 1, 8, 8, 4>}, {transform_indices = @transform_5, window_bounds = array<i64: 1, 8, 8, 4>}]} {
    %c0 = arith.constant 0 : index
    %c0_0 = arith.constant 0 : index
    %c0_1 = arith.constant 0 : index
    %c0_2 = arith.constant 0 : index
    %0 = vector.load %arg1[%c0, %c0_0, %c0_1, %c0_2] : memref<1x10x10x4xf32, #tpu.memory_space<vmem>>, vector<1x10x10x4xf32>
    %1 = vector.shape_cast %0 : vector<1x10x10x4xf32> to vector<10x10x4xf32>
    %2 = vector.extract_strided_slice %1 {offsets = [0, 0, 0], sizes = [8, 8, 4], strides = [1, 1, 1]} : vector<10x10x4xf32> to vector<8x8x4xf32>
    %3 = vector.shape_cast %2 : vector<8x8x4xf32> to vector<64x4xf32>
    %4 = arith.truncf %3 : vector<64x4xf32> to vector<64x4xbf16>
    %c0_3 = arith.constant 0 : index
    %c0_4 = arith.constant 0 : index
    %c0_5 = arith.constant 0 : index
    %5 = vector.load %arg2[%c0_3, %c0_4, %c0_5] : memref<9x4x4xbf16, #tpu.memory_space<vmem>>, vector<1x4x4xbf16>
    %6 = vector.shape_cast %5 : vector<1x4x4xbf16> to vector<4x4xbf16>
    %cst = arith.constant dense<0.000000e+00> : vector<64x4xf32>
    %7 = tpu.matmul %4, %6, %cst {dimension_numbers = #tpu.dot_dimension_numbers<[1], [0], [0], [1], [0, 0, 1, 1], [], []>} : vector<64x4xbf16>, vector<4x4xbf16>, vector<64x4xf32> -> vector<64x4xf32>
    %8 = vector.extract_strided_slice %1 {offsets = [0, 1, 0], sizes = [8, 8, 4], strides = [1, 1, 1]} : vector<10x10x4xf32> to vector<8x8x4xf32>
    %9 = vector.shape_cast %8 : vector<8x8x4xf32> to vector<64x4xf32>
    %10 = arith.truncf %9 : vector<64x4xf32> to vector<64x4xbf16>
    %c1 = arith.constant 1 : index
    %c0_6 = arith.constant 0 : index
    %c0_7 = arith.constant 0 : index
    %11 = vector.load %arg2[%c1, %c0_6, %c0_7] : memref<9x4x4xbf16, #tpu.memory_space<vmem>>, vector<1x4x4xbf16>
    %12 = vector.shape_cast %11 : vector<1x4x4xbf16> to vector<4x4xbf16>
    %cst_8 = arith.constant dense<0.000000e+00> : vector<64x4xf32>
    %13 = tpu.matmul %10, %12, %cst_8 {dimension_numbers = #tpu.dot_dimension_numbers<[1], [0], [0], [1], [0, 0, 1, 1], [], []>} : vector<64x4xbf16>, vector<4x4xbf16>, vector<64x4xf32> -> vector<64x4xf32>
    %14 = arith.addf %7, %13 : vector<64x4xf32>
    %15 = vector.extract_strided_slice %1 {offsets = [0, 2, 0], sizes = [8, 8, 4], strides = [1, 1, 1]} : vector<10x10x4xf32> to vector<8x8x4xf32>
    %16 = vector.shape_cast %15 : vector<8x8x4xf32> to vector<64x4xf32>
    %17 = arith.truncf %16 : vector<64x4xf32> to vector<64x4xbf16>
    %c2 = arith.constant 2 : index
    %c0_9 = arith.constant 0 : index
    %c0_10 = arith.constant 0 : index
    %18 = vector.load %arg2[%c2, %c0_9, %c0_10] : memref<9x4x4xbf16, #tpu.memory_space<vmem>>, vector<1x4x4xbf16>
    %19 = vector.shape_cast %18 : vector<1x4x4xbf16> to vector<4x4xbf16>
    %cst_11 = arith.constant dense<0.000000e+00> : vector<64x4xf32>
    %20 = tpu.matmul %17, %19, %cst_11 {dimension_numbers = #tpu.dot_dimension_numbers<[1], [0], [0], [1], [0, 0, 1, 1], [], []>} : vector<64x4xbf16>, vector<4x4xbf16>, vector<64x4xf32> -> vector<64x4xf32>
    %21 = arith.addf %14, %20 : vector<64x4xf32>
    %22 = vector.extract_strided_slice %1 {offsets = [1, 0, 0], sizes = [8, 8, 4], strides = [1, 1, 1]} : vector<10x10x4xf32> to vector<8x8x4xf32>
    %23 = vector.shape_cast %22 : vector<8x8x4xf32> to vector<64x4xf32>
    %24 = arith.truncf %23 : vector<64x4xf32> to vector<64x4xbf16>
    %c3 = arith.constant 3 : index
    %c0_12 = arith.constant 0 : index
    %c0_13 = arith.constant 0 : index
    %25 = vector.load %arg2[%c3, %c0_12, %c0_13] : memref<9x4x4xbf16, #tpu.memory_space<vmem>>, vector<1x4x4xbf16>
    %26 = vector.shape_cast %25 : vector<1x4x4xbf16> to vector<4x4xbf16>
    %cst_14 = arith.constant dense<0.000000e+00> : vector<64x4xf32>
    %27 = tpu.matmul %24, %26, %cst_14 {dimension_numbers = #tpu.dot_dimension_numbers<[1], [0], [0], [1], [0, 0, 1, 1], [], []>} : vector<64x4xbf16>, vector<4x4xbf16>, vector<64x4xf32> -> vector<64x4xf32>
    %28 = arith.addf %21, %27 : vector<64x4xf32>
    %29 = vector.extract_strided_slice %1 {offsets = [1, 1, 0], sizes = [8, 8, 4], strides = [1, 1, 1]} : vector<10x10x4xf32> to vector<8x8x4xf32>
    %30 = vector.shape_cast %29 : vector<8x8x4xf32> to vector<64x4xf32>
    %31 = arith.truncf %30 : vector<64x4xf32> to vector<64x4xbf16>
    %c4 = arith.constant 4 : index
    %c0_15 = arith.constant 0 : index
    %c0_16 = arith.constant 0 : index
    %32 = vector.load %arg2[%c4, %c0_15, %c0_16] : memref<9x4x4xbf16, #tpu.memory_space<vmem>>, vector<1x4x4xbf16>
    %33 = vector.shape_cast %32 : vector<1x4x4xbf16> to vector<4x4xbf16>
    %cst_17 = arith.constant dense<0.000000e+00> : vector<64x4xf32>
    %34 = tpu.matmul %31, %33, %cst_17 {dimension_numbers = #tpu.dot_dimension_numbers<[1], [0], [0], [1], [0, 0, 1, 1], [], []>} : vector<64x4xbf16>, vector<4x4xbf16>, vector<64x4xf32> -> vector<64x4xf32>
    %35 = arith.addf %28, %34 : vector<64x4xf32>
    %36 = vector.extract_strided_slice %1 {offsets = [1, 2, 0], sizes = [8, 8, 4], strides = [1, 1, 1]} : vector<10x10x4xf32> to vector<8x8x4xf32>
    %37 = vector.shape_cast %36 : vector<8x8x4xf32> to vector<64x4xf32>
    %38 = arith.truncf %37 : vector<64x4xf32> to vector<64x4xbf16>
    %c5 = arith.constant 5 : index
    %c0_18 = arith.constant 0 : index
    %c0_19 = arith.constant 0 : index
    %39 = vector.load %arg2[%c5, %c0_18, %c0_19] : memref<9x4x4xbf16, #tpu.memory_space<vmem>>, vector<1x4x4xbf16>
    %40 = vector.shape_cast %39 : vector<1x4x4xbf16> to vector<4x4xbf16>
    %cst_20 = arith.constant dense<0.000000e+00> : vector<64x4xf32>
    %41 = tpu.matmul %38, %40, %cst_20 {dimension_numbers = #tpu.dot_dimension_numbers<[1], [0], [0], [1], [0, 0, 1, 1], [], []>} : vector<64x4xbf16>, vector<4x4xbf16>, vector<64x4xf32> -> vector<64x4xf32>
    %42 = arith.addf %35, %41 : vector<64x4xf32>
    %43 = vector.extract_strided_slice %1 {offsets = [2, 0, 0], sizes = [8, 8, 4], strides = [1, 1, 1]} : vector<10x10x4xf32> to vector<8x8x4xf32>
    %44 = vector.shape_cast %43 : vector<8x8x4xf32> to vector<64x4xf32>
    %45 = arith.truncf %44 : vector<64x4xf32> to vector<64x4xbf16>
    %c6 = arith.constant 6 : index
    %c0_21 = arith.constant 0 : index
    %c0_22 = arith.constant 0 : index
    %46 = vector.load %arg2[%c6, %c0_21, %c0_22] : memref<9x4x4xbf16, #tpu.memory_space<vmem>>, vector<1x4x4xbf16>
    %47 = vector.shape_cast %46 : vector<1x4x4xbf16> to vector<4x4xbf16>
    %cst_23 = arith.constant dense<0.000000e+00> : vector<64x4xf32>
    %48 = tpu.matmul %45, %47, %cst_23 {dimension_numbers = #tpu.dot_dimension_numbers<[1], [0], [0], [1], [0, 0, 1, 1], [], []>} : vector<64x4xbf16>, vector<4x4xbf16>, vector<64x4xf32> -> vector<64x4xf32>
    %49 = arith.addf %42, %48 : vector<64x4xf32>
    %50 = vector.extract_strided_slice %1 {offsets = [2, 1, 0], sizes = [8, 8, 4], strides = [1, 1, 1]} : vector<10x10x4xf32> to vector<8x8x4xf32>
    %51 = vector.shape_cast %50 : vector<8x8x4xf32> to vector<64x4xf32>
    %52 = arith.truncf %51 : vector<64x4xf32> to vector<64x4xbf16>
    %c7 = arith.constant 7 : index
    %c0_24 = arith.constant 0 : index
    %c0_25 = arith.constant 0 : index
    %53 = vector.load %arg2[%c7, %c0_24, %c0_25] : memref<9x4x4xbf16, #tpu.memory_space<vmem>>, vector<1x4x4xbf16>
    %54 = vector.shape_cast %53 : vector<1x4x4xbf16> to vector<4x4xbf16>
    %cst_26 = arith.constant dense<0.000000e+00> : vector<64x4xf32>
    %55 = tpu.matmul %52, %54, %cst_26 {dimension_numbers = #tpu.dot_dimension_numbers<[1], [0], [0], [1], [0, 0, 1, 1], [], []>} : vector<64x4xbf16>, vector<4x4xbf16>, vector<64x4xf32> -> vector<64x4xf32>
    %56 = arith.addf %49, %55 : vector<64x4xf32>
    %57 = vector.extract_strided_slice %1 {offsets = [2, 2, 0], sizes = [8, 8, 4], strides = [1, 1, 1]} : vector<10x10x4xf32> to vector<8x8x4xf32>
    %58 = vector.shape_cast %57 : vector<8x8x4xf32> to vector<64x4xf32>
    %59 = arith.truncf %58 : vector<64x4xf32> to vector<64x4xbf16>
    %c8 = arith.constant 8 : index
    %c0_27 = arith.constant 0 : index
    %c0_28 = arith.constant 0 : index
    %60 = vector.load %arg2[%c8, %c0_27, %c0_28] : memref<9x4x4xbf16, #tpu.memory_space<vmem>>, vector<1x4x4xbf16>
    %61 = vector.shape_cast %60 : vector<1x4x4xbf16> to vector<4x4xbf16>
    %cst_29 = arith.constant dense<0.000000e+00> : vector<64x4xf32>
    %62 = tpu.matmul %59, %61, %cst_29 {dimension_numbers = #tpu.dot_dimension_numbers<[1], [0], [0], [1], [0, 0, 1, 1], [], []>} : vector<64x4xbf16>, vector<4x4xbf16>, vector<64x4xf32> -> vector<64x4xf32>
    %63 = arith.addf %56, %62 : vector<64x4xf32>
    %64 = vector.shape_cast %63 : vector<64x4xf32> to vector<1x64x4xf32>
    %cst_30 = arith.constant dense<0.000000e+00> : vector<1xf32>
    %65 = vector.multi_reduction <add>, %64, %cst_30 [1, 2] : vector<1x64x4xf32> to vector<1xf32>
    %66 = vector.shape_cast %65 : vector<1xf32> to vector<1x1x1xf32>
    %67 = vector.extract %66[0, 0, 0] : f32 from vector<1x1x1xf32>
    %68 = vector.broadcast %67 : f32 to vector<1x1xf32>
    %69 = arith.mulf %63, %63 : vector<64x4xf32>
    %70 = vector.shape_cast %69 : vector<64x4xf32> to vector<1x64x4xf32>
    %cst_31 = arith.constant dense<0.000000e+00> : vector<1xf32>
    %71 = vector.multi_reduction <add>, %70, %cst_31 [1, 2] : vector<1x64x4xf32> to vector<1xf32>
    %72 = vector.shape_cast %71 : vector<1xf32> to vector<1x1x1xf32>
    %73 = vector.extract %72[0, 0, 0] : f32 from vector<1x1x1xf32>
    %74 = vector.broadcast %73 : f32 to vector<1x1xf32>
    %cst_32 = arith.constant 3.906250e-03 : f32
    %75 = vector.broadcast %cst_32 : f32 to vector<1x1xf32>
    %76 = arith.mulf %68, %75 : vector<1x1xf32>
    %cst_33 = arith.constant 3.906250e-03 : f32
    %77 = vector.broadcast %cst_33 : f32 to vector<1x1xf32>
    %78 = arith.mulf %74, %77 : vector<1x1xf32>
    %79 = arith.mulf %76, %76 : vector<1x1xf32>
    %80 = arith.subf %78, %79 : vector<1x1xf32>
    %cst_34 = arith.constant 0.000000e+00 : f32
    %81 = vector.broadcast %cst_34 : f32 to vector<1x1xf32>
    %82 = arith.maximumf %80, %81 : vector<1x1xf32>
    %83 = vector.broadcast %76 : vector<1x1xf32> to vector<64x4xf32>
    %84 = arith.subf %63, %83 : vector<64x4xf32>
    %cst_35 = arith.constant 9.99999974E-6 : f32
    %85 = vector.broadcast %cst_35 : f32 to vector<1x1xf32>
    %86 = arith.addf %82, %85 : vector<1x1xf32>
    %87 = math.rsqrt %86 : vector<1x1xf32>
    %88 = vector.broadcast %87 : vector<1x1xf32> to vector<64x4xf32>
    %89 = arith.mulf %84, %88 : vector<64x4xf32>
    %c0_36 = arith.constant 0 : index
    %c0_37 = arith.constant 0 : index
    %90 = vector.load %arg3[%c0_36, %c0_37] : memref<1x4xf32, #tpu.memory_space<vmem>>, vector<1x4xf32>
    %91 = vector.broadcast %90 : vector<1x4xf32> to vector<64x4xf32>
    %92 = arith.mulf %89, %91 : vector<64x4xf32>
    %c0_38 = arith.constant 0 : index
    %c0_39 = arith.constant 0 : index
    %93 = vector.load %arg4[%c0_38, %c0_39] : memref<1x4xf32, #tpu.memory_space<vmem>>, vector<1x4xf32>
    %94 = vector.broadcast %93 : vector<1x4xf32> to vector<64x4xf32>
    %95 = arith.addf %92, %94 : vector<64x4xf32>
    %c0_40 = arith.constant 0 : index
    %c0_41 = arith.constant 0 : index
    %c0_42 = arith.constant 0 : index
    %c0_43 = arith.constant 0 : index
    %96 = vector.load %arg5[%c0_40, %c0_41, %c0_42, %c0_43] : memref<1x8x8x4xf32, #tpu.memory_space<vmem>>, vector<1x8x8x4xf32>
    %97 = vector.shape_cast %96 : vector<1x8x8x4xf32> to vector<8x8x4xf32>
    %98 = vector.shape_cast %97 : vector<8x8x4xf32> to vector<64x4xf32>
    %99 = arith.addf %98, %95 : vector<64x4xf32>
    %cst_44 = arith.constant 5.000000e-01 : f32
    %100 = vector.broadcast %cst_44 : f32 to vector<64x4xf32>
    %101 = arith.mulf %100, %99 : vector<64x4xf32>
    %cst_45 = arith.constant 0.707106769 : f32
    %102 = vector.broadcast %cst_45 : f32 to vector<64x4xf32>
    %103 = arith.mulf %99, %102 : vector<64x4xf32>
    %104 = math.erf %103 : vector<64x4xf32>
    %cst_46 = arith.constant 1.000000e+00 : f32
    %105 = vector.broadcast %cst_46 : f32 to vector<64x4xf32>
    %106 = arith.addf %105, %104 : vector<64x4xf32>
    %107 = arith.mulf %101, %106 : vector<64x4xf32>
    %108 = vector.shape_cast %107 : vector<64x4xf32> to vector<8x8x4xf32>
    %c0_47 = arith.constant 0 : index
    %c0_48 = arith.constant 0 : index
    %c0_49 = arith.constant 0 : index
    %c0_50 = arith.constant 0 : index
    %109 = vector.load %arg6[%c0_47, %c0_48, %c0_49, %c0_50] : memref<1x8x8x4xf32, #tpu.memory_space<vmem>>, vector<1x8x8x4xf32>
    %110 = vector.shape_cast %109 : vector<1x8x8x4xf32> to vector<8x8x4xf32>
    %111 = vector.shape_cast %108 : vector<8x8x4xf32> to vector<1x8x8x4xf32>
    tpu.vector_store %arg6[%c0_47, %c0_48, %c0_49, %c0_50], %111 {strides = array<i32>} : memref<1x8x8x4xf32, #tpu.memory_space<vmem>>, vector<1x8x8x4xf32>,
    return
  }
  func.func @transform_0(%arg0: i32) -> (i32, i32, i32, i32) {
    %c0_i32 = arith.constant 0 : i32
    %c0_i32_0 = arith.constant 0 : i32
    %c0_i32_1 = arith.constant 0 : i32
    %c0_i32_2 = arith.constant 0 : i32
    return %arg0, %c0_i32, %c0_i32_0, %c0_i32_1 : i32, i32, i32, i32
  }
  func.func @transform_1(%arg0: i32) -> (i32, i32, i32) {
    %c0_i32 = arith.constant 0 : i32
    %c0_i32_0 = arith.constant 0 : i32
    %c0_i32_1 = arith.constant 0 : i32
    %c0_i32_2 = arith.constant 0 : i32
    return %c0_i32, %c0_i32_0, %c0_i32_1 : i32, i32, i32
  }
  func.func @transform_2(%arg0: i32) -> (i32, i32) {
    %c0_i32 = arith.constant 0 : i32
    %c0_i32_0 = arith.constant 0 : i32
    %c0_i32_1 = arith.constant 0 : i32
    return %c0_i32, %c0_i32_0 : i32, i32
  }
  func.func @transform_3(%arg0: i32) -> (i32, i32) {
    %c0_i32 = arith.constant 0 : i32
    %c0_i32_0 = arith.constant 0 : i32
    %c0_i32_1 = arith.constant 0 : i32
    return %c0_i32, %c0_i32_0 : i32, i32
  }
  func.func @transform_4(%arg0: i32) -> (i32, i32, i32, i32) {
    %c0_i32 = arith.constant 0 : i32
    %c0_i32_0 = arith.constant 0 : i32
    %c0_i32_1 = arith.constant 0 : i32
    %c0_i32_2 = arith.constant 0 : i32
    return %arg0, %c0_i32, %c0_i32_0, %c0_i32_1 : i32, i32, i32, i32
  }
  func.func @transform_5(%arg0: i32) -> (i32, i32, i32, i32) {
    %c0_i32 = arith.constant 0 : i32
    %c0_i32_0 = arith.constant 0 : i32
    %c0_i32_1 = arith.constant 0 : i32
    %c0_i32_2 = arith.constant 0 : i32
    return %arg0, %c0_i32, %c0_i32_0, %c0_i32_1 : i32, i32, i32, i32
  }
}

module attributes {stable_mosaic.version = 11 : i64} {
  func.func @kernel(%arg0: i32, %arg1: memref<1x10x10x4xf32, #tpu.memory_space<vmem>>, %arg2: memref<9x4x4xbf16, #tpu.memory_space<vmem>>, %arg3: memref<1x4xf32, #tpu.memory_space<vmem>>, %arg4: memref<1x4xf32, #tpu.memory_space<vmem>>, %arg5: memref<1x8x8x4xf32, #tpu.memory_space<vmem>>) attributes {dimension_semantics = [#tpu.dimension_semantics<parallel>], iteration_bounds = array<i64: 2>, scalar_prefetch = 0 : i64, scratch_operands = 0 : i64, tpu.core_type = #tpu.core_type<tc>, window_params = [{transform_indices = @transform_0, window_bounds = array<i64: 1, 10, 10, 4>}, {pipeline_mode = #tpu.pipeline_mode<synchronous>, transform_indices = @transform_1, window_bounds = array<i64: 9, 4, 4>}, {pipeline_mode = #tpu.pipeline_mode<synchronous>, transform_indices = @transform_2, window_bounds = array<i64: 1, 4>}, {pipeline_mode = #tpu.pipeline_mode<synchronous>, transform_indices = @transform_3, window_bounds = array<i64: 1, 4>}, {transform_indices = @transform_4, window_bounds = array<i64: 1, 8, 8, 4>}]} {
    %c0 = arith.constant 0 : index
    %c0_0 = arith.constant 0 : index
    %c0_1 = arith.constant 0 : index
    %c0_2 = arith.constant 0 : index
    %0 = vector.load %arg1[%c0, %c0_0, %c0_1, %c0_2] : memref<1x10x10x4xf32, #tpu.memory_space<vmem>>, vector<1x10x10x4xf32>
    %1 = vector.shape_cast %0 : vector<1x10x10x4xf32> to vector<10x10x4xf32>
    %2 = vector.extract_strided_slice %1 {offsets = [0, 0, 0], sizes = [8, 8, 4], strides = [1, 1, 1]} : vector<10x10x4xf32> to vector<8x8x4xf32>
    %3 = vector.shape_cast %2 : vector<8x8x4xf32> to vector<64x4xf32>
    %4 = arith.truncf %3 : vector<64x4xf32> to vector<64x4xbf16>
    %c0_3 = arith.constant 0 : index
    %c0_4 = arith.constant 0 : index
    %c0_5 = arith.constant 0 : index
    %5 = vector.load %arg2[%c0_3, %c0_4, %c0_5] : memref<9x4x4xbf16, #tpu.memory_space<vmem>>, vector<1x4x4xbf16>
    %6 = vector.shape_cast %5 : vector<1x4x4xbf16> to vector<4x4xbf16>
    %cst = arith.constant dense<0.000000e+00> : vector<64x4xf32>
    %7 = tpu.matmul %4, %6, %cst {dimension_numbers = #tpu.dot_dimension_numbers<[1], [0], [0], [1], [0, 0, 1, 1], [], []>} : vector<64x4xbf16>, vector<4x4xbf16>, vector<64x4xf32> -> vector<64x4xf32>
    %8 = vector.extract_strided_slice %1 {offsets = [0, 1, 0], sizes = [8, 8, 4], strides = [1, 1, 1]} : vector<10x10x4xf32> to vector<8x8x4xf32>
    %9 = vector.shape_cast %8 : vector<8x8x4xf32> to vector<64x4xf32>
    %10 = arith.truncf %9 : vector<64x4xf32> to vector<64x4xbf16>
    %c1 = arith.constant 1 : index
    %c0_6 = arith.constant 0 : index
    %c0_7 = arith.constant 0 : index
    %11 = vector.load %arg2[%c1, %c0_6, %c0_7] : memref<9x4x4xbf16, #tpu.memory_space<vmem>>, vector<1x4x4xbf16>
    %12 = vector.shape_cast %11 : vector<1x4x4xbf16> to vector<4x4xbf16>
    %cst_8 = arith.constant dense<0.000000e+00> : vector<64x4xf32>
    %13 = tpu.matmul %10, %12, %cst_8 {dimension_numbers = #tpu.dot_dimension_numbers<[1], [0], [0], [1], [0, 0, 1, 1], [], []>} : vector<64x4xbf16>, vector<4x4xbf16>, vector<64x4xf32> -> vector<64x4xf32>
    %14 = arith.addf %7, %13 : vector<64x4xf32>
    %15 = vector.extract_strided_slice %1 {offsets = [0, 2, 0], sizes = [8, 8, 4], strides = [1, 1, 1]} : vector<10x10x4xf32> to vector<8x8x4xf32>
    %16 = vector.shape_cast %15 : vector<8x8x4xf32> to vector<64x4xf32>
    %17 = arith.truncf %16 : vector<64x4xf32> to vector<64x4xbf16>
    %c2 = arith.constant 2 : index
    %c0_9 = arith.constant 0 : index
    %c0_10 = arith.constant 0 : index
    %18 = vector.load %arg2[%c2, %c0_9, %c0_10] : memref<9x4x4xbf16, #tpu.memory_space<vmem>>, vector<1x4x4xbf16>
    %19 = vector.shape_cast %18 : vector<1x4x4xbf16> to vector<4x4xbf16>
    %cst_11 = arith.constant dense<0.000000e+00> : vector<64x4xf32>
    %20 = tpu.matmul %17, %19, %cst_11 {dimension_numbers = #tpu.dot_dimension_numbers<[1], [0], [0], [1], [0, 0, 1, 1], [], []>} : vector<64x4xbf16>, vector<4x4xbf16>, vector<64x4xf32> -> vector<64x4xf32>
    %21 = arith.addf %14, %20 : vector<64x4xf32>
    %22 = vector.extract_strided_slice %1 {offsets = [1, 0, 0], sizes = [8, 8, 4], strides = [1, 1, 1]} : vector<10x10x4xf32> to vector<8x8x4xf32>
    %23 = vector.shape_cast %22 : vector<8x8x4xf32> to vector<64x4xf32>
    %24 = arith.truncf %23 : vector<64x4xf32> to vector<64x4xbf16>
    %c3 = arith.constant 3 : index
    %c0_12 = arith.constant 0 : index
    %c0_13 = arith.constant 0 : index
    %25 = vector.load %arg2[%c3, %c0_12, %c0_13] : memref<9x4x4xbf16, #tpu.memory_space<vmem>>, vector<1x4x4xbf16>
    %26 = vector.shape_cast %25 : vector<1x4x4xbf16> to vector<4x4xbf16>
    %cst_14 = arith.constant dense<0.000000e+00> : vector<64x4xf32>
    %27 = tpu.matmul %24, %26, %cst_14 {dimension_numbers = #tpu.dot_dimension_numbers<[1], [0], [0], [1], [0, 0, 1, 1], [], []>} : vector<64x4xbf16>, vector<4x4xbf16>, vector<64x4xf32> -> vector<64x4xf32>
    %28 = arith.addf %21, %27 : vector<64x4xf32>
    %29 = vector.extract_strided_slice %1 {offsets = [1, 1, 0], sizes = [8, 8, 4], strides = [1, 1, 1]} : vector<10x10x4xf32> to vector<8x8x4xf32>
    %30 = vector.shape_cast %29 : vector<8x8x4xf32> to vector<64x4xf32>
    %31 = arith.truncf %30 : vector<64x4xf32> to vector<64x4xbf16>
    %c4 = arith.constant 4 : index
    %c0_15 = arith.constant 0 : index
    %c0_16 = arith.constant 0 : index
    %32 = vector.load %arg2[%c4, %c0_15, %c0_16] : memref<9x4x4xbf16, #tpu.memory_space<vmem>>, vector<1x4x4xbf16>
    %33 = vector.shape_cast %32 : vector<1x4x4xbf16> to vector<4x4xbf16>
    %cst_17 = arith.constant dense<0.000000e+00> : vector<64x4xf32>
    %34 = tpu.matmul %31, %33, %cst_17 {dimension_numbers = #tpu.dot_dimension_numbers<[1], [0], [0], [1], [0, 0, 1, 1], [], []>} : vector<64x4xbf16>, vector<4x4xbf16>, vector<64x4xf32> -> vector<64x4xf32>
    %35 = arith.addf %28, %34 : vector<64x4xf32>
    %36 = vector.extract_strided_slice %1 {offsets = [1, 2, 0], sizes = [8, 8, 4], strides = [1, 1, 1]} : vector<10x10x4xf32> to vector<8x8x4xf32>
    %37 = vector.shape_cast %36 : vector<8x8x4xf32> to vector<64x4xf32>
    %38 = arith.truncf %37 : vector<64x4xf32> to vector<64x4xbf16>
    %c5 = arith.constant 5 : index
    %c0_18 = arith.constant 0 : index
    %c0_19 = arith.constant 0 : index
    %39 = vector.load %arg2[%c5, %c0_18, %c0_19] : memref<9x4x4xbf16, #tpu.memory_space<vmem>>, vector<1x4x4xbf16>
    %40 = vector.shape_cast %39 : vector<1x4x4xbf16> to vector<4x4xbf16>
    %cst_20 = arith.constant dense<0.000000e+00> : vector<64x4xf32>
    %41 = tpu.matmul %38, %40, %cst_20 {dimension_numbers = #tpu.dot_dimension_numbers<[1], [0], [0], [1], [0, 0, 1, 1], [], []>} : vector<64x4xbf16>, vector<4x4xbf16>, vector<64x4xf32> -> vector<64x4xf32>
    %42 = arith.addf %35, %41 : vector<64x4xf32>
    %43 = vector.extract_strided_slice %1 {offsets = [2, 0, 0], sizes = [8, 8, 4], strides = [1, 1, 1]} : vector<10x10x4xf32> to vector<8x8x4xf32>
    %44 = vector.shape_cast %43 : vector<8x8x4xf32> to vector<64x4xf32>
    %45 = arith.truncf %44 : vector<64x4xf32> to vector<64x4xbf16>
    %c6 = arith.constant 6 : index
    %c0_21 = arith.constant 0 : index
    %c0_22 = arith.constant 0 : index
    %46 = vector.load %arg2[%c6, %c0_21, %c0_22] : memref<9x4x4xbf16, #tpu.memory_space<vmem>>, vector<1x4x4xbf16>
    %47 = vector.shape_cast %46 : vector<1x4x4xbf16> to vector<4x4xbf16>
    %cst_23 = arith.constant dense<0.000000e+00> : vector<64x4xf32>
    %48 = tpu.matmul %45, %47, %cst_23 {dimension_numbers = #tpu.dot_dimension_numbers<[1], [0], [0], [1], [0, 0, 1, 1], [], []>} : vector<64x4xbf16>, vector<4x4xbf16>, vector<64x4xf32> -> vector<64x4xf32>
    %49 = arith.addf %42, %48 : vector<64x4xf32>
    %50 = vector.extract_strided_slice %1 {offsets = [2, 1, 0], sizes = [8, 8, 4], strides = [1, 1, 1]} : vector<10x10x4xf32> to vector<8x8x4xf32>
    %51 = vector.shape_cast %50 : vector<8x8x4xf32> to vector<64x4xf32>
    %52 = arith.truncf %51 : vector<64x4xf32> to vector<64x4xbf16>
    %c7 = arith.constant 7 : index
    %c0_24 = arith.constant 0 : index
    %c0_25 = arith.constant 0 : index
    %53 = vector.load %arg2[%c7, %c0_24, %c0_25] : memref<9x4x4xbf16, #tpu.memory_space<vmem>>, vector<1x4x4xbf16>
    %54 = vector.shape_cast %53 : vector<1x4x4xbf16> to vector<4x4xbf16>
    %cst_26 = arith.constant dense<0.000000e+00> : vector<64x4xf32>
    %55 = tpu.matmul %52, %54, %cst_26 {dimension_numbers = #tpu.dot_dimension_numbers<[1], [0], [0], [1], [0, 0, 1, 1], [], []>} : vector<64x4xbf16>, vector<4x4xbf16>, vector<64x4xf32> -> vector<64x4xf32>
    %56 = arith.addf %49, %55 : vector<64x4xf32>
    %57 = vector.extract_strided_slice %1 {offsets = [2, 2, 0], sizes = [8, 8, 4], strides = [1, 1, 1]} : vector<10x10x4xf32> to vector<8x8x4xf32>
    %58 = vector.shape_cast %57 : vector<8x8x4xf32> to vector<64x4xf32>
    %59 = arith.truncf %58 : vector<64x4xf32> to vector<64x4xbf16>
    %c8 = arith.constant 8 : index
    %c0_27 = arith.constant 0 : index
    %c0_28 = arith.constant 0 : index
    %60 = vector.load %arg2[%c8, %c0_27, %c0_28] : memref<9x4x4xbf16, #tpu.memory_space<vmem>>, vector<1x4x4xbf16>
    %61 = vector.shape_cast %60 : vector<1x4x4xbf16> to vector<4x4xbf16>
    %cst_29 = arith.constant dense<0.000000e+00> : vector<64x4xf32>
    %62 = tpu.matmul %59, %61, %cst_29 {dimension_numbers = #tpu.dot_dimension_numbers<[1], [0], [0], [1], [0, 0, 1, 1], [], []>} : vector<64x4xbf16>, vector<4x4xbf16>, vector<64x4xf32> -> vector<64x4xf32>
    %63 = arith.addf %56, %62 : vector<64x4xf32>
    %64 = vector.shape_cast %63 : vector<64x4xf32> to vector<1x64x4xf32>
    %cst_30 = arith.constant dense<0.000000e+00> : vector<1xf32>
    %65 = vector.multi_reduction <add>, %64, %cst_30 [1, 2] : vector<1x64x4xf32> to vector<1xf32>
    %66 = vector.shape_cast %65 : vector<1xf32> to vector<1x1x1xf32>
    %67 = vector.extract %66[0, 0, 0] : f32 from vector<1x1x1xf32>
    %68 = vector.broadcast %67 : f32 to vector<1x1xf32>
    %69 = arith.mulf %63, %63 : vector<64x4xf32>
    %70 = vector.shape_cast %69 : vector<64x4xf32> to vector<1x64x4xf32>
    %cst_31 = arith.constant dense<0.000000e+00> : vector<1xf32>
    %71 = vector.multi_reduction <add>, %70, %cst_31 [1, 2] : vector<1x64x4xf32> to vector<1xf32>
    %72 = vector.shape_cast %71 : vector<1xf32> to vector<1x1x1xf32>
    %73 = vector.extract %72[0, 0, 0] : f32 from vector<1x1x1xf32>
    %74 = vector.broadcast %73 : f32 to vector<1x1xf32>
    %cst_32 = arith.constant 3.906250e-03 : f32
    %75 = vector.broadcast %cst_32 : f32 to vector<1x1xf32>
    %76 = arith.mulf %68, %75 : vector<1x1xf32>
    %cst_33 = arith.constant 3.906250e-03 : f32
    %77 = vector.broadcast %cst_33 : f32 to vector<1x1xf32>
    %78 = arith.mulf %74, %77 : vector<1x1xf32>
    %79 = arith.mulf %76, %76 : vector<1x1xf32>
    %80 = arith.subf %78, %79 : vector<1x1xf32>
    %cst_34 = arith.constant 0.000000e+00 : f32
    %81 = vector.broadcast %cst_34 : f32 to vector<1x1xf32>
    %82 = arith.maximumf %80, %81 : vector<1x1xf32>
    %83 = vector.broadcast %76 : vector<1x1xf32> to vector<64x4xf32>
    %84 = arith.subf %63, %83 : vector<64x4xf32>
    %cst_35 = arith.constant 9.99999974E-6 : f32
    %85 = vector.broadcast %cst_35 : f32 to vector<1x1xf32>
    %86 = arith.addf %82, %85 : vector<1x1xf32>
    %87 = math.rsqrt %86 : vector<1x1xf32>
    %88 = vector.broadcast %87 : vector<1x1xf32> to vector<64x4xf32>
    %89 = arith.mulf %84, %88 : vector<64x4xf32>
    %c0_36 = arith.constant 0 : index
    %c0_37 = arith.constant 0 : index
    %90 = vector.load %arg3[%c0_36, %c0_37] : memref<1x4xf32, #tpu.memory_space<vmem>>, vector<1x4xf32>
    %91 = vector.broadcast %90 : vector<1x4xf32> to vector<64x4xf32>
    %92 = arith.mulf %89, %91 : vector<64x4xf32>
    %c0_38 = arith.constant 0 : index
    %c0_39 = arith.constant 0 : index
    %93 = vector.load %arg4[%c0_38, %c0_39] : memref<1x4xf32, #tpu.memory_space<vmem>>, vector<1x4xf32>
    %94 = vector.broadcast %93 : vector<1x4xf32> to vector<64x4xf32>
    %95 = arith.addf %92, %94 : vector<64x4xf32>
    %cst_40 = arith.constant 5.000000e-01 : f32
    %96 = vector.broadcast %cst_40 : f32 to vector<64x4xf32>
    %97 = arith.mulf %96, %95 : vector<64x4xf32>
    %cst_41 = arith.constant 0.707106769 : f32
    %98 = vector.broadcast %cst_41 : f32 to vector<64x4xf32>
    %99 = arith.mulf %95, %98 : vector<64x4xf32>
    %100 = math.erf %99 : vector<64x4xf32>
    %cst_42 = arith.constant 1.000000e+00 : f32
    %101 = vector.broadcast %cst_42 : f32 to vector<64x4xf32>
    %102 = arith.addf %101, %100 : vector<64x4xf32>
    %103 = arith.mulf %97, %102 : vector<64x4xf32>
    %104 = vector.shape_cast %103 : vector<64x4xf32> to vector<8x8x4xf32>
    %c0_43 = arith.constant 0 : index
    %c0_44 = arith.constant 0 : index
    %c0_45 = arith.constant 0 : index
    %c0_46 = arith.constant 0 : index
    %105 = vector.load %arg5[%c0_43, %c0_44, %c0_45, %c0_46] : memref<1x8x8x4xf32, #tpu.memory_space<vmem>>, vector<1x8x8x4xf32>
    %106 = vector.shape_cast %105 : vector<1x8x8x4xf32> to vector<8x8x4xf32>
    %107 = vector.shape_cast %104 : vector<8x8x4xf32> to vector<1x8x8x4xf32>
    tpu.vector_store %arg5[%c0_43, %c0_44, %c0_45, %c0_46], %107 {strides = array<i32>} : memref<1x8x8x4xf32, #tpu.memory_space<vmem>>, vector<1x8x8x4xf32>,
    return
  }
  func.func @transform_0(%arg0: i32) -> (i32, i32, i32, i32) {
    %c0_i32 = arith.constant 0 : i32
    %c0_i32_0 = arith.constant 0 : i32
    %c0_i32_1 = arith.constant 0 : i32
    %c0_i32_2 = arith.constant 0 : i32
    return %arg0, %c0_i32, %c0_i32_0, %c0_i32_1 : i32, i32, i32, i32
  }
  func.func @transform_1(%arg0: i32) -> (i32, i32, i32) {
    %c0_i32 = arith.constant 0 : i32
    %c0_i32_0 = arith.constant 0 : i32
    %c0_i32_1 = arith.constant 0 : i32
    %c0_i32_2 = arith.constant 0 : i32
    return %c0_i32, %c0_i32_0, %c0_i32_1 : i32, i32, i32
  }
  func.func @transform_2(%arg0: i32) -> (i32, i32) {
    %c0_i32 = arith.constant 0 : i32
    %c0_i32_0 = arith.constant 0 : i32
    %c0_i32_1 = arith.constant 0 : i32
    return %c0_i32, %c0_i32_0 : i32, i32
  }
  func.func @transform_3(%arg0: i32) -> (i32, i32) {
    %c0_i32 = arith.constant 0 : i32
    %c0_i32_0 = arith.constant 0 : i32
    %c0_i32_1 = arith.constant 0 : i32
    return %c0_i32, %c0_i32_0 : i32, i32
  }
  func.func @transform_4(%arg0: i32) -> (i32, i32, i32, i32) {
    %c0_i32 = arith.constant 0 : i32
    %c0_i32_0 = arith.constant 0 : i32
    %c0_i32_1 = arith.constant 0 : i32
    %c0_i32_2 = arith.constant 0 : i32
    return %arg0, %c0_i32, %c0_i32_0, %c0_i32_1 : i32, i32, i32, i32
  }
}

module attributes {stable_mosaic.version = 11 : i64} {
  func.func @kernel(%arg0: i32, %arg1: memref<1x10x10x4xf32, #tpu.memory_space<vmem>>, %arg2: memref<9x4x8xbf16, #tpu.memory_space<vmem>>, %arg3: memref<1x8xf32, #tpu.memory_space<vmem>>, %arg4: memref<1x8xf32, #tpu.memory_space<vmem>>, %arg5: memref<1x8x8x8xf32, #tpu.memory_space<vmem>>) attributes {dimension_semantics = [#tpu.dimension_semantics<parallel>], iteration_bounds = array<i64: 2>, scalar_prefetch = 0 : i64, scratch_operands = 0 : i64, tpu.core_type = #tpu.core_type<tc>, window_params = [{transform_indices = @transform_0, window_bounds = array<i64: 1, 10, 10, 4>}, {pipeline_mode = #tpu.pipeline_mode<synchronous>, transform_indices = @transform_1, window_bounds = array<i64: 9, 4, 8>}, {pipeline_mode = #tpu.pipeline_mode<synchronous>, transform_indices = @transform_2, window_bounds = array<i64: 1, 8>}, {pipeline_mode = #tpu.pipeline_mode<synchronous>, transform_indices = @transform_3, window_bounds = array<i64: 1, 8>}, {transform_indices = @transform_4, window_bounds = array<i64: 1, 8, 8, 8>}]} {
    %c0 = arith.constant 0 : index
    %c0_0 = arith.constant 0 : index
    %c0_1 = arith.constant 0 : index
    %c0_2 = arith.constant 0 : index
    %0 = vector.load %arg1[%c0, %c0_0, %c0_1, %c0_2] : memref<1x10x10x4xf32, #tpu.memory_space<vmem>>, vector<1x10x10x4xf32>
    %1 = vector.shape_cast %0 : vector<1x10x10x4xf32> to vector<10x10x4xf32>
    %2 = vector.extract_strided_slice %1 {offsets = [0, 0, 0], sizes = [8, 8, 4], strides = [1, 1, 1]} : vector<10x10x4xf32> to vector<8x8x4xf32>
    %3 = vector.shape_cast %2 : vector<8x8x4xf32> to vector<64x4xf32>
    %4 = arith.truncf %3 : vector<64x4xf32> to vector<64x4xbf16>
    %c0_3 = arith.constant 0 : index
    %c0_4 = arith.constant 0 : index
    %c0_5 = arith.constant 0 : index
    %5 = vector.load %arg2[%c0_3, %c0_4, %c0_5] : memref<9x4x8xbf16, #tpu.memory_space<vmem>>, vector<1x4x8xbf16>
    %6 = vector.shape_cast %5 : vector<1x4x8xbf16> to vector<4x8xbf16>
    %cst = arith.constant dense<0.000000e+00> : vector<64x8xf32>
    %7 = tpu.matmul %4, %6, %cst {dimension_numbers = #tpu.dot_dimension_numbers<[1], [0], [0], [1], [0, 0, 1, 1], [], []>} : vector<64x4xbf16>, vector<4x8xbf16>, vector<64x8xf32> -> vector<64x8xf32>
    %8 = vector.extract_strided_slice %1 {offsets = [0, 1, 0], sizes = [8, 8, 4], strides = [1, 1, 1]} : vector<10x10x4xf32> to vector<8x8x4xf32>
    %9 = vector.shape_cast %8 : vector<8x8x4xf32> to vector<64x4xf32>
    %10 = arith.truncf %9 : vector<64x4xf32> to vector<64x4xbf16>
    %c1 = arith.constant 1 : index
    %c0_6 = arith.constant 0 : index
    %c0_7 = arith.constant 0 : index
    %11 = vector.load %arg2[%c1, %c0_6, %c0_7] : memref<9x4x8xbf16, #tpu.memory_space<vmem>>, vector<1x4x8xbf16>
    %12 = vector.shape_cast %11 : vector<1x4x8xbf16> to vector<4x8xbf16>
    %cst_8 = arith.constant dense<0.000000e+00> : vector<64x8xf32>
    %13 = tpu.matmul %10, %12, %cst_8 {dimension_numbers = #tpu.dot_dimension_numbers<[1], [0], [0], [1], [0, 0, 1, 1], [], []>} : vector<64x4xbf16>, vector<4x8xbf16>, vector<64x8xf32> -> vector<64x8xf32>
    %14 = arith.addf %7, %13 : vector<64x8xf32>
    %15 = vector.extract_strided_slice %1 {offsets = [0, 2, 0], sizes = [8, 8, 4], strides = [1, 1, 1]} : vector<10x10x4xf32> to vector<8x8x4xf32>
    %16 = vector.shape_cast %15 : vector<8x8x4xf32> to vector<64x4xf32>
    %17 = arith.truncf %16 : vector<64x4xf32> to vector<64x4xbf16>
    %c2 = arith.constant 2 : index
    %c0_9 = arith.constant 0 : index
    %c0_10 = arith.constant 0 : index
    %18 = vector.load %arg2[%c2, %c0_9, %c0_10] : memref<9x4x8xbf16, #tpu.memory_space<vmem>>, vector<1x4x8xbf16>
    %19 = vector.shape_cast %18 : vector<1x4x8xbf16> to vector<4x8xbf16>
    %cst_11 = arith.constant dense<0.000000e+00> : vector<64x8xf32>
    %20 = tpu.matmul %17, %19, %cst_11 {dimension_numbers = #tpu.dot_dimension_numbers<[1], [0], [0], [1], [0, 0, 1, 1], [], []>} : vector<64x4xbf16>, vector<4x8xbf16>, vector<64x8xf32> -> vector<64x8xf32>
    %21 = arith.addf %14, %20 : vector<64x8xf32>
    %22 = vector.extract_strided_slice %1 {offsets = [1, 0, 0], sizes = [8, 8, 4], strides = [1, 1, 1]} : vector<10x10x4xf32> to vector<8x8x4xf32>
    %23 = vector.shape_cast %22 : vector<8x8x4xf32> to vector<64x4xf32>
    %24 = arith.truncf %23 : vector<64x4xf32> to vector<64x4xbf16>
    %c3 = arith.constant 3 : index
    %c0_12 = arith.constant 0 : index
    %c0_13 = arith.constant 0 : index
    %25 = vector.load %arg2[%c3, %c0_12, %c0_13] : memref<9x4x8xbf16, #tpu.memory_space<vmem>>, vector<1x4x8xbf16>
    %26 = vector.shape_cast %25 : vector<1x4x8xbf16> to vector<4x8xbf16>
    %cst_14 = arith.constant dense<0.000000e+00> : vector<64x8xf32>
    %27 = tpu.matmul %24, %26, %cst_14 {dimension_numbers = #tpu.dot_dimension_numbers<[1], [0], [0], [1], [0, 0, 1, 1], [], []>} : vector<64x4xbf16>, vector<4x8xbf16>, vector<64x8xf32> -> vector<64x8xf32>
    %28 = arith.addf %21, %27 : vector<64x8xf32>
    %29 = vector.extract_strided_slice %1 {offsets = [1, 1, 0], sizes = [8, 8, 4], strides = [1, 1, 1]} : vector<10x10x4xf32> to vector<8x8x4xf32>
    %30 = vector.shape_cast %29 : vector<8x8x4xf32> to vector<64x4xf32>
    %31 = arith.truncf %30 : vector<64x4xf32> to vector<64x4xbf16>
    %c4 = arith.constant 4 : index
    %c0_15 = arith.constant 0 : index
    %c0_16 = arith.constant 0 : index
    %32 = vector.load %arg2[%c4, %c0_15, %c0_16] : memref<9x4x8xbf16, #tpu.memory_space<vmem>>, vector<1x4x8xbf16>
    %33 = vector.shape_cast %32 : vector<1x4x8xbf16> to vector<4x8xbf16>
    %cst_17 = arith.constant dense<0.000000e+00> : vector<64x8xf32>
    %34 = tpu.matmul %31, %33, %cst_17 {dimension_numbers = #tpu.dot_dimension_numbers<[1], [0], [0], [1], [0, 0, 1, 1], [], []>} : vector<64x4xbf16>, vector<4x8xbf16>, vector<64x8xf32> -> vector<64x8xf32>
    %35 = arith.addf %28, %34 : vector<64x8xf32>
    %36 = vector.extract_strided_slice %1 {offsets = [1, 2, 0], sizes = [8, 8, 4], strides = [1, 1, 1]} : vector<10x10x4xf32> to vector<8x8x4xf32>
    %37 = vector.shape_cast %36 : vector<8x8x4xf32> to vector<64x4xf32>
    %38 = arith.truncf %37 : vector<64x4xf32> to vector<64x4xbf16>
    %c5 = arith.constant 5 : index
    %c0_18 = arith.constant 0 : index
    %c0_19 = arith.constant 0 : index
    %39 = vector.load %arg2[%c5, %c0_18, %c0_19] : memref<9x4x8xbf16, #tpu.memory_space<vmem>>, vector<1x4x8xbf16>
    %40 = vector.shape_cast %39 : vector<1x4x8xbf16> to vector<4x8xbf16>
    %cst_20 = arith.constant dense<0.000000e+00> : vector<64x8xf32>
    %41 = tpu.matmul %38, %40, %cst_20 {dimension_numbers = #tpu.dot_dimension_numbers<[1], [0], [0], [1], [0, 0, 1, 1], [], []>} : vector<64x4xbf16>, vector<4x8xbf16>, vector<64x8xf32> -> vector<64x8xf32>
    %42 = arith.addf %35, %41 : vector<64x8xf32>
    %43 = vector.extract_strided_slice %1 {offsets = [2, 0, 0], sizes = [8, 8, 4], strides = [1, 1, 1]} : vector<10x10x4xf32> to vector<8x8x4xf32>
    %44 = vector.shape_cast %43 : vector<8x8x4xf32> to vector<64x4xf32>
    %45 = arith.truncf %44 : vector<64x4xf32> to vector<64x4xbf16>
    %c6 = arith.constant 6 : index
    %c0_21 = arith.constant 0 : index
    %c0_22 = arith.constant 0 : index
    %46 = vector.load %arg2[%c6, %c0_21, %c0_22] : memref<9x4x8xbf16, #tpu.memory_space<vmem>>, vector<1x4x8xbf16>
    %47 = vector.shape_cast %46 : vector<1x4x8xbf16> to vector<4x8xbf16>
    %cst_23 = arith.constant dense<0.000000e+00> : vector<64x8xf32>
    %48 = tpu.matmul %45, %47, %cst_23 {dimension_numbers = #tpu.dot_dimension_numbers<[1], [0], [0], [1], [0, 0, 1, 1], [], []>} : vector<64x4xbf16>, vector<4x8xbf16>, vector<64x8xf32> -> vector<64x8xf32>
    %49 = arith.addf %42, %48 : vector<64x8xf32>
    %50 = vector.extract_strided_slice %1 {offsets = [2, 1, 0], sizes = [8, 8, 4], strides = [1, 1, 1]} : vector<10x10x4xf32> to vector<8x8x4xf32>
    %51 = vector.shape_cast %50 : vector<8x8x4xf32> to vector<64x4xf32>
    %52 = arith.truncf %51 : vector<64x4xf32> to vector<64x4xbf16>
    %c7 = arith.constant 7 : index
    %c0_24 = arith.constant 0 : index
    %c0_25 = arith.constant 0 : index
    %53 = vector.load %arg2[%c7, %c0_24, %c0_25] : memref<9x4x8xbf16, #tpu.memory_space<vmem>>, vector<1x4x8xbf16>
    %54 = vector.shape_cast %53 : vector<1x4x8xbf16> to vector<4x8xbf16>
    %cst_26 = arith.constant dense<0.000000e+00> : vector<64x8xf32>
    %55 = tpu.matmul %52, %54, %cst_26 {dimension_numbers = #tpu.dot_dimension_numbers<[1], [0], [0], [1], [0, 0, 1, 1], [], []>} : vector<64x4xbf16>, vector<4x8xbf16>, vector<64x8xf32> -> vector<64x8xf32>
    %56 = arith.addf %49, %55 : vector<64x8xf32>
    %57 = vector.extract_strided_slice %1 {offsets = [2, 2, 0], sizes = [8, 8, 4], strides = [1, 1, 1]} : vector<10x10x4xf32> to vector<8x8x4xf32>
    %58 = vector.shape_cast %57 : vector<8x8x4xf32> to vector<64x4xf32>
    %59 = arith.truncf %58 : vector<64x4xf32> to vector<64x4xbf16>
    %c8 = arith.constant 8 : index
    %c0_27 = arith.constant 0 : index
    %c0_28 = arith.constant 0 : index
    %60 = vector.load %arg2[%c8, %c0_27, %c0_28] : memref<9x4x8xbf16, #tpu.memory_space<vmem>>, vector<1x4x8xbf16>
    %61 = vector.shape_cast %60 : vector<1x4x8xbf16> to vector<4x8xbf16>
    %cst_29 = arith.constant dense<0.000000e+00> : vector<64x8xf32>
    %62 = tpu.matmul %59, %61, %cst_29 {dimension_numbers = #tpu.dot_dimension_numbers<[1], [0], [0], [1], [0, 0, 1, 1], [], []>} : vector<64x4xbf16>, vector<4x8xbf16>, vector<64x8xf32> -> vector<64x8xf32>
    %63 = arith.addf %56, %62 : vector<64x8xf32>
    %64 = vector.shape_cast %63 : vector<64x8xf32> to vector<1x64x8xf32>
    %cst_30 = arith.constant dense<0.000000e+00> : vector<1xf32>
    %65 = vector.multi_reduction <add>, %64, %cst_30 [1, 2] : vector<1x64x8xf32> to vector<1xf32>
    %66 = vector.shape_cast %65 : vector<1xf32> to vector<1x1x1xf32>
    %67 = vector.extract %66[0, 0, 0] : f32 from vector<1x1x1xf32>
    %68 = vector.broadcast %67 : f32 to vector<1x1xf32>
    %69 = arith.mulf %63, %63 : vector<64x8xf32>
    %70 = vector.shape_cast %69 : vector<64x8xf32> to vector<1x64x8xf32>
    %cst_31 = arith.constant dense<0.000000e+00> : vector<1xf32>
    %71 = vector.multi_reduction <add>, %70, %cst_31 [1, 2] : vector<1x64x8xf32> to vector<1xf32>
    %72 = vector.shape_cast %71 : vector<1xf32> to vector<1x1x1xf32>
    %73 = vector.extract %72[0, 0, 0] : f32 from vector<1x1x1xf32>
    %74 = vector.broadcast %73 : f32 to vector<1x1xf32>
    %cst_32 = arith.constant 0.001953125 : f32
    %75 = vector.broadcast %cst_32 : f32 to vector<1x1xf32>
    %76 = arith.mulf %68, %75 : vector<1x1xf32>
    %cst_33 = arith.constant 0.001953125 : f32
    %77 = vector.broadcast %cst_33 : f32 to vector<1x1xf32>
    %78 = arith.mulf %74, %77 : vector<1x1xf32>
    %79 = arith.mulf %76, %76 : vector<1x1xf32>
    %80 = arith.subf %78, %79 : vector<1x1xf32>
    %cst_34 = arith.constant 0.000000e+00 : f32
    %81 = vector.broadcast %cst_34 : f32 to vector<1x1xf32>
    %82 = arith.maximumf %80, %81 : vector<1x1xf32>
    %83 = vector.broadcast %76 : vector<1x1xf32> to vector<64x8xf32>
    %84 = arith.subf %63, %83 : vector<64x8xf32>
    %cst_35 = arith.constant 9.99999974E-6 : f32
    %85 = vector.broadcast %cst_35 : f32 to vector<1x1xf32>
    %86 = arith.addf %82, %85 : vector<1x1xf32>
    %87 = math.rsqrt %86 : vector<1x1xf32>
    %88 = vector.broadcast %87 : vector<1x1xf32> to vector<64x8xf32>
    %89 = arith.mulf %84, %88 : vector<64x8xf32>
    %c0_36 = arith.constant 0 : index
    %c0_37 = arith.constant 0 : index
    %90 = vector.load %arg3[%c0_36, %c0_37] : memref<1x8xf32, #tpu.memory_space<vmem>>, vector<1x8xf32>
    %91 = vector.broadcast %90 : vector<1x8xf32> to vector<64x8xf32>
    %92 = arith.mulf %89, %91 : vector<64x8xf32>
    %c0_38 = arith.constant 0 : index
    %c0_39 = arith.constant 0 : index
    %93 = vector.load %arg4[%c0_38, %c0_39] : memref<1x8xf32, #tpu.memory_space<vmem>>, vector<1x8xf32>
    %94 = vector.broadcast %93 : vector<1x8xf32> to vector<64x8xf32>
    %95 = arith.addf %92, %94 : vector<64x8xf32>
    %cst_40 = arith.constant 5.000000e-01 : f32
    %96 = vector.broadcast %cst_40 : f32 to vector<64x8xf32>
    %97 = arith.mulf %96, %95 : vector<64x8xf32>
    %cst_41 = arith.constant 0.707106769 : f32
    %98 = vector.broadcast %cst_41 : f32 to vector<64x8xf32>
    %99 = arith.mulf %95, %98 : vector<64x8xf32>
    %100 = math.erf %99 : vector<64x8xf32>
    %cst_42 = arith.constant 1.000000e+00 : f32
    %101 = vector.broadcast %cst_42 : f32 to vector<64x8xf32>
    %102 = arith.addf %101, %100 : vector<64x8xf32>
    %103 = arith.mulf %97, %102 : vector<64x8xf32>
    %104 = vector.shape_cast %103 : vector<64x8xf32> to vector<8x8x8xf32>
    %c0_43 = arith.constant 0 : index
    %c0_44 = arith.constant 0 : index
    %c0_45 = arith.constant 0 : index
    %c0_46 = arith.constant 0 : index
    %105 = vector.load %arg5[%c0_43, %c0_44, %c0_45, %c0_46] : memref<1x8x8x8xf32, #tpu.memory_space<vmem>>, vector<1x8x8x8xf32>
    %106 = vector.shape_cast %105 : vector<1x8x8x8xf32> to vector<8x8x8xf32>
    %107 = vector.shape_cast %104 : vector<8x8x8xf32> to vector<1x8x8x8xf32>
    tpu.vector_store %arg5[%c0_43, %c0_44, %c0_45, %c0_46], %107 {strides = array<i32>} : memref<1x8x8x8xf32, #tpu.memory_space<vmem>>, vector<1x8x8x8xf32>,
    return
  }
  func.func @transform_0(%arg0: i32) -> (i32, i32, i32, i32) {
    %c0_i32 = arith.constant 0 : i32
    %c0_i32_0 = arith.constant 0 : i32
    %c0_i32_1 = arith.constant 0 : i32
    %c0_i32_2 = arith.constant 0 : i32
    return %arg0, %c0_i32, %c0_i32_0, %c0_i32_1 : i32, i32, i32, i32
  }
  func.func @transform_1(%arg0: i32) -> (i32, i32, i32) {
    %c0_i32 = arith.constant 0 : i32
    %c0_i32_0 = arith.constant 0 : i32
    %c0_i32_1 = arith.constant 0 : i32
    %c0_i32_2 = arith.constant 0 : i32
    return %c0_i32, %c0_i32_0, %c0_i32_1 : i32, i32, i32
  }
  func.func @transform_2(%arg0: i32) -> (i32, i32) {
    %c0_i32 = arith.constant 0 : i32
    %c0_i32_0 = arith.constant 0 : i32
    %c0_i32_1 = arith.constant 0 : i32
    return %c0_i32, %c0_i32_0 : i32, i32
  }
  func.func @transform_3(%arg0: i32) -> (i32, i32) {
    %c0_i32 = arith.constant 0 : i32
    %c0_i32_0 = arith.constant 0 : i32
    %c0_i32_1 = arith.constant 0 : i32
    return %c0_i32, %c0_i32_0 : i32, i32
  }
  func.func @transform_4(%arg0: i32) -> (i32, i32, i32, i32) {
    %c0_i32 = arith.constant 0 : i32
    %c0_i32_0 = arith.constant 0 : i32
    %c0_i32_1 = arith.constant 0 : i32
    %c0_i32_2 = arith.constant 0 : i32
    return %arg0, %c0_i32, %c0_i32_0, %c0_i32_1 : i32, i32, i32, i32
  }
}

module attributes {stable_mosaic.version = 11 : i64} {
  func.func @_emb_kernel(%arg0: i32, %arg1: memref<2x32xf32, #tpu.memory_space<vmem>>, %arg2: memref<32x8xbf16, #tpu.memory_space<vmem>>, %arg3: memref<1x8xf32, #tpu.memory_space<vmem>>, %arg4: memref<2x48xf32, #tpu.memory_space<vmem>>, %arg5: memref<48x8xbf16, #tpu.memory_space<vmem>>, %arg6: memref<1x8xf32, #tpu.memory_space<vmem>>, %arg7: memref<2x8xf32, #tpu.memory_space<vmem>>) attributes {dimension_semantics = [#tpu.dimension_semantics<arbitrary>], iteration_bounds = array<i64: 1>, scalar_prefetch = 0 : i64, scratch_operands = 0 : i64, tpu.core_type = #tpu.core_type<tc>, window_params = [{pipeline_mode = #tpu.pipeline_mode<synchronous>, transform_indices = @transform_0, window_bounds = array<i64: 2, 32>}, {pipeline_mode = #tpu.pipeline_mode<synchronous>, transform_indices = @transform_1, window_bounds = array<i64: 32, 8>}, {pipeline_mode = #tpu.pipeline_mode<synchronous>, transform_indices = @transform_2, window_bounds = array<i64: 1, 8>}, {pipeline_mode = #tpu.pipeline_mode<synchronous>, transform_indices = @transform_3, window_bounds = array<i64: 2, 48>}, {pipeline_mode = #tpu.pipeline_mode<synchronous>, transform_indices = @transform_4, window_bounds = array<i64: 48, 8>}, {pipeline_mode = #tpu.pipeline_mode<synchronous>, transform_indices = @transform_5, window_bounds = array<i64: 1, 8>}, {pipeline_mode = #tpu.pipeline_mode<synchronous>, transform_indices = @transform_6, window_bounds = array<i64: 2, 8>}]} {
    %c0 = arith.constant 0 : index
    %c0_0 = arith.constant 0 : index
    %0 = vector.load %arg1[%c0, %c0_0] : memref<2x32xf32, #tpu.memory_space<vmem>>, vector<2x32xf32>
    %c0_1 = arith.constant 0 : index
    %c0_2 = arith.constant 0 : index
    %1 = vector.load %arg4[%c0_1, %c0_2] : memref<2x48xf32, #tpu.memory_space<vmem>>, vector<2x48xf32>
    %2 = arith.negf %0 : vector<2x32xf32>
    %3 = math.exp %2 : vector<2x32xf32>
    %cst = arith.constant 1.000000e+00 : f32
    %4 = vector.broadcast %cst : f32 to vector<2x32xf32>
    %5 = arith.addf %4, %3 : vector<2x32xf32>
    %6 = arith.divf %4, %5 : vector<2x32xf32>
    %7 = arith.mulf %0, %6 : vector<2x32xf32>
    %8 = arith.truncf %7 : vector<2x32xf32> to vector<2x32xbf16>
    %9 = arith.negf %1 : vector<2x48xf32>
    %10 = math.exp %9 : vector<2x48xf32>
    %cst_3 = arith.constant 1.000000e+00 : f32
    %11 = vector.broadcast %cst_3 : f32 to vector<2x48xf32>
    %12 = arith.addf %11, %10 : vector<2x48xf32>
    %13 = arith.divf %11, %12 : vector<2x48xf32>
    %14 = arith.mulf %1, %13 : vector<2x48xf32>
    %15 = arith.truncf %14 : vector<2x48xf32> to vector<2x48xbf16>
    %c0_4 = arith.constant 0 : index
    %c0_5 = arith.constant 0 : index
    %16 = vector.load %arg2[%c0_4, %c0_5] : memref<32x8xbf16, #tpu.memory_space<vmem>>, vector<32x8xbf16>
    %cst_6 = arith.constant dense<0.000000e+00> : vector<2x8xf32>
    %17 = tpu.matmul %8, %16, %cst_6 {dimension_numbers = #tpu.dot_dimension_numbers<[1], [0], [0], [1], [0, 0, 1, 1], [], []>} : vector<2x32xbf16>, vector<32x8xbf16>, vector<2x8xf32> -> vector<2x8xf32>
    %c0_7 = arith.constant 0 : index
    %c0_8 = arith.constant 0 : index
    %18 = vector.load %arg5[%c0_7, %c0_8] : memref<48x8xbf16, #tpu.memory_space<vmem>>, vector<48x8xbf16>
    %cst_9 = arith.constant dense<0.000000e+00> : vector<2x8xf32>
    %19 = tpu.matmul %15, %18, %cst_9 {dimension_numbers = #tpu.dot_dimension_numbers<[1], [0], [0], [1], [0, 0, 1, 1], [], []>} : vector<2x48xbf16>, vector<48x8xbf16>, vector<2x8xf32> -> vector<2x8xf32>
    %20 = arith.addf %17, %19 : vector<2x8xf32>
    %c0_10 = arith.constant 0 : index
    %c0_11 = arith.constant 0 : index
    %21 = vector.load %arg3[%c0_10, %c0_11] : memref<1x8xf32, #tpu.memory_space<vmem>>, vector<1x8xf32>
    %22 = vector.broadcast %21 : vector<1x8xf32> to vector<2x8xf32>
    %23 = arith.addf %20, %22 : vector<2x8xf32>
    %c0_12 = arith.constant 0 : index
    %c0_13 = arith.constant 0 : index
    %24 = vector.load %arg6[%c0_12, %c0_13] : memref<1x8xf32, #tpu.memory_space<vmem>>, vector<1x8xf32>
    %25 = vector.broadcast %24 : vector<1x8xf32> to vector<2x8xf32>
    %26 = arith.addf %23, %25 : vector<2x8xf32>
    %c0_14 = arith.constant 0 : index
    %c0_15 = arith.constant 0 : index
    %27 = vector.load %arg7[%c0_14, %c0_15] : memref<2x8xf32, #tpu.memory_space<vmem>>, vector<2x8xf32>
    tpu.vector_store %arg7[%c0_14, %c0_15], %26 {strides = array<i32>} : memref<2x8xf32, #tpu.memory_space<vmem>>, vector<2x8xf32>,
    return
  }
  func.func @transform_0(%arg0: i32) -> (i32, i32) {
    %c0_i32 = arith.constant 0 : i32
    %c0_i32_0 = arith.constant 0 : i32
    %c0_i32_1 = arith.constant 0 : i32
    return %c0_i32, %c0_i32_0 : i32, i32
  }
  func.func @transform_1(%arg0: i32) -> (i32, i32) {
    %c0_i32 = arith.constant 0 : i32
    %c0_i32_0 = arith.constant 0 : i32
    %c0_i32_1 = arith.constant 0 : i32
    return %c0_i32, %c0_i32_0 : i32, i32
  }
  func.func @transform_2(%arg0: i32) -> (i32, i32) {
    %c0_i32 = arith.constant 0 : i32
    %c0_i32_0 = arith.constant 0 : i32
    %c0_i32_1 = arith.constant 0 : i32
    return %c0_i32, %c0_i32_0 : i32, i32
  }
  func.func @transform_3(%arg0: i32) -> (i32, i32) {
    %c0_i32 = arith.constant 0 : i32
    %c0_i32_0 = arith.constant 0 : i32
    %c0_i32_1 = arith.constant 0 : i32
    return %c0_i32, %c0_i32_0 : i32, i32
  }
  func.func @transform_4(%arg0: i32) -> (i32, i32) {
    %c0_i32 = arith.constant 0 : i32
    %c0_i32_0 = arith.constant 0 : i32
    %c0_i32_1 = arith.constant 0 : i32
    return %c0_i32, %c0_i32_0 : i32, i32
  }
  func.func @transform_5(%arg0: i32) -> (i32, i32) {
    %c0_i32 = arith.constant 0 : i32
    %c0_i32_0 = arith.constant 0 : i32
    %c0_i32_1 = arith.constant 0 : i32
    return %c0_i32, %c0_i32_0 : i32, i32
  }
  func.func @transform_6(%arg0: i32) -> (i32, i32) {
    %c0_i32 = arith.constant 0 : i32
    %c0_i32_0 = arith.constant 0 : i32
    %c0_i32_1 = arith.constant 0 : i32
    return %c0_i32, %c0_i32_0 : i32, i32
  }
}

module attributes {stable_mosaic.version = 11 : i64} {
  func.func @kernel(%arg0: i32, %arg1: memref<1x10x10x8xf32, #tpu.memory_space<vmem>>, %arg2: memref<9x8x8xbf16, #tpu.memory_space<vmem>>, %arg3: memref<1x8xf32, #tpu.memory_space<vmem>>, %arg4: memref<1x8xf32, #tpu.memory_space<vmem>>, %arg5: memref<1x1x8xf32, #tpu.memory_space<vmem>>, %arg6: memref<1x8x8x8xf32, #tpu.memory_space<vmem>>) attributes {dimension_semantics = [#tpu.dimension_semantics<parallel>], iteration_bounds = array<i64: 2>, scalar_prefetch = 0 : i64, scratch_operands = 0 : i64, tpu.core_type = #tpu.core_type<tc>, window_params = [{transform_indices = @transform_0, window_bounds = array<i64: 1, 10, 10, 8>}, {pipeline_mode = #tpu.pipeline_mode<synchronous>, transform_indices = @transform_1, window_bounds = array<i64: 9, 8, 8>}, {pipeline_mode = #tpu.pipeline_mode<synchronous>, transform_indices = @transform_2, window_bounds = array<i64: 1, 8>}, {pipeline_mode = #tpu.pipeline_mode<synchronous>, transform_indices = @transform_3, window_bounds = array<i64: 1, 8>}, {transform_indices = @transform_4, window_bounds = array<i64: 1, 1, 8>}, {transform_indices = @transform_5, window_bounds = array<i64: 1, 8, 8, 8>}]} {
    %c0 = arith.constant 0 : index
    %c0_0 = arith.constant 0 : index
    %c0_1 = arith.constant 0 : index
    %c0_2 = arith.constant 0 : index
    %0 = vector.load %arg1[%c0, %c0_0, %c0_1, %c0_2] : memref<1x10x10x8xf32, #tpu.memory_space<vmem>>, vector<1x10x10x8xf32>
    %1 = vector.shape_cast %0 : vector<1x10x10x8xf32> to vector<10x10x8xf32>
    %2 = vector.extract_strided_slice %1 {offsets = [0, 0, 0], sizes = [8, 8, 8], strides = [1, 1, 1]} : vector<10x10x8xf32> to vector<8x8x8xf32>
    %3 = vector.shape_cast %2 : vector<8x8x8xf32> to vector<64x8xf32>
    %4 = arith.truncf %3 : vector<64x8xf32> to vector<64x8xbf16>
    %c0_3 = arith.constant 0 : index
    %c0_4 = arith.constant 0 : index
    %c0_5 = arith.constant 0 : index
    %5 = vector.load %arg2[%c0_3, %c0_4, %c0_5] : memref<9x8x8xbf16, #tpu.memory_space<vmem>>, vector<1x8x8xbf16>
    %6 = vector.shape_cast %5 : vector<1x8x8xbf16> to vector<8x8xbf16>
    %cst = arith.constant dense<0.000000e+00> : vector<64x8xf32>
    %7 = tpu.matmul %4, %6, %cst {dimension_numbers = #tpu.dot_dimension_numbers<[1], [0], [0], [1], [0, 0, 1, 1], [], []>} : vector<64x8xbf16>, vector<8x8xbf16>, vector<64x8xf32> -> vector<64x8xf32>
    %8 = vector.extract_strided_slice %1 {offsets = [0, 1, 0], sizes = [8, 8, 8], strides = [1, 1, 1]} : vector<10x10x8xf32> to vector<8x8x8xf32>
    %9 = vector.shape_cast %8 : vector<8x8x8xf32> to vector<64x8xf32>
    %10 = arith.truncf %9 : vector<64x8xf32> to vector<64x8xbf16>
    %c1 = arith.constant 1 : index
    %c0_6 = arith.constant 0 : index
    %c0_7 = arith.constant 0 : index
    %11 = vector.load %arg2[%c1, %c0_6, %c0_7] : memref<9x8x8xbf16, #tpu.memory_space<vmem>>, vector<1x8x8xbf16>
    %12 = vector.shape_cast %11 : vector<1x8x8xbf16> to vector<8x8xbf16>
    %cst_8 = arith.constant dense<0.000000e+00> : vector<64x8xf32>
    %13 = tpu.matmul %10, %12, %cst_8 {dimension_numbers = #tpu.dot_dimension_numbers<[1], [0], [0], [1], [0, 0, 1, 1], [], []>} : vector<64x8xbf16>, vector<8x8xbf16>, vector<64x8xf32> -> vector<64x8xf32>
    %14 = arith.addf %7, %13 : vector<64x8xf32>
    %15 = vector.extract_strided_slice %1 {offsets = [0, 2, 0], sizes = [8, 8, 8], strides = [1, 1, 1]} : vector<10x10x8xf32> to vector<8x8x8xf32>
    %16 = vector.shape_cast %15 : vector<8x8x8xf32> to vector<64x8xf32>
    %17 = arith.truncf %16 : vector<64x8xf32> to vector<64x8xbf16>
    %c2 = arith.constant 2 : index
    %c0_9 = arith.constant 0 : index
    %c0_10 = arith.constant 0 : index
    %18 = vector.load %arg2[%c2, %c0_9, %c0_10] : memref<9x8x8xbf16, #tpu.memory_space<vmem>>, vector<1x8x8xbf16>
    %19 = vector.shape_cast %18 : vector<1x8x8xbf16> to vector<8x8xbf16>
    %cst_11 = arith.constant dense<0.000000e+00> : vector<64x8xf32>
    %20 = tpu.matmul %17, %19, %cst_11 {dimension_numbers = #tpu.dot_dimension_numbers<[1], [0], [0], [1], [0, 0, 1, 1], [], []>} : vector<64x8xbf16>, vector<8x8xbf16>, vector<64x8xf32> -> vector<64x8xf32>
    %21 = arith.addf %14, %20 : vector<64x8xf32>
    %22 = vector.extract_strided_slice %1 {offsets = [1, 0, 0], sizes = [8, 8, 8], strides = [1, 1, 1]} : vector<10x10x8xf32> to vector<8x8x8xf32>
    %23 = vector.shape_cast %22 : vector<8x8x8xf32> to vector<64x8xf32>
    %24 = arith.truncf %23 : vector<64x8xf32> to vector<64x8xbf16>
    %c3 = arith.constant 3 : index
    %c0_12 = arith.constant 0 : index
    %c0_13 = arith.constant 0 : index
    %25 = vector.load %arg2[%c3, %c0_12, %c0_13] : memref<9x8x8xbf16, #tpu.memory_space<vmem>>, vector<1x8x8xbf16>
    %26 = vector.shape_cast %25 : vector<1x8x8xbf16> to vector<8x8xbf16>
    %cst_14 = arith.constant dense<0.000000e+00> : vector<64x8xf32>
    %27 = tpu.matmul %24, %26, %cst_14 {dimension_numbers = #tpu.dot_dimension_numbers<[1], [0], [0], [1], [0, 0, 1, 1], [], []>} : vector<64x8xbf16>, vector<8x8xbf16>, vector<64x8xf32> -> vector<64x8xf32>
    %28 = arith.addf %21, %27 : vector<64x8xf32>
    %29 = vector.extract_strided_slice %1 {offsets = [1, 1, 0], sizes = [8, 8, 8], strides = [1, 1, 1]} : vector<10x10x8xf32> to vector<8x8x8xf32>
    %30 = vector.shape_cast %29 : vector<8x8x8xf32> to vector<64x8xf32>
    %31 = arith.truncf %30 : vector<64x8xf32> to vector<64x8xbf16>
    %c4 = arith.constant 4 : index
    %c0_15 = arith.constant 0 : index
    %c0_16 = arith.constant 0 : index
    %32 = vector.load %arg2[%c4, %c0_15, %c0_16] : memref<9x8x8xbf16, #tpu.memory_space<vmem>>, vector<1x8x8xbf16>
    %33 = vector.shape_cast %32 : vector<1x8x8xbf16> to vector<8x8xbf16>
    %cst_17 = arith.constant dense<0.000000e+00> : vector<64x8xf32>
    %34 = tpu.matmul %31, %33, %cst_17 {dimension_numbers = #tpu.dot_dimension_numbers<[1], [0], [0], [1], [0, 0, 1, 1], [], []>} : vector<64x8xbf16>, vector<8x8xbf16>, vector<64x8xf32> -> vector<64x8xf32>
    %35 = arith.addf %28, %34 : vector<64x8xf32>
    %36 = vector.extract_strided_slice %1 {offsets = [1, 2, 0], sizes = [8, 8, 8], strides = [1, 1, 1]} : vector<10x10x8xf32> to vector<8x8x8xf32>
    %37 = vector.shape_cast %36 : vector<8x8x8xf32> to vector<64x8xf32>
    %38 = arith.truncf %37 : vector<64x8xf32> to vector<64x8xbf16>
    %c5 = arith.constant 5 : index
    %c0_18 = arith.constant 0 : index
    %c0_19 = arith.constant 0 : index
    %39 = vector.load %arg2[%c5, %c0_18, %c0_19] : memref<9x8x8xbf16, #tpu.memory_space<vmem>>, vector<1x8x8xbf16>
    %40 = vector.shape_cast %39 : vector<1x8x8xbf16> to vector<8x8xbf16>
    %cst_20 = arith.constant dense<0.000000e+00> : vector<64x8xf32>
    %41 = tpu.matmul %38, %40, %cst_20 {dimension_numbers = #tpu.dot_dimension_numbers<[1], [0], [0], [1], [0, 0, 1, 1], [], []>} : vector<64x8xbf16>, vector<8x8xbf16>, vector<64x8xf32> -> vector<64x8xf32>
    %42 = arith.addf %35, %41 : vector<64x8xf32>
    %43 = vector.extract_strided_slice %1 {offsets = [2, 0, 0], sizes = [8, 8, 8], strides = [1, 1, 1]} : vector<10x10x8xf32> to vector<8x8x8xf32>
    %44 = vector.shape_cast %43 : vector<8x8x8xf32> to vector<64x8xf32>
    %45 = arith.truncf %44 : vector<64x8xf32> to vector<64x8xbf16>
    %c6 = arith.constant 6 : index
    %c0_21 = arith.constant 0 : index
    %c0_22 = arith.constant 0 : index
    %46 = vector.load %arg2[%c6, %c0_21, %c0_22] : memref<9x8x8xbf16, #tpu.memory_space<vmem>>, vector<1x8x8xbf16>
    %47 = vector.shape_cast %46 : vector<1x8x8xbf16> to vector<8x8xbf16>
    %cst_23 = arith.constant dense<0.000000e+00> : vector<64x8xf32>
    %48 = tpu.matmul %45, %47, %cst_23 {dimension_numbers = #tpu.dot_dimension_numbers<[1], [0], [0], [1], [0, 0, 1, 1], [], []>} : vector<64x8xbf16>, vector<8x8xbf16>, vector<64x8xf32> -> vector<64x8xf32>
    %49 = arith.addf %42, %48 : vector<64x8xf32>
    %50 = vector.extract_strided_slice %1 {offsets = [2, 1, 0], sizes = [8, 8, 8], strides = [1, 1, 1]} : vector<10x10x8xf32> to vector<8x8x8xf32>
    %51 = vector.shape_cast %50 : vector<8x8x8xf32> to vector<64x8xf32>
    %52 = arith.truncf %51 : vector<64x8xf32> to vector<64x8xbf16>
    %c7 = arith.constant 7 : index
    %c0_24 = arith.constant 0 : index
    %c0_25 = arith.constant 0 : index
    %53 = vector.load %arg2[%c7, %c0_24, %c0_25] : memref<9x8x8xbf16, #tpu.memory_space<vmem>>, vector<1x8x8xbf16>
    %54 = vector.shape_cast %53 : vector<1x8x8xbf16> to vector<8x8xbf16>
    %cst_26 = arith.constant dense<0.000000e+00> : vector<64x8xf32>
    %55 = tpu.matmul %52, %54, %cst_26 {dimension_numbers = #tpu.dot_dimension_numbers<[1], [0], [0], [1], [0, 0, 1, 1], [], []>} : vector<64x8xbf16>, vector<8x8xbf16>, vector<64x8xf32> -> vector<64x8xf32>
    %56 = arith.addf %49, %55 : vector<64x8xf32>
    %57 = vector.extract_strided_slice %1 {offsets = [2, 2, 0], sizes = [8, 8, 8], strides = [1, 1, 1]} : vector<10x10x8xf32> to vector<8x8x8xf32>
    %58 = vector.shape_cast %57 : vector<8x8x8xf32> to vector<64x8xf32>
    %59 = arith.truncf %58 : vector<64x8xf32> to vector<64x8xbf16>
    %c8 = arith.constant 8 : index
    %c0_27 = arith.constant 0 : index
    %c0_28 = arith.constant 0 : index
    %60 = vector.load %arg2[%c8, %c0_27, %c0_28] : memref<9x8x8xbf16, #tpu.memory_space<vmem>>, vector<1x8x8xbf16>
    %61 = vector.shape_cast %60 : vector<1x8x8xbf16> to vector<8x8xbf16>
    %cst_29 = arith.constant dense<0.000000e+00> : vector<64x8xf32>
    %62 = tpu.matmul %59, %61, %cst_29 {dimension_numbers = #tpu.dot_dimension_numbers<[1], [0], [0], [1], [0, 0, 1, 1], [], []>} : vector<64x8xbf16>, vector<8x8xbf16>, vector<64x8xf32> -> vector<64x8xf32>
    %63 = arith.addf %56, %62 : vector<64x8xf32>
    %64 = vector.shape_cast %63 : vector<64x8xf32> to vector<1x64x8xf32>
    %cst_30 = arith.constant dense<0.000000e+00> : vector<1xf32>
    %65 = vector.multi_reduction <add>, %64, %cst_30 [1, 2] : vector<1x64x8xf32> to vector<1xf32>
    %66 = vector.shape_cast %65 : vector<1xf32> to vector<1x1x1xf32>
    %67 = vector.extract %66[0, 0, 0] : f32 from vector<1x1x1xf32>
    %68 = vector.broadcast %67 : f32 to vector<1x1xf32>
    %69 = arith.mulf %63, %63 : vector<64x8xf32>
    %70 = vector.shape_cast %69 : vector<64x8xf32> to vector<1x64x8xf32>
    %cst_31 = arith.constant dense<0.000000e+00> : vector<1xf32>
    %71 = vector.multi_reduction <add>, %70, %cst_31 [1, 2] : vector<1x64x8xf32> to vector<1xf32>
    %72 = vector.shape_cast %71 : vector<1xf32> to vector<1x1x1xf32>
    %73 = vector.extract %72[0, 0, 0] : f32 from vector<1x1x1xf32>
    %74 = vector.broadcast %73 : f32 to vector<1x1xf32>
    %cst_32 = arith.constant 0.001953125 : f32
    %75 = vector.broadcast %cst_32 : f32 to vector<1x1xf32>
    %76 = arith.mulf %68, %75 : vector<1x1xf32>
    %cst_33 = arith.constant 0.001953125 : f32
    %77 = vector.broadcast %cst_33 : f32 to vector<1x1xf32>
    %78 = arith.mulf %74, %77 : vector<1x1xf32>
    %79 = arith.mulf %76, %76 : vector<1x1xf32>
    %80 = arith.subf %78, %79 : vector<1x1xf32>
    %cst_34 = arith.constant 0.000000e+00 : f32
    %81 = vector.broadcast %cst_34 : f32 to vector<1x1xf32>
    %82 = arith.maximumf %80, %81 : vector<1x1xf32>
    %83 = vector.broadcast %76 : vector<1x1xf32> to vector<64x8xf32>
    %84 = arith.subf %63, %83 : vector<64x8xf32>
    %cst_35 = arith.constant 9.99999974E-6 : f32
    %85 = vector.broadcast %cst_35 : f32 to vector<1x1xf32>
    %86 = arith.addf %82, %85 : vector<1x1xf32>
    %87 = math.rsqrt %86 : vector<1x1xf32>
    %88 = vector.broadcast %87 : vector<1x1xf32> to vector<64x8xf32>
    %89 = arith.mulf %84, %88 : vector<64x8xf32>
    %c0_36 = arith.constant 0 : index
    %c0_37 = arith.constant 0 : index
    %90 = vector.load %arg3[%c0_36, %c0_37] : memref<1x8xf32, #tpu.memory_space<vmem>>, vector<1x8xf32>
    %91 = vector.broadcast %90 : vector<1x8xf32> to vector<64x8xf32>
    %92 = arith.mulf %89, %91 : vector<64x8xf32>
    %c0_38 = arith.constant 0 : index
    %c0_39 = arith.constant 0 : index
    %93 = vector.load %arg4[%c0_38, %c0_39] : memref<1x8xf32, #tpu.memory_space<vmem>>, vector<1x8xf32>
    %94 = vector.broadcast %93 : vector<1x8xf32> to vector<64x8xf32>
    %95 = arith.addf %92, %94 : vector<64x8xf32>
    %c0_40 = arith.constant 0 : index
    %c0_41 = arith.constant 0 : index
    %c0_42 = arith.constant 0 : index
    %96 = vector.load %arg5[%c0_40, %c0_41, %c0_42] : memref<1x1x8xf32, #tpu.memory_space<vmem>>, vector<1x1x8xf32>
    %97 = vector.shape_cast %96 : vector<1x1x8xf32> to vector<1x8xf32>
    %98 = vector.broadcast %97 : vector<1x8xf32> to vector<64x8xf32>
    %99 = arith.addf %95, %98 : vector<64x8xf32>
    %100 = vector.shape_cast %99 : vector<64x8xf32> to vector<8x8x8xf32>
    %c0_43 = arith.constant 0 : index
    %c0_44 = arith.constant 0 : index
    %c0_45 = arith.constant 0 : index
    %c0_46 = arith.constant 0 : index
    %101 = vector.load %arg6[%c0_43, %c0_44, %c0_45, %c0_46] : memref<1x8x8x8xf32, #tpu.memory_space<vmem>>, vector<1x8x8x8xf32>
    %102 = vector.shape_cast %101 : vector<1x8x8x8xf32> to vector<8x8x8xf32>
    %103 = vector.shape_cast %100 : vector<8x8x8xf32> to vector<1x8x8x8xf32>
    tpu.vector_store %arg6[%c0_43, %c0_44, %c0_45, %c0_46], %103 {strides = array<i32>} : memref<1x8x8x8xf32, #tpu.memory_space<vmem>>, vector<1x8x8x8xf32>,
    return
  }
  func.func @transform_0(%arg0: i32) -> (i32, i32, i32, i32) {
    %c0_i32 = arith.constant 0 : i32
    %c0_i32_0 = arith.constant 0 : i32
    %c0_i32_1 = arith.constant 0 : i32
    %c0_i32_2 = arith.constant 0 : i32
    return %arg0, %c0_i32, %c0_i32_0, %c0_i32_1 : i32, i32, i32, i32
  }
  func.func @transform_1(%arg0: i32) -> (i32, i32, i32) {
    %c0_i32 = arith.constant 0 : i32
    %c0_i32_0 = arith.constant 0 : i32
    %c0_i32_1 = arith.constant 0 : i32
    %c0_i32_2 = arith.constant 0 : i32
    return %c0_i32, %c0_i32_0, %c0_i32_1 : i32, i32, i32
  }
  func.func @transform_2(%arg0: i32) -> (i32, i32) {
    %c0_i32 = arith.constant 0 : i32
    %c0_i32_0 = arith.constant 0 : i32
    %c0_i32_1 = arith.constant 0 : i32
    return %c0_i32, %c0_i32_0 : i32, i32
  }
  func.func @transform_3(%arg0: i32) -> (i32, i32) {
    %c0_i32 = arith.constant 0 : i32
    %c0_i32_0 = arith.constant 0 : i32
    %c0_i32_1 = arith.constant 0 : i32
    return %c0_i32, %c0_i32_0 : i32, i32
  }
  func.func @transform_4(%arg0: i32) -> (i32, i32, i32) {
    %c0_i32 = arith.constant 0 : i32
    %c0_i32_0 = arith.constant 0 : i32
    %c0_i32_1 = arith.constant 0 : i32
    return %arg0, %c0_i32, %c0_i32_0 : i32, i32, i32
  }
  func.func @transform_5(%arg0: i32) -> (i32, i32, i32, i32) {
    %c0_i32 = arith.constant 0 : i32
    %c0_i32_0 = arith.constant 0 : i32
    %c0_i32_1 = arith.constant 0 : i32
    %c0_i32_2 = arith.constant 0 : i32
    return %arg0, %c0_i32, %c0_i32_0, %c0_i32_1 : i32, i32, i32, i32
  }
}

</mosaic_0001>

<llo_original>
// kernel: down_forward.6
$region0: #{down_forward.6}
  #allocation0 [shape = 'u32[]', space=smem, size = 0x4, offset = 0x4, fixed_abs, tag = 'smem constant byte address 0x4 - core index']
  #allocation1 [shape = 'u32[144,128]{1,0:T(1,128)}', space=vmem, size = 0x12000, scoped, tag = 'internal scratch']
  %s0 = inlined_call_operand.vmem [shape: f32[2,16,16,4], index: 0, kind: input, shape index: {}]
  %s1 = inlined_call_operand.vmem [shape: f32[2,8,8,4], index: 1, kind: output, shape index: {}]
  %s2 = sld [smem:[#allocation0]]
  $region37: #{down_forward.6} parent=0
    _
  %s4 = ssub.s32 1, %s2
  %s5 = scalar_select 0, %s4, %s2
  loop: start=0, step=1, limit=4
  $region2: #{down_forward.6} parent=0 // loop_pre_header
    _
  $region3: #{down_forward.6} parent=0 // loop_header
    %s7 = sphi 0, %s11
    %p8 = scmp.ge.s32.totalorder %s7, 4
    %s17 = sphi 0, %s19
    %s20 = sphi 0, %s17
    %s21 = sphi 0, %s20
    %s37 = sphi 0, %s21
    %s43 = sphi 0, %s45
    %s46 = sphi 0, %s43
    %s47 = sphi 0, %s46
    %s63 = sphi 0, %s47
  $region4: #{down_forward.6} parent=0 // loop_header_branch
    %10 = sbr.rel (%p8) target = $region8
  $region5: #{down_forward.6} parent=0 // loop_body
    %s12 = ssub.s32 %s7, 1
    %s13 = ssub.s32 %s7, 2
    %s14 = sadd.s32 %s7, 1
    %s15 = ssub.s32 %s7, %s14
    %p16 = scmp.eq.s32.totalorder %s15, 0
    %s18 = sadd.s32 %s17, 1
    %s19 = scalar_select %p16, %s17, %s18
    %p22 = pneg %p16
    %p23 = scmp.eq.s32.totalorder %s7, 1
    %p24 = por %p22, %p23
    %p25 = scmp.ne.s32.totalorder %s17, %s20
    %p26 = scmp.eq.s32.totalorder %s7, 0
    %p27 = por %p25, %p26
    %p28 = scmp.ne.s32.totalorder %s17, %s20
    %p29 = scmp.eq.s32.totalorder %s12, 1
    %p30 = por %p28, %p29
    %p31 = scmp.ne.s32.totalorder %s20, %s21
    %p32 = scmp.eq.s32.totalorder %s12, 0
    %p33 = por %p31, %p32
    %p34 = scmp.ne.s32.totalorder %s20, %s21
    %p35 = scmp.eq.s32.totalorder %s13, 1
    %p36 = por %p34, %p35
    %p38 = scmp.ne.s32.totalorder %s21, %s37
    %p39 = scmp.eq.s32.totalorder %s13, 0
    %p40 = por %p38, %p39
    %s41 = ssub.s32 %s7, %s14
    %p42 = scmp.eq.s32.totalorder %s41, 0
    %s44 = sadd.s32 %s43, 1
    %s45 = scalar_select %p42, %s43, %s44
    %p48 = pneg %p42
    %p49 = scmp.eq.s32.totalorder %s7, 1
    %p50 = por %p48, %p49
    %p51 = scmp.ne.s32.totalorder %s43, %s46
    %p52 = scmp.eq.s32.totalorder %s7, 0
    %p53 = por %p51, %p52
    %p54 = scmp.ne.s32.totalorder %s43, %s46
    %p55 = scmp.eq.s32.totalorder %s12, 1
    %p56 = por %p54, %p55
    %p57 = scmp.ne.s32.totalorder %s46, %s47
    %p58 = scmp.eq.s32.totalorder %s12, 0
    %p59 = por %p57, %p58
    %p60 = scmp.ne.s32.totalorder %s46, %s47
    %p61 = scmp.eq.s32.totalorder %s13, 1
    %p62 = por %p60, %p61
    %p64 = scmp.ne.s32.totalorder %s47, %s63
    %p65 = scmp.eq.s32.totalorder %s13, 0
    %p66 = por %p64, %p65
    %p67 = scmp.le.s32.totalorder 1, %s7
    %p68 = scmp.lt.s32.totalorder %s7, 3
    %p69 = pnand %p67, %p68
    %p70 = pneg %p69
    // Predicated region
    $region9: #{down_forward.6} parent=5 // pred_check
      _
    $region10: #{down_forward.6} parent=5 // pred_check_branch
      %72 = sbr.rel (%p69) target = $region12
    $region11: #{down_forward.6} parent=5 // pred_region
      %s73 = ssub.s32 %s7, 1
    $region12: #{down_forward.6} parent=5 // pred_fallthru
      _
    %p74 = scmp.lt.s32.totalorder %s7, 2
    // Predicated region
    $region13: #{down_forward.6} parent=5 // pred_check
      %p75 = pneg %p74
    $region14: #{down_forward.6} parent=5 // pred_check_branch
      %77 = sbr.rel (%p75) target = $region16
    $region15: #{down_forward.6} parent=5 // pred_region
      // Predicated region
      $region17: #{down_forward.6} parent=15 // pred_check
        %p78 = pneg %p27
      $region18: #{down_forward.6} parent=15 // pred_check_branch
        %80 = sbr.rel (%p78) target = $region20
      $region19: #{down_forward.6} parent=15 // pred_region
        %p81 = scmp.lt.s32.totalorder %s7, 1
        %s82 = scalar_select %p81, %s7, 1
        %s83 = smul.addr %s82, 32
        %s84 = smul.addr %s83, 8
        %s85 = scalar_lea.vmem %s0, %s84
      $region20: #{down_forward.6} parent=15 // pred_fallthru
        _
    $region16: #{down_forward.6} parent=5 // pred_fallthru
      _
    %p86 = scmp.le.s32.totalorder 1, %s7
    %p87 = scmp.lt.s32.totalorder %s7, 3
    %p88 = pnand %p86, %p87
    %p89 = pneg %p88
    // Predicated region
    $region21: #{down_forward.6} parent=5 // pred_check
      _
    $region22: #{down_forward.6} parent=5 // pred_check_branch
      %91 = sbr.rel (%p88) target = $region24
    $region23: #{down_forward.6} parent=5 // pred_region
      %s92 = ssub.s32 %s7, 1
      %p93 = scmp.lt.s32.totalorder %s12, 1
      %s94 = scalar_select %p93, %s12, 1
      %s95 = smul.addr %s94, 32
      %s96 = smul.addr %s95, 8
      %s97 = scalar_lea.vmem %s0, %s96
      %p98 = pneg %p33
      %p99 = pneg %p30
      %p100 = pneg %p59
      %p101 = pneg %p56
      %p102 = scmp.lt.s32.totalorder %s12, 1
      %s103 = scalar_select %p102, %s12, 1
      %s104 = smul.addr %s103, 8
      %s105 = smul.addr %s104, 8
      %s106 = scalar_lea.vmem %s1, %s105
      %p107 = scmp.lt.s32.totalorder %s12, 1
      %s108 = scalar_select %p107, %s12, 1
      %s109 = smul.addr %s108, 32
      %s110 = smul.addr %s109, 8
      %s111 = scalar_lea.vmem %s0, %s110
      %p112 = scmp.lt.s32.totalorder %s12, 1
      %s113 = scalar_select %p112, %s12, 1
      %s114 = smul.addr %s113, 8
      %s115 = smul.addr %s114, 8
      %s116 = scalar_lea.vmem %s1, %s115
      %v117 = vld [vmem:[%s111] sm:$0xff]
      %v118 = vld [vmem:[%s111 + $0x8] sm:$0xff]
      %v119 = vld [vmem:[%s111 + $0x10] sm:$0xff]
      %v120 = vld [vmem:[%s111 + $0x18] sm:$0xff]
      %v121 = vld [vmem:[%s111 + $0x20] sm:$0xff]
      %v122 = vld [vmem:[%s111 + $0x28] sm:$0xff]
      %v123 = vld [vmem:[%s111 + $0x30] sm:$0xff]
      %v124 = vld [vmem:[%s111 + $0x38] sm:$0xff]
      %v125 = vld [vmem:[%s111 + $0x40] sm:$0xff]
      %v126 = vld [vmem:[%s111 + $0x48] sm:$0xff]
      %v127 = vld [vmem:[%s111 + $0x50] sm:$0xff]
      %v128 = vld [vmem:[%s111 + $0x58] sm:$0xff]
      %v129 = vld [vmem:[%s111 + $0x60] sm:$0xff]
      %v130 = vld [vmem:[%s111 + $0x68] sm:$0xff]
      %v131 = vld [vmem:[%s111 + $0x70] sm:$0xff]
      %v132 = vld [vmem:[%s111 + $0x78] sm:$0xff]
      %v133 = vld [vmem:[%s111 + $0x80] sm:$0xff]
      %v134 = vld [vmem:[%s111 + $0x88] sm:$0xff]
      %v135 = vld [vmem:[%s111 + $0x90] sm:$0xff]
      %v136 = vld [vmem:[%s111 + $0x98] sm:$0xff]
      %v137 = vld [vmem:[%s111 + $0xa0] sm:$0xff]
      %v138 = vld [vmem:[%s111 + $0xa8] sm:$0xff]
      %v139 = vld [vmem:[%s111 + $0xb0] sm:$0xff]
      %v140 = vld [vmem:[%s111 + $0xb8] sm:$0xff]
      %v141 = vld [vmem:[%s111 + $0xc0] sm:$0xff]
      %v142 = vld [vmem:[%s111 + $0xc8] sm:$0xff]
      %v143 = vld [vmem:[%s111 + $0xd0] sm:$0xff]
      %v144 = vld [vmem:[%s111 + $0xd8] sm:$0xff]
      %v145 = vld [vmem:[%s111 + $0xe0] sm:$0xff]
      %v146 = vld [vmem:[%s111 + $0xe8] sm:$0xff]
      %v147 = vld [vmem:[%s111 + $0xf0] sm:$0xff]
      %v148 = vld [vmem:[%s111 + $0xf8] sm:$0xff]
      %v181 = vcombine.high %v117, %v117
      %v183 = vunpack.c.l.s4 1983009808
      %v184 = vunpack.c.0.s8 %v183
      %v185 = vlaneseq
      %v186 = vshrl.u32 %v185, 7
      %v187 = vsub.s32 %v184, %v186
      %v188 = vrot.slane %v117, %v187
      %v190 = vunpack.c.l.s4 1983009808
      %v191 = vunpack.c.0.s8 %v190
      %v192 = vlaneseq
      %v193 = vshrl.u32 %v192, 7
      %v194 = vsub.s32 %v191, %v193
      %v195 = vrot.slane %v181, %v194
      %v196 = vcombine.high %v188, %v188
      %v197 = vcombine.high %v195, %v195
      %v198 = vcombine.high %v118, %v118
      %v200 = vunpack.c.l.s4 1983009808
      %v201 = vunpack.c.0.s8 %v200
      %v202 = vlaneseq
      %v203 = vshrl.u32 %v202, 7
      %v204 = vsub.s32 %v201, %v203
      %v205 = vrot.slane %v118, %v204
      %v207 = vunpack.c.l.s4 1983009808
      %v208 = vunpack.c.0.s8 %v207
      %v209 = vlaneseq
      %v210 = vshrl.u32 %v209, 7
      %v211 = vsub.s32 %v208, %v210
      %v212 = vrot.slane %v198, %v211
      %v213 = vcombine.high %v205, %v205
      %v214 = vcombine.high %v212, %v212
      %v215 = vcombine.high %v119, %v119
      %v217 = vunpack.c.l.s4 1983009808
      %v218 = vunpack.c.0.s8 %v217
      %v219 = vlaneseq
      %v220 = vshrl.u32 %v219, 7
      %v221 = vsub.s32 %v218, %v220
      %v222 = vrot.slane %v119, %v221
      %v224 = vunpack.c.l.s4 1983009808
      %v225 = vunpack.c.0.s8 %v224
      %v226 = vlaneseq
      %v227 = vshrl.u32 %v226, 7
      %v228 = vsub.s32 %v225, %v227
      %v229 = vrot.slane %v215, %v228
      %v230 = vcombine.high %v222, %v222
      %v231 = vcombine.high %v229, %v229
      %v232 = vcombine.high %v120, %v120
      %v234 = vunpack.c.l.s4 1983009808
      %v235 = vunpack.c.0.s8 %v234
      %v236 = vlaneseq
      %v237 = vshrl.u32 %v236, 7
      %v238 = vsub.s32 %v235, %v237
      %v239 = vrot.slane %v120, %v238
      %v241 = vunpack.c.l.s4 1983009808
      %v242 = vunpack.c.0.s8 %v241
      %v243 = vlaneseq
      %v244 = vshrl.u32 %v243, 7
      %v245 = vsub.s32 %v242, %v244
      %v246 = vrot.slane %v232, %v245
      %v247 = vcombine.high %v239, %v239
      %v248 = vcombine.high %v246, %v246
      %v249 = vcombine.high %v121, %v121
      %v251 = vunpack.c.l.s4 1983009808
      %v252 = vunpack.c.0.s8 %v251
      %v253 = vlaneseq
      %v254 = vshrl.u32 %v253, 7
      %v255 = vsub.s32 %v252, %v254
      %v256 = vrot.slane %v121, %v255
      %v258 = vunpack.c.l.s4 1983009808
      %v259 = vunpack.c.0.s8 %v258
      %v260 = vlaneseq
      %v261 = vshrl.u32 %v260, 7
      %v262 = vsub.s32 %v259, %v261
      %v263 = vrot.slane %v249, %v262
      %v264 = vcombine.high %v256, %v256
      %v265 = vcombine.high %v263, %v263
      %v266 = vcombine.high %v122, %v122
      %v268 = vunpack.c.l.s4 1983009808
      %v269 = vunpack.c.0.s8 %v268
      %v270 = vlaneseq
      %v271 = vshrl.u32 %v270, 7
      %v272 = vsub.s32 %v269, %v271
      %v273 = vrot.slane %v122, %v272
      %v275 = vunpack.c.l.s4 1983009808
      %v276 = vunpack.c.0.s8 %v275
      %v277 = vlaneseq
      %v278 = vshrl.u32 %v277, 7
      %v279 = vsub.s32 %v276, %v278
      %v280 = vrot.slane %v266, %v279
      %v281 = vcombine.high %v273, %v273
      %v282 = vcombine.high %v280, %v280
      %v283 = vcombine.high %v123, %v123
      %v285 = vunpack.c.l.s4 1983009808
      %v286 = vunpack.c.0.s8 %v285
      %v287 = vlaneseq
      %v288 = vshrl.u32 %v287, 7
      %v289 = vsub.s32 %v286, %v288
      %v290 = vrot.slane %v123, %v289
      %v292 = vunpack.c.l.s4 1983009808
      %v293 = vunpack.c.0.s8 %v292
      %v294 = vlaneseq
      %v295 = vshrl.u32 %v294, 7
      %v296 = vsub.s32 %v293, %v295
      %v297 = vrot.slane %v283, %v296
      %v298 = vcombine.high %v290, %v290
      %v299 = vcombine.high %v297, %v297
      %v300 = vcombine.high %v124, %v124
      %v302 = vunpack.c.l.s4 1983009808
      %v303 = vunpack.c.0.s8 %v302
      %v304 = vlaneseq
      %v305 = vshrl.u32 %v304, 7
      %v306 = vsub.s32 %v303, %v305
      %v307 = vrot.slane %v124, %v306
      %v309 = vunpack.c.l.s4 1983009808
      %v310 = vunpack.c.0.s8 %v309
      %v311 = vlaneseq
      %v312 = vshrl.u32 %v311, 7
      %v313 = vsub.s32 %v310, %v312
      %v314 = vrot.slane %v300, %v313
      %v315 = vcombine.high %v307, %v307
      %v316 = vcombine.high %v314, %v314
      %v317 = vcombine.high %v125, %v125
      %v319 = vunpack.c.l.s4 1983009808
      %v320 = vunpack.c.0.s8 %v319
      %v321 = vlaneseq
      %v322 = vshrl.u32 %v321, 7
      %v323 = vsub.s32 %v320, %v322
      %v324 = vrot.slane %v125, %v323
      %v326 = vunpack.c.l.s4 1983009808
      %v327 = vunpack.c.0.s8 %v326
      %v328 = vlaneseq
      %v329 = vshrl.u32 %v328, 7
      %v330 = vsub.s32 %v327, %v329
      %v331 = vrot.slane %v317, %v330
      %v332 = vcombine.high %v324, %v324
      %v333 = vcombine.high %v331, %v331
      %v334 = vcombine.high %v126, %v126
      %v336 = vunpack.c.l.s4 1983009808
      %v337 = vunpack.c.0.s8 %v336
      %v338 = vlaneseq
      %v339 = vshrl.u32 %v338, 7
      %v340 = vsub.s32 %v337, %v339
      %v341 = vrot.slane %v126, %v340
      %v343 = vunpack.c.l.s4 1983009808
      %v344 = vunpack.c.0.s8 %v343
      %v345 = vlaneseq
      %v346 = vshrl.u32 %v345, 7
      %v347 = vsub.s32 %v344, %v346
      %v348 = vrot.slane %v334, %v347
      %v349 = vcombine.high %v341, %v341
      %v350 = vcombine.high %v348, %v348
      %v351 = vcombine.high %v127, %v127
      %v353 = vunpack.c.l.s4 1983009808
      %v354 = vunpack.c.0.s8 %v353
      %v355 = vlaneseq
      %v356 = vshrl.u32 %v355, 7
      %v357 = vsub.s32 %v354, %v356
      %v358 = vrot.slane %v127, %v357
      %v360 = vunpack.c.l.s4 1983009808
      %v361 = vunpack.c.0.s8 %v360
      %v362 = vlaneseq
      %v363 = vshrl.u32 %v362, 7
      %v364 = vsub.s32 %v361, %v363
      %v365 = vrot.slane %v351, %v364
      %v366 = vcombine.high %v358, %v358
      %v367 = vcombine.high %v365, %v365
      %v368 = vcombine.high %v128, %v128
      %v370 = vunpack.c.l.s4 1983009808
      %v371 = vunpack.c.0.s8 %v370
      %v372 = vlaneseq
      %v373 = vshrl.u32 %v372, 7
      %v374 = vsub.s32 %v371, %v373
      %v375 = vrot.slane %v128, %v374
      %v377 = vunpack.c.l.s4 1983009808
      %v378 = vunpack.c.0.s8 %v377
      %v379 = vlaneseq
      %v380 = vshrl.u32 %v379, 7
      %v381 = vsub.s32 %v378, %v380
      %v382 = vrot.slane %v368, %v381
      %v383 = vcombine.high %v375, %v375
      %v384 = vcombine.high %v382, %v382
      %v385 = vcombine.high %v129, %v129
      %v387 = vunpack.c.l.s4 1983009808
      %v388 = vunpack.c.0.s8 %v387
      %v389 = vlaneseq
      %v390 = vshrl.u32 %v389, 7
      %v391 = vsub.s32 %v388, %v390
      %v392 = vrot.slane %v129, %v391
      %v394 = vunpack.c.l.s4 1983009808
      %v395 = vunpack.c.0.s8 %v394
      %v396 = vlaneseq
      %v397 = vshrl.u32 %v396, 7
      %v398 = vsub.s32 %v395, %v397
      %v399 = vrot.slane %v385, %v398
      %v400 = vcombine.high %v392, %v392
      %v401 = vcombine.high %v399, %v399
      %v402 = vcombine.high %v130, %v130
      %v404 = vunpack.c.l.s4 1983009808
      %v405 = vunpack.c.0.s8 %v404
      %v406 = vlaneseq
      %v407 = vshrl.u32 %v406, 7
      %v408 = vsub.s32 %v405, %v407
      %v409 = vrot.slane %v130, %v408
      %v411 = vunpack.c.l.s4 1983009808
      %v412 = vunpack.c.0.s8 %v411
      %v413 = vlaneseq
      %v414 = vshrl.u32 %v413, 7
      %v415 = vsub.s32 %v412, %v414
      %v416 = vrot.slane %v402, %v415
      %v417 = vcombine.high %v409, %v409
      %v418 = vcombine.high %v416, %v416
      %v419 = vcombine.high %v131, %v131
      %v421 = vunpack.c.l.s4 1983009808
      %v422 = vunpack.c.0.s8 %v421
      %v423 = vlaneseq
      %v424 = vshrl.u32 %v423, 7
      %v425 = vsub.s32 %v422, %v424
      %v426 = vrot.slane %v131, %v425
      %v428 = vunpack.c.l.s4 1983009808
      %v429 = vunpack.c.0.s8 %v428
      %v430 = vlaneseq
      %v431 = vshrl.u32 %v430, 7
      %v432 = vsub.s32 %v429, %v431
      %v433 = vrot.slane %v419, %v432
      %v434 = vcombine.high %v426, %v426
      %v435 = vcombine.high %v433, %v433
      %v436 = vcombine.high %v132, %v132
      %v438 = vunpack.c.l.s4 1983009808
      %v439 = vunpack.c.0.s8 %v438
      %v440 = vlaneseq
      %v441 = vshrl.u32 %v440, 7
      %v442 = vsub.s32 %v439, %v441
      %v443 = vrot.slane %v132, %v442
      %v445 = vunpack.c.l.s4 1983009808
      %v446 = vunpack.c.0.s8 %v445
      %v447 = vlaneseq
      %v448 = vshrl.u32 %v447, 7
      %v449 = vsub.s32 %v446, %v448
      %v450 = vrot.slane %v436, %v449
      %v451 = vcombine.high %v443, %v443
      %v452 = vcombine.high %v450, %v450
      %v453 = vcombine.high %v133, %v133
      %v455 = vunpack.c.l.s4 1983009808
      %v456 = vunpack.c.0.s8 %v455
      %v457 = vlaneseq
      %v458 = vshrl.u32 %v457, 7
      %v459 = vsub.s32 %v456, %v458
      %v460 = vrot.slane %v133, %v459
      %v462 = vunpack.c.l.s4 1983009808
      %v463 = vunpack.c.0.s8 %v462
      %v464 = vlaneseq
      %v465 = vshrl.u32 %v464, 7
      %v466 = vsub.s32 %v463, %v465
      %v467 = vrot.slane %v453, %v466
      %v468 = vcombine.high %v460, %v460
      %v469 = vcombine.high %v467, %v467
      %v470 = vcombine.high %v134, %v134
      %v472 = vunpack.c.l.s4 1983009808
      %v473 = vunpack.c.0.s8 %v472
      %v474 = vlaneseq
      %v475 = vshrl.u32 %v474, 7
      %v476 = vsub.s32 %v473, %v475
      %v477 = vrot.slane %v134, %v476
      %v479 = vunpack.c.l.s4 1983009808
      %v480 = vunpack.c.0.s8 %v479
      %v481 = vlaneseq
      %v482 = vshrl.u32 %v481, 7
      %v483 = vsub.s32 %v480, %v482
      %v484 = vrot.slane %v470, %v483
      %v485 = vcombine.high %v477, %v477
      %v486 = vcombine.high %v484, %v484
      %v487 = vcombine.high %v135, %v135
      %v489 = vunpack.c.l.s4 1983009808
      %v490 = vunpack.c.0.s8 %v489
      %v491 = vlaneseq
      %v492 = vshrl.u32 %v491, 7
      %v493 = vsub.s32 %v490, %v492
      %v494 = vrot.slane %v135, %v493
      %v496 = vunpack.c.l.s4 1983009808
      %v497 = vunpack.c.0.s8 %v496
      %v498 = vlaneseq
      %v499 = vshrl.u32 %v498, 7
      %v500 = vsub.s32 %v497, %v499
      %v501 = vrot.slane %v487, %v500
      %v502 = vcombine.high %v494, %v494
      %v503 = vcombine.high %v501, %v501
      %v504 = vcombine.high %v136, %v136
      %v506 = vunpack.c.l.s4 1983009808
      %v507 = vunpack.c.0.s8 %v506
      %v508 = vlaneseq
      %v509 = vshrl.u32 %v508, 7
      %v510 = vsub.s32 %v507, %v509
      %v511 = vrot.slane %v136, %v510
      %v513 = vunpack.c.l.s4 1983009808
      %v514 = vunpack.c.0.s8 %v513
      %v515 = vlaneseq
      %v516 = vshrl.u32 %v515, 7
      %v517 = vsub.s32 %v514, %v516
      %v518 = vrot.slane %v504, %v517
      %v519 = vcombine.high %v511, %v511
      %v520 = vcombine.high %v518, %v518
      %v521 = vcombine.high %v137, %v137
      %v523 = vunpack.c.l.s4 1983009808
      %v524 = vunpack.c.0.s8 %v523
      %v525 = vlaneseq
      %v526 = vshrl.u32 %v525, 7
      %v527 = vsub.s32 %v524, %v526
      %v528 = vrot.slane %v137, %v527
      %v530 = vunpack.c.l.s4 1983009808
      %v531 = vunpack.c.0.s8 %v530
      %v532 = vlaneseq
      %v533 = vshrl.u32 %v532, 7
      %v534 = vsub.s32 %v531, %v533
      %v535 = vrot.slane %v521, %v534
      %v536 = vcombine.high %v528, %v528
      %v537 = vcombine.high %v535, %v535
      %v538 = vcombine.high %v138, %v138
      %v540 = vunpack.c.l.s4 1983009808
      %v541 = vunpack.c.0.s8 %v540
      %v542 = vlaneseq
      %v543 = vshrl.u32 %v542, 7
      %v544 = vsub.s32 %v541, %v543
      %v545 = vrot.slane %v138, %v544
      %v547 = vunpack.c.l.s4 1983009808
      %v548 = vunpack.c.0.s8 %v547
      %v549 = vlaneseq
      %v550 = vshrl.u32 %v549, 7
      %v551 = vsub.s32 %v548, %v550
      %v552 = vrot.slane %v538, %v551
      %v553 = vcombine.high %v545, %v545
      %v554 = vcombine.high %v552, %v552
      %v555 = vcombine.high %v139, %v139
      %v557 = vunpack.c.l.s4 1983009808
      %v558 = vunpack.c.0.s8 %v557
      %v559 = vlaneseq
      %v560 = vshrl.u32 %v559, 7
      %v561 = vsub.s32 %v558, %v560
      %v562 = vrot.slane %v139, %v561
      %v564 = vunpack.c.l.s4 1983009808
      %v565 = vunpack.c.0.s8 %v564
      %v566 = vlaneseq
      %v567 = vshrl.u32 %v566, 7
      %v568 = vsub.s32 %v565, %v567
      %v569 = vrot.slane %v555, %v568
      %v570 = vcombine.high %v562, %v562
      %v571 = vcombine.high %v569, %v569
      %v572 = vcombine.high %v140, %v140
      %v574 = vunpack.c.l.s4 1983009808
      %v575 = vunpack.c.0.s8 %v574
      %v576 = vlaneseq
      %v577 = vshrl.u32 %v576, 7
      %v578 = vsub.s32 %v575, %v577
      %v579 = vrot.slane %v140, %v578
      %v581 = vunpack.c.l.s4 1983009808
      %v582 = vunpack.c.0.s8 %v581
      %v583 = vlaneseq
      %v584 = vshrl.u32 %v583, 7
      %v585 = vsub.s32 %v582, %v584
      %v586 = vrot.slane %v572, %v585
      %v587 = vcombine.high %v579, %v579
      %v588 = vcombine.high %v586, %v586
      %v589 = vcombine.high %v141, %v141
      %v591 = vunpack.c.l.s4 1983009808
      %v592 = vunpack.c.0.s8 %v591
      %v593 = vlaneseq
      %v594 = vshrl.u32 %v593, 7
      %v595 = vsub.s32 %v592, %v594
      %v596 = vrot.slane %v141, %v595
      %v598 = vunpack.c.l.s4 1983009808
      %v599 = vunpack.c.0.s8 %v598
      %v600 = vlaneseq
      %v601 = vshrl.u32 %v600, 7
      %v602 = vsub.s32 %v599, %v601
      %v603 = vrot.slane %v589, %v602
      %v604 = vcombine.high %v596, %v596
      %v605 = vcombine.high %v603, %v603
      %v606 = vcombine.high %v142, %v142
      %v608 = vunpack.c.l.s4 1983009808
      %v609 = vunpack.c.0.s8 %v608
      %v610 = vlaneseq
      %v611 = vshrl.u32 %v610, 7
      %v612 = vsub.s32 %v609, %v611
      %v613 = vrot.slane %v142, %v612
      %v615 = vunpack.c.l.s4 1983009808
      %v616 = vunpack.c.0.s8 %v615
      %v617 = vlaneseq
      %v618 = vshrl.u32 %v617, 7
      %v619 = vsub.s32 %v616, %v618
      %v620 = vrot.slane %v606, %v619
      %v621 = vcombine.high %v613, %v613
      %v622 = vcombine.high %v620, %v620
      %v623 = vcombine.high %v143, %v143
      %v625 = vunpack.c.l.s4 1983009808
      %v626 = vunpack.c.0.s8 %v625
      %v627 = vlaneseq
      %v628 = vshrl.u32 %v627, 7
      %v629 = vsub.s32 %v626, %v628
      %v630 = vrot.slane %v143, %v629
      %v632 = vunpack.c.l.s4 1983009808
      %v633 = vunpack.c.0.s8 %v632
      %v634 = vlaneseq
      %v635 = vshrl.u32 %v634, 7
      %v636 = vsub.s32 %v633, %v635
      %v637 = vrot.slane %v623, %v636
      %v638 = vcombine.high %v630, %v630
      %v639 = vcombine.high %v637, %v637
      %v640 = vcombine.high %v144, %v144
      %v642 = vunpack.c.l.s4 1983009808
      %v643 = vunpack.c.0.s8 %v642
      %v644 = vlaneseq
      %v645 = vshrl.u32 %v644, 7
      %v646 = vsub.s32 %v643, %v645
      %v647 = vrot.slane %v144, %v646
      %v649 = vunpack.c.l.s4 1983009808
      %v650 = vunpack.c.0.s8 %v649
      %v651 = vlaneseq
      %v652 = vshrl.u32 %v651, 7
      %v653 = vsub.s32 %v650, %v652
      %v654 = vrot.slane %v640, %v653
      %v655 = vcombine.high %v647, %v647
      %v656 = vcombine.high %v654, %v654
      %v657 = vcombine.high %v145, %v145
      %v659 = vunpack.c.l.s4 1983009808
      %v660 = vunpack.c.0.s8 %v659
      %v661 = vlaneseq
      %v662 = vshrl.u32 %v661, 7
      %v663 = vsub.s32 %v660, %v662
      %v664 = vrot.slane %v145, %v663
      %v666 = vunpack.c.l.s4 1983009808
      %v667 = vunpack.c.0.s8 %v666
      %v668 = vlaneseq
      %v669 = vshrl.u32 %v668, 7
      %v670 = vsub.s32 %v667, %v669
      %v671 = vrot.slane %v657, %v670
      %v672 = vcombine.high %v664, %v664
      %v673 = vcombine.high %v671, %v671
      %v674 = vcombine.high %v146, %v146
      %v676 = vunpack.c.l.s4 1983009808
      %v677 = vunpack.c.0.s8 %v676
      %v678 = vlaneseq
      %v679 = vshrl.u32 %v678, 7
      %v680 = vsub.s32 %v677, %v679
      %v681 = vrot.slane %v146, %v680
      %v683 = vunpack.c.l.s4 1983009808
      %v684 = vunpack.c.0.s8 %v683
      %v685 = vlaneseq
      %v686 = vshrl.u32 %v685, 7
      %v687 = vsub.s32 %v684, %v686
      %v688 = vrot.slane %v674, %v687
      %v689 = vcombine.high %v681, %v681
      %v690 = vcombine.high %v688, %v688
      %v691 = vcombine.high %v147, %v147
      %v693 = vunpack.c.l.s4 1983009808
      %v694 = vunpack.c.0.s8 %v693
      %v695 = vlaneseq
      %v696 = vshrl.u32 %v695, 7
      %v697 = vsub.s32 %v694, %v696
      %v698 = vrot.slane %v147, %v697
      %v700 = vunpack.c.l.s4 1983009808
      %v701 = vunpack.c.0.s8 %v700
      %v702 = vlaneseq
      %v703 = vshrl.u32 %v702, 7
      %v704 = vsub.s32 %v701, %v703
      %v705 = vrot.slane %v691, %v704
      %v706 = vcombine.high %v698, %v698
      %v707 = vcombine.high %v705, %v705
      %v708 = vcombine.high %v148, %v148
      %v710 = vunpack.c.l.s4 1983009808
      %v711 = vunpack.c.0.s8 %v710
      %v712 = vlaneseq
      %v713 = vshrl.u32 %v712, 7
      %v714 = vsub.s32 %v711, %v713
      %v715 = vrot.slane %v148, %v714
      %v717 = vunpack.c.l.s4 1983009808
      %v718 = vunpack.c.0.s8 %v717
      %v719 = vlaneseq
      %v720 = vshrl.u32 %v719, 7
      %v721 = vsub.s32 %v718, %v720
      %v722 = vrot.slane %v708, %v721
      %v723 = vcombine.high %v715, %v715
      %v724 = vcombine.high %v722, %v722
      %v853 = vrot.slane %v188, 7
      %v854 = vrot.slane %v853, 2
      %v855 = vrot.slane %v196, 7
      %v856 = vrot.slane %v855, 2
      %v857 = vrot.slane %v195, 7
      %v858 = vrot.slane %v857, 2
      %v859 = vrot.slane %v197, 7
      %v860 = vrot.slane %v859, 2
      %v861 = vrot.slane %v205, 7
      %v862 = vrot.slane %v861, 2
      %v863 = vrot.slane %v213, 7
      %v864 = vrot.slane %v863, 2
      %v865 = vrot.slane %v212, 7
      %v866 = vrot.slane %v865, 2
      %v867 = vrot.slane %v214, 7
      %v868 = vrot.slane %v867, 2
      %v869 = vrot.slane %v222, 7
      %v870 = vrot.slane %v869, 2
      %v871 = vrot.slane %v230, 7
      %v872 = vrot.slane %v871, 2
      %v873 = vrot.slane %v229, 7
      %v874 = vrot.slane %v873, 2
      %v875 = vrot.slane %v231, 7
      %v876 = vrot.slane %v875, 2
      %v877 = vrot.slane %v239, 7
      %v878 = vrot.slane %v877, 2
      %v879 = vrot.slane %v247, 7
      %v880 = vrot.slane %v879, 2
      %v881 = vrot.slane %v246, 7
      %v882 = vrot.slane %v881, 2
      %v883 = vrot.slane %v248, 7
      %v884 = vrot.slane %v883, 2
      %v885 = vrot.slane %v256, 7
      %v886 = vrot.slane %v885, 2
      %v887 = vrot.slane %v264, 7
      %v888 = vrot.slane %v887, 2
      %v889 = vrot.slane %v263, 7
      %v890 = vrot.slane %v889, 2
      %v891 = vrot.slane %v265, 7
      %v892 = vrot.slane %v891, 2
      %v893 = vrot.slane %v273, 7
      %v894 = vrot.slane %v893, 2
      %v895 = vrot.slane %v281, 7
      %v896 = vrot.slane %v895, 2
      %v897 = vrot.slane %v280, 7
      %v898 = vrot.slane %v897, 2
      %v899 = vrot.slane %v282, 7
      %v900 = vrot.slane %v899, 2
      %v901 = vrot.slane %v290, 7
      %v902 = vrot.slane %v901, 2
      %v903 = vrot.slane %v298, 7
      %v904 = vrot.slane %v903, 2
      %v905 = vrot.slane %v297, 7
      %v906 = vrot.slane %v905, 2
      %v907 = vrot.slane %v299, 7
      %v908 = vrot.slane %v907, 2
      %v909 = vrot.slane %v307, 7
      %v910 = vrot.slane %v909, 2
      %v911 = vrot.slane %v315, 7
      %v912 = vrot.slane %v911, 2
      %v913 = vrot.slane %v314, 7
      %v914 = vrot.slane %v913, 2
      %v915 = vrot.slane %v316, 7
      %v916 = vrot.slane %v915, 2
      %v917 = vrot.slane %v324, 7
      %v918 = vrot.slane %v917, 2
      %v919 = vrot.slane %v332, 7
      %v920 = vrot.slane %v919, 2
      %v921 = vrot.slane %v331, 7
      %v922 = vrot.slane %v921, 2
      %v923 = vrot.slane %v333, 7
      %v924 = vrot.slane %v923, 2
      %v925 = vrot.slane %v341, 7
      %v926 = vrot.slane %v925, 2
      %v927 = vrot.slane %v349, 7
      %v928 = vrot.slane %v927, 2
      %v929 = vrot.slane %v348, 7
      %v930 = vrot.slane %v929, 2
      %v931 = vrot.slane %v350, 7
      %v932 = vrot.slane %v931, 2
      %v933 = vrot.slane %v358, 7
      %v934 = vrot.slane %v933, 2
      %v935 = vrot.slane %v366, 7
      %v936 = vrot.slane %v935, 2
      %v937 = vrot.slane %v365, 7
      %v938 = vrot.slane %v937, 2
      %v939 = vrot.slane %v367, 7
      %v940 = vrot.slane %v939, 2
      %v941 = vrot.slane %v375, 7
      %v942 = vrot.slane %v941, 2
      %v943 = vrot.slane %v383, 7
      %v944 = vrot.slane %v943, 2
      %v945 = vrot.slane %v382, 7
      %v946 = vrot.slane %v945, 2
      %v947 = vrot.slane %v384, 7
      %v948 = vrot.slane %v947, 2
      %v949 = vrot.slane %v392, 7
      %v950 = vrot.slane %v949, 2
      %v951 = vrot.slane %v400, 7
      %v952 = vrot.slane %v951, 2
      %v953 = vrot.slane %v399, 7
      %v954 = vrot.slane %v953, 2
      %v955 = vrot.slane %v401, 7
      %v956 = vrot.slane %v955, 2
      %v957 = vrot.slane %v409, 7
      %v958 = vrot.slane %v957, 2
      %v959 = vrot.slane %v417, 7
      %v960 = vrot.slane %v959, 2
      %v961 = vrot.slane %v416, 7
      %v962 = vrot.slane %v961, 2
      %v963 = vrot.slane %v418, 7
      %v964 = vrot.slane %v963, 2
      %v965 = vrot.slane %v426, 7
      %v966 = vrot.slane %v965, 2
      %v967 = vrot.slane %v434, 7
      %v968 = vrot.slane %v967, 2
      %v969 = vrot.slane %v433, 7
      %v970 = vrot.slane %v969, 2
      %v971 = vrot.slane %v435, 7
      %v972 = vrot.slane %v971, 2
      %v973 = vrot.slane %v443, 7
      %v974 = vrot.slane %v973, 2
      %v975 = vrot.slane %v451, 7
      %v976 = vrot.slane %v975, 2
      %v977 = vrot.slane %v450, 7
      %v978 = vrot.slane %v977, 2
      %v979 = vrot.slane %v452, 7
      %v980 = vrot.slane %v979, 2
      %v981 = vrot.slane %v460, 7
      %v982 = vrot.slane %v981, 2
      %v983 = vrot.slane %v468, 7
      %v984 = vrot.slane %v983, 2
      %v985 = vrot.slane %v467, 7
      %v986 = vrot.slane %v985, 2
      %v987 = vrot.slane %v469, 7
      %v988 = vrot.slane %v987, 2
      %v989 = vrot.slane %v477, 7
      %v990 = vrot.slane %v989, 2
      %v991 = vrot.slane %v485, 7
      %v992 = vrot.slane %v991, 2
      %v993 = vrot.slane %v484, 7
      %v994 = vrot.slane %v993, 2
      %v995 = vrot.slane %v486, 7
      %v996 = vrot.slane %v995, 2
      %v997 = vrot.slane %v494, 7
      %v998 = vrot.slane %v997, 2
      %v999 = vrot.slane %v502, 7
      %v1000 = vrot.slane %v999, 2
      %v1001 = vrot.slane %v501, 7
      %v1002 = vrot.slane %v1001, 2
      %v1003 = vrot.slane %v503, 7
      %v1004 = vrot.slane %v1003, 2
      %v1005 = vrot.slane %v511, 7
      %v1006 = vrot.slane %v1005, 2
      %v1007 = vrot.slane %v519, 7
      %v1008 = vrot.slane %v1007, 2
      %v1009 = vrot.slane %v518, 7
      %v1010 = vrot.slane %v1009, 2
      %v1011 = vrot.slane %v520, 7
      %v1012 = vrot.slane %v1011, 2
      %v1013 = vrot.slane %v528, 7
      %v1014 = vrot.slane %v1013, 2
      %v1015 = vrot.slane %v536, 7
      %v1016 = vrot.slane %v1015, 2
      %v1017 = vrot.slane %v535, 7
      %v1018 = vrot.slane %v1017, 2
      %v1019 = vrot.slane %v537, 7
      %v1020 = vrot.slane %v1019, 2
      %v1021 = vrot.slane %v545, 7
      %v1022 = vrot.slane %v1021, 2
      %v1023 = vrot.slane %v553, 7
      %v1024 = vrot.slane %v1023, 2
      %v1025 = vrot.slane %v552, 7
      %v1026 = vrot.slane %v1025, 2
      %v1027 = vrot.slane %v554, 7
      %v1028 = vrot.slane %v1027, 2
      %v1029 = vrot.slane %v562, 7
      %v1030 = vrot.slane %v1029, 2
      %v1031 = vrot.slane %v570, 7
      %v1032 = vrot.slane %v1031, 2
      %v1033 = vrot.slane %v569, 7
      %v1034 = vrot.slane %v1033, 2
      %v1035 = vrot.slane %v571, 7
      %v1036 = vrot.slane %v1035, 2
      %v1037 = vrot.slane %v579, 7
      %v1038 = vrot.slane %v1037, 2
      %v1039 = vrot.slane %v587, 7
      %v1040 = vrot.slane %v1039, 2
      %v1041 = vrot.slane %v586, 7
      %v1042 = vrot.slane %v1041, 2
      %v1043 = vrot.slane %v588, 7
      %v1044 = vrot.slane %v1043, 2
      %v1045 = vrot.slane %v596, 7
      %v1046 = vrot.slane %v1045, 2
      %v1047 = vrot.slane %v604, 7
      %v1048 = vrot.slane %v1047, 2
      %v1049 = vrot.slane %v603, 7
      %v1050 = vrot.slane %v1049, 2
      %v1051 = vrot.slane %v605, 7
      %v1052 = vrot.slane %v1051, 2
      %v1053 = vrot.slane %v613, 7
      %v1054 = vrot.slane %v1053, 2
      %v1055 = vrot.slane %v621, 7
      %v1056 = vrot.slane %v1055, 2
      %v1057 = vrot.slane %v620, 7
      %v1058 = vrot.slane %v1057, 2
      %v1059 = vrot.slane %v622, 7
      %v1060 = vrot.slane %v1059, 2
      %v1061 = vrot.slane %v630, 7
      %v1062 = vrot.slane %v1061, 2
      %v1063 = vrot.slane %v638, 7
      %v1064 = vrot.slane %v1063, 2
      %v1065 = vrot.slane %v637, 7
      %v1066 = vrot.slane %v1065, 2
      %v1067 = vrot.slane %v639, 7
      %v1068 = vrot.slane %v1067, 2
      %v1069 = vrot.slane %v647, 7
      %v1070 = vrot.slane %v1069, 2
      %v1071 = vrot.slane %v655, 7
      %v1072 = vrot.slane %v1071, 2
      %v1073 = vrot.slane %v654, 7
      %v1074 = vrot.slane %v1073, 2
      %v1075 = vrot.slane %v656, 7
      %v1076 = vrot.slane %v1075, 2
      %v1077 = vrot.slane %v664, 7
      %v1078 = vrot.slane %v1077, 2
      %v1079 = vrot.slane %v672, 7
      %v1080 = vrot.slane %v1079, 2
      %v1081 = vrot.slane %v671, 7
      %v1082 = vrot.slane %v1081, 2
      %v1083 = vrot.slane %v673, 7
      %v1084 = vrot.slane %v1083, 2
      %v1085 = vrot.slane %v681, 7
      %v1086 = vrot.slane %v1085, 2
      %v1087 = vrot.slane %v689, 7
      %v1088 = vrot.slane %v1087, 2
      %v1089 = vrot.slane %v688, 7
      %v1090 = vrot.slane %v1089, 2
      %v1091 = vrot.slane %v690, 7
      %v1092 = vrot.slane %v1091, 2
      %v1093 = vrot.slane %v698, 7
      %v1094 = vrot.slane %v1093, 2
      %v1095 = vrot.slane %v706, 7
      %v1096 = vrot.slane %v1095, 2
      %v1097 = vrot.slane %v705, 7
      %v1098 = vrot.slane %v1097, 2
      %v1099 = vrot.slane %v707, 7
      %v1100 = vrot.slane %v1099, 2
      %v1101 = vrot.slane %v715, 7
      %v1102 = vrot.slane %v1101, 2
      %v1103 = vrot.slane %v723, 7
      %v1104 = vrot.slane %v1103, 2
      %v1105 = vrot.slane %v722, 7
      %v1106 = vrot.slane %v1105, 2
      %v1107 = vrot.slane %v724, 7
      %v1108 = vrot.slane %v1107, 2
      %v1237 = vmax.f32 %v188, %v854
      %v1238 = vmax.f32 %v196, %v856
      %v1239 = vmax.f32 %v195, %v858
      %v1240 = vmax.f32 %v197, %v860
      %v1241 = vmax.f32 %v205, %v862
      %v1242 = vmax.f32 %v213, %v864
      %v1243 = vmax.f32 %v212, %v866
      %v1244 = vmax.f32 %v214, %v868
      %v1245 = vmax.f32 %v222, %v870
      %v1246 = vmax.f32 %v230, %v872
      %v1247 = vmax.f32 %v229, %v874
      %v1248 = vmax.f32 %v231, %v876
      %v1249 = vmax.f32 %v239, %v878
      %v1250 = vmax.f32 %v247, %v880
      %v1251 = vmax.f32 %v246, %v882
      %v1252 = vmax.f32 %v248, %v884
      %v1253 = vmax.f32 %v256, %v886
      %v1254 = vmax.f32 %v264, %v888
      %v1255 = vmax.f32 %v263, %v890
      %v1256 = vmax.f32 %v265, %v892
      %v1257 = vmax.f32 %v273, %v894
      %v1258 = vmax.f32 %v281, %v896
      %v1259 = vmax.f32 %v280, %v898
      %v1260 = vmax.f32 %v282, %v900
      %v1261 = vmax.f32 %v290, %v902
      %v1262 = vmax.f32 %v298, %v904
      %v1263 = vmax.f32 %v297, %v906
      %v1264 = vmax.f32 %v299, %v908
      %v1265 = vmax.f32 %v307, %v910
      %v1266 = vmax.f32 %v315, %v912
      %v1267 = vmax.f32 %v314, %v914
      %v1268 = vmax.f32 %v316, %v916
      %v1269 = vmax.f32 %v324, %v918
      %v1270 = vmax.f32 %v332, %v920
      %v1271 = vmax.f32 %v331, %v922
      %v1272 = vmax.f32 %v333, %v924
      %v1273 = vmax.f32 %v341, %v926
      %v1274 = vmax.f32 %v349, %v928
      %v1275 = vmax.f32 %v348, %v930
      %v1276 = vmax.f32 %v350, %v932
      %v1277 = vmax.f32 %v358, %v934
      %v1278 = vmax.f32 %v366, %v936
      %v1279 = vmax.f32 %v365, %v938
      %v1280 = vmax.f32 %v367, %v940
      %v1281 = vmax.f32 %v375, %v942
      %v1282 = vmax.f32 %v383, %v944
      %v1283 = vmax.f32 %v382, %v946
      %v1284 = vmax.f32 %v384, %v948
      %v1285 = vmax.f32 %v392, %v950
      %v1286 = vmax.f32 %v400, %v952
      %v1287 = vmax.f32 %v399, %v954
      %v1288 = vmax.f32 %v401, %v956
      %v1289 = vmax.f32 %v409, %v958
      %v1290 = vmax.f32 %v417, %v960
      %v1291 = vmax.f32 %v416, %v962
      %v1292 = vmax.f32 %v418, %v964
      %v1293 = vmax.f32 %v426, %v966
      %v1294 = vmax.f32 %v434, %v968
      %v1295 = vmax.f32 %v433, %v970
      %v1296 = vmax.f32 %v435, %v972
      %v1297 = vmax.f32 %v443, %v974
      %v1298 = vmax.f32 %v451, %v976
      %v1299 = vmax.f32 %v450, %v978
      %v1300 = vmax.f32 %v452, %v980
      %v1301 = vmax.f32 %v460, %v982
      %v1302 = vmax.f32 %v468, %v984
      %v1303 = vmax.f32 %v467, %v986
      %v1304 = vmax.f32 %v469, %v988
      %v1305 = vmax.f32 %v477, %v990
      %v1306 = vmax.f32 %v485, %v992
      %v1307 = vmax.f32 %v484, %v994
      %v1308 = vmax.f32 %v486, %v996
      %v1309 = vmax.f32 %v494, %v998
      %v1310 = vmax.f32 %v502, %v1000
      %v1311 = vmax.f32 %v501, %v1002
      %v1312 = vmax.f32 %v503, %v1004
      %v1313 = vmax.f32 %v511, %v1006
      %v1314 = vmax.f32 %v519, %v1008
      %v1315 = vmax.f32 %v518, %v1010
      %v1316 = vmax.f32 %v520, %v1012
      %v1317 = vmax.f32 %v528, %v1014
      %v1318 = vmax.f32 %v536, %v1016
      %v1319 = vmax.f32 %v535, %v1018
      %v1320 = vmax.f32 %v537, %v1020
      %v1321 = vmax.f32 %v545, %v1022
      %v1322 = vmax.f32 %v553, %v1024
      %v1323 = vmax.f32 %v552, %v1026
      %v1324 = vmax.f32 %v554, %v1028
      %v1325 = vmax.f32 %v562, %v1030
      %v1326 = vmax.f32 %v570, %v1032
      %v1327 = vmax.f32 %v569, %v1034
      %v1328 = vmax.f32 %v571, %v1036
      %v1329 = vmax.f32 %v579, %v1038
      %v1330 = vmax.f32 %v587, %v1040
      %v1331 = vmax.f32 %v586, %v1042
      %v1332 = vmax.f32 %v588, %v1044
      %v1333 = vmax.f32 %v596, %v1046
      %v1334 = vmax.f32 %v604, %v1048
      %v1335 = vmax.f32 %v603, %v1050
      %v1336 = vmax.f32 %v605, %v1052
      %v1337 = vmax.f32 %v613, %v1054
      %v1338 = vmax.f32 %v621, %v1056
      %v1339 = vmax.f32 %v620, %v1058
      %v1340 = vmax.f32 %v622, %v1060
      %v1341 = vmax.f32 %v630, %v1062
      %v1342 = vmax.f32 %v638, %v1064
      %v1343 = vmax.f32 %v637, %v1066
      %v1344 = vmax.f32 %v639, %v1068
      %v1345 = vmax.f32 %v647, %v1070
      %v1346 = vmax.f32 %v655, %v1072
      %v1347 = vmax.f32 %v654, %v1074
      %v1348 = vmax.f32 %v656, %v1076
      %v1349 = vmax.f32 %v664, %v1078
      %v1350 = vmax.f32 %v672, %v1080
      %v1351 = vmax.f32 %v671, %v1082
      %v1352 = vmax.f32 %v673, %v1084
      %v1353 = vmax.f32 %v681, %v1086
      %v1354 = vmax.f32 %v689, %v1088
      %v1355 = vmax.f32 %v688, %v1090
      %v1356 = vmax.f32 %v690, %v1092
      %v1357 = vmax.f32 %v698, %v1094
      %v1358 = vmax.f32 %v706, %v1096
      %v1359 = vmax.f32 %v705, %v1098
      %v1360 = vmax.f32 %v707, %v1100
      %v1361 = vmax.f32 %v715, %v1102
      %v1362 = vmax.f32 %v723, %v1104
      %v1363 = vmax.f32 %v722, %v1106
      %v1364 = vmax.f32 %v724, %v1108
      %v1365 = vmax.f32 %v1237, %v1245
      %v1366 = vmax.f32 %v1238, %v1246
      %v1367 = vmax.f32 %v1239, %v1247
      %v1368 = vmax.f32 %v1240, %v1248
      %v1369 = vmax.f32 %v1241, %v1249
      %v1370 = vmax.f32 %v1242, %v1250
      %v1371 = vmax.f32 %v1243, %v1251
      %v1372 = vmax.f32 %v1244, %v1252
      %v1373 = vmax.f32 %v1253, %v1261
      %v1374 = vmax.f32 %v1254, %v1262
      %v1375 = vmax.f32 %v1255, %v1263
      %v1376 = vmax.f32 %v1256, %v1264
      %v1377 = vmax.f32 %v1257, %v1265
      %v1378 = vmax.f32 %v1258, %v1266
      %v1379 = vmax.f32 %v1259, %v1267
      %v1380 = vmax.f32 %v1260, %v1268
      %v1381 = vmax.f32 %v1269, %v1277
      %v1382 = vmax.f32 %v1270, %v1278
      %v1383 = vmax.f32 %v1271, %v1279
      %v1384 = vmax.f32 %v1272, %v1280
      %v1385 = vmax.f32 %v1273, %v1281
      %v1386 = vmax.f32 %v1274, %v1282
      %v1387 = vmax.f32 %v1275, %v1283
      %v1388 = vmax.f32 %v1276, %v1284
      %v1389 = vmax.f32 %v1285, %v1293
      %v1390 = vmax.f32 %v1286, %v1294
      %v1391 = vmax.f32 %v1287, %v1295
      %v1392 = vmax.f32 %v1288, %v1296
      %v1393 = vmax.f32 %v1289, %v1297
      %v1394 = vmax.f32 %v1290, %v1298
      %v1395 = vmax.f32 %v1291, %v1299
      %v1396 = vmax.f32 %v1292, %v1300
      %v1397 = vmax.f32 %v1301, %v1309
      %v1398 = vmax.f32 %v1302, %v1310
      %v1399 = vmax.f32 %v1303, %v1311
      %v1400 = vmax.f32 %v1304, %v1312
      %v1401 = vmax.f32 %v1305, %v1313
      %v1402 = vmax.f32 %v1306, %v1314
      %v1403 = vmax.f32 %v1307, %v1315
      %v1404 = vmax.f32 %v1308, %v1316
      %v1405 = vmax.f32 %v1317, %v1325
      %v1406 = vmax.f32 %v1318, %v1326
      %v1407 = vmax.f32 %v1319, %v1327
      %v1408 = vmax.f32 %v1320, %v1328
      %v1409 = vmax.f32 %v1321, %v1329
      %v1410 = vmax.f32 %v1322, %v1330
      %v1411 = vmax.f32 %v1323, %v1331
      %v1412 = vmax.f32 %v1324, %v1332
      %v1413 = vmax.f32 %v1333, %v1341
      %v1414 = vmax.f32 %v1334, %v1342
      %v1415 = vmax.f32 %v1335, %v1343
      %v1416 = vmax.f32 %v1336, %v1344
      %v1417 = vmax.f32 %v1337, %v1345
      %v1418 = vmax.f32 %v1338, %v1346
      %v1419 = vmax.f32 %v1339, %v1347
      %v1420 = vmax.f32 %v1340, %v1348
      %v1421 = vmax.f32 %v1349, %v1357
      %v1422 = vmax.f32 %v1350, %v1358
      %v1423 = vmax.f32 %v1351, %v1359
      %v1424 = vmax.f32 %v1352, %v1360
      %v1425 = vmax.f32 %v1353, %v1361
      %v1426 = vmax.f32 %v1354, %v1362
      %v1427 = vmax.f32 %v1355, %v1363
      %v1428 = vmax.f32 %v1356, %v1364
      %v1493 = vlaneseq
      %v1494 = vshrl.u32 %v1493, 7
      %v1495 = vsub.s32 0, %v1494
      %v1496 = vrot.slane %v1365, %v1495
      %v1497 = vlaneseq
      %v1498 = vshrl.u32 %v1497, 7
      %v1499 = vsub.s32 0, %v1498
      %v1500 = vrot.slane %v1366, %v1499
      %v1501 = vlaneseq
      %v1502 = vshrl.u32 %v1501, 7
      %v1503 = vsub.s32 0, %v1502
      %v1504 = vrot.slane %v1367, %v1503
      %v1505 = vlaneseq
      %v1506 = vshrl.u32 %v1505, 7
      %v1507 = vsub.s32 0, %v1506
      %v1508 = vrot.slane %v1368, %v1507
      %v1509 = vlaneseq
      %v1510 = vshrl.u32 %v1509, 7
      %v1511 = vsub.s32 0, %v1510
      %v1512 = vrot.slane %v1369, %v1511
      %v1513 = vlaneseq
      %v1514 = vshrl.u32 %v1513, 7
      %v1515 = vsub.s32 0, %v1514
      %v1516 = vrot.slane %v1370, %v1515
      %v1517 = vlaneseq
      %v1518 = vshrl.u32 %v1517, 7
      %v1519 = vsub.s32 0, %v1518
      %v1520 = vrot.slane %v1371, %v1519
      %v1521 = vlaneseq
      %v1522 = vshrl.u32 %v1521, 7
      %v1523 = vsub.s32 0, %v1522
      %v1524 = vrot.slane %v1372, %v1523
      %v1525 = vlaneseq
      %v1526 = vshrl.u32 %v1525, 7
      %v1527 = vsub.s32 0, %v1526
      %v1528 = vrot.slane %v1373, %v1527
      %v1529 = vlaneseq
      %v1530 = vshrl.u32 %v1529, 7
      %v1531 = vsub.s32 0, %v1530
      %v1532 = vrot.slane %v1374, %v1531
      %v1533 = vlaneseq
      %v1534 = vshrl.u32 %v1533, 7
      %v1535 = vsub.s32 0, %v1534
      %v1536 = vrot.slane %v1375, %v1535
      %v1537 = vlaneseq
      %v1538 = vshrl.u32 %v1537, 7
      %v1539 = vsub.s32 0, %v1538
      %v1540 = vrot.slane %v1376, %v1539
      %v1541 = vlaneseq
      %v1542 = vshrl.u32 %v1541, 7
      %v1543 = vsub.s32 0, %v1542
      %v1544 = vrot.slane %v1377, %v1543
      %v1545 = vlaneseq
      %v1546 = vshrl.u32 %v1545, 7
      %v1547 = vsub.s32 0, %v1546
      %v1548 = vrot.slane %v1378, %v1547
      %v1549 = vlaneseq
      %v1550 = vshrl.u32 %v1549, 7
      %v1551 = vsub.s32 0, %v1550
      %v1552 = vrot.slane %v1379, %v1551
      %v1553 = vlaneseq
      %v1554 = vshrl.u32 %v1553, 7
      %v1555 = vsub.s32 0, %v1554
      %v1556 = vrot.slane %v1380, %v1555
      %v1557 = vlaneseq
      %v1558 = vshrl.u32 %v1557, 7
      %v1559 = vsub.s32 0, %v1558
      %v1560 = vrot.slane %v1381, %v1559
      %v1561 = vlaneseq
      %v1562 = vshrl.u32 %v1561, 7
      %v1563 = vsub.s32 0, %v1562
      %v1564 = vrot.slane %v1382, %v1563
      %v1565 = vlaneseq
      %v1566 = vshrl.u32 %v1565, 7
      %v1567 = vsub.s32 0, %v1566
      %v1568 = vrot.slane %v1383, %v1567
      %v1569 = vlaneseq
      %v1570 = vshrl.u32 %v1569, 7
      %v1571 = vsub.s32 0, %v1570
      %v1572 = vrot.slane %v1384, %v1571
      %v1573 = vlaneseq
      %v1574 = vshrl.u32 %v1573, 7
      %v1575 = vsub.s32 0, %v1574
      %v1576 = vrot.slane %v1385, %v1575
      %v1577 = vlaneseq
      %v1578 = vshrl.u32 %v1577, 7
      %v1579 = vsub.s32 0, %v1578
      %v1580 = vrot.slane %v1386, %v1579
      %v1581 = vlaneseq
      %v1582 = vshrl.u32 %v1581, 7
      %v1583 = vsub.s32 0, %v1582
      %v1584 = vrot.slane %v1387, %v1583
      %v1585 = vlaneseq
      %v1586 = vshrl.u32 %v1585, 7
      %v1587 = vsub.s32 0, %v1586
      %v1588 = vrot.slane %v1388, %v1587
      %v1589 = vlaneseq
      %v1590 = vshrl.u32 %v1589, 7
      %v1591 = vsub.s32 0, %v1590
      %v1592 = vrot.slane %v1389, %v1591
      %v1593 = vlaneseq
      %v1594 = vshrl.u32 %v1593, 7
      %v1595 = vsub.s32 0, %v1594
      %v1596 = vrot.slane %v1390, %v1595
      %v1597 = vlaneseq
      %v1598 = vshrl.u32 %v1597, 7
      %v1599 = vsub.s32 0, %v1598
      %v1600 = vrot.slane %v1391, %v1599
      %v1601 = vlaneseq
      %v1602 = vshrl.u32 %v1601, 7
      %v1603 = vsub.s32 0, %v1602
      %v1604 = vrot.slane %v1392, %v1603
      %v1605 = vlaneseq
      %v1606 = vshrl.u32 %v1605, 7
      %v1607 = vsub.s32 0, %v1606
      %v1608 = vrot.slane %v1393, %v1607
      %v1609 = vlaneseq
      %v1610 = vshrl.u32 %v1609, 7
      %v1611 = vsub.s32 0, %v1610
      %v1612 = vrot.slane %v1394, %v1611
      %v1613 = vlaneseq
      %v1614 = vshrl.u32 %v1613, 7
      %v1615 = vsub.s32 0, %v1614
      %v1616 = vrot.slane %v1395, %v1615
      %v1617 = vlaneseq
      %v1618 = vshrl.u32 %v1617, 7
      %v1619 = vsub.s32 0, %v1618
      %v1620 = vrot.slane %v1396, %v1619
      %v1621 = vlaneseq
      %v1622 = vshrl.u32 %v1621, 7
      %v1623 = vsub.s32 0, %v1622
      %v1624 = vrot.slane %v1397, %v1623
      %v1625 = vlaneseq
      %v1626 = vshrl.u32 %v1625, 7
      %v1627 = vsub.s32 0, %v1626
      %v1628 = vrot.slane %v1398, %v1627
      %v1629 = vlaneseq
      %v1630 = vshrl.u32 %v1629, 7
      %v1631 = vsub.s32 0, %v1630
      %v1632 = vrot.slane %v1399, %v1631
      %v1633 = vlaneseq
      %v1634 = vshrl.u32 %v1633, 7
      %v1635 = vsub.s32 0, %v1634
      %v1636 = vrot.slane %v1400, %v1635
      %v1637 = vlaneseq
      %v1638 = vshrl.u32 %v1637, 7
      %v1639 = vsub.s32 0, %v1638
      %v1640 = vrot.slane %v1401, %v1639
      %v1641 = vlaneseq
      %v1642 = vshrl.u32 %v1641, 7
      %v1643 = vsub.s32 0, %v1642
      %v1644 = vrot.slane %v1402, %v1643
      %v1645 = vlaneseq
      %v1646 = vshrl.u32 %v1645, 7
      %v1647 = vsub.s32 0, %v1646
      %v1648 = vrot.slane %v1403, %v1647
      %v1649 = vlaneseq
      %v1650 = vshrl.u32 %v1649, 7
      %v1651 = vsub.s32 0, %v1650
      %v1652 = vrot.slane %v1404, %v1651
      %v1653 = vlaneseq
      %v1654 = vshrl.u32 %v1653, 7
      %v1655 = vsub.s32 0, %v1654
      %v1656 = vrot.slane %v1405, %v1655
      %v1657 = vlaneseq
      %v1658 = vshrl.u32 %v1657, 7
      %v1659 = vsub.s32 0, %v1658
      %v1660 = vrot.slane %v1406, %v1659
      %v1661 = vlaneseq
      %v1662 = vshrl.u32 %v1661, 7
      %v1663 = vsub.s32 0, %v1662
      %v1664 = vrot.slane %v1407, %v1663
      %v1665 = vlaneseq
      %v1666 = vshrl.u32 %v1665, 7
      %v1667 = vsub.s32 0, %v1666
      %v1668 = vrot.slane %v1408, %v1667
      %v1669 = vlaneseq
      %v1670 = vshrl.u32 %v1669, 7
      %v1671 = vsub.s32 0, %v1670
      %v1672 = vrot.slane %v1409, %v1671
      %v1673 = vlaneseq
      %v1674 = vshrl.u32 %v1673, 7
      %v1675 = vsub.s32 0, %v1674
      %v1676 = vrot.slane %v1410, %v1675
      %v1677 = vlaneseq
      %v1678 = vshrl.u32 %v1677, 7
      %v1679 = vsub.s32 0, %v1678
      %v1680 = vrot.slane %v1411, %v1679
      %v1681 = vlaneseq
      %v1682 = vshrl.u32 %v1681, 7
      %v1683 = vsub.s32 0, %v1682
      %v1684 = vrot.slane %v1412, %v1683
      %v1685 = vlaneseq
      %v1686 = vshrl.u32 %v1685, 7
      %v1687 = vsub.s32 0, %v1686
      %v1688 = vrot.slane %v1413, %v1687
      %v1689 = vlaneseq
      %v1690 = vshrl.u32 %v1689, 7
      %v1691 = vsub.s32 0, %v1690
      %v1692 = vrot.slane %v1414, %v1691
      %v1693 = vlaneseq
      %v1694 = vshrl.u32 %v1693, 7
      %v1695 = vsub.s32 0, %v1694
      %v1696 = vrot.slane %v1415, %v1695
      %v1697 = vlaneseq
      %v1698 = vshrl.u32 %v1697, 7
      %v1699 = vsub.s32 0, %v1698
      %v1700 = vrot.slane %v1416, %v1699
      %v1701 = vlaneseq
      %v1702 = vshrl.u32 %v1701, 7
      %v1703 = vsub.s32 0, %v1702
      %v1704 = vrot.slane %v1417, %v1703
      %v1705 = vlaneseq
      %v1706 = vshrl.u32 %v1705, 7
      %v1707 = vsub.s32 0, %v1706
      %v1708 = vrot.slane %v1418, %v1707
      %v1709 = vlaneseq
      %v1710 = vshrl.u32 %v1709, 7
      %v1711 = vsub.s32 0, %v1710
      %v1712 = vrot.slane %v1419, %v1711
      %v1713 = vlaneseq
      %v1714 = vshrl.u32 %v1713, 7
      %v1715 = vsub.s32 0, %v1714
      %v1716 = vrot.slane %v1420, %v1715
      %v1717 = vlaneseq
      %v1718 = vshrl.u32 %v1717, 7
      %v1719 = vsub.s32 0, %v1718
      %v1720 = vrot.slane %v1421, %v1719
      %v1721 = vlaneseq
      %v1722 = vshrl.u32 %v1721, 7
      %v1723 = vsub.s32 0, %v1722
      %v1724 = vrot.slane %v1422, %v1723
      %v1725 = vlaneseq
      %v1726 = vshrl.u32 %v1725, 7
      %v1727 = vsub.s32 0, %v1726
      %v1728 = vrot.slane %v1423, %v1727
      %v1729 = vlaneseq
      %v1730 = vshrl.u32 %v1729, 7
      %v1731 = vsub.s32 0, %v1730
      %v1732 = vrot.slane %v1424, %v1731
      %v1733 = vlaneseq
      %v1734 = vshrl.u32 %v1733, 7
      %v1735 = vsub.s32 0, %v1734
      %v1736 = vrot.slane %v1425, %v1735
      %v1737 = vlaneseq
      %v1738 = vshrl.u32 %v1737, 7
      %v1739 = vsub.s32 0, %v1738
      %v1740 = vrot.slane %v1426, %v1739
      %v1741 = vlaneseq
      %v1742 = vshrl.u32 %v1741, 7
      %v1743 = vsub.s32 0, %v1742
      %v1744 = vrot.slane %v1427, %v1743
      %v1745 = vlaneseq
      %v1746 = vshrl.u32 %v1745, 7
      %v1747 = vsub.s32 0, %v1746
      %v1748 = vrot.slane %v1428, %v1747
      %vm1749 = vcmask 1041409
      %v1750 = vsel %vm1749, %v1500, %v1496
      %vm1751 = vcmask 1042434
      %v1752 = vsel %vm1751, %v1504, %v1750
      %vm1753 = vcmask 1043459
      %v1754 = vsel %vm1753, %v1508, %v1752
      %vm1755 = vcmask 1044484
      %v1756 = vsel %vm1755, %v1512, %v1754
      %vm1757 = vcmask 1045509
      %v1758 = vsel %vm1757, %v1516, %v1756
      %vm1759 = vcmask 1046534
      %v1760 = vsel %vm1759, %v1520, %v1758
      %vm1761 = vcmask 1047559
      %v1762 = vsel %vm1761, %v1524, %v1760
      %v1763 = vsel %vm1749, %v1532, %v1528
      %v1764 = vsel %vm1751, %v1536, %v1763
      %v1765 = vsel %vm1753, %v1540, %v1764
      %v1766 = vsel %vm1755, %v1544, %v1765
      %v1767 = vsel %vm1757, %v1548, %v1766
      %v1768 = vsel %vm1759, %v1552, %v1767
      %v1769 = vsel %vm1761, %v1556, %v1768
      %v1770 = vsel %vm1749, %v1564, %v1560
      %v1771 = vsel %vm1751, %v1568, %v1770
      %v1772 = vsel %vm1753, %v1572, %v1771
      %v1773 = vsel %vm1755, %v1576, %v1772
      %v1774 = vsel %vm1757, %v1580, %v1773
      %v1775 = vsel %vm1759, %v1584, %v1774
      %v1776 = vsel %vm1761, %v1588, %v1775
      %v1777 = vsel %vm1749, %v1596, %v1592
      %v1778 = vsel %vm1751, %v1600, %v1777
      %v1779 = vsel %vm1753, %v1604, %v1778
      %v1780 = vsel %vm1755, %v1608, %v1779
      %v1781 = vsel %vm1757, %v1612, %v1780
      %v1782 = vsel %vm1759, %v1616, %v1781
      %v1783 = vsel %vm1761, %v1620, %v1782
      %v1784 = vsel %vm1749, %v1628, %v1624
      %v1785 = vsel %vm1751, %v1632, %v1784
      %v1786 = vsel %vm1753, %v1636, %v1785
      %v1787 = vsel %vm1755, %v1640, %v1786
      %v1788 = vsel %vm1757, %v1644, %v1787
      %v1789 = vsel %vm1759, %v1648, %v1788
      %v1790 = vsel %vm1761, %v1652, %v1789
      %v1791 = vsel %vm1749, %v1660, %v1656
      %v1792 = vsel %vm1751, %v1664, %v1791
      %v1793 = vsel %vm1753, %v1668, %v1792
      %v1794 = vsel %vm1755, %v1672, %v1793
      %v1795 = vsel %vm1757, %v1676, %v1794
      %v1796 = vsel %vm1759, %v1680, %v1795
      %v1797 = vsel %vm1761, %v1684, %v1796
      %v1798 = vsel %vm1749, %v1692, %v1688
      %v1799 = vsel %vm1751, %v1696, %v1798
      %v1800 = vsel %vm1753, %v1700, %v1799
      %v1801 = vsel %vm1755, %v1704, %v1800
      %v1802 = vsel %vm1757, %v1708, %v1801
      %v1803 = vsel %vm1759, %v1712, %v1802
      %v1804 = vsel %vm1761, %v1716, %v1803
      %v1805 = vsel %vm1749, %v1724, %v1720
      %v1806 = vsel %vm1751, %v1728, %v1805
      %v1807 = vsel %vm1753, %v1732, %v1806
      %v1808 = vsel %vm1755, %v1736, %v1807
      %v1809 = vsel %vm1757, %v1740, %v1808
      %v1810 = vsel %vm1759, %v1744, %v1809
      %v1811 = vsel %vm1761, %v1748, %v1810
      %vm1820 = vcmask 31744
      %1821 = vst.msk [vmem:[%s116] sm:$0xff] %vm1820, %v1762
      %1822 = vst.msk [vmem:[%s116 + $0x8] sm:$0xff] %vm1820, %v1769
      %1823 = vst.msk [vmem:[%s116 + $0x10] sm:$0xff] %vm1820, %v1776
      %1824 = vst.msk [vmem:[%s116 + $0x18] sm:$0xff] %vm1820, %v1783
      %1825 = vst.msk [vmem:[%s116 + $0x20] sm:$0xff] %vm1820, %v1790
      %1826 = vst.msk [vmem:[%s116 + $0x28] sm:$0xff] %vm1820, %v1797
      %1827 = vst.msk [vmem:[%s116 + $0x30] sm:$0xff] %vm1820, %v1804
      %1828 = vst.msk [vmem:[%s116 + $0x38] sm:$0xff] %vm1820, %v1811
      %p1829 = scmp.lt.s32.totalorder %s12, 1
      %s1830 = scalar_select %p1829, %s12, 1
      %s1831 = smul.addr %s1830, 8
      %s1832 = smul.addr %s1831, 8
      %s1833 = scalar_lea.vmem %s1, %s1832
      // Predicated region
      $region25: #{down_forward.6} parent=23 // pred_check
        %p1834 = pneg %p56
      $region26: #{down_forward.6} parent=23 // pred_check_branch
        %1836 = sbr.rel (%p1834) target = $region28
      $region27: #{down_forward.6} parent=23 // pred_region
        _
      $region28: #{down_forward.6} parent=23 // pred_fallthru
        _
    $region24: #{down_forward.6} parent=5 // pred_fallthru
      _
    %p1837 = scmp.le.s32.totalorder 2, %s7
    // Predicated region
    $region29: #{down_forward.6} parent=5 // pred_check
      %p1838 = pneg %p1837
    $region30: #{down_forward.6} parent=5 // pred_check_branch
      %1840 = sbr.rel (%p1838) target = $region32
    $region31: #{down_forward.6} parent=5 // pred_region
      %s1841 = ssub.s32 %s7, 2
      // Predicated region
      $region33: #{down_forward.6} parent=31 // pred_check
        %p1842 = pneg %p62
      $region34: #{down_forward.6} parent=31 // pred_check_branch
        %1844 = sbr.rel (%p1842) target = $region36
      $region35: #{down_forward.6} parent=31 // pred_region
        %p1845 = scmp.lt.s32.totalorder %s13, 1
        %s1846 = scalar_select %p1845, %s13, 1
        %s1847 = smul.addr %s1846, 8
        %s1848 = smul.addr %s1847, 8
        %s1849 = scalar_lea.vmem %s1, %s1848
      $region36: #{down_forward.6} parent=31 // pred_fallthru
        _
    $region32: #{down_forward.6} parent=5 // pred_fallthru
      _
  $region6: #{down_forward.6} parent=0 // loop_footer
    %s11 = sadd.s32 1, %s7
  $region7: #{down_forward.6} parent=0 // loop_footer_branch
    %6 = sbr.rel target = $region3
  $region8: #{down_forward.6} parent=0 // loop_exit
    _

// kernel: down_forward.10
$region0: #{down_forward.10}
  #allocation0 [shape = 'u32[]', space=smem, size = 0x4, offset = 0x4, fixed_abs, tag = 'smem constant byte address 0x4 - core index']
  #allocation1 [shape = 'u32[144,128]{1,0:T(1,128)}', space=vmem, size = 0x12000, scoped, tag = 'internal scratch']
  %s0 = inlined_call_operand.vmem [shape: f32[2,10,10,4], index: 0, kind: input, shape index: {}]
  %s1 = inlined_call_operand.vmem [shape: bf16[9,4,8], index: 1, kind: input, shape index: {}]
  %s2 = inlined_call_operand.vmem [shape: f32[1,8], index: 2, kind: input, shape index: {}]
  %s3 = inlined_call_operand.vmem [shape: f32[1,8], index: 3, kind: input, shape index: {}]
  %s4 = inlined_call_operand.vmem [shape: f32[2,8,8,8], index: 4, kind: output, shape index: {}]
  %s5 = sld [smem:[#allocation0]]
  $region49: #{down_forward.10} parent=0
    _
  %s7 = ssub.s32 1, %s5
  %s8 = scalar_select 0, %s7, %s5
  loop: start=0, step=1, limit=4
  $region2: #{down_forward.10} parent=0 // loop_pre_header
    _
  $region3: #{down_forward.10} parent=0 // loop_header
    %s10 = sphi 0, %s14
    %p11 = scmp.ge.s32.totalorder %s10, 4
    %s20 = sphi 0, %s22
    %s23 = sphi 0, %s20
    %s24 = sphi 0, %s23
    %s40 = sphi 0, %s24
    %s44 = sphi 0, %s44
    %s46 = sphi 0, %s44
    %s47 = sphi 0, %s46
    %s61 = sphi 0, %s47
    %s65 = sphi 0, %s65
    %s67 = sphi 0, %s65
    %s68 = sphi 0, %s67
    %s82 = sphi 0, %s68
    %s86 = sphi 0, %s86
    %s88 = sphi 0, %s86
    %s89 = sphi 0, %s88
    %s103 = sphi 0, %s89
    %s109 = sphi 0, %s111
    %s112 = sphi 0, %s109
    %s113 = sphi 0, %s112
    %s129 = sphi 0, %s113
  $region4: #{down_forward.10} parent=0 // loop_header_branch
    %13 = sbr.rel (%p11) target = $region8
  $region5: #{down_forward.10} parent=0 // loop_body
    %s15 = ssub.s32 %s10, 1
    %s16 = ssub.s32 %s10, 2
    %s17 = sadd.s32 %s10, 1
    %s18 = ssub.s32 %s10, %s17
    %p19 = scmp.eq.s32.totalorder %s18, 0
    %s21 = sadd.s32 %s20, 1
    %s22 = scalar_select %p19, %s20, %s21
    %p25 = pneg %p19
    %p26 = scmp.eq.s32.totalorder %s10, 1
    %p27 = por %p25, %p26
    %p28 = scmp.ne.s32.totalorder %s20, %s23
    %p29 = scmp.eq.s32.totalorder %s10, 0
    %p30 = por %p28, %p29
    %p31 = scmp.ne.s32.totalorder %s20, %s23
    %p32 = scmp.eq.s32.totalorder %s15, 1
    %p33 = por %p31, %p32
    %p34 = scmp.ne.s32.totalorder %s23, %s24
    %p35 = scmp.eq.s32.totalorder %s15, 0
    %p36 = por %p34, %p35
    %p37 = scmp.ne.s32.totalorder %s23, %s24
    %p38 = scmp.eq.s32.totalorder %s16, 1
    %p39 = por %p37, %p38
    %p41 = scmp.ne.s32.totalorder %s24, %s40
    %p42 = scmp.eq.s32.totalorder %s16, 0
    %p43 = por %p41, %p42
    %s45 = sadd.s32 %s44, 1
    %p48 = scmp.eq.s32.totalorder %s10, 1
    %p49 = scmp.ne.s32.totalorder %s44, %s46
    %p50 = scmp.eq.s32.totalorder %s10, 0
    %p51 = por %p49, %p50
    %p52 = scmp.ne.s32.totalorder %s44, %s46
    %p53 = scmp.eq.s32.totalorder %s15, 1
    %p54 = por %p52, %p53
    %p55 = scmp.ne.s32.totalorder %s46, %s47
    %p56 = scmp.eq.s32.totalorder %s15, 0
    %p57 = por %p55, %p56
    %p58 = scmp.ne.s32.totalorder %s46, %s47
    %p59 = scmp.eq.s32.totalorder %s16, 1
    %p60 = por %p58, %p59
    %p62 = scmp.ne.s32.totalorder %s47, %s61
    %p63 = scmp.eq.s32.totalorder %s16, 0
    %p64 = por %p62, %p63
    %s66 = sadd.s32 %s65, 1
    %p69 = scmp.eq.s32.totalorder %s10, 1
    %p70 = scmp.ne.s32.totalorder %s65, %s67
    %p71 = scmp.eq.s32.totalorder %s10, 0
    %p72 = por %p70, %p71
    %p73 = scmp.ne.s32.totalorder %s65, %s67
    %p74 = scmp.eq.s32.totalorder %s15, 1
    %p75 = por %p73, %p74
    %p76 = scmp.ne.s32.totalorder %s67, %s68
    %p77 = scmp.eq.s32.totalorder %s15, 0
    %p78 = por %p76, %p77
    %p79 = scmp.ne.s32.totalorder %s67, %s68
    %p80 = scmp.eq.s32.totalorder %s16, 1
    %p81 = por %p79, %p80
    %p83 = scmp.ne.s32.totalorder %s68, %s82
    %p84 = scmp.eq.s32.totalorder %s16, 0
    %p85 = por %p83, %p84
    %s87 = sadd.s32 %s86, 1
    %p90 = scmp.eq.s32.totalorder %s10, 1
    %p91 = scmp.ne.s32.totalorder %s86, %s88
    %p92 = scmp.eq.s32.totalorder %s10, 0
    %p93 = por %p91, %p92
    %p94 = scmp.ne.s32.totalorder %s86, %s88
    %p95 = scmp.eq.s32.totalorder %s15, 1
    %p96 = por %p94, %p95
    %p97 = scmp.ne.s32.totalorder %s88, %s89
    %p98 = scmp.eq.s32.totalorder %s15, 0
    %p99 = por %p97, %p98
    %p100 = scmp.ne.s32.totalorder %s88, %s89
    %p101 = scmp.eq.s32.totalorder %s16, 1
    %p102 = por %p100, %p101
    %p104 = scmp.ne.s32.totalorder %s89, %s103
    %p105 = scmp.eq.s32.totalorder %s16, 0
    %p106 = por %p104, %p105
    %s107 = ssub.s32 %s10, %s17
    %p108 = scmp.eq.s32.totalorder %s107, 0
    %s110 = sadd.s32 %s109, 1
    %s111 = scalar_select %p108, %s109, %s110
    %p114 = pneg %p108
    %p115 = scmp.eq.s32.totalorder %s10, 1
    %p116 = por %p114, %p115
    %p117 = scmp.ne.s32.totalorder %s109, %s112
    %p118 = scmp.eq.s32.totalorder %s10, 0
    %p119 = por %p117, %p118
    %p120 = scmp.ne.s32.totalorder %s109, %s112
    %p121 = scmp.eq.s32.totalorder %s15, 1
    %p122 = por %p120, %p121
    %p123 = scmp.ne.s32.totalorder %s112, %s113
    %p124 = scmp.eq.s32.totalorder %s15, 0
    %p125 = por %p123, %p124
    %p126 = scmp.ne.s32.totalorder %s112, %s113
    %p127 = scmp.eq.s32.totalorder %s16, 1
    %p128 = por %p126, %p127
    %p130 = scmp.ne.s32.totalorder %s113, %s129
    %p131 = scmp.eq.s32.totalorder %s16, 0
    %p132 = por %p130, %p131
    %p133 = scmp.le.s32.totalorder 1, %s10
    %p134 = scmp.lt.s32.totalorder %s10, 3
    %p135 = pnand %p133, %p134
    %p136 = pneg %p135
    // Predicated region
    $region9: #{down_forward.10} parent=5 // pred_check
      _
    $region10: #{down_forward.10} parent=5 // pred_check_branch
      %138 = sbr.rel (%p135) target = $region12
    $region11: #{down_forward.10} parent=5 // pred_region
      %s139 = ssub.s32 %s10, 1
      // Predicated region
      $region13: #{down_forward.10} parent=11 // pred_check
        %p140 = pneg %p57
      $region14: #{down_forward.10} parent=11 // pred_check_branch
        %142 = sbr.rel (%p140) target = $region16
      $region15: #{down_forward.10} parent=11 // pred_region
        _
      $region16: #{down_forward.10} parent=11 // pred_fallthru
        _
      // Predicated region
      $region17: #{down_forward.10} parent=11 // pred_check
        %p143 = pneg %p78
      $region18: #{down_forward.10} parent=11 // pred_check_branch
        %145 = sbr.rel (%p143) target = $region20
      $region19: #{down_forward.10} parent=11 // pred_region
        _
      $region20: #{down_forward.10} parent=11 // pred_fallthru
        _
      // Predicated region
      $region21: #{down_forward.10} parent=11 // pred_check
        %p146 = pneg %p99
      $region22: #{down_forward.10} parent=11 // pred_check_branch
        %148 = sbr.rel (%p146) target = $region24
      $region23: #{down_forward.10} parent=11 // pred_region
        _
      $region24: #{down_forward.10} parent=11 // pred_fallthru
        _
    $region12: #{down_forward.10} parent=5 // pred_fallthru
      _
    %p149 = scmp.lt.s32.totalorder %s10, 2
    // Predicated region
    $region25: #{down_forward.10} parent=5 // pred_check
      %p150 = pneg %p149
    $region26: #{down_forward.10} parent=5 // pred_check_branch
      %152 = sbr.rel (%p150) target = $region28
    $region27: #{down_forward.10} parent=5 // pred_region
      // Predicated region
      $region29: #{down_forward.10} parent=27 // pred_check
        %p153 = pneg %p30
      $region30: #{down_forward.10} parent=27 // pred_check_branch
        %155 = sbr.rel (%p153) target = $region32
      $region31: #{down_forward.10} parent=27 // pred_region
        %p156 = scmp.lt.s32.totalorder %s10, 1
        %s157 = scalar_select %p156, %s10, 1
        %s158 = smul.addr %s157, 20
        %s159 = smul.addr %s158, 8
        %s160 = scalar_lea.vmem %s0, %s159
      $region32: #{down_forward.10} parent=27 // pred_fallthru
        _
    $region28: #{down_forward.10} parent=5 // pred_fallthru
      _
    %p161 = scmp.le.s32.totalorder 1, %s10
    %p162 = scmp.lt.s32.totalorder %s10, 3
    %p163 = pnand %p161, %p162
    %p164 = pneg %p163
    // Predicated region
    $region33: #{down_forward.10} parent=5 // pred_check
      _
    $region34: #{down_forward.10} parent=5 // pred_check_branch
      %166 = sbr.rel (%p163) target = $region36
    $region35: #{down_forward.10} parent=5 // pred_region
      %s167 = ssub.s32 %s10, 1
      %p168 = scmp.lt.s32.totalorder %s15, 1
      %s169 = scalar_select %p168, %s15, 1
      %s170 = smul.addr %s169, 20
      %s171 = smul.addr %s170, 8
      %s172 = scalar_lea.vmem %s0, %s171
      %p173 = pneg %p36
      %p174 = pneg %p33
      %p175 = pneg %p57
      %p176 = pneg %p54
      %p177 = pneg %p78
      %p178 = pneg %p75
      %p179 = pneg %p99
      %p180 = pneg %p96
      %p181 = pneg %p125
      %p182 = pneg %p122
      %p183 = scmp.lt.s32.totalorder %s15, 1
      %s184 = scalar_select %p183, %s15, 1
      %s185 = smul.addr %s184, 8
      %s186 = smul.addr %s185, 8
      %s187 = scalar_lea.vmem %s4, %s186
      %p188 = scmp.lt.s32.totalorder %s15, 1
      %s189 = scalar_select %p188, %s15, 1
      %s190 = smul.addr %s189, 20
      %s191 = smul.addr %s190, 8
      %s192 = scalar_lea.vmem %s0, %s191
      %p193 = scmp.lt.s32.totalorder %s15, 1
      %s194 = scalar_select %p193, %s15, 1
      %s195 = smul.addr %s194, 8
      %s196 = smul.addr %s195, 8
      %s197 = scalar_lea.vmem %s4, %s196
      %v199 = vld [vmem:[%s192] sm:$0xff]
      %v200 = vld [vmem:[%s192 + $0x8] sm:$0x3]
      %v201 = vld [vmem:[%s192 + $0x10] sm:$0xff]
      %v202 = vld [vmem:[%s192 + $0x18] sm:$0x3]
      %v203 = vld [vmem:[%s192 + $0x20] sm:$0xff]
      %v204 = vld [vmem:[%s192 + $0x28] sm:$0x3]
      %v205 = vld [vmem:[%s192 + $0x30] sm:$0xff]
      %v206 = vld [vmem:[%s192 + $0x38] sm:$0x3]
      %v207 = vld [vmem:[%s192 + $0x40] sm:$0xff]
      %v208 = vld [vmem:[%s192 + $0x48] sm:$0x3]
      %v209 = vld [vmem:[%s192 + $0x50] sm:$0xff]
      %v210 = vld [vmem:[%s192 + $0x58] sm:$0x3]
      %v211 = vld [vmem:[%s192 + $0x60] sm:$0xff]
      %v212 = vld [vmem:[%s192 + $0x68] sm:$0x3]
      %v213 = vld [vmem:[%s192 + $0x70] sm:$0xff]
      %v214 = vld [vmem:[%s192 + $0x78] sm:$0x3]
      %v215 = vld [vmem:[%s192 + $0x80] sm:$0xff]
      %v216 = vld [vmem:[%s192 + $0x88] sm:$0x3]
      %v217 = vld [vmem:[%s192 + $0x90] sm:$0xff]
      %v218 = vld [vmem:[%s192 + $0x98] sm:$0x3]
      %v219 = vpack.c.bf16 %v201, %v199
      %v220 = vpack.c.bf16 %v205, %v203
      %v221 = vpack.c.bf16 %v209, %v207
      %v222 = vpack.c.bf16 %v213, %v211
      %v223 = vld [vmem:[%s1] sm:$0x3]
      %vm240 = vcmask 1046528
      %v241 = vrot.slane %v199, 1
      %v242 = vrot.slane %v200, 1
      %v243 = vsel %vm240, %v241, %v242
      %v244 = vrot.slane %v201, 1
      %v245 = vrot.slane %v202, 1
      %v246 = vsel %vm240, %v244, %v245
      %v247 = vrot.slane %v203, 1
      %v248 = vrot.slane %v204, 1
      %v249 = vsel %vm240, %v247, %v248
      %v250 = vrot.slane %v205, 1
      %v251 = vrot.slane %v206, 1
      %v252 = vsel %vm240, %v250, %v251
      %v253 = vrot.slane %v207, 1
      %v254 = vrot.slane %v208, 1
      %v255 = vsel %vm240, %v253, %v254
      %v256 = vrot.slane %v209, 1
      %v257 = vrot.slane %v210, 1
      %v258 = vsel %vm240, %v256, %v257
      %v259 = vrot.slane %v211, 1
      %v260 = vrot.slane %v212, 1
      %v261 = vsel %vm240, %v259, %v260
      %v262 = vrot.slane %v213, 1
      %v263 = vrot.slane %v214, 1
      %v264 = vsel %vm240, %v262, %v263
      %v273 = vpack.c.bf16 %v246, %v243
      %v274 = vpack.c.bf16 %v252, %v249
      %v275 = vpack.c.bf16 %v258, %v255
      %v276 = vpack.c.bf16 %v264, %v261
      %s277 = scalar_lea.vmem %s1, 2
      %v278 = vld [vmem:[%s277] sm:$0x3]
      %vm279 = vcmask 31744
      %v281 = vsel %vm279, %v273, 0
      %v284 = vsel %vm279, %v274, 0
      %v287 = vsel %vm279, %v275, 0
      %v290 = vsel %vm279, %v276, 0
      %vm292 = vcmask 1041408
      %v294 = vsel %vm292, %v278, 0
      %296 = vmatprep.subr.bf16.mxu0 0
      %297 = vmatpush1.bf16.msra.mxu0 %v294
      %298 = vmatprep.subr.bf16.mxu0 0
      %299 = vmatpush1.bf16.msra.mxu0 0
      %300 = vmatprep.subr.bf16.mxu0 0
      %301 = vmatpush1.bf16.msra.mxu0 0
      %302 = vmatprep.subr.bf16.mxu0 0
      %303 = vmatpush1.bf16.msra.mxu0 0
      %304 = vmatprep.subr.bf16.mxu0 0
      %305 = vmatpush1.bf16.msra.mxu0 0
      %306 = vmatprep.subr.bf16.mxu0 0
      %307 = vmatpush1.bf16.msra.mxu0 0
      %308 = vmatprep.subr.bf16.mxu0 0
      %309 = vmatpush1.bf16.msra.mxu0 0
      %310 = vmatprep.subr.bf16.mxu0 0
      %311 = vmatpush1.bf16.msra.mxu0 0
      %312 = vmatprep.subr.bf16.mxu0 0
      %313 = vmatpush1.bf16.msra.mxu0 0
      %314 = vmatprep.subr.bf16.mxu0 0
      %315 = vmatpush1.bf16.msra.mxu0 0
      %316 = vmatprep.subr.bf16.mxu0 0
      %317 = vmatpush1.bf16.msra.mxu0 0
      %318 = vmatprep.subr.bf16.mxu0 0
      %319 = vmatpush1.bf16.msra.mxu0 0
      %320 = vmatprep.subr.bf16.mxu0 0
      %321 = vmatpush1.bf16.msra.mxu0 0
      %322 = vmatprep.subr.bf16.mxu0 0
      %323 = vmatpush1.bf16.msra.mxu0 0
      %324 = vmatprep.subr.bf16.mxu0 0
      %325 = vmatpush1.bf16.msra.mxu0 0
      %326 = vmatprep.subr.bf16.mxu0 0
      %327 = vmatpush1.bf16.msra.mxu0 0
      %328 = vmatprep.mubr.bf16.mxu0 0
      %329 = vmatmul.mubr.bf16.gmra.mrb[0].mxu0 %v281
      %v330 = vpop.f32.mrb[0].mxu0
      %v331 = vadd.f32 0.0, %v330
      %v332 = vpop.f32.mrb[0].mxu0
      %v333 = vpop.f32.mrb[0].mxu0
      %v334 = vadd.f32 0.0, %v333
      %v335 = vpop.f32.mrb[0].mxu0
      %336 = vmatprep.mubr.bf16.mxu0 0
      %337 = vmatmul.mubr.bf16.gmra.mrb[0].mxu0 %v284
      %v338 = vpop.f32.mrb[0].mxu0
      %v339 = vadd.f32 0.0, %v338
      %v340 = vpop.f32.mrb[0].mxu0
      %v341 = vpop.f32.mrb[0].mxu0
      %v342 = vadd.f32 0.0, %v341
      %v343 = vpop.f32.mrb[0].mxu0
      %344 = vmatprep.mubr.bf16.mxu0 0
      %345 = vmatmul.mubr.bf16.gmra.mrb[0].mxu0 %v287
      %v346 = vpop.f32.mrb[0].mxu0
      %v347 = vadd.f32 0.0, %v346
      %v348 = vpop.f32.mrb[0].mxu0
      %v349 = vpop.f32.mrb[0].mxu0
      %v350 = vadd.f32 0.0, %v349
      %v351 = vpop.f32.mrb[0].mxu0
      %352 = vmatprep.mubr.bf16.mxu0 0
      %353 = vmatmul.mubr.bf16.gmra.mrb[0].mxu0 %v290
      %v354 = vpop.f32.mrb[0].mxu0
      %v355 = vadd.f32 0.0, %v354
      %v356 = vpop.f32.mrb[0].mxu0
      %v357 = vpop.f32.mrb[0].mxu0
      %v358 = vadd.f32 0.0, %v357
      %v359 = vpop.f32.mrb[0].mxu0
      %360 = vdwg.mxu0
      %v362 = vsel %vm279, %v219, 0
      %v365 = vsel %vm279, %v220, 0
      %v368 = vsel %vm279, %v221, 0
      %v371 = vsel %vm279, %v222, 0
      %v374 = vsel %vm292, %v223, 0
      %376 = vmatprep.subr.bf16.mxu0 0
      %377 = vmatpush1.bf16.msra.mxu0 %v374
      %378 = vmatprep.subr.bf16.mxu0 0
      %379 = vmatpush1.bf16.msra.mxu0 0
      %380 = vmatprep.subr.bf16.mxu0 0
      %381 = vmatpush1.bf16.msra.mxu0 0
      %382 = vmatprep.subr.bf16.mxu0 0
      %383 = vmatpush1.bf16.msra.mxu0 0
      %384 = vmatprep.subr.bf16.mxu0 0
      %385 = vmatpush1.bf16.msra.mxu0 0
      %386 = vmatprep.subr.bf16.mxu0 0
      %387 = vmatpush1.bf16.msra.mxu0 0
      %388 = vmatprep.subr.bf16.mxu0 0
      %389 = vmatpush1.bf16.msra.mxu0 0
      %390 = vmatprep.subr.bf16.mxu0 0
      %391 = vmatpush1.bf16.msra.mxu0 0
      %392 = vmatprep.subr.bf16.mxu0 0
      %393 = vmatpush1.bf16.msra.mxu0 0
      %394 = vmatprep.subr.bf16.mxu0 0
      %395 = vmatpush1.bf16.msra.mxu0 0
      %396 = vmatprep.subr.bf16.mxu0 0
      %397 = vmatpush1.bf16.msra.mxu0 0
      %398 = vmatprep.subr.bf16.mxu0 0
      %399 = vmatpush1.bf16.msra.mxu0 0
      %400 = vmatprep.subr.bf16.mxu0 0
      %401 = vmatpush1.bf16.msra.mxu0 0
      %402 = vmatprep.subr.bf16.mxu0 0
      %403 = vmatpush1.bf16.msra.mxu0 0
      %404 = vmatprep.subr.bf16.mxu0 0
      %405 = vmatpush1.bf16.msra.mxu0 0
      %406 = vmatprep.subr.bf16.mxu0 0
      %407 = vmatpush1.bf16.msra.mxu0 0
      %408 = vmatprep.mubr.bf16.mxu0 0
      %409 = vmatmul.mubr.bf16.gmra.mrb[0].mxu0 %v362
      %v410 = vpop.f32.mrb[0].mxu0
      %v411 = vadd.f32 %v331, %v410
      %v412 = vpop.f32.mrb[0].mxu0
      %v413 = vpop.f32.mrb[0].mxu0
      %v414 = vadd.f32 %v334, %v413
      %v415 = vpop.f32.mrb[0].mxu0
      %416 = vmatprep.mubr.bf16.mxu0 0
      %417 = vmatmul.mubr.bf16.gmra.mrb[0].mxu0 %v365
      %v418 = vpop.f32.mrb[0].mxu0
      %v419 = vadd.f32 %v339, %v418
      %v420 = vpop.f32.mrb[0].mxu0
      %v421 = vpop.f32.mrb[0].mxu0
      %v422 = vadd.f32 %v342, %v421
      %v423 = vpop.f32.mrb[0].mxu0
      %424 = vmatprep.mubr.bf16.mxu0 0
      %425 = vmatmul.mubr.bf16.gmra.mrb[0].mxu0 %v368
      %v426 = vpop.f32.mrb[0].mxu0
      %v427 = vadd.f32 %v347, %v426
      %v428 = vpop.f32.mrb[0].mxu0
      %v429 = vpop.f32.mrb[0].mxu0
      %v430 = vadd.f32 %v350, %v429
      %v431 = vpop.f32.mrb[0].mxu0
      %432 = vmatprep.mubr.bf16.mxu0 0
      %433 = vmatmul.mubr.bf16.gmra.mrb[0].mxu0 %v371
      %v434 = vpop.f32.mrb[0].mxu0
      %v435 = vadd.f32 %v355, %v434
      %v436 = vpop.f32.mrb[0].mxu0
      %v437 = vpop.f32.mrb[0].mxu0
      %v438 = vadd.f32 %v358, %v437
      %v439 = vpop.f32.mrb[0].mxu0
      %440 = vdwg.mxu0
      %vm441 = vcmask 1045504
      %v442 = vrot.slane %v199, 2
      %v443 = vrot.slane %v200, 2
      %v444 = vsel %vm441, %v442, %v443
      %v445 = vrot.slane %v201, 2
      %v446 = vrot.slane %v202, 2
      %v447 = vsel %vm441, %v445, %v446
      %v448 = vrot.slane %v203, 2
      %v449 = vrot.slane %v204, 2
      %v450 = vsel %vm441, %v448, %v449
      %v451 = vrot.slane %v205, 2
      %v452 = vrot.slane %v206, 2
      %v453 = vsel %vm441, %v451, %v452
      %v454 = vrot.slane %v207, 2
      %v455 = vrot.slane %v208, 2
      %v456 = vsel %vm441, %v454, %v455
      %v457 = vrot.slane %v209, 2
      %v458 = vrot.slane %v210, 2
      %v459 = vsel %vm441, %v457, %v458
      %v460 = vrot.slane %v211, 2
      %v461 = vrot.slane %v212, 2
      %v462 = vsel %vm441, %v460, %v461
      %v463 = vrot.slane %v213, 2
      %v464 = vrot.slane %v214, 2
      %v465 = vsel %vm441, %v463, %v464
      %v474 = vpack.c.bf16 %v447, %v444
      %v475 = vpack.c.bf16 %v453, %v450
      %v476 = vpack.c.bf16 %v459, %v456
      %v477 = vpack.c.bf16 %v465, %v462
      %s478 = scalar_lea.vmem %s1, 4
      %v479 = vld [vmem:[%s478] sm:$0x3]
      %v481 = vsel %vm279, %v474, 0
      %v484 = vsel %vm279, %v475, 0
      %v487 = vsel %vm279, %v476, 0
      %v490 = vsel %vm279, %v477, 0
      %v493 = vsel %vm292, %v479, 0
      %495 = vmatprep.subr.bf16.mxu0 0
      %496 = vmatpush1.bf16.msra.mxu0 %v493
      %497 = vmatprep.subr.bf16.mxu0 0
      %498 = vmatpush1.bf16.msra.mxu0 0
      %499 = vmatprep.subr.bf16.mxu0 0
      %500 = vmatpush1.bf16.msra.mxu0 0
      %501 = vmatprep.subr.bf16.mxu0 0
      %502 = vmatpush1.bf16.msra.mxu0 0
      %503 = vmatprep.subr.bf16.mxu0 0
      %504 = vmatpush1.bf16.msra.mxu0 0
      %505 = vmatprep.subr.bf16.mxu0 0
      %506 = vmatpush1.bf16.msra.mxu0 0
      %507 = vmatprep.subr.bf16.mxu0 0
      %508 = vmatpush1.bf16.msra.mxu0 0
      %509 = vmatprep.subr.bf16.mxu0 0
      %510 = vmatpush1.bf16.msra.mxu0 0
      %511 = vmatprep.subr.bf16.mxu0 0
      %512 = vmatpush1.bf16.msra.mxu0 0
      %513 = vmatprep.subr.bf16.mxu0 0
      %514 = vmatpush1.bf16.msra.mxu0 0
      %515 = vmatprep.subr.bf16.mxu0 0
      %516 = vmatpush1.bf16.msra.mxu0 0
      %517 = vmatprep.subr.bf16.mxu0 0
      %518 = vmatpush1.bf16.msra.mxu0 0
      %519 = vmatprep.subr.bf16.mxu0 0
      %520 = vmatpush1.bf16.msra.mxu0 0
      %521 = vmatprep.subr.bf16.mxu0 0
      %522 = vmatpush1.bf16.msra.mxu0 0
      %523 = vmatprep.subr.bf16.mxu0 0
      %524 = vmatpush1.bf16.msra.mxu0 0
      %525 = vmatprep.subr.bf16.mxu0 0
      %526 = vmatpush1.bf16.msra.mxu0 0
      %527 = vmatprep.mubr.bf16.mxu0 0
      %528 = vmatmul.mubr.bf16.gmra.mrb[0].mxu0 %v481
      %v529 = vpop.f32.mrb[0].mxu0
      %v530 = vadd.f32 0.0, %v529
      %v531 = vpop.f32.mrb[0].mxu0
      %v532 = vpop.f32.mrb[0].mxu0
      %v533 = vadd.f32 0.0, %v532
      %v534 = vpop.f32.mrb[0].mxu0
      %535 = vmatprep.mubr.bf16.mxu0 0
      %536 = vmatmul.mubr.bf16.gmra.mrb[0].mxu0 %v484
      %v537 = vpop.f32.mrb[0].mxu0
      %v538 = vadd.f32 0.0, %v537
      %v539 = vpop.f32.mrb[0].mxu0
      %v540 = vpop.f32.mrb[0].mxu0
      %v541 = vadd.f32 0.0, %v540
      %v542 = vpop.f32.mrb[0].mxu0
      %543 = vmatprep.mubr.bf16.mxu0 0
      %544 = vmatmul.mubr.bf16.gmra.mrb[0].mxu0 %v487
      %v545 = vpop.f32.mrb[0].mxu0
      %v546 = vadd.f32 0.0, %v545
      %v547 = vpop.f32.mrb[0].mxu0
      %v548 = vpop.f32.mrb[0].mxu0
      %v549 = vadd.f32 0.0, %v548
      %v550 = vpop.f32.mrb[0].mxu0
      %551 = vmatprep.mubr.bf16.mxu0 0
      %552 = vmatmul.mubr.bf16.gmra.mrb[0].mxu0 %v490
      %v553 = vpop.f32.mrb[0].mxu0
      %v554 = vadd.f32 0.0, %v553
      %v555 = vpop.f32.mrb[0].mxu0
      %v556 = vpop.f32.mrb[0].mxu0
      %v557 = vadd.f32 0.0, %v556
      %v558 = vpop.f32.mrb[0].mxu0
      %559 = vdwg.mxu0
      %v560 = vadd.f32 %v411, %v530
      %v561 = vadd.f32 %v414, %v533
      %v562 = vadd.f32 %v419, %v538
      %v563 = vadd.f32 %v422, %v541
      %v564 = vadd.f32 %v427, %v546
      %v565 = vadd.f32 %v430, %v549
      %v566 = vadd.f32 %v435, %v554
      %v567 = vadd.f32 %v438, %v557
      %v568 = vpack.c.bf16 %v203, %v201
      %v569 = vpack.c.bf16 %v207, %v205
      %v570 = vpack.c.bf16 %v211, %v209
      %v571 = vpack.c.bf16 %v215, %v213
      %s572 = scalar_lea.vmem %s1, 6
      %v573 = vld [vmem:[%s572] sm:$0x3]
      %v575 = vsel %vm279, %v568, 0
      %v578 = vsel %vm279, %v569, 0
      %v581 = vsel %vm279, %v570, 0
      %v584 = vsel %vm279, %v571, 0
      %v587 = vsel %vm292, %v573, 0
      %589 = vmatprep.subr.bf16.mxu0 0
      %590 = vmatpush1.bf16.msra.mxu0 %v587
      %591 = vmatprep.subr.bf16.mxu0 0
      %592 = vmatpush1.bf16.msra.mxu0 0
      %593 = vmatprep.subr.bf16.mxu0 0
      %594 = vmatpush1.bf16.msra.mxu0 0
      %595 = vmatprep.subr.bf16.mxu0 0
      %596 = vmatpush1.bf16.msra.mxu0 0
      %597 = vmatprep.subr.bf16.mxu0 0
      %598 = vmatpush1.bf16.msra.mxu0 0
      %599 = vmatprep.subr.bf16.mxu0 0
      %600 = vmatpush1.bf16.msra.mxu0 0
      %601 = vmatprep.subr.bf16.mxu0 0
      %602 = vmatpush1.bf16.msra.mxu0 0
      %603 = vmatprep.subr.bf16.mxu0 0
      %604 = vmatpush1.bf16.msra.mxu0 0
      %605 = vmatprep.subr.bf16.mxu0 0
      %606 = vmatpush1.bf16.msra.mxu0 0
      %607 = vmatprep.subr.bf16.mxu0 0
      %608 = vmatpush1.bf16.msra.mxu0 0
      %609 = vmatprep.subr.bf16.mxu0 0
      %610 = vmatpush1.bf16.msra.mxu0 0
      %611 = vmatprep.subr.bf16.mxu0 0
      %612 = vmatpush1.bf16.msra.mxu0 0
      %613 = vmatprep.subr.bf16.mxu0 0
      %614 = vmatpush1.bf16.msra.mxu0 0
      %615 = vmatprep.subr.bf16.mxu0 0
      %616 = vmatpush1.bf16.msra.mxu0 0
      %617 = vmatprep.subr.bf16.mxu0 0
      %618 = vmatpush1.bf16.msra.mxu0 0
      %619 = vmatprep.subr.bf16.mxu0 0
      %620 = vmatpush1.bf16.msra.mxu0 0
      %621 = vmatprep.mubr.bf16.mxu0 0
      %622 = vmatmul.mubr.bf16.gmra.mrb[0].mxu0 %v575
      %v623 = vpop.f32.mrb[0].mxu0
      %v624 = vadd.f32 0.0, %v623
      %v625 = vpop.f32.mrb[0].mxu0
      %v626 = vpop.f32.mrb[0].mxu0
      %v627 = vadd.f32 0.0, %v626
      %v628 = vpop.f32.mrb[0].mxu0
      %629 = vmatprep.mubr.bf16.mxu0 0
      %630 = vmatmul.mubr.bf16.gmra.mrb[0].mxu0 %v578
      %v631 = vpop.f32.mrb[0].mxu0
      %v632 = vadd.f32 0.0, %v631
      %v633 = vpop.f32.mrb[0].mxu0
      %v634 = vpop.f32.mrb[0].mxu0
      %v635 = vadd.f32 0.0, %v634
      %v636 = vpop.f32.mrb[0].mxu0
      %637 = vmatprep.mubr.bf16.mxu0 0
      %638 = vmatmul.mubr.bf16.gmra.mrb[0].mxu0 %v581
      %v639 = vpop.f32.mrb[0].mxu0
      %v640 = vadd.f32 0.0, %v639
      %v641 = vpop.f32.mrb[0].mxu0
      %v642 = vpop.f32.mrb[0].mxu0
      %v643 = vadd.f32 0.0, %v642
      %v644 = vpop.f32.mrb[0].mxu0
      %645 = vmatprep.mubr.bf16.mxu0 0
      %646 = vmatmul.mubr.bf16.gmra.mrb[0].mxu0 %v584
      %v647 = vpop.f32.mrb[0].mxu0
      %v648 = vadd.f32 0.0, %v647
      %v649 = vpop.f32.mrb[0].mxu0
      %v650 = vpop.f32.mrb[0].mxu0
      %v651 = vadd.f32 0.0, %v650
      %v652 = vpop.f32.mrb[0].mxu0
      %653 = vdwg.mxu0
      %v654 = vadd.f32 %v560, %v624
      %v655 = vadd.f32 %v561, %v627
      %v656 = vadd.f32 %v562, %v632
      %v657 = vadd.f32 %v563, %v635
      %v658 = vadd.f32 %v564, %v640
      %v659 = vadd.f32 %v565, %v643
      %v660 = vadd.f32 %v566, %v648
      %v661 = vadd.f32 %v567, %v651
      %v664 = vrot.slane %v215, 1
      %v665 = vrot.slane %v216, 1
      %v666 = vsel %vm240, %v664, %v665
      %v668 = vpack.c.bf16 %v249, %v246
      %v669 = vpack.c.bf16 %v255, %v252
      %v670 = vpack.c.bf16 %v261, %v258
      %v671 = vpack.c.bf16 %v666, %v264
      %s672 = scalar_lea.vmem %s1, 8
      %v673 = vld [vmem:[%s672] sm:$0x3]
      %v675 = vsel %vm279, %v668, 0
      %v678 = vsel %vm279, %v669, 0
      %v681 = vsel %vm279, %v670, 0
      %v684 = vsel %vm279, %v671, 0
      %v687 = vsel %vm292, %v673, 0
      %689 = vmatprep.subr.bf16.mxu0 0
      %690 = vmatpush1.bf16.msra.mxu0 %v687
      %691 = vmatprep.subr.bf16.mxu0 0
      %692 = vmatpush1.bf16.msra.mxu0 0
      %693 = vmatprep.subr.bf16.mxu0 0
      %694 = vmatpush1.bf16.msra.mxu0 0
      %695 = vmatprep.subr.bf16.mxu0 0
      %696 = vmatpush1.bf16.msra.mxu0 0
      %697 = vmatprep.subr.bf16.mxu0 0
      %698 = vmatpush1.bf16.msra.mxu0 0
      %699 = vmatprep.subr.bf16.mxu0 0
      %700 = vmatpush1.bf16.msra.mxu0 0
      %701 = vmatprep.subr.bf16.mxu0 0
      %702 = vmatpush1.bf16.msra.mxu0 0
      %703 = vmatprep.subr.bf16.mxu0 0
      %704 = vmatpush1.bf16.msra.mxu0 0
      %705 = vmatprep.subr.bf16.mxu0 0
      %706 = vmatpush1.bf16.msra.mxu0 0
      %707 = vmatprep.subr.bf16.mxu0 0
      %708 = vmatpush1.bf16.msra.mxu0 0
      %709 = vmatprep.subr.bf16.mxu0 0
      %710 = vmatpush1.bf16.msra.mxu0 0
      %711 = vmatprep.subr.bf16.mxu0 0
      %712 = vmatpush1.bf16.msra.mxu0 0
      %713 = vmatprep.subr.bf16.mxu0 0
      %714 = vmatpush1.bf16.msra.mxu0 0
      %715 = vmatprep.subr.bf16.mxu0 0
      %716 = vmatpush1.bf16.msra.mxu0 0
      %717 = vmatprep.subr.bf16.mxu0 0
      %718 = vmatpush1.bf16.msra.mxu0 0
      %719 = vmatprep.subr.bf16.mxu0 0
      %720 = vmatpush1.bf16.msra.mxu0 0
      %721 = vmatprep.mubr.bf16.mxu0 0
      %722 = vmatmul.mubr.bf16.gmra.mrb[0].mxu0 %v675
      %v723 = vpop.f32.mrb[0].mxu0
      %v724 = vadd.f32 0.0, %v723
      %v725 = vpop.f32.mrb[0].mxu0
      %v726 = vpop.f32.mrb[0].mxu0
      %v727 = vadd.f32 0.0, %v726
      %v728 = vpop.f32.mrb[0].mxu0
      %729 = vmatprep.mubr.bf16.mxu0 0
      %730 = vmatmul.mubr.bf16.gmra.mrb[0].mxu0 %v678
      %v731 = vpop.f32.mrb[0].mxu0
      %v732 = vadd.f32 0.0, %v731
      %v733 = vpop.f32.mrb[0].mxu0
      %v734 = vpop.f32.mrb[0].mxu0
      %v735 = vadd.f32 0.0, %v734
      %v736 = vpop.f32.mrb[0].mxu0
      %737 = vmatprep.mubr.bf16.mxu0 0
      %738 = vmatmul.mubr.bf16.gmra.mrb[0].mxu0 %v681
      %v739 = vpop.f32.mrb[0].mxu0
      %v740 = vadd.f32 0.0, %v739
      %v741 = vpop.f32.mrb[0].mxu0
      %v742 = vpop.f32.mrb[0].mxu0
      %v743 = vadd.f32 0.0, %v742
      %v744 = vpop.f32.mrb[0].mxu0
      %745 = vmatprep.mubr.bf16.mxu0 0
      %746 = vmatmul.mubr.bf16.gmra.mrb[0].mxu0 %v684
      %v747 = vpop.f32.mrb[0].mxu0
      %v748 = vadd.f32 0.0, %v747
      %v749 = vpop.f32.mrb[0].mxu0
      %v750 = vpop.f32.mrb[0].mxu0
      %v751 = vadd.f32 0.0, %v750
      %v752 = vpop.f32.mrb[0].mxu0
      %753 = vdwg.mxu0
      %v754 = vadd.f32 %v654, %v724
      %v755 = vadd.f32 %v655, %v727
      %v756 = vadd.f32 %v656, %v732
      %v757 = vadd.f32 %v657, %v735
      %v758 = vadd.f32 %v658, %v740
      %v759 = vadd.f32 %v659, %v743
      %v760 = vadd.f32 %v660, %v748
      %v761 = vadd.f32 %v661, %v751
      %v762 = vrot.slane %v215, 2
      %v763 = vrot.slane %v216, 2
      %v764 = vsel %vm441, %v762, %v763
      %v766 = vpack.c.bf16 %v450, %v447
      %v767 = vpack.c.bf16 %v456, %v453
      %v768 = vpack.c.bf16 %v462, %v459
      %v769 = vpack.c.bf16 %v764, %v465
      %s770 = scalar_lea.vmem %s1, 10
      %v771 = vld [vmem:[%s770] sm:$0x3]
      %v773 = vsel %vm279, %v766, 0
      %v776 = vsel %vm279, %v767, 0
      %v779 = vsel %vm279, %v768, 0
      %v782 = vsel %vm279, %v769, 0
      %v785 = vsel %vm292, %v771, 0
      %787 = vmatprep.subr.bf16.mxu0 0
      %788 = vmatpush1.bf16.msra.mxu0 %v785
      %789 = vmatprep.subr.bf16.mxu0 0
      %790 = vmatpush1.bf16.msra.mxu0 0
      %791 = vmatprep.subr.bf16.mxu0 0
      %792 = vmatpush1.bf16.msra.mxu0 0
      %793 = vmatprep.subr.bf16.mxu0 0
      %794 = vmatpush1.bf16.msra.mxu0 0
      %795 = vmatprep.subr.bf16.mxu0 0
      %796 = vmatpush1.bf16.msra.mxu0 0
      %797 = vmatprep.subr.bf16.mxu0 0
      %798 = vmatpush1.bf16.msra.mxu0 0
      %799 = vmatprep.subr.bf16.mxu0 0
      %800 = vmatpush1.bf16.msra.mxu0 0
      %801 = vmatprep.subr.bf16.mxu0 0
      %802 = vmatpush1.bf16.msra.mxu0 0
      %803 = vmatprep.subr.bf16.mxu0 0
      %804 = vmatpush1.bf16.msra.mxu0 0
      %805 = vmatprep.subr.bf16.mxu0 0
      %806 = vmatpush1.bf16.msra.mxu0 0
      %807 = vmatprep.subr.bf16.mxu0 0
      %808 = vmatpush1.bf16.msra.mxu0 0
      %809 = vmatprep.subr.bf16.mxu0 0
      %810 = vmatpush1.bf16.msra.mxu0 0
      %811 = vmatprep.subr.bf16.mxu0 0
      %812 = vmatpush1.bf16.msra.mxu0 0
      %813 = vmatprep.subr.bf16.mxu0 0
      %814 = vmatpush1.bf16.msra.mxu0 0
      %815 = vmatprep.subr.bf16.mxu0 0
      %816 = vmatpush1.bf16.msra.mxu0 0
      %817 = vmatprep.subr.bf16.mxu0 0
      %818 = vmatpush1.bf16.msra.mxu0 0
      %819 = vmatprep.mubr.bf16.mxu0 0
      %820 = vmatmul.mubr.bf16.gmra.mrb[0].mxu0 %v773
      %v821 = vpop.f32.mrb[0].mxu0
      %v822 = vadd.f32 0.0, %v821
      %v823 = vpop.f32.mrb[0].mxu0
      %v824 = vpop.f32.mrb[0].mxu0
      %v825 = vadd.f32 0.0, %v824
      %v826 = vpop.f32.mrb[0].mxu0
      %827 = vmatprep.mubr.bf16.mxu0 0
      %828 = vmatmul.mubr.bf16.gmra.mrb[0].mxu0 %v776
      %v829 = vpop.f32.mrb[0].mxu0
      %v830 = vadd.f32 0.0, %v829
      %v831 = vpop.f32.mrb[0].mxu0
      %v832 = vpop.f32.mrb[0].mxu0
      %v833 = vadd.f32 0.0, %v832
      %v834 = vpop.f32.mrb[0].mxu0
      %835 = vmatprep.mubr.bf16.mxu0 0
      %836 = vmatmul.mubr.bf16.gmra.mrb[0].mxu0 %v779
      %v837 = vpop.f32.mrb[0].mxu0
      %v838 = vadd.f32 0.0, %v837
      %v839 = vpop.f32.mrb[0].mxu0
      %v840 = vpop.f32.mrb[0].mxu0
      %v841 = vadd.f32 0.0, %v840
      %v842 = vpop.f32.mrb[0].mxu0
      %843 = vmatprep.mubr.bf16.mxu0 0
      %844 = vmatmul.mubr.bf16.gmra.mrb[0].mxu0 %v782
      %v845 = vpop.f32.mrb[0].mxu0
      %v846 = vadd.f32 0.0, %v845
      %v847 = vpop.f32.mrb[0].mxu0
      %v848 = vpop.f32.mrb[0].mxu0
      %v849 = vadd.f32 0.0, %v848
      %v850 = vpop.f32.mrb[0].mxu0
      %851 = vdwg.mxu0
      %v852 = vadd.f32 %v754, %v822
      %v853 = vadd.f32 %v755, %v825
      %v854 = vadd.f32 %v756, %v830
      %v855 = vadd.f32 %v757, %v833
      %v856 = vadd.f32 %v758, %v838
      %v857 = vadd.f32 %v759, %v841
      %v858 = vadd.f32 %v760, %v846
      %v859 = vadd.f32 %v761, %v849
      %v860 = vpack.c.bf16 %v217, %v215
      %s861 = scalar_lea.vmem %s1, 12
      %v862 = vld [vmem:[%s861] sm:$0x3]
      %v864 = vsel %vm279, %v860, 0
      %v867 = vsel %vm292, %v862, 0
      %869 = vmatprep.subr.bf16.mxu0 0
      %870 = vmatpush1.bf16.msra.mxu0 %v867
      %871 = vmatprep.subr.bf16.mxu0 0
      %872 = vmatpush1.bf16.msra.mxu0 0
      %873 = vmatprep.subr.bf16.mxu0 0
      %874 = vmatpush1.bf16.msra.mxu0 0
      %875 = vmatprep.subr.bf16.mxu0 0
      %876 = vmatpush1.bf16.msra.mxu0 0
      %877 = vmatprep.subr.bf16.mxu0 0
      %878 = vmatpush1.bf16.msra.mxu0 0
      %879 = vmatprep.subr.bf16.mxu0 0
      %880 = vmatpush1.bf16.msra.mxu0 0
      %881 = vmatprep.subr.bf16.mxu0 0
      %882 = vmatpush1.bf16.msra.mxu0 0
      %883 = vmatprep.subr.bf16.mxu0 0
      %884 = vmatpush1.bf16.msra.mxu0 0
      %885 = vmatprep.subr.bf16.mxu0 0
      %886 = vmatpush1.bf16.msra.mxu0 0
      %887 = vmatprep.subr.bf16.mxu0 0
      %888 = vmatpush1.bf16.msra.mxu0 0
      %889 = vmatprep.subr.bf16.mxu0 0
      %890 = vmatpush1.bf16.msra.mxu0 0
      %891 = vmatprep.subr.bf16.mxu0 0
      %892 = vmatpush1.bf16.msra.mxu0 0
      %893 = vmatprep.subr.bf16.mxu0 0
      %894 = vmatpush1.bf16.msra.mxu0 0
      %895 = vmatprep.subr.bf16.mxu0 0
      %896 = vmatpush1.bf16.msra.mxu0 0
      %897 = vmatprep.subr.bf16.mxu0 0
      %898 = vmatpush1.bf16.msra.mxu0 0
      %899 = vmatprep.subr.bf16.mxu0 0
      %900 = vmatpush1.bf16.msra.mxu0 0
      %901 = vmatprep.mubr.bf16.mxu0 0
      %902 = vmatmul.mubr.bf16.gmra.mrb[0].mxu0 %v365
      %v903 = vpop.f32.mrb[0].mxu0
      %v904 = vadd.f32 0.0, %v903
      %v905 = vpop.f32.mrb[0].mxu0
      %v906 = vpop.f32.mrb[0].mxu0
      %v907 = vadd.f32 0.0, %v906
      %v908 = vpop.f32.mrb[0].mxu0
      %909 = vmatprep.mubr.bf16.mxu0 0
      %910 = vmatmul.mubr.bf16.gmra.mrb[0].mxu0 %v368
      %v911 = vpop.f32.mrb[0].mxu0
      %v912 = vadd.f32 0.0, %v911
      %v913 = vpop.f32.mrb[0].mxu0
      %v914 = vpop.f32.mrb[0].mxu0
      %v915 = vadd.f32 0.0, %v914
      %v916 = vpop.f32.mrb[0].mxu0
      %917 = vmatprep.mubr.bf16.mxu0 0
      %918 = vmatmul.mubr.bf16.gmra.mrb[0].mxu0 %v371
      %v919 = vpop.f32.mrb[0].mxu0
      %v920 = vadd.f32 0.0, %v919
      %v921 = vpop.f32.mrb[0].mxu0
      %v922 = vpop.f32.mrb[0].mxu0
      %v923 = vadd.f32 0.0, %v922
      %v924 = vpop.f32.mrb[0].mxu0
      %925 = vmatprep.mubr.bf16.mxu0 0
      %926 = vmatmul.mubr.bf16.gmra.mrb[0].mxu0 %v864
      %v927 = vpop.f32.mrb[0].mxu0
      %v928 = vadd.f32 0.0, %v927
      %v929 = vpop.f32.mrb[0].mxu0
      %v930 = vpop.f32.mrb[0].mxu0
      %v931 = vadd.f32 0.0, %v930
      %v932 = vpop.f32.mrb[0].mxu0
      %933 = vdwg.mxu0
      %v934 = vadd.f32 %v852, %v904
      %v935 = vadd.f32 %v853, %v907
      %v936 = vadd.f32 %v854, %v912
      %v937 = vadd.f32 %v855, %v915
      %v938 = vadd.f32 %v856, %v920
      %v939 = vadd.f32 %v857, %v923
      %v940 = vadd.f32 %v858, %v928
      %v941 = vadd.f32 %v859, %v931
      %v944 = vrot.slane %v217, 1
      %v945 = vrot.slane %v218, 1
      %v946 = vsel %vm240, %v944, %v945
      %v948 = vpack.c.bf16 %v946, %v666
      %s949 = scalar_lea.vmem %s1, 14
      %v950 = vld [vmem:[%s949] sm:$0x3]
      %v952 = vsel %vm279, %v948, 0
      %v955 = vsel %vm292, %v950, 0
      %957 = vmatprep.subr.bf16.mxu0 0
      %958 = vmatpush1.bf16.msra.mxu0 %v955
      %959 = vmatprep.subr.bf16.mxu0 0
      %960 = vmatpush1.bf16.msra.mxu0 0
      %961 = vmatprep.subr.bf16.mxu0 0
      %962 = vmatpush1.bf16.msra.mxu0 0
      %963 = vmatprep.subr.bf16.mxu0 0
      %964 = vmatpush1.bf16.msra.mxu0 0
      %965 = vmatprep.subr.bf16.mxu0 0
      %966 = vmatpush1.bf16.msra.mxu0 0
      %967 = vmatprep.subr.bf16.mxu0 0
      %968 = vmatpush1.bf16.msra.mxu0 0
      %969 = vmatprep.subr.bf16.mxu0 0
      %970 = vmatpush1.bf16.msra.mxu0 0
      %971 = vmatprep.subr.bf16.mxu0 0
      %972 = vmatpush1.bf16.msra.mxu0 0
      %973 = vmatprep.subr.bf16.mxu0 0
      %974 = vmatpush1.bf16.msra.mxu0 0
      %975 = vmatprep.subr.bf16.mxu0 0
      %976 = vmatpush1.bf16.msra.mxu0 0
      %977 = vmatprep.subr.bf16.mxu0 0
      %978 = vmatpush1.bf16.msra.mxu0 0
      %979 = vmatprep.subr.bf16.mxu0 0
      %980 = vmatpush1.bf16.msra.mxu0 0
      %981 = vmatprep.subr.bf16.mxu0 0
      %982 = vmatpush1.bf16.msra.mxu0 0
      %983 = vmatprep.subr.bf16.mxu0 0
      %984 = vmatpush1.bf16.msra.mxu0 0
      %985 = vmatprep.subr.bf16.mxu0 0
      %986 = vmatpush1.bf16.msra.mxu0 0
      %987 = vmatprep.subr.bf16.mxu0 0
      %988 = vmatpush1.bf16.msra.mxu0 0
      %989 = vmatprep.mubr.bf16.mxu0 0
      %990 = vmatmul.mubr.bf16.gmra.mrb[0].mxu0 %v284
      %v991 = vpop.f32.mrb[0].mxu0
      %v992 = vadd.f32 0.0, %v991
      %v993 = vpop.f32.mrb[0].mxu0
      %v994 = vpop.f32.mrb[0].mxu0
      %v995 = vadd.f32 0.0, %v994
      %v996 = vpop.f32.mrb[0].mxu0
      %997 = vmatprep.mubr.bf16.mxu0 0
      %998 = vmatmul.mubr.bf16.gmra.mrb[0].mxu0 %v287
      %v999 = vpop.f32.mrb[0].mxu0
      %v1000 = vadd.f32 0.0, %v999
      %v1001 = vpop.f32.mrb[0].mxu0
      %v1002 = vpop.f32.mrb[0].mxu0
      %v1003 = vadd.f32 0.0, %v1002
      %v1004 = vpop.f32.mrb[0].mxu0
      %1005 = vmatprep.mubr.bf16.mxu0 0
      %1006 = vmatmul.mubr.bf16.gmra.mrb[0].mxu0 %v290
      %v1007 = vpop.f32.mrb[0].mxu0
      %v1008 = vadd.f32 0.0, %v1007
      %v1009 = vpop.f32.mrb[0].mxu0
      %v1010 = vpop.f32.mrb[0].mxu0
      %v1011 = vadd.f32 0.0, %v1010
      %v1012 = vpop.f32.mrb[0].mxu0
      %1013 = vmatprep.mubr.bf16.mxu0 0
      %1014 = vmatmul.mubr.bf16.gmra.mrb[0].mxu0 %v952
      %v1015 = vpop.f32.mrb[0].mxu0
      %v1016 = vadd.f32 0.0, %v1015
      %v1017 = vpop.f32.mrb[0].mxu0
      %v1018 = vpop.f32.mrb[0].mxu0
      %v1019 = vadd.f32 0.0, %v1018
      %v1020 = vpop.f32.mrb[0].mxu0
      %1021 = vdwg.mxu0
      %v1022 = vadd.f32 %v934, %v992
      %v1023 = vadd.f32 %v935, %v995
      %v1024 = vadd.f32 %v936, %v1000
      %v1025 = vadd.f32 %v937, %v1003
      %v1026 = vadd.f32 %v938, %v1008
      %v1027 = vadd.f32 %v939, %v1011
      %v1028 = vadd.f32 %v940, %v1016
      %v1029 = vadd.f32 %v941, %v1019
      %v1030 = vrot.slane %v217, 2
      %v1031 = vrot.slane %v218, 2
      %v1032 = vsel %vm441, %v1030, %v1031
      %v1034 = vpack.c.bf16 %v1032, %v764
      %s1035 = scalar_lea.vmem %s1, 16
      %v1036 = vld [vmem:[%s1035] sm:$0x3]
      %v1038 = vsel %vm279, %v1034, 0
      %v1041 = vsel %vm292, %v1036, 0
      %1043 = vmatprep.subr.bf16.mxu0 0
      %1044 = vmatpush1.bf16.msra.mxu0 %v1041
      %1045 = vmatprep.subr.bf16.mxu0 0
      %1046 = vmatpush1.bf16.msra.mxu0 0
      %1047 = vmatprep.subr.bf16.mxu0 0
      %1048 = vmatpush1.bf16.msra.mxu0 0
      %1049 = vmatprep.subr.bf16.mxu0 0
      %1050 = vmatpush1.bf16.msra.mxu0 0
      %1051 = vmatprep.subr.bf16.mxu0 0
      %1052 = vmatpush1.bf16.msra.mxu0 0
      %1053 = vmatprep.subr.bf16.mxu0 0
      %1054 = vmatpush1.bf16.msra.mxu0 0
      %1055 = vmatprep.subr.bf16.mxu0 0
      %1056 = vmatpush1.bf16.msra.mxu0 0
      %1057 = vmatprep.subr.bf16.mxu0 0
      %1058 = vmatpush1.bf16.msra.mxu0 0
      %1059 = vmatprep.subr.bf16.mxu0 0
      %1060 = vmatpush1.bf16.msra.mxu0 0
      %1061 = vmatprep.subr.bf16.mxu0 0
      %1062 = vmatpush1.bf16.msra.mxu0 0
      %1063 = vmatprep.subr.bf16.mxu0 0
      %1064 = vmatpush1.bf16.msra.mxu0 0
      %1065 = vmatprep.subr.bf16.mxu0 0
      %1066 = vmatpush1.bf16.msra.mxu0 0
      %1067 = vmatprep.subr.bf16.mxu0 0
      %1068 = vmatpush1.bf16.msra.mxu0 0
      %1069 = vmatprep.subr.bf16.mxu0 0
      %1070 = vmatpush1.bf16.msra.mxu0 0
      %1071 = vmatprep.subr.bf16.mxu0 0
      %1072 = vmatpush1.bf16.msra.mxu0 0
      %1073 = vmatprep.subr.bf16.mxu0 0
      %1074 = vmatpush1.bf16.msra.mxu0 0
      %1075 = vmatprep.mubr.bf16.mxu0 0
      %1076 = vmatmul.mubr.bf16.gmra.mrb[0].mxu0 %v484
      %v1077 = vpop.f32.mrb[0].mxu0
      %v1078 = vadd.f32 0.0, %v1077
      %v1079 = vpop.f32.mrb[0].mxu0
      %v1080 = vpop.f32.mrb[0].mxu0
      %v1081 = vadd.f32 0.0, %v1080
      %v1082 = vpop.f32.mrb[0].mxu0
      %1083 = vmatprep.mubr.bf16.mxu0 0
      %1084 = vmatmul.mubr.bf16.gmra.mrb[0].mxu0 %v487
      %v1085 = vpop.f32.mrb[0].mxu0
      %v1086 = vadd.f32 0.0, %v1085
      %v1087 = vpop.f32.mrb[0].mxu0
      %v1088 = vpop.f32.mrb[0].mxu0
      %v1089 = vadd.f32 0.0, %v1088
      %v1090 = vpop.f32.mrb[0].mxu0
      %1091 = vmatprep.mubr.bf16.mxu0 0
      %1092 = vmatmul.mubr.bf16.gmra.mrb[0].mxu0 %v490
      %v1093 = vpop.f32.mrb[0].mxu0
      %v1094 = vadd.f32 0.0, %v1093
      %v1095 = vpop.f32.mrb[0].mxu0
      %v1096 = vpop.f32.mrb[0].mxu0
      %v1097 = vadd.f32 0.0, %v1096
      %v1098 = vpop.f32.mrb[0].mxu0
      %1099 = vmatprep.mubr.bf16.mxu0 0
      %1100 = vmatmul.mubr.bf16.gmra.mrb[0].mxu0 %v1038
      %v1101 = vpop.f32.mrb[0].mxu0
      %v1102 = vadd.f32 0.0, %v1101
      %v1103 = vpop.f32.mrb[0].mxu0
      %v1104 = vpop.f32.mrb[0].mxu0
      %v1105 = vadd.f32 0.0, %v1104
      %v1106 = vpop.f32.mrb[0].mxu0
      %1107 = vdwg.mxu0
      %v1108 = vadd.f32 %v1022, %v1078
      %v1109 = vadd.f32 %v1023, %v1081
      %v1110 = vadd.f32 %v1024, %v1086
      %v1111 = vadd.f32 %v1025, %v1089
      %v1112 = vadd.f32 %v1026, %v1094
      %v1113 = vadd.f32 %v1027, %v1097
      %v1114 = vadd.f32 %v1028, %v1102
      %v1115 = vadd.f32 %v1029, %v1105
      %vm1116 = vcmask 64512
      %v1117 = vsel %vm1116, %v1108, 0.0
      %v1118 = vsel %vm1116, %v1109, 0.0
      %v1119 = vadd.f32 %v1117, %v1118
      %v1120 = vsel %vm1116, %v1110, 0.0
      %v1121 = vadd.f32 %v1119, %v1120
      %v1122 = vsel %vm1116, %v1111, 0.0
      %v1123 = vadd.f32 %v1121, %v1122
      %v1124 = vsel %vm1116, %v1112, 0.0
      %v1125 = vadd.f32 %v1123, %v1124
      %v1126 = vsel %vm1116, %v1113, 0.0
      %v1127 = vadd.f32 %v1125, %v1126
      %v1128 = vsel %vm1116, %v1114, 0.0
      %v1129 = vadd.f32 %v1127, %v1128
      %v1130 = vsel %vm1116, %v1115, 0.0
      %v1131 = vadd.f32 %v1129, %v1130
      %1132 = vadd.xlane.f32.xlu0 %v1131
      %v1133 = vpop.xlane.xlu0 %1132
      %v1134 = vrot.slane %v1133, 4
      %v1135 = vadd.f32 %v1133, %v1134
      %v1136 = vrot.slane %v1135, 2
      %v1137 = vadd.f32 %v1135, %v1136
      %v1138 = vrot.slane %v1137, 1
      %v1139 = vadd.f32 %v1137, %v1138
      %s1140 = vtos %v1139
      %v1141 = vstv %s1140
      %v1142 = vmul.f32 %v1108, %v1108
      %v1143 = vmul.f32 %v1109, %v1109
      %v1144 = vmul.f32 %v1110, %v1110
      %v1145 = vmul.f32 %v1111, %v1111
      %v1146 = vmul.f32 %v1112, %v1112
      %v1147 = vmul.f32 %v1113, %v1113
      %v1148 = vmul.f32 %v1114, %v1114
      %v1149 = vmul.f32 %v1115, %v1115
      %v1150 = vsel %vm1116, %v1142, 0.0
      %v1151 = vsel %vm1116, %v1143, 0.0
      %v1152 = vadd.f32 %v1150, %v1151
      %v1153 = vsel %vm1116, %v1144, 0.0
      %v1154 = vadd.f32 %v1152, %v1153
      %v1155 = vsel %vm1116, %v1145, 0.0
      %v1156 = vadd.f32 %v1154, %v1155
      %v1157 = vsel %vm1116, %v1146, 0.0
      %v1158 = vadd.f32 %v1156, %v1157
      %v1159 = vsel %vm1116, %v1147, 0.0
      %v1160 = vadd.f32 %v1158, %v1159
      %v1161 = vsel %vm1116, %v1148, 0.0
      %v1162 = vadd.f32 %v1160, %v1161
      %v1163 = vsel %vm1116, %v1149, 0.0
      %v1164 = vadd.f32 %v1162, %v1163
      %1165 = vadd.xlane.f32.xlu0 %v1164
      %v1166 = vpop.xlane.xlu0 %1165
      %v1167 = vrot.slane %v1166, 4
      %v1168 = vadd.f32 %v1166, %v1167
      %v1169 = vrot.slane %v1168, 2
      %v1170 = vadd.f32 %v1168, %v1169
      %v1171 = vrot.slane %v1170, 1
      %v1172 = vadd.f32 %v1170, %v1171
      %s1173 = vtos %v1172
      %v1174 = vstv %s1173
      %v1175 = vmul.f32 %v1141, 0.001953125
      %v1176 = vmul.f32 %v1174, 0.001953125
      %v1177 = vmul.f32 %v1175, %v1175
      %v1178 = vsub.f32 %v1176, %v1177
      %v1179 = vmax.f32 %v1178, 0.0
      %v1180 = vsub.f32 %v1108, %v1175
      %v1181 = vsub.f32 %v1109, %v1175
      %v1182 = vsub.f32 %v1110, %v1175
      %v1183 = vsub.f32 %v1111, %v1175
      %v1184 = vsub.f32 %v1112, %v1175
      %v1185 = vsub.f32 %v1113, %v1175
      %v1186 = vsub.f32 %v1114, %v1175
      %v1187 = vsub.f32 %v1115, %v1175
      %v1188 = vadd.f32 %v1179, 1e-05
      %v1189 = vrsqrt.pop %v1188
      %v1190 = vmul.f32 %v1180, %v1189
      %v1191 = vmul.f32 %v1181, %v1189
      %v1192 = vmul.f32 %v1182, %v1189
      %v1193 = vmul.f32 %v1183, %v1189
      %v1194 = vmul.f32 %v1184, %v1189
      %v1195 = vmul.f32 %v1185, %v1189
      %v1196 = vmul.f32 %v1186, %v1189
      %v1197 = vmul.f32 %v1187, %v1189
      %v1198 = vld [vmem:[%s2] sm:$0x1]
      %v1200 = vlaneseq
      %v1201 = vshrl.u32 %v1200, 7
      %v1202 = vsub.s32 0, %v1201
      %v1203 = vrot.slane %v1198, %v1202
      %v1205 = vmul.f32 %v1190, %v1203
      %v1206 = vmul.f32 %v1191, %v1203
      %v1207 = vmul.f32 %v1192, %v1203
      %v1208 = vmul.f32 %v1193, %v1203
      %v1209 = vmul.f32 %v1194, %v1203
      %v1210 = vmul.f32 %v1195, %v1203
      %v1211 = vmul.f32 %v1196, %v1203
      %v1212 = vmul.f32 %v1197, %v1203
      %v1213 = vld [vmem:[%s3] sm:$0x1]
      %v1215 = vlaneseq
      %v1216 = vshrl.u32 %v1215, 7
      %v1217 = vsub.s32 0, %v1216
      %v1218 = vrot.slane %v1213, %v1217
      %v1220 = vadd.f32 %v1205, %v1218
      %v1221 = vadd.f32 %v1206, %v1218
      %v1222 = vadd.f32 %v1207, %v1218
      %v1223 = vadd.f32 %v1208, %v1218
      %v1224 = vadd.f32 %v1209, %v1218
      %v1225 = vadd.f32 %v1210, %v1218
      %v1226 = vadd.f32 %v1211, %v1218
      %v1227 = vadd.f32 %v1212, %v1218
      %v1228 = vmul.f32 %v1220, 0.5
      %v1229 = vmul.f32 %v1221, 0.5
      %v1230 = vmul.f32 %v1222, 0.5
      %v1231 = vmul.f32 %v1223, 0.5
      %v1232 = vmul.f32 %v1224, 0.5
      %v1233 = vmul.f32 %v1225, 0.5
      %v1234 = vmul.f32 %v1226, 0.5
      %v1235 = vmul.f32 %v1227, 0.5
      %v1236 = vmul.f32 %v1220, 0.70710677
      %v1237 = vmul.f32 %v1221, 0.70710677
      %v1238 = vmul.f32 %v1222, 0.70710677
      %v1239 = vmul.f32 %v1223, 0.70710677
      %v1240 = vmul.f32 %v1224, 0.70710677
      %v1241 = vmul.f32 %v1225, 0.70710677
      %v1242 = vmul.f32 %v1226, 0.70710677
      %v1243 = vmul.f32 %v1227, 0.70710677
      %v1244 = verf.f32.pop %v1236
      %v1245 = verf.f32.pop %v1237
      %v1246 = verf.f32.pop %v1238
      %v1247 = verf.f32.pop %v1239
      %v1248 = verf.f32.pop %v1240
      %v1249 = verf.f32.pop %v1241
      %v1250 = verf.f32.pop %v1242
      %v1251 = verf.f32.pop %v1243
      %v1252 = vadd.f32 %v1244, 1.0
      %v1253 = vadd.f32 %v1245, 1.0
      %v1254 = vadd.f32 %v1246, 1.0
      %v1255 = vadd.f32 %v1247, 1.0
      %v1256 = vadd.f32 %v1248, 1.0
      %v1257 = vadd.f32 %v1249, 1.0
      %v1258 = vadd.f32 %v1250, 1.0
      %v1259 = vadd.f32 %v1251, 1.0
      %v1260 = vmul.f32 %v1228, %v1252
      %v1261 = vmul.f32 %v1229, %v1253
      %v1262 = vmul.f32 %v1230, %v1254
      %v1263 = vmul.f32 %v1231, %v1255
      %v1264 = vmul.f32 %v1232, %v1256
      %v1265 = vmul.f32 %v1233, %v1257
      %v1266 = vmul.f32 %v1234, %v1258
      %v1267 = vmul.f32 %v1235, %v1259
      %1268 = vst.msk [vmem:[%s197] sm:$0xff] %vm1116, %v1260
      %1269 = vst.msk [vmem:[%s197 + $0x8] sm:$0xff] %vm1116, %v1261
      %1270 = vst.msk [vmem:[%s197 + $0x10] sm:$0xff] %vm1116, %v1262
      %1271 = vst.msk [vmem:[%s197 + $0x18] sm:$0xff] %vm1116, %v1263
      %1272 = vst.msk [vmem:[%s197 + $0x20] sm:$0xff] %vm1116, %v1264
      %1273 = vst.msk [vmem:[%s197 + $0x28] sm:$0xff] %vm1116, %v1265
      %1274 = vst.msk [vmem:[%s197 + $0x30] sm:$0xff] %vm1116, %v1266
      %1275 = vst.msk [vmem:[%s197 + $0x38] sm:$0xff] %vm1116, %v1267
      %p1276 = scmp.lt.s32.totalorder %s15, 1
      %s1277 = scalar_select %p1276, %s15, 1
      %s1278 = smul.addr %s1277, 8
      %s1279 = smul.addr %s1278, 8
      %s1280 = scalar_lea.vmem %s4, %s1279
      // Predicated region
      $region37: #{down_forward.10} parent=35 // pred_check
        %p1281 = pneg %p122
      $region38: #{down_forward.10} parent=35 // pred_check_branch
        %1283 = sbr.rel (%p1281) target = $region40
      $region39: #{down_forward.10} parent=35 // pred_region
        _
      $region40: #{down_forward.10} parent=35 // pred_fallthru
        _
    $region36: #{down_forward.10} parent=5 // pred_fallthru
      _
    %p1284 = scmp.le.s32.totalorder 2, %s10
    // Predicated region
    $region41: #{down_forward.10} parent=5 // pred_check
      %p1285 = pneg %p1284
    $region42: #{down_forward.10} parent=5 // pred_check_branch
      %1287 = sbr.rel (%p1285) target = $region44
    $region43: #{down_forward.10} parent=5 // pred_region
      %s1288 = ssub.s32 %s10, 2
      // Predicated region
      $region45: #{down_forward.10} parent=43 // pred_check
        %p1289 = pneg %p128
      $region46: #{down_forward.10} parent=43 // pred_check_branch
        %1291 = sbr.rel (%p1289) target = $region48
      $region47: #{down_forward.10} parent=43 // pred_region
        %p1292 = scmp.lt.s32.totalorder %s16, 1
        %s1293 = scalar_select %p1292, %s16, 1
        %s1294 = smul.addr %s1293, 8
        %s1295 = smul.addr %s1294, 8
        %s1296 = scalar_lea.vmem %s4, %s1295
      $region48: #{down_forward.10} parent=43 // pred_fallthru
        _
    $region44: #{down_forward.10} parent=5 // pred_fallthru
      _
  $region6: #{down_forward.10} parent=0 // loop_footer
    %s14 = sadd.s32 1, %s10
  $region7: #{down_forward.10} parent=0 // loop_footer_branch
    %9 = sbr.rel target = $region3
  $region8: #{down_forward.10} parent=0 // loop_exit
    _

// kernel: down_forward.8
$region0: #{down_forward.8}
  #allocation0 [shape = 'u32[]', space=smem, size = 0x4, offset = 0x4, fixed_abs, tag = 'smem constant byte address 0x4 - core index']
  #allocation1 [shape = 'u32[144,128]{1,0:T(1,128)}', space=vmem, size = 0x12000, scoped, tag = 'internal scratch']
  %s0 = inlined_call_operand.vmem [shape: f32[2,10,10,4], index: 0, kind: input, shape index: {}]
  %s1 = inlined_call_operand.vmem [shape: bf16[9,4,4], index: 1, kind: input, shape index: {}]
  %s2 = inlined_call_operand.vmem [shape: f32[1,4], index: 2, kind: input, shape index: {}]
  %s3 = inlined_call_operand.vmem [shape: f32[1,4], index: 3, kind: input, shape index: {}]
  %s4 = inlined_call_operand.vmem [shape: f32[2,8,8,4], index: 4, kind: input, shape index: {}]
  %s5 = inlined_call_operand.vmem [shape: f32[2,8,8,4], index: 5, kind: output, shape index: {}]
  %s6 = sld [smem:[#allocation0]]
  $region53: #{down_forward.8} parent=0
    _
  %s8 = ssub.s32 1, %s6
  %s9 = scalar_select 0, %s8, %s6
  loop: start=0, step=1, limit=4
  $region2: #{down_forward.8} parent=0 // loop_pre_header
    _
  $region3: #{down_forward.8} parent=0 // loop_header
    %s11 = sphi 0, %s15
    %p12 = scmp.ge.s32.totalorder %s11, 4
    %s21 = sphi 0, %s23
    %s24 = sphi 0, %s21
    %s25 = sphi 0, %s24
    %s41 = sphi 0, %s25
    %s45 = sphi 0, %s45
    %s47 = sphi 0, %s45
    %s48 = sphi 0, %s47
    %s62 = sphi 0, %s48
    %s66 = sphi 0, %s66
    %s68 = sphi 0, %s66
    %s69 = sphi 0, %s68
    %s83 = sphi 0, %s69
    %s87 = sphi 0, %s87
    %s89 = sphi 0, %s87
    %s90 = sphi 0, %s89
    %s104 = sphi 0, %s90
    %s110 = sphi 0, %s112
    %s113 = sphi 0, %s110
    %s114 = sphi 0, %s113
    %s130 = sphi 0, %s114
    %s136 = sphi 0, %s138
    %s139 = sphi 0, %s136
    %s140 = sphi 0, %s139
    %s156 = sphi 0, %s140
  $region4: #{down_forward.8} parent=0 // loop_header_branch
    %14 = sbr.rel (%p12) target = $region8
  $region5: #{down_forward.8} parent=0 // loop_body
    %s16 = ssub.s32 %s11, 1
    %s17 = ssub.s32 %s11, 2
    %s18 = sadd.s32 %s11, 1
    %s19 = ssub.s32 %s11, %s18
    %p20 = scmp.eq.s32.totalorder %s19, 0
    %s22 = sadd.s32 %s21, 1
    %s23 = scalar_select %p20, %s21, %s22
    %p26 = pneg %p20
    %p27 = scmp.eq.s32.totalorder %s11, 1
    %p28 = por %p26, %p27
    %p29 = scmp.ne.s32.totalorder %s21, %s24
    %p30 = scmp.eq.s32.totalorder %s11, 0
    %p31 = por %p29, %p30
    %p32 = scmp.ne.s32.totalorder %s21, %s24
    %p33 = scmp.eq.s32.totalorder %s16, 1
    %p34 = por %p32, %p33
    %p35 = scmp.ne.s32.totalorder %s24, %s25
    %p36 = scmp.eq.s32.totalorder %s16, 0
    %p37 = por %p35, %p36
    %p38 = scmp.ne.s32.totalorder %s24, %s25
    %p39 = scmp.eq.s32.totalorder %s17, 1
    %p40 = por %p38, %p39
    %p42 = scmp.ne.s32.totalorder %s25, %s41
    %p43 = scmp.eq.s32.totalorder %s17, 0
    %p44 = por %p42, %p43
    %s46 = sadd.s32 %s45, 1
    %p49 = scmp.eq.s32.totalorder %s11, 1
    %p50 = scmp.ne.s32.totalorder %s45, %s47
    %p51 = scmp.eq.s32.totalorder %s11, 0
    %p52 = por %p50, %p51
    %p53 = scmp.ne.s32.totalorder %s45, %s47
    %p54 = scmp.eq.s32.totalorder %s16, 1
    %p55 = por %p53, %p54
    %p56 = scmp.ne.s32.totalorder %s47, %s48
    %p57 = scmp.eq.s32.totalorder %s16, 0
    %p58 = por %p56, %p57
    %p59 = scmp.ne.s32.totalorder %s47, %s48
    %p60 = scmp.eq.s32.totalorder %s17, 1
    %p61 = por %p59, %p60
    %p63 = scmp.ne.s32.totalorder %s48, %s62
    %p64 = scmp.eq.s32.totalorder %s17, 0
    %p65 = por %p63, %p64
    %s67 = sadd.s32 %s66, 1
    %p70 = scmp.eq.s32.totalorder %s11, 1
    %p71 = scmp.ne.s32.totalorder %s66, %s68
    %p72 = scmp.eq.s32.totalorder %s11, 0
    %p73 = por %p71, %p72
    %p74 = scmp.ne.s32.totalorder %s66, %s68
    %p75 = scmp.eq.s32.totalorder %s16, 1
    %p76 = por %p74, %p75
    %p77 = scmp.ne.s32.totalorder %s68, %s69
    %p78 = scmp.eq.s32.totalorder %s16, 0
    %p79 = por %p77, %p78
    %p80 = scmp.ne.s32.totalorder %s68, %s69
    %p81 = scmp.eq.s32.totalorder %s17, 1
    %p82 = por %p80, %p81
    %p84 = scmp.ne.s32.totalorder %s69, %s83
    %p85 = scmp.eq.s32.totalorder %s17, 0
    %p86 = por %p84, %p85
    %s88 = sadd.s32 %s87, 1
    %p91 = scmp.eq.s32.totalorder %s11, 1
    %p92 = scmp.ne.s32.totalorder %s87, %s89
    %p93 = scmp.eq.s32.totalorder %s11, 0
    %p94 = por %p92, %p93
    %p95 = scmp.ne.s32.totalorder %s87, %s89
    %p96 = scmp.eq.s32.totalorder %s16, 1
    %p97 = por %p95, %p96
    %p98 = scmp.ne.s32.totalorder %s89, %s90
    %p99 = scmp.eq.s32.totalorder %s16, 0
    %p100 = por %p98, %p99
    %p101 = scmp.ne.s32.totalorder %s89, %s90
    %p102 = scmp.eq.s32.totalorder %s17, 1
    %p103 = por %p101, %p102
    %p105 = scmp.ne.s32.totalorder %s90, %s104
    %p106 = scmp.eq.s32.totalorder %s17, 0
    %p107 = por %p105, %p106
    %s108 = ssub.s32 %s11, %s18
    %p109 = scmp.eq.s32.totalorder %s108, 0
    %s111 = sadd.s32 %s110, 1
    %s112 = scalar_select %p109, %s110, %s111
    %p115 = pneg %p109
    %p116 = scmp.eq.s32.totalorder %s11, 1
    %p117 = por %p115, %p116
    %p118 = scmp.ne.s32.totalorder %s110, %s113
    %p119 = scmp.eq.s32.totalorder %s11, 0
    %p120 = por %p118, %p119
    %p121 = scmp.ne.s32.totalorder %s110, %s113
    %p122 = scmp.eq.s32.totalorder %s16, 1
    %p123 = por %p121, %p122
    %p124 = scmp.ne.s32.totalorder %s113, %s114
    %p125 = scmp.eq.s32.totalorder %s16, 0
    %p126 = por %p124, %p125
    %p127 = scmp.ne.s32.totalorder %s113, %s114
    %p128 = scmp.eq.s32.totalorder %s17, 1
    %p129 = por %p127, %p128
    %p131 = scmp.ne.s32.totalorder %s114, %s130
    %p132 = scmp.eq.s32.totalorder %s17, 0
    %p133 = por %p131, %p132
    %s134 = ssub.s32 %s11, %s18
    %p135 = scmp.eq.s32.totalorder %s134, 0
    %s137 = sadd.s32 %s136, 1
    %s138 = scalar_select %p135, %s136, %s137
    %p141 = pneg %p135
    %p142 = scmp.eq.s32.totalorder %s11, 1
    %p143 = por %p141, %p142
    %p144 = scmp.ne.s32.totalorder %s136, %s139
    %p145 = scmp.eq.s32.totalorder %s11, 0
    %p146 = por %p144, %p145
    %p147 = scmp.ne.s32.totalorder %s136, %s139
    %p148 = scmp.eq.s32.totalorder %s16, 1
    %p149 = por %p147, %p148
    %p150 = scmp.ne.s32.totalorder %s139, %s140
    %p151 = scmp.eq.s32.totalorder %s16, 0
    %p152 = por %p150, %p151
    %p153 = scmp.ne.s32.totalorder %s139, %s140
    %p154 = scmp.eq.s32.totalorder %s17, 1
    %p155 = por %p153, %p154
    %p157 = scmp.ne.s32.totalorder %s140, %s156
    %p158 = scmp.eq.s32.totalorder %s17, 0
    %p159 = por %p157, %p158
    %p160 = scmp.le.s32.totalorder 1, %s11
    %p161 = scmp.lt.s32.totalorder %s11, 3
    %p162 = pnand %p160, %p161
    %p163 = pneg %p162
    // Predicated region
    $region9: #{down_forward.8} parent=5 // pred_check
      _
    $region10: #{down_forward.8} parent=5 // pred_check_branch
      %165 = sbr.rel (%p162) target = $region12
    $region11: #{down_forward.8} parent=5 // pred_region
      %s166 = ssub.s32 %s11, 1
      // Predicated region
      $region13: #{down_forward.8} parent=11 // pred_check
        %p167 = pneg %p58
      $region14: #{down_forward.8} parent=11 // pred_check_branch
        %169 = sbr.rel (%p167) target = $region16
      $region15: #{down_forward.8} parent=11 // pred_region
        _
      $region16: #{down_forward.8} parent=11 // pred_fallthru
        _
      // Predicated region
      $region17: #{down_forward.8} parent=11 // pred_check
        %p170 = pneg %p79
      $region18: #{down_forward.8} parent=11 // pred_check_branch
        %172 = sbr.rel (%p170) target = $region20
      $region19: #{down_forward.8} parent=11 // pred_region
        _
      $region20: #{down_forward.8} parent=11 // pred_fallthru
        _
      // Predicated region
      $region21: #{down_forward.8} parent=11 // pred_check
        %p173 = pneg %p100
      $region22: #{down_forward.8} parent=11 // pred_check_branch
        %175 = sbr.rel (%p173) target = $region24
      $region23: #{down_forward.8} parent=11 // pred_region
        _
      $region24: #{down_forward.8} parent=11 // pred_fallthru
        _
    $region12: #{down_forward.8} parent=5 // pred_fallthru
      _
    %p176 = scmp.lt.s32.totalorder %s11, 2
    // Predicated region
    $region25: #{down_forward.8} parent=5 // pred_check
      %p177 = pneg %p176
    $region26: #{down_forward.8} parent=5 // pred_check_branch
      %179 = sbr.rel (%p177) target = $region28
    $region27: #{down_forward.8} parent=5 // pred_region
      // Predicated region
      $region29: #{down_forward.8} parent=27 // pred_check
        %p180 = pneg %p31
      $region30: #{down_forward.8} parent=27 // pred_check_branch
        %182 = sbr.rel (%p180) target = $region32
      $region31: #{down_forward.8} parent=27 // pred_region
        %p183 = scmp.lt.s32.totalorder %s11, 1
        %s184 = scalar_select %p183, %s11, 1
        %s185 = smul.addr %s184, 20
        %s186 = smul.addr %s185, 8
        %s187 = scalar_lea.vmem %s0, %s186
      $region32: #{down_forward.8} parent=27 // pred_fallthru
        _
      // Predicated region
      $region33: #{down_forward.8} parent=27 // pred_check
        %p188 = pneg %p120
      $region34: #{down_forward.8} parent=27 // pred_check_branch
        %190 = sbr.rel (%p188) target = $region36
      $region35: #{down_forward.8} parent=27 // pred_region
        %p191 = scmp.lt.s32.totalorder %s11, 1
        %s192 = scalar_select %p191, %s11, 1
        %s193 = smul.addr %s192, 8
        %s194 = smul.addr %s193, 8
        %s195 = scalar_lea.vmem %s4, %s194
      $region36: #{down_forward.8} parent=27 // pred_fallthru
        _
    $region28: #{down_forward.8} parent=5 // pred_fallthru
      _
    %p196 = scmp.le.s32.totalorder 1, %s11
    %p197 = scmp.lt.s32.totalorder %s11, 3
    %p198 = pnand %p196, %p197
    %p199 = pneg %p198
    // Predicated region
    $region37: #{down_forward.8} parent=5 // pred_check
      _
    $region38: #{down_forward.8} parent=5 // pred_check_branch
      %201 = sbr.rel (%p198) target = $region40
    $region39: #{down_forward.8} parent=5 // pred_region
      %s202 = ssub.s32 %s11, 1
      %p203 = scmp.lt.s32.totalorder %s16, 1
      %s204 = scalar_select %p203, %s16, 1
      %s205 = smul.addr %s204, 20
      %s206 = smul.addr %s205, 8
      %s207 = scalar_lea.vmem %s0, %s206
      %p208 = pneg %p37
      %p209 = pneg %p34
      %p210 = pneg %p58
      %p211 = pneg %p55
      %p212 = pneg %p79
      %p213 = pneg %p76
      %p214 = pneg %p100
      %p215 = pneg %p97
      %p216 = scmp.lt.s32.totalorder %s16, 1
      %s217 = scalar_select %p216, %s16, 1
      %s218 = smul.addr %s217, 8
      %s219 = smul.addr %s218, 8
      %s220 = scalar_lea.vmem %s4, %s219
      %p221 = pneg %p126
      %p222 = pneg %p123
      %p223 = pneg %p152
      %p224 = pneg %p149
      %p225 = scmp.lt.s32.totalorder %s16, 1
      %s226 = scalar_select %p225, %s16, 1
      %s227 = smul.addr %s226, 8
      %s228 = smul.addr %s227, 8
      %s229 = scalar_lea.vmem %s5, %s228
      %p230 = scmp.lt.s32.totalorder %s16, 1
      %s231 = scalar_select %p230, %s16, 1
      %s232 = smul.addr %s231, 20
      %s233 = smul.addr %s232, 8
      %s234 = scalar_lea.vmem %s0, %s233
      %p235 = scmp.lt.s32.totalorder %s16, 1
      %s236 = scalar_select %p235, %s16, 1
      %s237 = smul.addr %s236, 8
      %s238 = smul.addr %s237, 8
      %s239 = scalar_lea.vmem %s4, %s238
      %p240 = scmp.lt.s32.totalorder %s16, 1
      %s241 = scalar_select %p240, %s16, 1
      %s242 = smul.addr %s241, 8
      %s243 = smul.addr %s242, 8
      %s244 = scalar_lea.vmem %s5, %s243
      %v246 = vld [vmem:[%s234] sm:$0xff]
      %v247 = vld [vmem:[%s234 + $0x8] sm:$0x3]
      %v248 = vld [vmem:[%s234 + $0x10] sm:$0xff]
      %v249 = vld [vmem:[%s234 + $0x18] sm:$0x3]
      %v250 = vld [vmem:[%s234 + $0x20] sm:$0xff]
      %v251 = vld [vmem:[%s234 + $0x28] sm:$0x3]
      %v252 = vld [vmem:[%s234 + $0x30] sm:$0xff]
      %v253 = vld [vmem:[%s234 + $0x38] sm:$0x3]
      %v254 = vld [vmem:[%s234 + $0x40] sm:$0xff]
      %v255 = vld [vmem:[%s234 + $0x48] sm:$0x3]
      %v256 = vld [vmem:[%s234 + $0x50] sm:$0xff]
      %v257 = vld [vmem:[%s234 + $0x58] sm:$0x3]
      %v258 = vld [vmem:[%s234 + $0x60] sm:$0xff]
      %v259 = vld [vmem:[%s234 + $0x68] sm:$0x3]
      %v260 = vld [vmem:[%s234 + $0x70] sm:$0xff]
      %v261 = vld [vmem:[%s234 + $0x78] sm:$0x3]
      %v262 = vld [vmem:[%s234 + $0x80] sm:$0xff]
      %v263 = vld [vmem:[%s234 + $0x88] sm:$0x3]
      %v264 = vld [vmem:[%s234 + $0x90] sm:$0xff]
      %v265 = vld [vmem:[%s234 + $0x98] sm:$0x3]
      %v266 = vpack.c.bf16 %v248, %v246
      %v267 = vpack.c.bf16 %v252, %v250
      %v268 = vpack.c.bf16 %v256, %v254
      %v269 = vpack.c.bf16 %v260, %v258
      %v270 = vld [vmem:[%s1] sm:$0x3]
      %vm287 = vcmask 1046528
      %v288 = vrot.slane %v246, 1
      %v289 = vrot.slane %v247, 1
      %v290 = vsel %vm287, %v288, %v289
      %v291 = vrot.slane %v248, 1
      %v292 = vrot.slane %v249, 1
      %v293 = vsel %vm287, %v291, %v292
      %v294 = vrot.slane %v250, 1
      %v295 = vrot.slane %v251, 1
      %v296 = vsel %vm287, %v294, %v295
      %v297 = vrot.slane %v252, 1
      %v298 = vrot.slane %v253, 1
      %v299 = vsel %vm287, %v297, %v298
      %v300 = vrot.slane %v254, 1
      %v301 = vrot.slane %v255, 1
      %v302 = vsel %vm287, %v300, %v301
      %v303 = vrot.slane %v256, 1
      %v304 = vrot.slane %v257, 1
      %v305 = vsel %vm287, %v303, %v304
      %v306 = vrot.slane %v258, 1
      %v307 = vrot.slane %v259, 1
      %v308 = vsel %vm287, %v306, %v307
      %v309 = vrot.slane %v260, 1
      %v310 = vrot.slane %v261, 1
      %v311 = vsel %vm287, %v309, %v310
      %v320 = vpack.c.bf16 %v293, %v290
      %v321 = vpack.c.bf16 %v299, %v296
      %v322 = vpack.c.bf16 %v305, %v302
      %v323 = vpack.c.bf16 %v311, %v308
      %s324 = scalar_lea.vmem %s1, 2
      %v325 = vld [vmem:[%s324] sm:$0x3]
      %vm326 = vcmask 31744
      %v328 = vsel %vm326, %v320, 0
      %v331 = vsel %vm326, %v321, 0
      %v334 = vsel %vm326, %v322, 0
      %v337 = vsel %vm326, %v323, 0
      %vm339 = vcmask 1041408
      %v341 = vsel %vm339, %v325, 0
      %343 = vmatprep.subr.bf16.mxu0 0
      %344 = vmatpush1.bf16.msra.mxu0 %v341
      %345 = vmatprep.subr.bf16.mxu0 0
      %346 = vmatpush1.bf16.msra.mxu0 0
      %347 = vmatprep.subr.bf16.mxu0 0
      %348 = vmatpush1.bf16.msra.mxu0 0
      %349 = vmatprep.subr.bf16.mxu0 0
      %350 = vmatpush1.bf16.msra.mxu0 0
      %351 = vmatprep.subr.bf16.mxu0 0
      %352 = vmatpush1.bf16.msra.mxu0 0
      %353 = vmatprep.subr.bf16.mxu0 0
      %354 = vmatpush1.bf16.msra.mxu0 0
      %355 = vmatprep.subr.bf16.mxu0 0
      %356 = vmatpush1.bf16.msra.mxu0 0
      %357 = vmatprep.subr.bf16.mxu0 0
      %358 = vmatpush1.bf16.msra.mxu0 0
      %359 = vmatprep.subr.bf16.mxu0 0
      %360 = vmatpush1.bf16.msra.mxu0 0
      %361 = vmatprep.subr.bf16.mxu0 0
      %362 = vmatpush1.bf16.msra.mxu0 0
      %363 = vmatprep.subr.bf16.mxu0 0
      %364 = vmatpush1.bf16.msra.mxu0 0
      %365 = vmatprep.subr.bf16.mxu0 0
      %366 = vmatpush1.bf16.msra.mxu0 0
      %367 = vmatprep.subr.bf16.mxu0 0
      %368 = vmatpush1.bf16.msra.mxu0 0
      %369 = vmatprep.subr.bf16.mxu0 0
      %370 = vmatpush1.bf16.msra.mxu0 0
      %371 = vmatprep.subr.bf16.mxu0 0
      %372 = vmatpush1.bf16.msra.mxu0 0
      %373 = vmatprep.subr.bf16.mxu0 0
      %374 = vmatpush1.bf16.msra.mxu0 0
      %375 = vmatprep.mubr.bf16.mxu0 0
      %376 = vmatmul.mubr.bf16.gmra.mrb[0].mxu0 %v328
      %v377 = vpop.f32.mrb[0].mxu0
      %v378 = vadd.f32 0.0, %v377
      %v379 = vpop.f32.mrb[0].mxu0
      %v380 = vpop.f32.mrb[0].mxu0
      %v381 = vadd.f32 0.0, %v380
      %v382 = vpop.f32.mrb[0].mxu0
      %383 = vmatprep.mubr.bf16.mxu0 0
      %384 = vmatmul.mubr.bf16.gmra.mrb[0].mxu0 %v331
      %v385 = vpop.f32.mrb[0].mxu0
      %v386 = vadd.f32 0.0, %v385
      %v387 = vpop.f32.mrb[0].mxu0
      %v388 = vpop.f32.mrb[0].mxu0
      %v389 = vadd.f32 0.0, %v388
      %v390 = vpop.f32.mrb[0].mxu0
      %391 = vmatprep.mubr.bf16.mxu0 0
      %392 = vmatmul.mubr.bf16.gmra.mrb[0].mxu0 %v334
      %v393 = vpop.f32.mrb[0].mxu0
      %v394 = vadd.f32 0.0, %v393
      %v395 = vpop.f32.mrb[0].mxu0
      %v396 = vpop.f32.mrb[0].mxu0
      %v397 = vadd.f32 0.0, %v396
      %v398 = vpop.f32.mrb[0].mxu0
      %399 = vmatprep.mubr.bf16.mxu0 0
      %400 = vmatmul.mubr.bf16.gmra.mrb[0].mxu0 %v337
      %v401 = vpop.f32.mrb[0].mxu0
      %v402 = vadd.f32 0.0, %v401
      %v403 = vpop.f32.mrb[0].mxu0
      %v404 = vpop.f32.mrb[0].mxu0
      %v405 = vadd.f32 0.0, %v404
      %v406 = vpop.f32.mrb[0].mxu0
      %407 = vdwg.mxu0
      %v409 = vsel %vm326, %v266, 0
      %v412 = vsel %vm326, %v267, 0
      %v415 = vsel %vm326, %v268, 0
      %v418 = vsel %vm326, %v269, 0
      %v421 = vsel %vm339, %v270, 0
      %423 = vmatprep.subr.bf16.mxu0 0
      %424 = vmatpush1.bf16.msra.mxu0 %v421
      %425 = vmatprep.subr.bf16.mxu0 0
      %426 = vmatpush1.bf16.msra.mxu0 0
      %427 = vmatprep.subr.bf16.mxu0 0
      %428 = vmatpush1.bf16.msra.mxu0 0
      %429 = vmatprep.subr.bf16.mxu0 0
      %430 = vmatpush1.bf16.msra.mxu0 0
      %431 = vmatprep.subr.bf16.mxu0 0
      %432 = vmatpush1.bf16.msra.mxu0 0
      %433 = vmatprep.subr.bf16.mxu0 0
      %434 = vmatpush1.bf16.msra.mxu0 0
      %435 = vmatprep.subr.bf16.mxu0 0
      %436 = vmatpush1.bf16.msra.mxu0 0
      %437 = vmatprep.subr.bf16.mxu0 0
      %438 = vmatpush1.bf16.msra.mxu0 0
      %439 = vmatprep.subr.bf16.mxu0 0
      %440 = vmatpush1.bf16.msra.mxu0 0
      %441 = vmatprep.subr.bf16.mxu0 0
      %442 = vmatpush1.bf16.msra.mxu0 0
      %443 = vmatprep.subr.bf16.mxu0 0
      %444 = vmatpush1.bf16.msra.mxu0 0
      %445 = vmatprep.subr.bf16.mxu0 0
      %446 = vmatpush1.bf16.msra.mxu0 0
      %447 = vmatprep.subr.bf16.mxu0 0
      %448 = vmatpush1.bf16.msra.mxu0 0
      %449 = vmatprep.subr.bf16.mxu0 0
      %450 = vmatpush1.bf16.msra.mxu0 0
      %451 = vmatprep.subr.bf16.mxu0 0
      %452 = vmatpush1.bf16.msra.mxu0 0
      %453 = vmatprep.subr.bf16.mxu0 0
      %454 = vmatpush1.bf16.msra.mxu0 0
      %455 = vmatprep.mubr.bf16.mxu0 0
      %456 = vmatmul.mubr.bf16.gmra.mrb[0].mxu0 %v409
      %v457 = vpop.f32.mrb[0].mxu0
      %v458 = vadd.f32 %v378, %v457
      %v459 = vpop.f32.mrb[0].mxu0
      %v460 = vpop.f32.mrb[0].mxu0
      %v461 = vadd.f32 %v381, %v460
      %v462 = vpop.f32.mrb[0].mxu0
      %463 = vmatprep.mubr.bf16.mxu0 0
      %464 = vmatmul.mubr.bf16.gmra.mrb[0].mxu0 %v412
      %v465 = vpop.f32.mrb[0].mxu0
      %v466 = vadd.f32 %v386, %v465
      %v467 = vpop.f32.mrb[0].mxu0
      %v468 = vpop.f32.mrb[0].mxu0
      %v469 = vadd.f32 %v389, %v468
      %v470 = vpop.f32.mrb[0].mxu0
      %471 = vmatprep.mubr.bf16.mxu0 0
      %472 = vmatmul.mubr.bf16.gmra.mrb[0].mxu0 %v415
      %v473 = vpop.f32.mrb[0].mxu0
      %v474 = vadd.f32 %v394, %v473
      %v475 = vpop.f32.mrb[0].mxu0
      %v476 = vpop.f32.mrb[0].mxu0
      %v477 = vadd.f32 %v397, %v476
      %v478 = vpop.f32.mrb[0].mxu0
      %479 = vmatprep.mubr.bf16.mxu0 0
      %480 = vmatmul.mubr.bf16.gmra.mrb[0].mxu0 %v418
      %v481 = vpop.f32.mrb[0].mxu0
      %v482 = vadd.f32 %v402, %v481
      %v483 = vpop.f32.mrb[0].mxu0
      %v484 = vpop.f32.mrb[0].mxu0
      %v485 = vadd.f32 %v405, %v484
      %v486 = vpop.f32.mrb[0].mxu0
      %487 = vdwg.mxu0
      %vm488 = vcmask 1045504
      %v489 = vrot.slane %v246, 2
      %v490 = vrot.slane %v247, 2
      %v491 = vsel %vm488, %v489, %v490
      %v492 = vrot.slane %v248, 2
      %v493 = vrot.slane %v249, 2
      %v494 = vsel %vm488, %v492, %v493
      %v495 = vrot.slane %v250, 2
      %v496 = vrot.slane %v251, 2
      %v497 = vsel %vm488, %v495, %v496
      %v498 = vrot.slane %v252, 2
      %v499 = vrot.slane %v253, 2
      %v500 = vsel %vm488, %v498, %v499
      %v501 = vrot.slane %v254, 2
      %v502 = vrot.slane %v255, 2
      %v503 = vsel %vm488, %v501, %v502
      %v504 = vrot.slane %v256, 2
      %v505 = vrot.slane %v257, 2
      %v506 = vsel %vm488, %v504, %v505
      %v507 = vrot.slane %v258, 2
      %v508 = vrot.slane %v259, 2
      %v509 = vsel %vm488, %v507, %v508
      %v510 = vrot.slane %v260, 2
      %v511 = vrot.slane %v261, 2
      %v512 = vsel %vm488, %v510, %v511
      %v521 = vpack.c.bf16 %v494, %v491
      %v522 = vpack.c.bf16 %v500, %v497
      %v523 = vpack.c.bf16 %v506, %v503
      %v524 = vpack.c.bf16 %v512, %v509
      %s525 = scalar_lea.vmem %s1, 4
      %v526 = vld [vmem:[%s525] sm:$0x3]
      %v528 = vsel %vm326, %v521, 0
      %v531 = vsel %vm326, %v522, 0
      %v534 = vsel %vm326, %v523, 0
      %v537 = vsel %vm326, %v524, 0
      %v540 = vsel %vm339, %v526, 0
      %542 = vmatprep.subr.bf16.mxu0 0
      %543 = vmatpush1.bf16.msra.mxu0 %v540
      %544 = vmatprep.subr.bf16.mxu0 0
      %545 = vmatpush1.bf16.msra.mxu0 0
      %546 = vmatprep.subr.bf16.mxu0 0
      %547 = vmatpush1.bf16.msra.mxu0 0
      %548 = vmatprep.subr.bf16.mxu0 0
      %549 = vmatpush1.bf16.msra.mxu0 0
      %550 = vmatprep.subr.bf16.mxu0 0
      %551 = vmatpush1.bf16.msra.mxu0 0
      %552 = vmatprep.subr.bf16.mxu0 0
      %553 = vmatpush1.bf16.msra.mxu0 0
      %554 = vmatprep.subr.bf16.mxu0 0
      %555 = vmatpush1.bf16.msra.mxu0 0
      %556 = vmatprep.subr.bf16.mxu0 0
      %557 = vmatpush1.bf16.msra.mxu0 0
      %558 = vmatprep.subr.bf16.mxu0 0
      %559 = vmatpush1.bf16.msra.mxu0 0
      %560 = vmatprep.subr.bf16.mxu0 0
      %561 = vmatpush1.bf16.msra.mxu0 0
      %562 = vmatprep.subr.bf16.mxu0 0
      %563 = vmatpush1.bf16.msra.mxu0 0
      %564 = vmatprep.subr.bf16.mxu0 0
      %565 = vmatpush1.bf16.msra.mxu0 0
      %566 = vmatprep.subr.bf16.mxu0 0
      %567 = vmatpush1.bf16.msra.mxu0 0
      %568 = vmatprep.subr.bf16.mxu0 0
      %569 = vmatpush1.bf16.msra.mxu0 0
      %570 = vmatprep.subr.bf16.mxu0 0
      %571 = vmatpush1.bf16.msra.mxu0 0
      %572 = vmatprep.subr.bf16.mxu0 0
      %573 = vmatpush1.bf16.msra.mxu0 0
      %574 = vmatprep.mubr.bf16.mxu0 0
      %575 = vmatmul.mubr.bf16.gmra.mrb[0].mxu0 %v528
      %v576 = vpop.f32.mrb[0].mxu0
      %v577 = vadd.f32 0.0, %v576
      %v578 = vpop.f32.mrb[0].mxu0
      %v579 = vpop.f32.mrb[0].mxu0
      %v580 = vadd.f32 0.0, %v579
      %v581 = vpop.f32.mrb[0].mxu0
      %582 = vmatprep.mubr.bf16.mxu0 0
      %583 = vmatmul.mubr.bf16.gmra.mrb[0].mxu0 %v531
      %v584 = vpop.f32.mrb[0].mxu0
      %v585 = vadd.f32 0.0, %v584
      %v586 = vpop.f32.mrb[0].mxu0
      %v587 = vpop.f32.mrb[0].mxu0
      %v588 = vadd.f32 0.0, %v587
      %v589 = vpop.f32.mrb[0].mxu0
      %590 = vmatprep.mubr.bf16.mxu0 0
      %591 = vmatmul.mubr.bf16.gmra.mrb[0].mxu0 %v534
      %v592 = vpop.f32.mrb[0].mxu0
      %v593 = vadd.f32 0.0, %v592
      %v594 = vpop.f32.mrb[0].mxu0
      %v595 = vpop.f32.mrb[0].mxu0
      %v596 = vadd.f32 0.0, %v595
      %v597 = vpop.f32.mrb[0].mxu0
      %598 = vmatprep.mubr.bf16.mxu0 0
      %599 = vmatmul.mubr.bf16.gmra.mrb[0].mxu0 %v537
      %v600 = vpop.f32.mrb[0].mxu0
      %v601 = vadd.f32 0.0, %v600
      %v602 = vpop.f32.mrb[0].mxu0
      %v603 = vpop.f32.mrb[0].mxu0
      %v604 = vadd.f32 0.0, %v603
      %v605 = vpop.f32.mrb[0].mxu0
      %606 = vdwg.mxu0
      %v607 = vadd.f32 %v458, %v577
      %v608 = vadd.f32 %v461, %v580
      %v609 = vadd.f32 %v466, %v585
      %v610 = vadd.f32 %v469, %v588
      %v611 = vadd.f32 %v474, %v593
      %v612 = vadd.f32 %v477, %v596
      %v613 = vadd.f32 %v482, %v601
      %v614 = vadd.f32 %v485, %v604
      %v615 = vpack.c.bf16 %v250, %v248
      %v616 = vpack.c.bf16 %v254, %v252
      %v617 = vpack.c.bf16 %v258, %v256
      %v618 = vpack.c.bf16 %v262, %v260
      %s619 = scalar_lea.vmem %s1, 6
      %v620 = vld [vmem:[%s619] sm:$0x3]
      %v622 = vsel %vm326, %v615, 0
      %v625 = vsel %vm326, %v616, 0
      %v628 = vsel %vm326, %v617, 0
      %v631 = vsel %vm326, %v618, 0
      %v634 = vsel %vm339, %v620, 0
      %636 = vmatprep.subr.bf16.mxu0 0
      %637 = vmatpush1.bf16.msra.mxu0 %v634
      %638 = vmatprep.subr.bf16.mxu0 0
      %639 = vmatpush1.bf16.msra.mxu0 0
      %640 = vmatprep.subr.bf16.mxu0 0
      %641 = vmatpush1.bf16.msra.mxu0 0
      %642 = vmatprep.subr.bf16.mxu0 0
      %643 = vmatpush1.bf16.msra.mxu0 0
      %644 = vmatprep.subr.bf16.mxu0 0
      %645 = vmatpush1.bf16.msra.mxu0 0
      %646 = vmatprep.subr.bf16.mxu0 0
      %647 = vmatpush1.bf16.msra.mxu0 0
      %648 = vmatprep.subr.bf16.mxu0 0
      %649 = vmatpush1.bf16.msra.mxu0 0
      %650 = vmatprep.subr.bf16.mxu0 0
      %651 = vmatpush1.bf16.msra.mxu0 0
      %652 = vmatprep.subr.bf16.mxu0 0
      %653 = vmatpush1.bf16.msra.mxu0 0
      %654 = vmatprep.subr.bf16.mxu0 0
      %655 = vmatpush1.bf16.msra.mxu0 0
      %656 = vmatprep.subr.bf16.mxu0 0
      %657 = vmatpush1.bf16.msra.mxu0 0
      %658 = vmatprep.subr.bf16.mxu0 0
      %659 = vmatpush1.bf16.msra.mxu0 0
      %660 = vmatprep.subr.bf16.mxu0 0
      %661 = vmatpush1.bf16.msra.mxu0 0
      %662 = vmatprep.subr.bf16.mxu0 0
      %663 = vmatpush1.bf16.msra.mxu0 0
      %664 = vmatprep.subr.bf16.mxu0 0
      %665 = vmatpush1.bf16.msra.mxu0 0
      %666 = vmatprep.subr.bf16.mxu0 0
      %667 = vmatpush1.bf16.msra.mxu0 0
      %668 = vmatprep.mubr.bf16.mxu0 0
      %669 = vmatmul.mubr.bf16.gmra.mrb[0].mxu0 %v622
      %v670 = vpop.f32.mrb[0].mxu0
      %v671 = vadd.f32 0.0, %v670
      %v672 = vpop.f32.mrb[0].mxu0
      %v673 = vpop.f32.mrb[0].mxu0
      %v674 = vadd.f32 0.0, %v673
      %v675 = vpop.f32.mrb[0].mxu0
      %676 = vmatprep.mubr.bf16.mxu0 0
      %677 = vmatmul.mubr.bf16.gmra.mrb[0].mxu0 %v625
      %v678 = vpop.f32.mrb[0].mxu0
      %v679 = vadd.f32 0.0, %v678
      %v680 = vpop.f32.mrb[0].mxu0
      %v681 = vpop.f32.mrb[0].mxu0
      %v682 = vadd.f32 0.0, %v681
      %v683 = vpop.f32.mrb[0].mxu0
      %684 = vmatprep.mubr.bf16.mxu0 0
      %685 = vmatmul.mubr.bf16.gmra.mrb[0].mxu0 %v628
      %v686 = vpop.f32.mrb[0].mxu0
      %v687 = vadd.f32 0.0, %v686
      %v688 = vpop.f32.mrb[0].mxu0
      %v689 = vpop.f32.mrb[0].mxu0
      %v690 = vadd.f32 0.0, %v689
      %v691 = vpop.f32.mrb[0].mxu0
      %692 = vmatprep.mubr.bf16.mxu0 0
      %693 = vmatmul.mubr.bf16.gmra.mrb[0].mxu0 %v631
      %v694 = vpop.f32.mrb[0].mxu0
      %v695 = vadd.f32 0.0, %v694
      %v696 = vpop.f32.mrb[0].mxu0
      %v697 = vpop.f32.mrb[0].mxu0
      %v698 = vadd.f32 0.0, %v697
      %v699 = vpop.f32.mrb[0].mxu0
      %700 = vdwg.mxu0
      %v701 = vadd.f32 %v607, %v671
      %v702 = vadd.f32 %v608, %v674
      %v703 = vadd.f32 %v609, %v679
      %v704 = vadd.f32 %v610, %v682
      %v705 = vadd.f32 %v611, %v687
      %v706 = vadd.f32 %v612, %v690
      %v707 = vadd.f32 %v613, %v695
      %v708 = vadd.f32 %v614, %v698
      %v711 = vrot.slane %v262, 1
      %v712 = vrot.slane %v263, 1
      %v713 = vsel %vm287, %v711, %v712
      %v715 = vpack.c.bf16 %v296, %v293
      %v716 = vpack.c.bf16 %v302, %v299
      %v717 = vpack.c.bf16 %v308, %v305
      %v718 = vpack.c.bf16 %v713, %v311
      %s719 = scalar_lea.vmem %s1, 8
      %v720 = vld [vmem:[%s719] sm:$0x3]
      %v722 = vsel %vm326, %v715, 0
      %v725 = vsel %vm326, %v716, 0
      %v728 = vsel %vm326, %v717, 0
      %v731 = vsel %vm326, %v718, 0
      %v734 = vsel %vm339, %v720, 0
      %736 = vmatprep.subr.bf16.mxu0 0
      %737 = vmatpush1.bf16.msra.mxu0 %v734
      %738 = vmatprep.subr.bf16.mxu0 0
      %739 = vmatpush1.bf16.msra.mxu0 0
      %740 = vmatprep.subr.bf16.mxu0 0
      %741 = vmatpush1.bf16.msra.mxu0 0
      %742 = vmatprep.subr.bf16.mxu0 0
      %743 = vmatpush1.bf16.msra.mxu0 0
      %744 = vmatprep.subr.bf16.mxu0 0
      %745 = vmatpush1.bf16.msra.mxu0 0
      %746 = vmatprep.subr.bf16.mxu0 0
      %747 = vmatpush1.bf16.msra.mxu0 0
      %748 = vmatprep.subr.bf16.mxu0 0
      %749 = vmatpush1.bf16.msra.mxu0 0
      %750 = vmatprep.subr.bf16.mxu0 0
      %751 = vmatpush1.bf16.msra.mxu0 0
      %752 = vmatprep.subr.bf16.mxu0 0
      %753 = vmatpush1.bf16.msra.mxu0 0
      %754 = vmatprep.subr.bf16.mxu0 0
      %755 = vmatpush1.bf16.msra.mxu0 0
      %756 = vmatprep.subr.bf16.mxu0 0
      %757 = vmatpush1.bf16.msra.mxu0 0
      %758 = vmatprep.subr.bf16.mxu0 0
      %759 = vmatpush1.bf16.msra.mxu0 0
      %760 = vmatprep.subr.bf16.mxu0 0
      %761 = vmatpush1.bf16.msra.mxu0 0
      %762 = vmatprep.subr.bf16.mxu0 0
      %763 = vmatpush1.bf16.msra.mxu0 0
      %764 = vmatprep.subr.bf16.mxu0 0
      %765 = vmatpush1.bf16.msra.mxu0 0
      %766 = vmatprep.subr.bf16.mxu0 0
      %767 = vmatpush1.bf16.msra.mxu0 0
      %768 = vmatprep.mubr.bf16.mxu0 0
      %769 = vmatmul.mubr.bf16.gmra.mrb[0].mxu0 %v722
      %v770 = vpop.f32.mrb[0].mxu0
      %v771 = vadd.f32 0.0, %v770
      %v772 = vpop.f32.mrb[0].mxu0
      %v773 = vpop.f32.mrb[0].mxu0
      %v774 = vadd.f32 0.0, %v773
      %v775 = vpop.f32.mrb[0].mxu0
      %776 = vmatprep.mubr.bf16.mxu0 0
      %777 = vmatmul.mubr.bf16.gmra.mrb[0].mxu0 %v725
      %v778 = vpop.f32.mrb[0].mxu0
      %v779 = vadd.f32 0.0, %v778
      %v780 = vpop.f32.mrb[0].mxu0
      %v781 = vpop.f32.mrb[0].mxu0
      %v782 = vadd.f32 0.0, %v781
      %v783 = vpop.f32.mrb[0].mxu0
      %784 = vmatprep.mubr.bf16.mxu0 0
      %785 = vmatmul.mubr.bf16.gmra.mrb[0].mxu0 %v728
      %v786 = vpop.f32.mrb[0].mxu0
      %v787 = vadd.f32 0.0, %v786
      %v788 = vpop.f32.mrb[0].mxu0
      %v789 = vpop.f32.mrb[0].mxu0
      %v790 = vadd.f32 0.0, %v789
      %v791 = vpop.f32.mrb[0].mxu0
      %792 = vmatprep.mubr.bf16.mxu0 0
      %793 = vmatmul.mubr.bf16.gmra.mrb[0].mxu0 %v731
      %v794 = vpop.f32.mrb[0].mxu0
      %v795 = vadd.f32 0.0, %v794
      %v796 = vpop.f32.mrb[0].mxu0
      %v797 = vpop.f32.mrb[0].mxu0
      %v798 = vadd.f32 0.0, %v797
      %v799 = vpop.f32.mrb[0].mxu0
      %800 = vdwg.mxu0
      %v801 = vadd.f32 %v701, %v771
      %v802 = vadd.f32 %v702, %v774
      %v803 = vadd.f32 %v703, %v779
      %v804 = vadd.f32 %v704, %v782
      %v805 = vadd.f32 %v705, %v787
      %v806 = vadd.f32 %v706, %v790
      %v807 = vadd.f32 %v707, %v795
      %v808 = vadd.f32 %v708, %v798
      %v809 = vrot.slane %v262, 2
      %v810 = vrot.slane %v263, 2
      %v811 = vsel %vm488, %v809, %v810
      %v813 = vpack.c.bf16 %v497, %v494
      %v814 = vpack.c.bf16 %v503, %v500
      %v815 = vpack.c.bf16 %v509, %v506
      %v816 = vpack.c.bf16 %v811, %v512
      %s817 = scalar_lea.vmem %s1, 10
      %v818 = vld [vmem:[%s817] sm:$0x3]
      %v820 = vsel %vm326, %v813, 0
      %v823 = vsel %vm326, %v814, 0
      %v826 = vsel %vm326, %v815, 0
      %v829 = vsel %vm326, %v816, 0
      %v832 = vsel %vm339, %v818, 0
      %834 = vmatprep.subr.bf16.mxu0 0
      %835 = vmatpush1.bf16.msra.mxu0 %v832
      %836 = vmatprep.subr.bf16.mxu0 0
      %837 = vmatpush1.bf16.msra.mxu0 0
      %838 = vmatprep.subr.bf16.mxu0 0
      %839 = vmatpush1.bf16.msra.mxu0 0
      %840 = vmatprep.subr.bf16.mxu0 0
      %841 = vmatpush1.bf16.msra.mxu0 0
      %842 = vmatprep.subr.bf16.mxu0 0
      %843 = vmatpush1.bf16.msra.mxu0 0
      %844 = vmatprep.subr.bf16.mxu0 0
      %845 = vmatpush1.bf16.msra.mxu0 0
      %846 = vmatprep.subr.bf16.mxu0 0
      %847 = vmatpush1.bf16.msra.mxu0 0
      %848 = vmatprep.subr.bf16.mxu0 0
      %849 = vmatpush1.bf16.msra.mxu0 0
      %850 = vmatprep.subr.bf16.mxu0 0
      %851 = vmatpush1.bf16.msra.mxu0 0
      %852 = vmatprep.subr.bf16.mxu0 0
      %853 = vmatpush1.bf16.msra.mxu0 0
      %854 = vmatprep.subr.bf16.mxu0 0
      %855 = vmatpush1.bf16.msra.mxu0 0
      %856 = vmatprep.subr.bf16.mxu0 0
      %857 = vmatpush1.bf16.msra.mxu0 0
      %858 = vmatprep.subr.bf16.mxu0 0
      %859 = vmatpush1.bf16.msra.mxu0 0
      %860 = vmatprep.subr.bf16.mxu0 0
      %861 = vmatpush1.bf16.msra.mxu0 0
      %862 = vmatprep.subr.bf16.mxu0 0
      %863 = vmatpush1.bf16.msra.mxu0 0
      %864 = vmatprep.subr.bf16.mxu0 0
      %865 = vmatpush1.bf16.msra.mxu0 0
      %866 = vmatprep.mubr.bf16.mxu0 0
      %867 = vmatmul.mubr.bf16.gmra.mrb[0].mxu0 %v820
      %v868 = vpop.f32.mrb[0].mxu0
      %v869 = vadd.f32 0.0, %v868
      %v870 = vpop.f32.mrb[0].mxu0
      %v871 = vpop.f32.mrb[0].mxu0
      %v872 = vadd.f32 0.0, %v871
      %v873 = vpop.f32.mrb[0].mxu0
      %874 = vmatprep.mubr.bf16.mxu0 0
      %875 = vmatmul.mubr.bf16.gmra.mrb[0].mxu0 %v823
      %v876 = vpop.f32.mrb[0].mxu0
      %v877 = vadd.f32 0.0, %v876
      %v878 = vpop.f32.mrb[0].mxu0
      %v879 = vpop.f32.mrb[0].mxu0
      %v880 = vadd.f32 0.0, %v879
      %v881 = vpop.f32.mrb[0].mxu0
      %882 = vmatprep.mubr.bf16.mxu0 0
      %883 = vmatmul.mubr.bf16.gmra.mrb[0].mxu0 %v826
      %v884 = vpop.f32.mrb[0].mxu0
      %v885 = vadd.f32 0.0, %v884
      %v886 = vpop.f32.mrb[0].mxu0
      %v887 = vpop.f32.mrb[0].mxu0
      %v888 = vadd.f32 0.0, %v887
      %v889 = vpop.f32.mrb[0].mxu0
      %890 = vmatprep.mubr.bf16.mxu0 0
      %891 = vmatmul.mubr.bf16.gmra.mrb[0].mxu0 %v829
      %v892 = vpop.f32.mrb[0].mxu0
      %v893 = vadd.f32 0.0, %v892
      %v894 = vpop.f32.mrb[0].mxu0
      %v895 = vpop.f32.mrb[0].mxu0
      %v896 = vadd.f32 0.0, %v895
      %v897 = vpop.f32.mrb[0].mxu0
      %898 = vdwg.mxu0
      %v899 = vadd.f32 %v801, %v869
      %v900 = vadd.f32 %v802, %v872
      %v901 = vadd.f32 %v803, %v877
      %v902 = vadd.f32 %v804, %v880
      %v903 = vadd.f32 %v805, %v885
      %v904 = vadd.f32 %v806, %v888
      %v905 = vadd.f32 %v807, %v893
      %v906 = vadd.f32 %v808, %v896
      %v907 = vpack.c.bf16 %v264, %v262
      %s908 = scalar_lea.vmem %s1, 12
      %v909 = vld [vmem:[%s908] sm:$0x3]
      %v911 = vsel %vm326, %v907, 0
      %v914 = vsel %vm339, %v909, 0
      %916 = vmatprep.subr.bf16.mxu0 0
      %917 = vmatpush1.bf16.msra.mxu0 %v914
      %918 = vmatprep.subr.bf16.mxu0 0
      %919 = vmatpush1.bf16.msra.mxu0 0
      %920 = vmatprep.subr.bf16.mxu0 0
      %921 = vmatpush1.bf16.msra.mxu0 0
      %922 = vmatprep.subr.bf16.mxu0 0
      %923 = vmatpush1.bf16.msra.mxu0 0
      %924 = vmatprep.subr.bf16.mxu0 0
      %925 = vmatpush1.bf16.msra.mxu0 0
      %926 = vmatprep.subr.bf16.mxu0 0
      %927 = vmatpush1.bf16.msra.mxu0 0
      %928 = vmatprep.subr.bf16.mxu0 0
      %929 = vmatpush1.bf16.msra.mxu0 0
      %930 = vmatprep.subr.bf16.mxu0 0
      %931 = vmatpush1.bf16.msra.mxu0 0
      %932 = vmatprep.subr.bf16.mxu0 0
      %933 = vmatpush1.bf16.msra.mxu0 0
      %934 = vmatprep.subr.bf16.mxu0 0
      %935 = vmatpush1.bf16.msra.mxu0 0
      %936 = vmatprep.subr.bf16.mxu0 0
      %937 = vmatpush1.bf16.msra.mxu0 0
      %938 = vmatprep.subr.bf16.mxu0 0
      %939 = vmatpush1.bf16.msra.mxu0 0
      %940 = vmatprep.subr.bf16.mxu0 0
      %941 = vmatpush1.bf16.msra.mxu0 0
      %942 = vmatprep.subr.bf16.mxu0 0
      %943 = vmatpush1.bf16.msra.mxu0 0
      %944 = vmatprep.subr.bf16.mxu0 0
      %945 = vmatpush1.bf16.msra.mxu0 0
      %946 = vmatprep.subr.bf16.mxu0 0
      %947 = vmatpush1.bf16.msra.mxu0 0
      %948 = vmatprep.mubr.bf16.mxu0 0
      %949 = vmatmul.mubr.bf16.gmra.mrb[0].mxu0 %v412
      %v950 = vpop.f32.mrb[0].mxu0
      %v951 = vadd.f32 0.0, %v950
      %v952 = vpop.f32.mrb[0].mxu0
      %v953 = vpop.f32.mrb[0].mxu0
      %v954 = vadd.f32 0.0, %v953
      %v955 = vpop.f32.mrb[0].mxu0
      %956 = vmatprep.mubr.bf16.mxu0 0
      %957 = vmatmul.mubr.bf16.gmra.mrb[0].mxu0 %v415
      %v958 = vpop.f32.mrb[0].mxu0
      %v959 = vadd.f32 0.0, %v958
      %v960 = vpop.f32.mrb[0].mxu0
      %v961 = vpop.f32.mrb[0].mxu0
      %v962 = vadd.f32 0.0, %v961
      %v963 = vpop.f32.mrb[0].mxu0
      %964 = vmatprep.mubr.bf16.mxu0 0
      %965 = vmatmul.mubr.bf16.gmra.mrb[0].mxu0 %v418
      %v966 = vpop.f32.mrb[0].mxu0
      %v967 = vadd.f32 0.0, %v966
      %v968 = vpop.f32.mrb[0].mxu0
      %v969 = vpop.f32.mrb[0].mxu0
      %v970 = vadd.f32 0.0, %v969
      %v971 = vpop.f32.mrb[0].mxu0
      %972 = vmatprep.mubr.bf16.mxu0 0
      %973 = vmatmul.mubr.bf16.gmra.mrb[0].mxu0 %v911
      %v974 = vpop.f32.mrb[0].mxu0
      %v975 = vadd.f32 0.0, %v974
      %v976 = vpop.f32.mrb[0].mxu0
      %v977 = vpop.f32.mrb[0].mxu0
      %v978 = vadd.f32 0.0, %v977
      %v979 = vpop.f32.mrb[0].mxu0
      %980 = vdwg.mxu0
      %v981 = vadd.f32 %v899, %v951
      %v982 = vadd.f32 %v900, %v954
      %v983 = vadd.f32 %v901, %v959
      %v984 = vadd.f32 %v902, %v962
      %v985 = vadd.f32 %v903, %v967
      %v986 = vadd.f32 %v904, %v970
      %v987 = vadd.f32 %v905, %v975
      %v988 = vadd.f32 %v906, %v978
      %v991 = vrot.slane %v264, 1
      %v992 = vrot.slane %v265, 1
      %v993 = vsel %vm287, %v991, %v992
      %v995 = vpack.c.bf16 %v993, %v713
      %s996 = scalar_lea.vmem %s1, 14
      %v997 = vld [vmem:[%s996] sm:$0x3]
      %v999 = vsel %vm326, %v995, 0
      %v1002 = vsel %vm339, %v997, 0
      %1004 = vmatprep.subr.bf16.mxu0 0
      %1005 = vmatpush1.bf16.msra.mxu0 %v1002
      %1006 = vmatprep.subr.bf16.mxu0 0
      %1007 = vmatpush1.bf16.msra.mxu0 0
      %1008 = vmatprep.subr.bf16.mxu0 0
      %1009 = vmatpush1.bf16.msra.mxu0 0
      %1010 = vmatprep.subr.bf16.mxu0 0
      %1011 = vmatpush1.bf16.msra.mxu0 0
      %1012 = vmatprep.subr.bf16.mxu0 0
      %1013 = vmatpush1.bf16.msra.mxu0 0
      %1014 = vmatprep.subr.bf16.mxu0 0
      %1015 = vmatpush1.bf16.msra.mxu0 0
      %1016 = vmatprep.subr.bf16.mxu0 0
      %1017 = vmatpush1.bf16.msra.mxu0 0
      %1018 = vmatprep.subr.bf16.mxu0 0
      %1019 = vmatpush1.bf16.msra.mxu0 0
      %1020 = vmatprep.subr.bf16.mxu0 0
      %1021 = vmatpush1.bf16.msra.mxu0 0
      %1022 = vmatprep.subr.bf16.mxu0 0
      %1023 = vmatpush1.bf16.msra.mxu0 0
      %1024 = vmatprep.subr.bf16.mxu0 0
      %1025 = vmatpush1.bf16.msra.mxu0 0
      %1026 = vmatprep.subr.bf16.mxu0 0
      %1027 = vmatpush1.bf16.msra.mxu0 0
      %1028 = vmatprep.subr.bf16.mxu0 0
      %1029 = vmatpush1.bf16.msra.mxu0 0
      %1030 = vmatprep.subr.bf16.mxu0 0
      %1031 = vmatpush1.bf16.msra.mxu0 0
      %1032 = vmatprep.subr.bf16.mxu0 0
      %1033 = vmatpush1.bf16.msra.mxu0 0
      %1034 = vmatprep.subr.bf16.mxu0 0
      %1035 = vmatpush1.bf16.msra.mxu0 0
      %1036 = vmatprep.mubr.bf16.mxu0 0
      %1037 = vmatmul.mubr.bf16.gmra.mrb[0].mxu0 %v331
      %v1038 = vpop.f32.mrb[0].mxu0
      %v1039 = vadd.f32 0.0, %v1038
      %v1040 = vpop.f32.mrb[0].mxu0
      %v1041 = vpop.f32.mrb[0].mxu0
      %v1042 = vadd.f32 0.0, %v1041
      %v1043 = vpop.f32.mrb[0].mxu0
      %1044 = vmatprep.mubr.bf16.mxu0 0
      %1045 = vmatmul.mubr.bf16.gmra.mrb[0].mxu0 %v334
      %v1046 = vpop.f32.mrb[0].mxu0
      %v1047 = vadd.f32 0.0, %v1046
      %v1048 = vpop.f32.mrb[0].mxu0
      %v1049 = vpop.f32.mrb[0].mxu0
      %v1050 = vadd.f32 0.0, %v1049
      %v1051 = vpop.f32.mrb[0].mxu0
      %1052 = vmatprep.mubr.bf16.mxu0 0
      %1053 = vmatmul.mubr.bf16.gmra.mrb[0].mxu0 %v337
      %v1054 = vpop.f32.mrb[0].mxu0
      %v1055 = vadd.f32 0.0, %v1054
      %v1056 = vpop.f32.mrb[0].mxu0
      %v1057 = vpop.f32.mrb[0].mxu0
      %v1058 = vadd.f32 0.0, %v1057
      %v1059 = vpop.f32.mrb[0].mxu0
      %1060 = vmatprep.mubr.bf16.mxu0 0
      %1061 = vmatmul.mubr.bf16.gmra.mrb[0].mxu0 %v999
      %v1062 = vpop.f32.mrb[0].mxu0
      %v1063 = vadd.f32 0.0, %v1062
      %v1064 = vpop.f32.mrb[0].mxu0
      %v1065 = vpop.f32.mrb[0].mxu0
      %v1066 = vadd.f32 0.0, %v1065
      %v1067 = vpop.f32.mrb[0].mxu0
      %1068 = vdwg.mxu0
      %v1069 = vadd.f32 %v981, %v1039
      %v1070 = vadd.f32 %v982, %v1042
      %v1071 = vadd.f32 %v983, %v1047
      %v1072 = vadd.f32 %v984, %v1050
      %v1073 = vadd.f32 %v985, %v1055
      %v1074 = vadd.f32 %v986, %v1058
      %v1075 = vadd.f32 %v987, %v1063
      %v1076 = vadd.f32 %v988, %v1066
      %v1077 = vrot.slane %v264, 2
      %v1078 = vrot.slane %v265, 2
      %v1079 = vsel %vm488, %v1077, %v1078
      %v1081 = vpack.c.bf16 %v1079, %v811
      %s1082 = scalar_lea.vmem %s1, 16
      %v1083 = vld [vmem:[%s1082] sm:$0x3]
      %v1085 = vsel %vm326, %v1081, 0
      %v1088 = vsel %vm339, %v1083, 0
      %1090 = vmatprep.subr.bf16.mxu0 0
      %1091 = vmatpush1.bf16.msra.mxu0 %v1088
      %1092 = vmatprep.subr.bf16.mxu0 0
      %1093 = vmatpush1.bf16.msra.mxu0 0
      %1094 = vmatprep.subr.bf16.mxu0 0
      %1095 = vmatpush1.bf16.msra.mxu0 0
      %1096 = vmatprep.subr.bf16.mxu0 0
      %1097 = vmatpush1.bf16.msra.mxu0 0
      %1098 = vmatprep.subr.bf16.mxu0 0
      %1099 = vmatpush1.bf16.msra.mxu0 0
      %1100 = vmatprep.subr.bf16.mxu0 0
      %1101 = vmatpush1.bf16.msra.mxu0 0
      %1102 = vmatprep.subr.bf16.mxu0 0
      %1103 = vmatpush1.bf16.msra.mxu0 0
      %1104 = vmatprep.subr.bf16.mxu0 0
      %1105 = vmatpush1.bf16.msra.mxu0 0
      %1106 = vmatprep.subr.bf16.mxu0 0
      %1107 = vmatpush1.bf16.msra.mxu0 0
      %1108 = vmatprep.subr.bf16.mxu0 0
      %1109 = vmatpush1.bf16.msra.mxu0 0
      %1110 = vmatprep.subr.bf16.mxu0 0
      %1111 = vmatpush1.bf16.msra.mxu0 0
      %1112 = vmatprep.subr.bf16.mxu0 0
      %1113 = vmatpush1.bf16.msra.mxu0 0
      %1114 = vmatprep.subr.bf16.mxu0 0
      %1115 = vmatpush1.bf16.msra.mxu0 0
      %1116 = vmatprep.subr.bf16.mxu0 0
      %1117 = vmatpush1.bf16.msra.mxu0 0
      %1118 = vmatprep.subr.bf16.mxu0 0
      %1119 = vmatpush1.bf16.msra.mxu0 0
      %1120 = vmatprep.subr.bf16.mxu0 0
      %1121 = vmatpush1.bf16.msra.mxu0 0
      %1122 = vmatprep.mubr.bf16.mxu0 0
      %1123 = vmatmul.mubr.bf16.gmra.mrb[0].mxu0 %v531
      %v1124 = vpop.f32.mrb[0].mxu0
      %v1125 = vadd.f32 0.0, %v1124
      %v1126 = vpop.f32.mrb[0].mxu0
      %v1127 = vpop.f32.mrb[0].mxu0
      %v1128 = vadd.f32 0.0, %v1127
      %v1129 = vpop.f32.mrb[0].mxu0
      %1130 = vmatprep.mubr.bf16.mxu0 0
      %1131 = vmatmul.mubr.bf16.gmra.mrb[0].mxu0 %v534
      %v1132 = vpop.f32.mrb[0].mxu0
      %v1133 = vadd.f32 0.0, %v1132
      %v1134 = vpop.f32.mrb[0].mxu0
      %v1135 = vpop.f32.mrb[0].mxu0
      %v1136 = vadd.f32 0.0, %v1135
      %v1137 = vpop.f32.mrb[0].mxu0
      %1138 = vmatprep.mubr.bf16.mxu0 0
      %1139 = vmatmul.mubr.bf16.gmra.mrb[0].mxu0 %v537
      %v1140 = vpop.f32.mrb[0].mxu0
      %v1141 = vadd.f32 0.0, %v1140
      %v1142 = vpop.f32.mrb[0].mxu0
      %v1143 = vpop.f32.mrb[0].mxu0
      %v1144 = vadd.f32 0.0, %v1143
      %v1145 = vpop.f32.mrb[0].mxu0
      %1146 = vmatprep.mubr.bf16.mxu0 0
      %1147 = vmatmul.mubr.bf16.gmra.mrb[0].mxu0 %v1085
      %v1148 = vpop.f32.mrb[0].mxu0
      %v1149 = vadd.f32 0.0, %v1148
      %v1150 = vpop.f32.mrb[0].mxu0
      %v1151 = vpop.f32.mrb[0].mxu0
      %v1152 = vadd.f32 0.0, %v1151
      %v1153 = vpop.f32.mrb[0].mxu0
      %1154 = vdwg.mxu0
      %v1155 = vadd.f32 %v1069, %v1125
      %v1156 = vadd.f32 %v1070, %v1128
      %v1157 = vadd.f32 %v1071, %v1133
      %v1158 = vadd.f32 %v1072, %v1136
      %v1159 = vadd.f32 %v1073, %v1141
      %v1160 = vadd.f32 %v1074, %v1144
      %v1161 = vadd.f32 %v1075, %v1149
      %v1162 = vadd.f32 %v1076, %v1152
      %v1163 = vsel %vm326, %v1155, 0.0
      %v1164 = vsel %vm326, %v1156, 0.0
      %v1165 = vadd.f32 %v1163, %v1164
      %v1166 = vsel %vm326, %v1157, 0.0
      %v1167 = vadd.f32 %v1165, %v1166
      %v1168 = vsel %vm326, %v1158, 0.0
      %v1169 = vadd.f32 %v1167, %v1168
      %v1170 = vsel %vm326, %v1159, 0.0
      %v1171 = vadd.f32 %v1169, %v1170
      %v1172 = vsel %vm326, %v1160, 0.0
      %v1173 = vadd.f32 %v1171, %v1172
      %v1174 = vsel %vm326, %v1161, 0.0
      %v1175 = vadd.f32 %v1173, %v1174
      %v1176 = vsel %vm326, %v1162, 0.0
      %v1177 = vadd.f32 %v1175, %v1176
      %1178 = vadd.xlane.f32.xlu0 %v1177
      %v1179 = vpop.xlane.xlu0 %1178
      %v1180 = vrot.slane %v1179, 4
      %v1181 = vadd.f32 %v1179, %v1180
      %v1182 = vrot.slane %v1181, 2
      %v1183 = vadd.f32 %v1181, %v1182
      %v1184 = vrot.slane %v1183, 1
      %v1185 = vadd.f32 %v1183, %v1184
      %s1186 = vtos %v1185
      %v1187 = vstv %s1186
      %v1188 = vmul.f32 %v1155, %v1155
      %v1189 = vmul.f32 %v1156, %v1156
      %v1190 = vmul.f32 %v1157, %v1157
      %v1191 = vmul.f32 %v1158, %v1158
      %v1192 = vmul.f32 %v1159, %v1159
      %v1193 = vmul.f32 %v1160, %v1160
      %v1194 = vmul.f32 %v1161, %v1161
      %v1195 = vmul.f32 %v1162, %v1162
      %v1196 = vsel %vm326, %v1188, 0.0
      %v1197 = vsel %vm326, %v1189, 0.0
      %v1198 = vadd.f32 %v1196, %v1197
      %v1199 = vsel %vm326, %v1190, 0.0
      %v1200 = vadd.f32 %v1198, %v1199
      %v1201 = vsel %vm326, %v1191, 0.0
      %v1202 = vadd.f32 %v1200, %v1201
      %v1203 = vsel %vm326, %v1192, 0.0
      %v1204 = vadd.f32 %v1202, %v1203
      %v1205 = vsel %vm326, %v1193, 0.0
      %v1206 = vadd.f32 %v1204, %v1205
      %v1207 = vsel %vm326, %v1194, 0.0
      %v1208 = vadd.f32 %v1206, %v1207
      %v1209 = vsel %vm326, %v1195, 0.0
      %v1210 = vadd.f32 %v1208, %v1209
      %1211 = vadd.xlane.f32.xlu0 %v1210
      %v1212 = vpop.xlane.xlu0 %1211
      %v1213 = vrot.slane %v1212, 4
      %v1214 = vadd.f32 %v1212, %v1213
      %v1215 = vrot.slane %v1214, 2
      %v1216 = vadd.f32 %v1214, %v1215
      %v1217 = vrot.slane %v1216, 1
      %v1218 = vadd.f32 %v1216, %v1217
      %s1219 = vtos %v1218
      %v1220 = vstv %s1219
      %v1221 = vmul.f32 %v1187, 0.00390625
      %v1222 = vmul.f32 %v1220, 0.00390625
      %v1223 = vmul.f32 %v1221, %v1221
      %v1224 = vsub.f32 %v1222, %v1223
      %v1225 = vmax.f32 %v1224, 0.0
      %v1226 = vsub.f32 %v1155, %v1221
      %v1227 = vsub.f32 %v1156, %v1221
      %v1228 = vsub.f32 %v1157, %v1221
      %v1229 = vsub.f32 %v1158, %v1221
      %v1230 = vsub.f32 %v1159, %v1221
      %v1231 = vsub.f32 %v1160, %v1221
      %v1232 = vsub.f32 %v1161, %v1221
      %v1233 = vsub.f32 %v1162, %v1221
      %v1234 = vadd.f32 %v1225, 1e-05
      %v1235 = vrsqrt.pop %v1234
      %v1236 = vmul.f32 %v1226, %v1235
      %v1237 = vmul.f32 %v1227, %v1235
      %v1238 = vmul.f32 %v1228, %v1235
      %v1239 = vmul.f32 %v1229, %v1235
      %v1240 = vmul.f32 %v1230, %v1235
      %v1241 = vmul.f32 %v1231, %v1235
      %v1242 = vmul.f32 %v1232, %v1235
      %v1243 = vmul.f32 %v1233, %v1235
      %v1244 = vld [vmem:[%s2] sm:$0x1]
      %v1246 = vlaneseq
      %v1247 = vshrl.u32 %v1246, 7
      %v1248 = vsub.s32 0, %v1247
      %v1249 = vrot.slane %v1244, %v1248
      %v1251 = vmul.f32 %v1236, %v1249
      %v1252 = vmul.f32 %v1237, %v1249
      %v1253 = vmul.f32 %v1238, %v1249
      %v1254 = vmul.f32 %v1239, %v1249
      %v1255 = vmul.f32 %v1240, %v1249
      %v1256 = vmul.f32 %v1241, %v1249
      %v1257 = vmul.f32 %v1242, %v1249
      %v1258 = vmul.f32 %v1243, %v1249
      %v1259 = vld [vmem:[%s3] sm:$0x1]
      %v1261 = vlaneseq
      %v1262 = vshrl.u32 %v1261, 7
      %v1263 = vsub.s32 0, %v1262
      %v1264 = vrot.slane %v1259, %v1263
      %v1266 = vadd.f32 %v1251, %v1264
      %v1267 = vadd.f32 %v1252, %v1264
      %v1268 = vadd.f32 %v1253, %v1264
      %v1269 = vadd.f32 %v1254, %v1264
      %v1270 = vadd.f32 %v1255, %v1264
      %v1271 = vadd.f32 %v1256, %v1264
      %v1272 = vadd.f32 %v1257, %v1264
      %v1273 = vadd.f32 %v1258, %v1264
      %v1274 = vld [vmem:[%s239] sm:$0xff]
      %v1275 = vld [vmem:[%s239 + $0x8] sm:$0xff]
      %v1276 = vld [vmem:[%s239 + $0x10] sm:$0xff]
      %v1277 = vld [vmem:[%s239 + $0x18] sm:$0xff]
      %v1278 = vld [vmem:[%s239 + $0x20] sm:$0xff]
      %v1279 = vld [vmem:[%s239 + $0x28] sm:$0xff]
      %v1280 = vld [vmem:[%s239 + $0x30] sm:$0xff]
      %v1281 = vld [vmem:[%s239 + $0x38] sm:$0xff]
      %v1282 = vadd.f32 %v1274, %v1266
      %v1283 = vadd.f32 %v1275, %v1267
      %v1284 = vadd.f32 %v1276, %v1268
      %v1285 = vadd.f32 %v1277, %v1269
      %v1286 = vadd.f32 %v1278, %v1270
      %v1287 = vadd.f32 %v1279, %v1271
      %v1288 = vadd.f32 %v1280, %v1272
      %v1289 = vadd.f32 %v1281, %v1273
      %v1290 = vmul.f32 %v1282, 0.5
      %v1291 = vmul.f32 %v1283, 0.5
      %v1292 = vmul.f32 %v1284, 0.5
      %v1293 = vmul.f32 %v1285, 0.5
      %v1294 = vmul.f32 %v1286, 0.5
      %v1295 = vmul.f32 %v1287, 0.5
      %v1296 = vmul.f32 %v1288, 0.5
      %v1297 = vmul.f32 %v1289, 0.5
      %v1298 = vmul.f32 %v1282, 0.70710677
      %v1299 = vmul.f32 %v1283, 0.70710677
      %v1300 = vmul.f32 %v1284, 0.70710677
      %v1301 = vmul.f32 %v1285, 0.70710677
      %v1302 = vmul.f32 %v1286, 0.70710677
      %v1303 = vmul.f32 %v1287, 0.70710677
      %v1304 = vmul.f32 %v1288, 0.70710677
      %v1305 = vmul.f32 %v1289, 0.70710677
      %v1306 = verf.f32.pop %v1298
      %v1307 = verf.f32.pop %v1299
      %v1308 = verf.f32.pop %v1300
      %v1309 = verf.f32.pop %v1301
      %v1310 = verf.f32.pop %v1302
      %v1311 = verf.f32.pop %v1303
      %v1312 = verf.f32.pop %v1304
      %v1313 = verf.f32.pop %v1305
      %v1314 = vadd.f32 %v1306, 1.0
      %v1315 = vadd.f32 %v1307, 1.0
      %v1316 = vadd.f32 %v1308, 1.0
      %v1317 = vadd.f32 %v1309, 1.0
      %v1318 = vadd.f32 %v1310, 1.0
      %v1319 = vadd.f32 %v1311, 1.0
      %v1320 = vadd.f32 %v1312, 1.0
      %v1321 = vadd.f32 %v1313, 1.0
      %v1322 = vmul.f32 %v1290, %v1314
      %v1323 = vmul.f32 %v1291, %v1315
      %v1324 = vmul.f32 %v1292, %v1316
      %v1325 = vmul.f32 %v1293, %v1317
      %v1326 = vmul.f32 %v1294, %v1318
      %v1327 = vmul.f32 %v1295, %v1319
      %v1328 = vmul.f32 %v1296, %v1320
      %v1329 = vmul.f32 %v1297, %v1321
      %1330 = vst.msk [vmem:[%s244] sm:$0xff] %vm326, %v1322
      %1331 = vst.msk [vmem:[%s244 + $0x8] sm:$0xff] %vm326, %v1323
      %1332 = vst.msk [vmem:[%s244 + $0x10] sm:$0xff] %vm326, %v1324
      %1333 = vst.msk [vmem:[%s244 + $0x18] sm:$0xff] %vm326, %v1325
      %1334 = vst.msk [vmem:[%s244 + $0x20] sm:$0xff] %vm326, %v1326
      %1335 = vst.msk [vmem:[%s244 + $0x28] sm:$0xff] %vm326, %v1327
      %1336 = vst.msk [vmem:[%s244 + $0x30] sm:$0xff] %vm326, %v1328
      %1337 = vst.msk [vmem:[%s244 + $0x38] sm:$0xff] %vm326, %v1329
      %p1338 = scmp.lt.s32.totalorder %s16, 1
      %s1339 = scalar_select %p1338, %s16, 1
      %s1340 = smul.addr %s1339, 8
      %s1341 = smul.addr %s1340, 8
      %s1342 = scalar_lea.vmem %s5, %s1341
      // Predicated region
      $region41: #{down_forward.8} parent=39 // pred_check
        %p1343 = pneg %p149
      $region42: #{down_forward.8} parent=39 // pred_check_branch
        %1345 = sbr.rel (%p1343) target = $region44
      $region43: #{down_forward.8} parent=39 // pred_region
        _
      $region44: #{down_forward.8} parent=39 // pred_fallthru
        _
    $region40: #{down_forward.8} parent=5 // pred_fallthru
      _
    %p1346 = scmp.le.s32.totalorder 2, %s11
    // Predicated region
    $region45: #{down_forward.8} parent=5 // pred_check
      %p1347 = pneg %p1346
    $region46: #{down_forward.8} parent=5 // pred_check_branch
      %1349 = sbr.rel (%p1347) target = $region48
    $region47: #{down_forward.8} parent=5 // pred_region
      %s1350 = ssub.s32 %s11, 2
      // Predicated region
      $region49: #{down_forward.8} parent=47 // pred_check
        %p1351 = pneg %p155
      $region50: #{down_forward.8} parent=47 // pred_check_branch
        %1353 = sbr.rel (%p1351) target = $region52
      $region51: #{down_forward.8} parent=47 // pred_region
        %p1354 = scmp.lt.s32.totalorder %s17, 1
        %s1355 = scalar_select %p1354, %s17, 1
        %s1356 = smul.addr %s1355, 8
        %s1357 = smul.addr %s1356, 8
        %s1358 = scalar_lea.vmem %s5, %s1357
      $region52: #{down_forward.8} parent=47 // pred_fallthru
        _
    $region48: #{down_forward.8} parent=5 // pred_fallthru
      _
  $region6: #{down_forward.8} parent=0 // loop_footer
    %s15 = sadd.s32 1, %s11
  $region7: #{down_forward.8} parent=0 // loop_footer_branch
    %10 = sbr.rel target = $region3
  $region8: #{down_forward.8} parent=0 // loop_exit
    _

// kernel: down_forward.7
$region0: #{down_forward.7}
  #allocation0 [shape = 'u32[]', space=smem, size = 0x4, offset = 0x4, fixed_abs, tag = 'smem constant byte address 0x4 - core index']
  #allocation1 [shape = 'u32[144,128]{1,0:T(1,128)}', space=vmem, size = 0x12000, scoped, tag = 'internal scratch']
  %s0 = inlined_call_operand.vmem [shape: f32[2,10,10,4], index: 0, kind: input, shape index: {}]
  %s1 = inlined_call_operand.vmem [shape: bf16[9,4,4], index: 1, kind: input, shape index: {}]
  %s2 = inlined_call_operand.vmem [shape: f32[1,4], index: 2, kind: input, shape index: {}]
  %s3 = inlined_call_operand.vmem [shape: f32[1,4], index: 3, kind: input, shape index: {}]
  %s4 = inlined_call_operand.vmem [shape: f32[2,8,8,4], index: 4, kind: output, shape index: {}]
  %s5 = sld [smem:[#allocation0]]
  $region49: #{down_forward.7} parent=0
    _
  %s7 = ssub.s32 1, %s5
  %s8 = scalar_select 0, %s7, %s5
  loop: start=0, step=1, limit=4
  $region2: #{down_forward.7} parent=0 // loop_pre_header
    _
  $region3: #{down_forward.7} parent=0 // loop_header
    %s10 = sphi 0, %s14
    %p11 = scmp.ge.s32.totalorder %s10, 4
    %s20 = sphi 0, %s22
    %s23 = sphi 0, %s20
    %s24 = sphi 0, %s23
    %s40 = sphi 0, %s24
    %s44 = sphi 0, %s44
    %s46 = sphi 0, %s44
    %s47 = sphi 0, %s46
    %s61 = sphi 0, %s47
    %s65 = sphi 0, %s65
    %s67 = sphi 0, %s65
    %s68 = sphi 0, %s67
    %s82 = sphi 0, %s68
    %s86 = sphi 0, %s86
    %s88 = sphi 0, %s86
    %s89 = sphi 0, %s88
    %s103 = sphi 0, %s89
    %s109 = sphi 0, %s111
    %s112 = sphi 0, %s109
    %s113 = sphi 0, %s112
    %s129 = sphi 0, %s113
  $region4: #{down_forward.7} parent=0 // loop_header_branch
    %13 = sbr.rel (%p11) target = $region8
  $region5: #{down_forward.7} parent=0 // loop_body
    %s15 = ssub.s32 %s10, 1
    %s16 = ssub.s32 %s10, 2
    %s17 = sadd.s32 %s10, 1
    %s18 = ssub.s32 %s10, %s17
    %p19 = scmp.eq.s32.totalorder %s18, 0
    %s21 = sadd.s32 %s20, 1
    %s22 = scalar_select %p19, %s20, %s21
    %p25 = pneg %p19
    %p26 = scmp.eq.s32.totalorder %s10, 1
    %p27 = por %p25, %p26
    %p28 = scmp.ne.s32.totalorder %s20, %s23
    %p29 = scmp.eq.s32.totalorder %s10, 0
    %p30 = por %p28, %p29
    %p31 = scmp.ne.s32.totalorder %s20, %s23
    %p32 = scmp.eq.s32.totalorder %s15, 1
    %p33 = por %p31, %p32
    %p34 = scmp.ne.s32.totalorder %s23, %s24
    %p35 = scmp.eq.s32.totalorder %s15, 0
    %p36 = por %p34, %p35
    %p37 = scmp.ne.s32.totalorder %s23, %s24
    %p38 = scmp.eq.s32.totalorder %s16, 1
    %p39 = por %p37, %p38
    %p41 = scmp.ne.s32.totalorder %s24, %s40
    %p42 = scmp.eq.s32.totalorder %s16, 0
    %p43 = por %p41, %p42
    %s45 = sadd.s32 %s44, 1
    %p48 = scmp.eq.s32.totalorder %s10, 1
    %p49 = scmp.ne.s32.totalorder %s44, %s46
    %p50 = scmp.eq.s32.totalorder %s10, 0
    %p51 = por %p49, %p50
    %p52 = scmp.ne.s32.totalorder %s44, %s46
    %p53 = scmp.eq.s32.totalorder %s15, 1
    %p54 = por %p52, %p53
    %p55 = scmp.ne.s32.totalorder %s46, %s47
    %p56 = scmp.eq.s32.totalorder %s15, 0
    %p57 = por %p55, %p56
    %p58 = scmp.ne.s32.totalorder %s46, %s47
    %p59 = scmp.eq.s32.totalorder %s16, 1
    %p60 = por %p58, %p59
    %p62 = scmp.ne.s32.totalorder %s47, %s61
    %p63 = scmp.eq.s32.totalorder %s16, 0
    %p64 = por %p62, %p63
    %s66 = sadd.s32 %s65, 1
    %p69 = scmp.eq.s32.totalorder %s10, 1
    %p70 = scmp.ne.s32.totalorder %s65, %s67
    %p71 = scmp.eq.s32.totalorder %s10, 0
    %p72 = por %p70, %p71
    %p73 = scmp.ne.s32.totalorder %s65, %s67
    %p74 = scmp.eq.s32.totalorder %s15, 1
    %p75 = por %p73, %p74
    %p76 = scmp.ne.s32.totalorder %s67, %s68
    %p77 = scmp.eq.s32.totalorder %s15, 0
    %p78 = por %p76, %p77
    %p79 = scmp.ne.s32.totalorder %s67, %s68
    %p80 = scmp.eq.s32.totalorder %s16, 1
    %p81 = por %p79, %p80
    %p83 = scmp.ne.s32.totalorder %s68, %s82
    %p84 = scmp.eq.s32.totalorder %s16, 0
    %p85 = por %p83, %p84
    %s87 = sadd.s32 %s86, 1
    %p90 = scmp.eq.s32.totalorder %s10, 1
    %p91 = scmp.ne.s32.totalorder %s86, %s88
    %p92 = scmp.eq.s32.totalorder %s10, 0
    %p93 = por %p91, %p92
    %p94 = scmp.ne.s32.totalorder %s86, %s88
    %p95 = scmp.eq.s32.totalorder %s15, 1
    %p96 = por %p94, %p95
    %p97 = scmp.ne.s32.totalorder %s88, %s89
    %p98 = scmp.eq.s32.totalorder %s15, 0
    %p99 = por %p97, %p98
    %p100 = scmp.ne.s32.totalorder %s88, %s89
    %p101 = scmp.eq.s32.totalorder %s16, 1
    %p102 = por %p100, %p101
    %p104 = scmp.ne.s32.totalorder %s89, %s103
    %p105 = scmp.eq.s32.totalorder %s16, 0
    %p106 = por %p104, %p105
    %s107 = ssub.s32 %s10, %s17
    %p108 = scmp.eq.s32.totalorder %s107, 0
    %s110 = sadd.s32 %s109, 1
    %s111 = scalar_select %p108, %s109, %s110
    %p114 = pneg %p108
    %p115 = scmp.eq.s32.totalorder %s10, 1
    %p116 = por %p114, %p115
    %p117 = scmp.ne.s32.totalorder %s109, %s112
    %p118 = scmp.eq.s32.totalorder %s10, 0
    %p119 = por %p117, %p118
    %p120 = scmp.ne.s32.totalorder %s109, %s112
    %p121 = scmp.eq.s32.totalorder %s15, 1
    %p122 = por %p120, %p121
    %p123 = scmp.ne.s32.totalorder %s112, %s113
    %p124 = scmp.eq.s32.totalorder %s15, 0
    %p125 = por %p123, %p124
    %p126 = scmp.ne.s32.totalorder %s112, %s113
    %p127 = scmp.eq.s32.totalorder %s16, 1
    %p128 = por %p126, %p127
    %p130 = scmp.ne.s32.totalorder %s113, %s129
    %p131 = scmp.eq.s32.totalorder %s16, 0
    %p132 = por %p130, %p131
    %p133 = scmp.le.s32.totalorder 1, %s10
    %p134 = scmp.lt.s32.totalorder %s10, 3
    %p135 = pnand %p133, %p134
    %p136 = pneg %p135
    // Predicated region
    $region9: #{down_forward.7} parent=5 // pred_check
      _
    $region10: #{down_forward.7} parent=5 // pred_check_branch
      %138 = sbr.rel (%p135) target = $region12
    $region11: #{down_forward.7} parent=5 // pred_region
      %s139 = ssub.s32 %s10, 1
      // Predicated region
      $region13: #{down_forward.7} parent=11 // pred_check
        %p140 = pneg %p57
      $region14: #{down_forward.7} parent=11 // pred_check_branch
        %142 = sbr.rel (%p140) target = $region16
      $region15: #{down_forward.7} parent=11 // pred_region
        _
      $region16: #{down_forward.7} parent=11 // pred_fallthru
        _
      // Predicated region
      $region17: #{down_forward.7} parent=11 // pred_check
        %p143 = pneg %p78
      $region18: #{down_forward.7} parent=11 // pred_check_branch
        %145 = sbr.rel (%p143) target = $region20
      $region19: #{down_forward.7} parent=11 // pred_region
        _
      $region20: #{down_forward.7} parent=11 // pred_fallthru
        _
      // Predicated region
      $region21: #{down_forward.7} parent=11 // pred_check
        %p146 = pneg %p99
      $region22: #{down_forward.7} parent=11 // pred_check_branch
        %148 = sbr.rel (%p146) target = $region24
      $region23: #{down_forward.7} parent=11 // pred_region
        _
      $region24: #{down_forward.7} parent=11 // pred_fallthru
        _
    $region12: #{down_forward.7} parent=5 // pred_fallthru
      _
    %p149 = scmp.lt.s32.totalorder %s10, 2
    // Predicated region
    $region25: #{down_forward.7} parent=5 // pred_check
      %p150 = pneg %p149
    $region26: #{down_forward.7} parent=5 // pred_check_branch
      %152 = sbr.rel (%p150) target = $region28
    $region27: #{down_forward.7} parent=5 // pred_region
      // Predicated region
      $region29: #{down_forward.7} parent=27 // pred_check
        %p153 = pneg %p30
      $region30: #{down_forward.7} parent=27 // pred_check_branch
        %155 = sbr.rel (%p153) target = $region32
      $region31: #{down_forward.7} parent=27 // pred_region
        %p156 = scmp.lt.s32.totalorder %s10, 1
        %s157 = scalar_select %p156, %s10, 1
        %s158 = smul.addr %s157, 20
        %s159 = smul.addr %s158, 8
        %s160 = scalar_lea.vmem %s0, %s159
      $region32: #{down_forward.7} parent=27 // pred_fallthru
        _
    $region28: #{down_forward.7} parent=5 // pred_fallthru
      _
    %p161 = scmp.le.s32.totalorder 1, %s10
    %p162 = scmp.lt.s32.totalorder %s10, 3
    %p163 = pnand %p161, %p162
    %p164 = pneg %p163
    // Predicated region
    $region33: #{down_forward.7} parent=5 // pred_check
      _
    $region34: #{down_forward.7} parent=5 // pred_check_branch
      %166 = sbr.rel (%p163) target = $region36
    $region35: #{down_forward.7} parent=5 // pred_region
      %s167 = ssub.s32 %s10, 1
      %p168 = scmp.lt.s32.totalorder %s15, 1
      %s169 = scalar_select %p168, %s15, 1
      %s170 = smul.addr %s169, 20
      %s171 = smul.addr %s170, 8
      %s172 = scalar_lea.vmem %s0, %s171
      %p173 = pneg %p36
      %p174 = pneg %p33
      %p175 = pneg %p57
      %p176 = pneg %p54
      %p177 = pneg %p78
      %p178 = pneg %p75
      %p179 = pneg %p99
      %p180 = pneg %p96
      %p181 = pneg %p125
      %p182 = pneg %p122
      %p183 = scmp.lt.s32.totalorder %s15, 1
      %s184 = scalar_select %p183, %s15, 1
      %s185 = smul.addr %s184, 8
      %s186 = smul.addr %s185, 8
      %s187 = scalar_lea.vmem %s4, %s186
      %p188 = scmp.lt.s32.totalorder %s15, 1
      %s189 = scalar_select %p188, %s15, 1
      %s190 = smul.addr %s189, 20
      %s191 = smul.addr %s190, 8
      %s192 = scalar_lea.vmem %s0, %s191
      %p193 = scmp.lt.s32.totalorder %s15, 1
      %s194 = scalar_select %p193, %s15, 1
      %s195 = smul.addr %s194, 8
      %s196 = smul.addr %s195, 8
      %s197 = scalar_lea.vmem %s4, %s196
      %v199 = vld [vmem:[%s192] sm:$0xff]
      %v200 = vld [vmem:[%s192 + $0x8] sm:$0x3]
      %v201 = vld [vmem:[%s192 + $0x10] sm:$0xff]
      %v202 = vld [vmem:[%s192 + $0x18] sm:$0x3]
      %v203 = vld [vmem:[%s192 + $0x20] sm:$0xff]
      %v204 = vld [vmem:[%s192 + $0x28] sm:$0x3]
      %v205 = vld [vmem:[%s192 + $0x30] sm:$0xff]
      %v206 = vld [vmem:[%s192 + $0x38] sm:$0x3]
      %v207 = vld [vmem:[%s192 + $0x40] sm:$0xff]
      %v208 = vld [vmem:[%s192 + $0x48] sm:$0x3]
      %v209 = vld [vmem:[%s192 + $0x50] sm:$0xff]
      %v210 = vld [vmem:[%s192 + $0x58] sm:$0x3]
      %v211 = vld [vmem:[%s192 + $0x60] sm:$0xff]
      %v212 = vld [vmem:[%s192 + $0x68] sm:$0x3]
      %v213 = vld [vmem:[%s192 + $0x70] sm:$0xff]
      %v214 = vld [vmem:[%s192 + $0x78] sm:$0x3]
      %v215 = vld [vmem:[%s192 + $0x80] sm:$0xff]
      %v216 = vld [vmem:[%s192 + $0x88] sm:$0x3]
      %v217 = vld [vmem:[%s192 + $0x90] sm:$0xff]
      %v218 = vld [vmem:[%s192 + $0x98] sm:$0x3]
      %v219 = vpack.c.bf16 %v201, %v199
      %v220 = vpack.c.bf16 %v205, %v203
      %v221 = vpack.c.bf16 %v209, %v207
      %v222 = vpack.c.bf16 %v213, %v211
      %v223 = vld [vmem:[%s1] sm:$0x3]
      %vm240 = vcmask 1046528
      %v241 = vrot.slane %v199, 1
      %v242 = vrot.slane %v200, 1
      %v243 = vsel %vm240, %v241, %v242
      %v244 = vrot.slane %v201, 1
      %v245 = vrot.slane %v202, 1
      %v246 = vsel %vm240, %v244, %v245
      %v247 = vrot.slane %v203, 1
      %v248 = vrot.slane %v204, 1
      %v249 = vsel %vm240, %v247, %v248
      %v250 = vrot.slane %v205, 1
      %v251 = vrot.slane %v206, 1
      %v252 = vsel %vm240, %v250, %v251
      %v253 = vrot.slane %v207, 1
      %v254 = vrot.slane %v208, 1
      %v255 = vsel %vm240, %v253, %v254
      %v256 = vrot.slane %v209, 1
      %v257 = vrot.slane %v210, 1
      %v258 = vsel %vm240, %v256, %v257
      %v259 = vrot.slane %v211, 1
      %v260 = vrot.slane %v212, 1
      %v261 = vsel %vm240, %v259, %v260
      %v262 = vrot.slane %v213, 1
      %v263 = vrot.slane %v214, 1
      %v264 = vsel %vm240, %v262, %v263
      %v273 = vpack.c.bf16 %v246, %v243
      %v274 = vpack.c.bf16 %v252, %v249
      %v275 = vpack.c.bf16 %v258, %v255
      %v276 = vpack.c.bf16 %v264, %v261
      %s277 = scalar_lea.vmem %s1, 2
      %v278 = vld [vmem:[%s277] sm:$0x3]
      %vm279 = vcmask 31744
      %v281 = vsel %vm279, %v273, 0
      %v284 = vsel %vm279, %v274, 0
      %v287 = vsel %vm279, %v275, 0
      %v290 = vsel %vm279, %v276, 0
      %vm292 = vcmask 1041408
      %v294 = vsel %vm292, %v278, 0
      %296 = vmatprep.subr.bf16.mxu0 0
      %297 = vmatpush1.bf16.msra.mxu0 %v294
      %298 = vmatprep.subr.bf16.mxu0 0
      %299 = vmatpush1.bf16.msra.mxu0 0
      %300 = vmatprep.subr.bf16.mxu0 0
      %301 = vmatpush1.bf16.msra.mxu0 0
      %302 = vmatprep.subr.bf16.mxu0 0
      %303 = vmatpush1.bf16.msra.mxu0 0
      %304 = vmatprep.subr.bf16.mxu0 0
      %305 = vmatpush1.bf16.msra.mxu0 0
      %306 = vmatprep.subr.bf16.mxu0 0
      %307 = vmatpush1.bf16.msra.mxu0 0
      %308 = vmatprep.subr.bf16.mxu0 0
      %309 = vmatpush1.bf16.msra.mxu0 0
      %310 = vmatprep.subr.bf16.mxu0 0
      %311 = vmatpush1.bf16.msra.mxu0 0
      %312 = vmatprep.subr.bf16.mxu0 0
      %313 = vmatpush1.bf16.msra.mxu0 0
      %314 = vmatprep.subr.bf16.mxu0 0
      %315 = vmatpush1.bf16.msra.mxu0 0
      %316 = vmatprep.subr.bf16.mxu0 0
      %317 = vmatpush1.bf16.msra.mxu0 0
      %318 = vmatprep.subr.bf16.mxu0 0
      %319 = vmatpush1.bf16.msra.mxu0 0
      %320 = vmatprep.subr.bf16.mxu0 0
      %321 = vmatpush1.bf16.msra.mxu0 0
      %322 = vmatprep.subr.bf16.mxu0 0
      %323 = vmatpush1.bf16.msra.mxu0 0
      %324 = vmatprep.subr.bf16.mxu0 0
      %325 = vmatpush1.bf16.msra.mxu0 0
      %326 = vmatprep.subr.bf16.mxu0 0
      %327 = vmatpush1.bf16.msra.mxu0 0
      %328 = vmatprep.mubr.bf16.mxu0 0
      %329 = vmatmul.mubr.bf16.gmra.mrb[0].mxu0 %v281
      %v330 = vpop.f32.mrb[0].mxu0
      %v331 = vadd.f32 0.0, %v330
      %v332 = vpop.f32.mrb[0].mxu0
      %v333 = vpop.f32.mrb[0].mxu0
      %v334 = vadd.f32 0.0, %v333
      %v335 = vpop.f32.mrb[0].mxu0
      %336 = vmatprep.mubr.bf16.mxu0 0
      %337 = vmatmul.mubr.bf16.gmra.mrb[0].mxu0 %v284
      %v338 = vpop.f32.mrb[0].mxu0
      %v339 = vadd.f32 0.0, %v338
      %v340 = vpop.f32.mrb[0].mxu0
      %v341 = vpop.f32.mrb[0].mxu0
      %v342 = vadd.f32 0.0, %v341
      %v343 = vpop.f32.mrb[0].mxu0
      %344 = vmatprep.mubr.bf16.mxu0 0
      %345 = vmatmul.mubr.bf16.gmra.mrb[0].mxu0 %v287
      %v346 = vpop.f32.mrb[0].mxu0
      %v347 = vadd.f32 0.0, %v346
      %v348 = vpop.f32.mrb[0].mxu0
      %v349 = vpop.f32.mrb[0].mxu0
      %v350 = vadd.f32 0.0, %v349
      %v351 = vpop.f32.mrb[0].mxu0
      %352 = vmatprep.mubr.bf16.mxu0 0
      %353 = vmatmul.mubr.bf16.gmra.mrb[0].mxu0 %v290
      %v354 = vpop.f32.mrb[0].mxu0
      %v355 = vadd.f32 0.0, %v354
      %v356 = vpop.f32.mrb[0].mxu0
      %v357 = vpop.f32.mrb[0].mxu0
      %v358 = vadd.f32 0.0, %v357
      %v359 = vpop.f32.mrb[0].mxu0
      %360 = vdwg.mxu0
      %v362 = vsel %vm279, %v219, 0
      %v365 = vsel %vm279, %v220, 0
      %v368 = vsel %vm279, %v221, 0
      %v371 = vsel %vm279, %v222, 0
      %v374 = vsel %vm292, %v223, 0
      %376 = vmatprep.subr.bf16.mxu0 0
      %377 = vmatpush1.bf16.msra.mxu0 %v374
      %378 = vmatprep.subr.bf16.mxu0 0
      %379 = vmatpush1.bf16.msra.mxu0 0
      %380 = vmatprep.subr.bf16.mxu0 0
      %381 = vmatpush1.bf16.msra.mxu0 0
      %382 = vmatprep.subr.bf16.mxu0 0
      %383 = vmatpush1.bf16.msra.mxu0 0
      %384 = vmatprep.subr.bf16.mxu0 0
      %385 = vmatpush1.bf16.msra.mxu0 0
      %386 = vmatprep.subr.bf16.mxu0 0
      %387 = vmatpush1.bf16.msra.mxu0 0
      %388 = vmatprep.subr.bf16.mxu0 0
      %389 = vmatpush1.bf16.msra.mxu0 0
      %390 = vmatprep.subr.bf16.mxu0 0
      %391 = vmatpush1.bf16.msra.mxu0 0
      %392 = vmatprep.subr.bf16.mxu0 0
      %393 = vmatpush1.bf16.msra.mxu0 0
      %394 = vmatprep.subr.bf16.mxu0 0
      %395 = vmatpush1.bf16.msra.mxu0 0
      %396 = vmatprep.subr.bf16.mxu0 0
      %397 = vmatpush1.bf16.msra.mxu0 0
      %398 = vmatprep.subr.bf16.mxu0 0
      %399 = vmatpush1.bf16.msra.mxu0 0
      %400 = vmatprep.subr.bf16.mxu0 0
      %401 = vmatpush1.bf16.msra.mxu0 0
      %402 = vmatprep.subr.bf16.mxu0 0
      %403 = vmatpush1.bf16.msra.mxu0 0
      %404 = vmatprep.subr.bf16.mxu0 0
      %405 = vmatpush1.bf16.msra.mxu0 0
      %406 = vmatprep.subr.bf16.mxu0 0
      %407 = vmatpush1.bf16.msra.mxu0 0
      %408 = vmatprep.mubr.bf16.mxu0 0
      %409 = vmatmul.mubr.bf16.gmra.mrb[0].mxu0 %v362
      %v410 = vpop.f32.mrb[0].mxu0
      %v411 = vadd.f32 %v331, %v410
      %v412 = vpop.f32.mrb[0].mxu0
      %v413 = vpop.f32.mrb[0].mxu0
      %v414 = vadd.f32 %v334, %v413
      %v415 = vpop.f32.mrb[0].mxu0
      %416 = vmatprep.mubr.bf16.mxu0 0
      %417 = vmatmul.mubr.bf16.gmra.mrb[0].mxu0 %v365
      %v418 = vpop.f32.mrb[0].mxu0
      %v419 = vadd.f32 %v339, %v418
      %v420 = vpop.f32.mrb[0].mxu0
      %v421 = vpop.f32.mrb[0].mxu0
      %v422 = vadd.f32 %v342, %v421
      %v423 = vpop.f32.mrb[0].mxu0
      %424 = vmatprep.mubr.bf16.mxu0 0
      %425 = vmatmul.mubr.bf16.gmra.mrb[0].mxu0 %v368
      %v426 = vpop.f32.mrb[0].mxu0
      %v427 = vadd.f32 %v347, %v426
      %v428 = vpop.f32.mrb[0].mxu0
      %v429 = vpop.f32.mrb[0].mxu0
      %v430 = vadd.f32 %v350, %v429
      %v431 = vpop.f32.mrb[0].mxu0
      %432 = vmatprep.mubr.bf16.mxu0 0
      %433 = vmatmul.mubr.bf16.gmra.mrb[0].mxu0 %v371
      %v434 = vpop.f32.mrb[0].mxu0
      %v435 = vadd.f32 %v355, %v434
      %v436 = vpop.f32.mrb[0].mxu0
      %v437 = vpop.f32.mrb[0].mxu0
      %v438 = vadd.f32 %v358, %v437
      %v439 = vpop.f32.mrb[0].mxu0
      %440 = vdwg.mxu0
      %vm441 = vcmask 1045504
      %v442 = vrot.slane %v199, 2
      %v443 = vrot.slane %v200, 2
      %v444 = vsel %vm441, %v442, %v443
      %v445 = vrot.slane %v201, 2
      %v446 = vrot.slane %v202, 2
      %v447 = vsel %vm441, %v445, %v446
      %v448 = vrot.slane %v203, 2
      %v449 = vrot.slane %v204, 2
      %v450 = vsel %vm441, %v448, %v449
      %v451 = vrot.slane %v205, 2
      %v452 = vrot.slane %v206, 2
      %v453 = vsel %vm441, %v451, %v452
      %v454 = vrot.slane %v207, 2
      %v455 = vrot.slane %v208, 2
      %v456 = vsel %vm441, %v454, %v455
      %v457 = vrot.slane %v209, 2
      %v458 = vrot.slane %v210, 2
      %v459 = vsel %vm441, %v457, %v458
      %v460 = vrot.slane %v211, 2
      %v461 = vrot.slane %v212, 2
      %v462 = vsel %vm441, %v460, %v461
      %v463 = vrot.slane %v213, 2
      %v464 = vrot.slane %v214, 2
      %v465 = vsel %vm441, %v463, %v464
      %v474 = vpack.c.bf16 %v447, %v444
      %v475 = vpack.c.bf16 %v453, %v450
      %v476 = vpack.c.bf16 %v459, %v456
      %v477 = vpack.c.bf16 %v465, %v462
      %s478 = scalar_lea.vmem %s1, 4
      %v479 = vld [vmem:[%s478] sm:$0x3]
      %v481 = vsel %vm279, %v474, 0
      %v484 = vsel %vm279, %v475, 0
      %v487 = vsel %vm279, %v476, 0
      %v490 = vsel %vm279, %v477, 0
      %v493 = vsel %vm292, %v479, 0
      %495 = vmatprep.subr.bf16.mxu0 0
      %496 = vmatpush1.bf16.msra.mxu0 %v493
      %497 = vmatprep.subr.bf16.mxu0 0
      %498 = vmatpush1.bf16.msra.mxu0 0
      %499 = vmatprep.subr.bf16.mxu0 0
      %500 = vmatpush1.bf16.msra.mxu0 0
      %501 = vmatprep.subr.bf16.mxu0 0
      %502 = vmatpush1.bf16.msra.mxu0 0
      %503 = vmatprep.subr.bf16.mxu0 0
      %504 = vmatpush1.bf16.msra.mxu0 0
      %505 = vmatprep.subr.bf16.mxu0 0
      %506 = vmatpush1.bf16.msra.mxu0 0
      %507 = vmatprep.subr.bf16.mxu0 0
      %508 = vmatpush1.bf16.msra.mxu0 0
      %509 = vmatprep.subr.bf16.mxu0 0
      %510 = vmatpush1.bf16.msra.mxu0 0
      %511 = vmatprep.subr.bf16.mxu0 0
      %512 = vmatpush1.bf16.msra.mxu0 0
      %513 = vmatprep.subr.bf16.mxu0 0
      %514 = vmatpush1.bf16.msra.mxu0 0
      %515 = vmatprep.subr.bf16.mxu0 0
      %516 = vmatpush1.bf16.msra.mxu0 0
      %517 = vmatprep.subr.bf16.mxu0 0
      %518 = vmatpush1.bf16.msra.mxu0 0
      %519 = vmatprep.subr.bf16.mxu0 0
      %520 = vmatpush1.bf16.msra.mxu0 0
      %521 = vmatprep.subr.bf16.mxu0 0
      %522 = vmatpush1.bf16.msra.mxu0 0
      %523 = vmatprep.subr.bf16.mxu0 0
      %524 = vmatpush1.bf16.msra.mxu0 0
      %525 = vmatprep.subr.bf16.mxu0 0
      %526 = vmatpush1.bf16.msra.mxu0 0
      %527 = vmatprep.mubr.bf16.mxu0 0
      %528 = vmatmul.mubr.bf16.gmra.mrb[0].mxu0 %v481
      %v529 = vpop.f32.mrb[0].mxu0
      %v530 = vadd.f32 0.0, %v529
      %v531 = vpop.f32.mrb[0].mxu0
      %v532 = vpop.f32.mrb[0].mxu0
      %v533 = vadd.f32 0.0, %v532
      %v534 = vpop.f32.mrb[0].mxu0
      %535 = vmatprep.mubr.bf16.mxu0 0
      %536 = vmatmul.mubr.bf16.gmra.mrb[0].mxu0 %v484
      %v537 = vpop.f32.mrb[0].mxu0
      %v538 = vadd.f32 0.0, %v537
      %v539 = vpop.f32.mrb[0].mxu0
      %v540 = vpop.f32.mrb[0].mxu0
      %v541 = vadd.f32 0.0, %v540
      %v542 = vpop.f32.mrb[0].mxu0
      %543 = vmatprep.mubr.bf16.mxu0 0
      %544 = vmatmul.mubr.bf16.gmra.mrb[0].mxu0 %v487
      %v545 = vpop.f32.mrb[0].mxu0
      %v546 = vadd.f32 0.0, %v545
      %v547 = vpop.f32.mrb[0].mxu0
      %v548 = vpop.f32.mrb[0].mxu0
      %v549 = vadd.f32 0.0, %v548
      %v550 = vpop.f32.mrb[0].mxu0
      %551 = vmatprep.mubr.bf16.mxu0 0
      %552 = vmatmul.mubr.bf16.gmra.mrb[0].mxu0 %v490
      %v553 = vpop.f32.mrb[0].mxu0
      %v554 = vadd.f32 0.0, %v553
      %v555 = vpop.f32.mrb[0].mxu0
      %v556 = vpop.f32.mrb[0].mxu0
      %v557 = vadd.f32 0.0, %v556
      %v558 = vpop.f32.mrb[0].mxu0
      %559 = vdwg.mxu0
      %v560 = vadd.f32 %v411, %v530
      %v561 = vadd.f32 %v414, %v533
      %v562 = vadd.f32 %v419, %v538
      %v563 = vadd.f32 %v422, %v541
      %v564 = vadd.f32 %v427, %v546
      %v565 = vadd.f32 %v430, %v549
      %v566 = vadd.f32 %v435, %v554
      %v567 = vadd.f32 %v438, %v557
      %v568 = vpack.c.bf16 %v203, %v201
      %v569 = vpack.c.bf16 %v207, %v205
      %v570 = vpack.c.bf16 %v211, %v209
      %v571 = vpack.c.bf16 %v215, %v213
      %s572 = scalar_lea.vmem %s1, 6
      %v573 = vld [vmem:[%s572] sm:$0x3]
      %v575 = vsel %vm279, %v568, 0
      %v578 = vsel %vm279, %v569, 0
      %v581 = vsel %vm279, %v570, 0
      %v584 = vsel %vm279, %v571, 0
      %v587 = vsel %vm292, %v573, 0
      %589 = vmatprep.subr.bf16.mxu0 0
      %590 = vmatpush1.bf16.msra.mxu0 %v587
      %591 = vmatprep.subr.bf16.mxu0 0
      %592 = vmatpush1.bf16.msra.mxu0 0
      %593 = vmatprep.subr.bf16.mxu0 0
      %594 = vmatpush1.bf16.msra.mxu0 0
      %595 = vmatprep.subr.bf16.mxu0 0
      %596 = vmatpush1.bf16.msra.mxu0 0
      %597 = vmatprep.subr.bf16.mxu0 0
      %598 = vmatpush1.bf16.msra.mxu0 0
      %599 = vmatprep.subr.bf16.mxu0 0
      %600 = vmatpush1.bf16.msra.mxu0 0
      %601 = vmatprep.subr.bf16.mxu0 0
      %602 = vmatpush1.bf16.msra.mxu0 0
      %603 = vmatprep.subr.bf16.mxu0 0
      %604 = vmatpush1.bf16.msra.mxu0 0
      %605 = vmatprep.subr.bf16.mxu0 0
      %606 = vmatpush1.bf16.msra.mxu0 0
      %607 = vmatprep.subr.bf16.mxu0 0
      %608 = vmatpush1.bf16.msra.mxu0 0
      %609 = vmatprep.subr.bf16.mxu0 0
      %610 = vmatpush1.bf16.msra.mxu0 0
      %611 = vmatprep.subr.bf16.mxu0 0
      %612 = vmatpush1.bf16.msra.mxu0 0
      %613 = vmatprep.subr.bf16.mxu0 0
      %614 = vmatpush1.bf16.msra.mxu0 0
      %615 = vmatprep.subr.bf16.mxu0 0
      %616 = vmatpush1.bf16.msra.mxu0 0
      %617 = vmatprep.subr.bf16.mxu0 0
      %618 = vmatpush1.bf16.msra.mxu0 0
      %619 = vmatprep.subr.bf16.mxu0 0
      %620 = vmatpush1.bf16.msra.mxu0 0
      %621 = vmatprep.mubr.bf16.mxu0 0
      %622 = vmatmul.mubr.bf16.gmra.mrb[0].mxu0 %v575
      %v623 = vpop.f32.mrb[0].mxu0
      %v624 = vadd.f32 0.0, %v623
      %v625 = vpop.f32.mrb[0].mxu0
      %v626 = vpop.f32.mrb[0].mxu0
      %v627 = vadd.f32 0.0, %v626
      %v628 = vpop.f32.mrb[0].mxu0
      %629 = vmatprep.mubr.bf16.mxu0 0
      %630 = vmatmul.mubr.bf16.gmra.mrb[0].mxu0 %v578
      %v631 = vpop.f32.mrb[0].mxu0
      %v632 = vadd.f32 0.0, %v631
      %v633 = vpop.f32.mrb[0].mxu0
      %v634 = vpop.f32.mrb[0].mxu0
      %v635 = vadd.f32 0.0, %v634
      %v636 = vpop.f32.mrb[0].mxu0
      %637 = vmatprep.mubr.bf16.mxu0 0
      %638 = vmatmul.mubr.bf16.gmra.mrb[0].mxu0 %v581
      %v639 = vpop.f32.mrb[0].mxu0
      %v640 = vadd.f32 0.0, %v639
      %v641 = vpop.f32.mrb[0].mxu0
      %v642 = vpop.f32.mrb[0].mxu0
      %v643 = vadd.f32 0.0, %v642
      %v644 = vpop.f32.mrb[0].mxu0
      %645 = vmatprep.mubr.bf16.mxu0 0
      %646 = vmatmul.mubr.bf16.gmra.mrb[0].mxu0 %v584
      %v647 = vpop.f32.mrb[0].mxu0
      %v648 = vadd.f32 0.0, %v647
      %v649 = vpop.f32.mrb[0].mxu0
      %v650 = vpop.f32.mrb[0].mxu0
      %v651 = vadd.f32 0.0, %v650
      %v652 = vpop.f32.mrb[0].mxu0
      %653 = vdwg.mxu0
      %v654 = vadd.f32 %v560, %v624
      %v655 = vadd.f32 %v561, %v627
      %v656 = vadd.f32 %v562, %v632
      %v657 = vadd.f32 %v563, %v635
      %v658 = vadd.f32 %v564, %v640
      %v659 = vadd.f32 %v565, %v643
      %v660 = vadd.f32 %v566, %v648
      %v661 = vadd.f32 %v567, %v651
      %v664 = vrot.slane %v215, 1
      %v665 = vrot.slane %v216, 1
      %v666 = vsel %vm240, %v664, %v665
      %v668 = vpack.c.bf16 %v249, %v246
      %v669 = vpack.c.bf16 %v255, %v252
      %v670 = vpack.c.bf16 %v261, %v258
      %v671 = vpack.c.bf16 %v666, %v264
      %s672 = scalar_lea.vmem %s1, 8
      %v673 = vld [vmem:[%s672] sm:$0x3]
      %v675 = vsel %vm279, %v668, 0
      %v678 = vsel %vm279, %v669, 0
      %v681 = vsel %vm279, %v670, 0
      %v684 = vsel %vm279, %v671, 0
      %v687 = vsel %vm292, %v673, 0
      %689 = vmatprep.subr.bf16.mxu0 0
      %690 = vmatpush1.bf16.msra.mxu0 %v687
      %691 = vmatprep.subr.bf16.mxu0 0
      %692 = vmatpush1.bf16.msra.mxu0 0
      %693 = vmatprep.subr.bf16.mxu0 0
      %694 = vmatpush1.bf16.msra.mxu0 0
      %695 = vmatprep.subr.bf16.mxu0 0
      %696 = vmatpush1.bf16.msra.mxu0 0
      %697 = vmatprep.subr.bf16.mxu0 0
      %698 = vmatpush1.bf16.msra.mxu0 0
      %699 = vmatprep.subr.bf16.mxu0 0
      %700 = vmatpush1.bf16.msra.mxu0 0
      %701 = vmatprep.subr.bf16.mxu0 0
      %702 = vmatpush1.bf16.msra.mxu0 0
      %703 = vmatprep.subr.bf16.mxu0 0
      %704 = vmatpush1.bf16.msra.mxu0 0
      %705 = vmatprep.subr.bf16.mxu0 0
      %706 = vmatpush1.bf16.msra.mxu0 0
      %707 = vmatprep.subr.bf16.mxu0 0
      %708 = vmatpush1.bf16.msra.mxu0 0
      %709 = vmatprep.subr.bf16.mxu0 0
      %710 = vmatpush1.bf16.msra.mxu0 0
      %711 = vmatprep.subr.bf16.mxu0 0
      %712 = vmatpush1.bf16.msra.mxu0 0
      %713 = vmatprep.subr.bf16.mxu0 0
      %714 = vmatpush1.bf16.msra.mxu0 0
      %715 = vmatprep.subr.bf16.mxu0 0
      %716 = vmatpush1.bf16.msra.mxu0 0
      %717 = vmatprep.subr.bf16.mxu0 0
      %718 = vmatpush1.bf16.msra.mxu0 0
      %719 = vmatprep.subr.bf16.mxu0 0
      %720 = vmatpush1.bf16.msra.mxu0 0
      %721 = vmatprep.mubr.bf16.mxu0 0
      %722 = vmatmul.mubr.bf16.gmra.mrb[0].mxu0 %v675
      %v723 = vpop.f32.mrb[0].mxu0
      %v724 = vadd.f32 0.0, %v723
      %v725 = vpop.f32.mrb[0].mxu0
      %v726 = vpop.f32.mrb[0].mxu0
      %v727 = vadd.f32 0.0, %v726
      %v728 = vpop.f32.mrb[0].mxu0
      %729 = vmatprep.mubr.bf16.mxu0 0
      %730 = vmatmul.mubr.bf16.gmra.mrb[0].mxu0 %v678
      %v731 = vpop.f32.mrb[0].mxu0
      %v732 = vadd.f32 0.0, %v731
      %v733 = vpop.f32.mrb[0].mxu0
      %v734 = vpop.f32.mrb[0].mxu0
      %v735 = vadd.f32 0.0, %v734
      %v736 = vpop.f32.mrb[0].mxu0
      %737 = vmatprep.mubr.bf16.mxu0 0
      %738 = vmatmul.mubr.bf16.gmra.mrb[0].mxu0 %v681
      %v739 = vpop.f32.mrb[0].mxu0
      %v740 = vadd.f32 0.0, %v739
      %v741 = vpop.f32.mrb[0].mxu0
      %v742 = vpop.f32.mrb[0].mxu0
      %v743 = vadd.f32 0.0, %v742
      %v744 = vpop.f32.mrb[0].mxu0
      %745 = vmatprep.mubr.bf16.mxu0 0
      %746 = vmatmul.mubr.bf16.gmra.mrb[0].mxu0 %v684
      %v747 = vpop.f32.mrb[0].mxu0
      %v748 = vadd.f32 0.0, %v747
      %v749 = vpop.f32.mrb[0].mxu0
      %v750 = vpop.f32.mrb[0].mxu0
      %v751 = vadd.f32 0.0, %v750
      %v752 = vpop.f32.mrb[0].mxu0
      %753 = vdwg.mxu0
      %v754 = vadd.f32 %v654, %v724
      %v755 = vadd.f32 %v655, %v727
      %v756 = vadd.f32 %v656, %v732
      %v757 = vadd.f32 %v657, %v735
      %v758 = vadd.f32 %v658, %v740
      %v759 = vadd.f32 %v659, %v743
      %v760 = vadd.f32 %v660, %v748
      %v761 = vadd.f32 %v661, %v751
      %v762 = vrot.slane %v215, 2
      %v763 = vrot.slane %v216, 2
      %v764 = vsel %vm441, %v762, %v763
      %v766 = vpack.c.bf16 %v450, %v447
      %v767 = vpack.c.bf16 %v456, %v453
      %v768 = vpack.c.bf16 %v462, %v459
      %v769 = vpack.c.bf16 %v764, %v465
      %s770 = scalar_lea.vmem %s1, 10
      %v771 = vld [vmem:[%s770] sm:$0x3]
      %v773 = vsel %vm279, %v766, 0
      %v776 = vsel %vm279, %v767, 0
      %v779 = vsel %vm279, %v768, 0
      %v782 = vsel %vm279, %v769, 0
      %v785 = vsel %vm292, %v771, 0
      %787 = vmatprep.subr.bf16.mxu0 0
      %788 = vmatpush1.bf16.msra.mxu0 %v785
      %789 = vmatprep.subr.bf16.mxu0 0
      %790 = vmatpush1.bf16.msra.mxu0 0
      %791 = vmatprep.subr.bf16.mxu0 0
      %792 = vmatpush1.bf16.msra.mxu0 0
      %793 = vmatprep.subr.bf16.mxu0 0
      %794 = vmatpush1.bf16.msra.mxu0 0
      %795 = vmatprep.subr.bf16.mxu0 0
      %796 = vmatpush1.bf16.msra.mxu0 0
      %797 = vmatprep.subr.bf16.mxu0 0
      %798 = vmatpush1.bf16.msra.mxu0 0
      %799 = vmatprep.subr.bf16.mxu0 0
      %800 = vmatpush1.bf16.msra.mxu0 0
      %801 = vmatprep.subr.bf16.mxu0 0
      %802 = vmatpush1.bf16.msra.mxu0 0
      %803 = vmatprep.subr.bf16.mxu0 0
      %804 = vmatpush1.bf16.msra.mxu0 0
      %805 = vmatprep.subr.bf16.mxu0 0
      %806 = vmatpush1.bf16.msra.mxu0 0
      %807 = vmatprep.subr.bf16.mxu0 0
      %808 = vmatpush1.bf16.msra.mxu0 0
      %809 = vmatprep.subr.bf16.mxu0 0
      %810 = vmatpush1.bf16.msra.mxu0 0
      %811 = vmatprep.subr.bf16.mxu0 0
      %812 = vmatpush1.bf16.msra.mxu0 0
      %813 = vmatprep.subr.bf16.mxu0 0
      %814 = vmatpush1.bf16.msra.mxu0 0
      %815 = vmatprep.subr.bf16.mxu0 0
      %816 = vmatpush1.bf16.msra.mxu0 0
      %817 = vmatprep.subr.bf16.mxu0 0
      %818 = vmatpush1.bf16.msra.mxu0 0
      %819 = vmatprep.mubr.bf16.mxu0 0
      %820 = vmatmul.mubr.bf16.gmra.mrb[0].mxu0 %v773
      %v821 = vpop.f32.mrb[0].mxu0
      %v822 = vadd.f32 0.0, %v821
      %v823 = vpop.f32.mrb[0].mxu0
      %v824 = vpop.f32.mrb[0].mxu0
      %v825 = vadd.f32 0.0, %v824
      %v826 = vpop.f32.mrb[0].mxu0
      %827 = vmatprep.mubr.bf16.mxu0 0
      %828 = vmatmul.mubr.bf16.gmra.mrb[0].mxu0 %v776
      %v829 = vpop.f32.mrb[0].mxu0
      %v830 = vadd.f32 0.0, %v829
      %v831 = vpop.f32.mrb[0].mxu0
      %v832 = vpop.f32.mrb[0].mxu0
      %v833 = vadd.f32 0.0, %v832
      %v834 = vpop.f32.mrb[0].mxu0
      %835 = vmatprep.mubr.bf16.mxu0 0
      %836 = vmatmul.mubr.bf16.gmra.mrb[0].mxu0 %v779
      %v837 = vpop.f32.mrb[0].mxu0
      %v838 = vadd.f32 0.0, %v837
      %v839 = vpop.f32.mrb[0].mxu0
      %v840 = vpop.f32.mrb[0].mxu0
      %v841 = vadd.f32 0.0, %v840
      %v842 = vpop.f32.mrb[0].mxu0
      %843 = vmatprep.mubr.bf16.mxu0 0
      %844 = vmatmul.mubr.bf16.gmra.mrb[0].mxu0 %v782
      %v845 = vpop.f32.mrb[0].mxu0
      %v846 = vadd.f32 0.0, %v845
      %v847 = vpop.f32.mrb[0].mxu0
      %v848 = vpop.f32.mrb[0].mxu0
      %v849 = vadd.f32 0.0, %v848
      %v850 = vpop.f32.mrb[0].mxu0
      %851 = vdwg.mxu0
      %v852 = vadd.f32 %v754, %v822
      %v853 = vadd.f32 %v755, %v825
      %v854 = vadd.f32 %v756, %v830
      %v855 = vadd.f32 %v757, %v833
      %v856 = vadd.f32 %v758, %v838
      %v857 = vadd.f32 %v759, %v841
      %v858 = vadd.f32 %v760, %v846
      %v859 = vadd.f32 %v761, %v849
      %v860 = vpack.c.bf16 %v217, %v215
      %s861 = scalar_lea.vmem %s1, 12
      %v862 = vld [vmem:[%s861] sm:$0x3]
      %v864 = vsel %vm279, %v860, 0
      %v867 = vsel %vm292, %v862, 0
      %869 = vmatprep.subr.bf16.mxu0 0
      %870 = vmatpush1.bf16.msra.mxu0 %v867
      %871 = vmatprep.subr.bf16.mxu0 0
      %872 = vmatpush1.bf16.msra.mxu0 0
      %873 = vmatprep.subr.bf16.mxu0 0
      %874 = vmatpush1.bf16.msra.mxu0 0
      %875 = vmatprep.subr.bf16.mxu0 0
      %876 = vmatpush1.bf16.msra.mxu0 0
      %877 = vmatprep.subr.bf16.mxu0 0
      %878 = vmatpush1.bf16.msra.mxu0 0
      %879 = vmatprep.subr.bf16.mxu0 0
      %880 = vmatpush1.bf16.msra.mxu0 0
      %881 = vmatprep.subr.bf16.mxu0 0
      %882 = vmatpush1.bf16.msra.mxu0 0
      %883 = vmatprep.subr.bf16.mxu0 0
      %884 = vmatpush1.bf16.msra.mxu0 0
      %885 = vmatprep.subr.bf16.mxu0 0
      %886 = vmatpush1.bf16.msra.mxu0 0
      %887 = vmatprep.subr.bf16.mxu0 0
      %888 = vmatpush1.bf16.msra.mxu0 0
      %889 = vmatprep.subr.bf16.mxu0 0
      %890 = vmatpush1.bf16.msra.mxu0 0
      %891 = vmatprep.subr.bf16.mxu0 0
      %892 = vmatpush1.bf16.msra.mxu0 0
      %893 = vmatprep.subr.bf16.mxu0 0
      %894 = vmatpush1.bf16.msra.mxu0 0
      %895 = vmatprep.subr.bf16.mxu0 0
      %896 = vmatpush1.bf16.msra.mxu0 0
      %897 = vmatprep.subr.bf16.mxu0 0
      %898 = vmatpush1.bf16.msra.mxu0 0
      %899 = vmatprep.subr.bf16.mxu0 0
      %900 = vmatpush1.bf16.msra.mxu0 0
      %901 = vmatprep.mubr.bf16.mxu0 0
      %902 = vmatmul.mubr.bf16.gmra.mrb[0].mxu0 %v365
      %v903 = vpop.f32.mrb[0].mxu0
      %v904 = vadd.f32 0.0, %v903
      %v905 = vpop.f32.mrb[0].mxu0
      %v906 = vpop.f32.mrb[0].mxu0
      %v907 = vadd.f32 0.0, %v906
      %v908 = vpop.f32.mrb[0].mxu0
      %909 = vmatprep.mubr.bf16.mxu0 0
      %910 = vmatmul.mubr.bf16.gmra.mrb[0].mxu0 %v368
      %v911 = vpop.f32.mrb[0].mxu0
      %v912 = vadd.f32 0.0, %v911
      %v913 = vpop.f32.mrb[0].mxu0
      %v914 = vpop.f32.mrb[0].mxu0
      %v915 = vadd.f32 0.0, %v914
      %v916 = vpop.f32.mrb[0].mxu0
      %917 = vmatprep.mubr.bf16.mxu0 0
      %918 = vmatmul.mubr.bf16.gmra.mrb[0].mxu0 %v371
      %v919 = vpop.f32.mrb[0].mxu0
      %v920 = vadd.f32 0.0, %v919
      %v921 = vpop.f32.mrb[0].mxu0
      %v922 = vpop.f32.mrb[0].mxu0
      %v923 = vadd.f32 0.0, %v922
      %v924 = vpop.f32.mrb[0].mxu0
      %925 = vmatprep.mubr.bf16.mxu0 0
      %926 = vmatmul.mubr.bf16.gmra.mrb[0].mxu0 %v864
      %v927 = vpop.f32.mrb[0].mxu0
      %v928 = vadd.f32 0.0, %v927
      %v929 = vpop.f32.mrb[0].mxu0
      %v930 = vpop.f32.mrb[0].mxu0
      %v931 = vadd.f32 0.0, %v930
      %v932 = vpop.f32.mrb[0].mxu0
      %933 = vdwg.mxu0
      %v934 = vadd.f32 %v852, %v904
      %v935 = vadd.f32 %v853, %v907
      %v936 = vadd.f32 %v854, %v912
      %v937 = vadd.f32 %v855, %v915
      %v938 = vadd.f32 %v856, %v920
      %v939 = vadd.f32 %v857, %v923
      %v940 = vadd.f32 %v858, %v928
      %v941 = vadd.f32 %v859, %v931
      %v944 = vrot.slane %v217, 1
      %v945 = vrot.slane %v218, 1
      %v946 = vsel %vm240, %v944, %v945
      %v948 = vpack.c.bf16 %v946, %v666
      %s949 = scalar_lea.vmem %s1, 14
      %v950 = vld [vmem:[%s949] sm:$0x3]
      %v952 = vsel %vm279, %v948, 0
      %v955 = vsel %vm292, %v950, 0
      %957 = vmatprep.subr.bf16.mxu0 0
      %958 = vmatpush1.bf16.msra.mxu0 %v955
      %959 = vmatprep.subr.bf16.mxu0 0
      %960 = vmatpush1.bf16.msra.mxu0 0
      %961 = vmatprep.subr.bf16.mxu0 0
      %962 = vmatpush1.bf16.msra.mxu0 0
      %963 = vmatprep.subr.bf16.mxu0 0
      %964 = vmatpush1.bf16.msra.mxu0 0
      %965 = vmatprep.subr.bf16.mxu0 0
      %966 = vmatpush1.bf16.msra.mxu0 0
      %967 = vmatprep.subr.bf16.mxu0 0
      %968 = vmatpush1.bf16.msra.mxu0 0
      %969 = vmatprep.subr.bf16.mxu0 0
      %970 = vmatpush1.bf16.msra.mxu0 0
      %971 = vmatprep.subr.bf16.mxu0 0
      %972 = vmatpush1.bf16.msra.mxu0 0
      %973 = vmatprep.subr.bf16.mxu0 0
      %974 = vmatpush1.bf16.msra.mxu0 0
      %975 = vmatprep.subr.bf16.mxu0 0
      %976 = vmatpush1.bf16.msra.mxu0 0
      %977 = vmatprep.subr.bf16.mxu0 0
      %978 = vmatpush1.bf16.msra.mxu0 0
      %979 = vmatprep.subr.bf16.mxu0 0
      %980 = vmatpush1.bf16.msra.mxu0 0
      %981 = vmatprep.subr.bf16.mxu0 0
      %982 = vmatpush1.bf16.msra.mxu0 0
      %983 = vmatprep.subr.bf16.mxu0 0
      %984 = vmatpush1.bf16.msra.mxu0 0
      %985 = vmatprep.subr.bf16.mxu0 0
      %986 = vmatpush1.bf16.msra.mxu0 0
      %987 = vmatprep.subr.bf16.mxu0 0
      %988 = vmatpush1.bf16.msra.mxu0 0
      %989 = vmatprep.mubr.bf16.mxu0 0
      %990 = vmatmul.mubr.bf16.gmra.mrb[0].mxu0 %v284
      %v991 = vpop.f32.mrb[0].mxu0
      %v992 = vadd.f32 0.0, %v991
      %v993 = vpop.f32.mrb[0].mxu0
      %v994 = vpop.f32.mrb[0].mxu0
      %v995 = vadd.f32 0.0, %v994
      %v996 = vpop.f32.mrb[0].mxu0
      %997 = vmatprep.mubr.bf16.mxu0 0
      %998 = vmatmul.mubr.bf16.gmra.mrb[0].mxu0 %v287
      %v999 = vpop.f32.mrb[0].mxu0
      %v1000 = vadd.f32 0.0, %v999
      %v1001 = vpop.f32.mrb[0].mxu0
      %v1002 = vpop.f32.mrb[0].mxu0
      %v1003 = vadd.f32 0.0, %v1002
      %v1004 = vpop.f32.mrb[0].mxu0
      %1005 = vmatprep.mubr.bf16.mxu0 0
      %1006 = vmatmul.mubr.bf16.gmra.mrb[0].mxu0 %v290
      %v1007 = vpop.f32.mrb[0].mxu0
      %v1008 = vadd.f32 0.0, %v1007
      %v1009 = vpop.f32.mrb[0].mxu0
      %v1010 = vpop.f32.mrb[0].mxu0
      %v1011 = vadd.f32 0.0, %v1010
      %v1012 = vpop.f32.mrb[0].mxu0
      %1013 = vmatprep.mubr.bf16.mxu0 0
      %1014 = vmatmul.mubr.bf16.gmra.mrb[0].mxu0 %v952
      %v1015 = vpop.f32.mrb[0].mxu0
      %v1016 = vadd.f32 0.0, %v1015
      %v1017 = vpop.f32.mrb[0].mxu0
      %v1018 = vpop.f32.mrb[0].mxu0
      %v1019 = vadd.f32 0.0, %v1018
      %v1020 = vpop.f32.mrb[0].mxu0
      %1021 = vdwg.mxu0
      %v1022 = vadd.f32 %v934, %v992
      %v1023 = vadd.f32 %v935, %v995
      %v1024 = vadd.f32 %v936, %v1000
      %v1025 = vadd.f32 %v937, %v1003
      %v1026 = vadd.f32 %v938, %v1008
      %v1027 = vadd.f32 %v939, %v1011
      %v1028 = vadd.f32 %v940, %v1016
      %v1029 = vadd.f32 %v941, %v1019
      %v1030 = vrot.slane %v217, 2
      %v1031 = vrot.slane %v218, 2
      %v1032 = vsel %vm441, %v1030, %v1031
      %v1034 = vpack.c.bf16 %v1032, %v764
      %s1035 = scalar_lea.vmem %s1, 16
      %v1036 = vld [vmem:[%s1035] sm:$0x3]
      %v1038 = vsel %vm279, %v1034, 0
      %v1041 = vsel %vm292, %v1036, 0
      %1043 = vmatprep.subr.bf16.mxu0 0
      %1044 = vmatpush1.bf16.msra.mxu0 %v1041
      %1045 = vmatprep.subr.bf16.mxu0 0
      %1046 = vmatpush1.bf16.msra.mxu0 0
      %1047 = vmatprep.subr.bf16.mxu0 0
      %1048 = vmatpush1.bf16.msra.mxu0 0
      %1049 = vmatprep.subr.bf16.mxu0 0
      %1050 = vmatpush1.bf16.msra.mxu0 0
      %1051 = vmatprep.subr.bf16.mxu0 0
      %1052 = vmatpush1.bf16.msra.mxu0 0
      %1053 = vmatprep.subr.bf16.mxu0 0
      %1054 = vmatpush1.bf16.msra.mxu0 0
      %1055 = vmatprep.subr.bf16.mxu0 0
      %1056 = vmatpush1.bf16.msra.mxu0 0
      %1057 = vmatprep.subr.bf16.mxu0 0
      %1058 = vmatpush1.bf16.msra.mxu0 0
      %1059 = vmatprep.subr.bf16.mxu0 0
      %1060 = vmatpush1.bf16.msra.mxu0 0
      %1061 = vmatprep.subr.bf16.mxu0 0
      %1062 = vmatpush1.bf16.msra.mxu0 0
      %1063 = vmatprep.subr.bf16.mxu0 0
      %1064 = vmatpush1.bf16.msra.mxu0 0
      %1065 = vmatprep.subr.bf16.mxu0 0
      %1066 = vmatpush1.bf16.msra.mxu0 0
      %1067 = vmatprep.subr.bf16.mxu0 0
      %1068 = vmatpush1.bf16.msra.mxu0 0
      %1069 = vmatprep.subr.bf16.mxu0 0
      %1070 = vmatpush1.bf16.msra.mxu0 0
      %1071 = vmatprep.subr.bf16.mxu0 0
      %1072 = vmatpush1.bf16.msra.mxu0 0
      %1073 = vmatprep.subr.bf16.mxu0 0
      %1074 = vmatpush1.bf16.msra.mxu0 0
      %1075 = vmatprep.mubr.bf16.mxu0 0
      %1076 = vmatmul.mubr.bf16.gmra.mrb[0].mxu0 %v484
      %v1077 = vpop.f32.mrb[0].mxu0
      %v1078 = vadd.f32 0.0, %v1077
      %v1079 = vpop.f32.mrb[0].mxu0
      %v1080 = vpop.f32.mrb[0].mxu0
      %v1081 = vadd.f32 0.0, %v1080
      %v1082 = vpop.f32.mrb[0].mxu0
      %1083 = vmatprep.mubr.bf16.mxu0 0
      %1084 = vmatmul.mubr.bf16.gmra.mrb[0].mxu0 %v487
      %v1085 = vpop.f32.mrb[0].mxu0
      %v1086 = vadd.f32 0.0, %v1085
      %v1087 = vpop.f32.mrb[0].mxu0
      %v1088 = vpop.f32.mrb[0].mxu0
      %v1089 = vadd.f32 0.0, %v1088
      %v1090 = vpop.f32.mrb[0].mxu0
      %1091 = vmatprep.mubr.bf16.mxu0 0
      %1092 = vmatmul.mubr.bf16.gmra.mrb[0].mxu0 %v490
      %v1093 = vpop.f32.mrb[0].mxu0
      %v1094 = vadd.f32 0.0, %v1093
      %v1095 = vpop.f32.mrb[0].mxu0
      %v1096 = vpop.f32.mrb[0].mxu0
      %v1097 = vadd.f32 0.0, %v1096
      %v1098 = vpop.f32.mrb[0].mxu0
      %1099 = vmatprep.mubr.bf16.mxu0 0
      %1100 = vmatmul.mubr.bf16.gmra.mrb[0].mxu0 %v1038
      %v1101 = vpop.f32.mrb[0].mxu0
      %v1102 = vadd.f32 0.0, %v1101
      %v1103 = vpop.f32.mrb[0].mxu0
      %v1104 = vpop.f32.mrb[0].mxu0
      %v1105 = vadd.f32 0.0, %v1104
      %v1106 = vpop.f32.mrb[0].mxu0
      %1107 = vdwg.mxu0
      %v1108 = vadd.f32 %v1022, %v1078
      %v1109 = vadd.f32 %v1023, %v1081
      %v1110 = vadd.f32 %v1024, %v1086
      %v1111 = vadd.f32 %v1025, %v1089
      %v1112 = vadd.f32 %v1026, %v1094
      %v1113 = vadd.f32 %v1027, %v1097
      %v1114 = vadd.f32 %v1028, %v1102
      %v1115 = vadd.f32 %v1029, %v1105
      %v1116 = vsel %vm279, %v1108, 0.0
      %v1117 = vsel %vm279, %v1109, 0.0
      %v1118 = vadd.f32 %v1116, %v1117
      %v1119 = vsel %vm279, %v1110, 0.0
      %v1120 = vadd.f32 %v1118, %v1119
      %v1121 = vsel %vm279, %v1111, 0.0
      %v1122 = vadd.f32 %v1120, %v1121
      %v1123 = vsel %vm279, %v1112, 0.0
      %v1124 = vadd.f32 %v1122, %v1123
      %v1125 = vsel %vm279, %v1113, 0.0
      %v1126 = vadd.f32 %v1124, %v1125
      %v1127 = vsel %vm279, %v1114, 0.0
      %v1128 = vadd.f32 %v1126, %v1127
      %v1129 = vsel %vm279, %v1115, 0.0
      %v1130 = vadd.f32 %v1128, %v1129
      %1131 = vadd.xlane.f32.xlu0 %v1130
      %v1132 = vpop.xlane.xlu0 %1131
      %v1133 = vrot.slane %v1132, 4
      %v1134 = vadd.f32 %v1132, %v1133
      %v1135 = vrot.slane %v1134, 2
      %v1136 = vadd.f32 %v1134, %v1135
      %v1137 = vrot.slane %v1136, 1
      %v1138 = vadd.f32 %v1136, %v1137
      %s1139 = vtos %v1138
      %v1140 = vstv %s1139
      %v1141 = vmul.f32 %v1108, %v1108
      %v1142 = vmul.f32 %v1109, %v1109
      %v1143 = vmul.f32 %v1110, %v1110
      %v1144 = vmul.f32 %v1111, %v1111
      %v1145 = vmul.f32 %v1112, %v1112
      %v1146 = vmul.f32 %v1113, %v1113
      %v1147 = vmul.f32 %v1114, %v1114
      %v1148 = vmul.f32 %v1115, %v1115
      %v1149 = vsel %vm279, %v1141, 0.0
      %v1150 = vsel %vm279, %v1142, 0.0
      %v1151 = vadd.f32 %v1149, %v1150
      %v1152 = vsel %vm279, %v1143, 0.0
      %v1153 = vadd.f32 %v1151, %v1152
      %v1154 = vsel %vm279, %v1144, 0.0
      %v1155 = vadd.f32 %v1153, %v1154
      %v1156 = vsel %vm279, %v1145, 0.0
      %v1157 = vadd.f32 %v1155, %v1156
      %v1158 = vsel %vm279, %v1146, 0.0
      %v1159 = vadd.f32 %v1157, %v1158
      %v1160 = vsel %vm279, %v1147, 0.0
      %v1161 = vadd.f32 %v1159, %v1160
      %v1162 = vsel %vm279, %v1148, 0.0
      %v1163 = vadd.f32 %v1161, %v1162
      %1164 = vadd.xlane.f32.xlu0 %v1163
      %v1165 = vpop.xlane.xlu0 %1164
      %v1166 = vrot.slane %v1165, 4
      %v1167 = vadd.f32 %v1165, %v1166
      %v1168 = vrot.slane %v1167, 2
      %v1169 = vadd.f32 %v1167, %v1168
      %v1170 = vrot.slane %v1169, 1
      %v1171 = vadd.f32 %v1169, %v1170
      %s1172 = vtos %v1171
      %v1173 = vstv %s1172
      %v1174 = vmul.f32 %v1140, 0.00390625
      %v1175 = vmul.f32 %v1173, 0.00390625
      %v1176 = vmul.f32 %v1174, %v1174
      %v1177 = vsub.f32 %v1175, %v1176
      %v1178 = vmax.f32 %v1177, 0.0
      %v1179 = vsub.f32 %v1108, %v1174
      %v1180 = vsub.f32 %v1109, %v1174
      %v1181 = vsub.f32 %v1110, %v1174
      %v1182 = vsub.f32 %v1111, %v1174
      %v1183 = vsub.f32 %v1112, %v1174
      %v1184 = vsub.f32 %v1113, %v1174
      %v1185 = vsub.f32 %v1114, %v1174
      %v1186 = vsub.f32 %v1115, %v1174
      %v1187 = vadd.f32 %v1178, 1e-05
      %v1188 = vrsqrt.pop %v1187
      %v1189 = vmul.f32 %v1179, %v1188
      %v1190 = vmul.f32 %v1180, %v1188
      %v1191 = vmul.f32 %v1181, %v1188
      %v1192 = vmul.f32 %v1182, %v1188
      %v1193 = vmul.f32 %v1183, %v1188
      %v1194 = vmul.f32 %v1184, %v1188
      %v1195 = vmul.f32 %v1185, %v1188
      %v1196 = vmul.f32 %v1186, %v1188
      %v1197 = vld [vmem:[%s2] sm:$0x1]
      %v1199 = vlaneseq
      %v1200 = vshrl.u32 %v1199, 7
      %v1201 = vsub.s32 0, %v1200
      %v1202 = vrot.slane %v1197, %v1201
      %v1204 = vmul.f32 %v1189, %v1202
      %v1205 = vmul.f32 %v1190, %v1202
      %v1206 = vmul.f32 %v1191, %v1202
      %v1207 = vmul.f32 %v1192, %v1202
      %v1208 = vmul.f32 %v1193, %v1202
      %v1209 = vmul.f32 %v1194, %v1202
      %v1210 = vmul.f32 %v1195, %v1202
      %v1211 = vmul.f32 %v1196, %v1202
      %v1212 = vld [vmem:[%s3] sm:$0x1]
      %v1214 = vlaneseq
      %v1215 = vshrl.u32 %v1214, 7
      %v1216 = vsub.s32 0, %v1215
      %v1217 = vrot.slane %v1212, %v1216
      %v1219 = vadd.f32 %v1204, %v1217
      %v1220 = vadd.f32 %v1205, %v1217
      %v1221 = vadd.f32 %v1206, %v1217
      %v1222 = vadd.f32 %v1207, %v1217
      %v1223 = vadd.f32 %v1208, %v1217
      %v1224 = vadd.f32 %v1209, %v1217
      %v1225 = vadd.f32 %v1210, %v1217
      %v1226 = vadd.f32 %v1211, %v1217
      %v1227 = vmul.f32 %v1219, 0.5
      %v1228 = vmul.f32 %v1220, 0.5
      %v1229 = vmul.f32 %v1221, 0.5
      %v1230 = vmul.f32 %v1222, 0.5
      %v1231 = vmul.f32 %v1223, 0.5
      %v1232 = vmul.f32 %v1224, 0.5
      %v1233 = vmul.f32 %v1225, 0.5
      %v1234 = vmul.f32 %v1226, 0.5
      %v1235 = vmul.f32 %v1219, 0.70710677
      %v1236 = vmul.f32 %v1220, 0.70710677
      %v1237 = vmul.f32 %v1221, 0.70710677
      %v1238 = vmul.f32 %v1222, 0.70710677
      %v1239 = vmul.f32 %v1223, 0.70710677
      %v1240 = vmul.f32 %v1224, 0.70710677
      %v1241 = vmul.f32 %v1225, 0.70710677
      %v1242 = vmul.f32 %v1226, 0.70710677
      %v1243 = verf.f32.pop %v1235
      %v1244 = verf.f32.pop %v1236
      %v1245 = verf.f32.pop %v1237
      %v1246 = verf.f32.pop %v1238
      %v1247 = verf.f32.pop %v1239
      %v1248 = verf.f32.pop %v1240
      %v1249 = verf.f32.pop %v1241
      %v1250 = verf.f32.pop %v1242
      %v1251 = vadd.f32 %v1243, 1.0
      %v1252 = vadd.f32 %v1244, 1.0
      %v1253 = vadd.f32 %v1245, 1.0
      %v1254 = vadd.f32 %v1246, 1.0
      %v1255 = vadd.f32 %v1247, 1.0
      %v1256 = vadd.f32 %v1248, 1.0
      %v1257 = vadd.f32 %v1249, 1.0
      %v1258 = vadd.f32 %v1250, 1.0
      %v1259 = vmul.f32 %v1227, %v1251
      %v1260 = vmul.f32 %v1228, %v1252
      %v1261 = vmul.f32 %v1229, %v1253
      %v1262 = vmul.f32 %v1230, %v1254
      %v1263 = vmul.f32 %v1231, %v1255
      %v1264 = vmul.f32 %v1232, %v1256
      %v1265 = vmul.f32 %v1233, %v1257
      %v1266 = vmul.f32 %v1234, %v1258
      %1267 = vst.msk [vmem:[%s197] sm:$0xff] %vm279, %v1259
      %1268 = vst.msk [vmem:[%s197 + $0x8] sm:$0xff] %vm279, %v1260
      %1269 = vst.msk [vmem:[%s197 + $0x10] sm:$0xff] %vm279, %v1261
      %1270 = vst.msk [vmem:[%s197 + $0x18] sm:$0xff] %vm279, %v1262
      %1271 = vst.msk [vmem:[%s197 + $0x20] sm:$0xff] %vm279, %v1263
      %1272 = vst.msk [vmem:[%s197 + $0x28] sm:$0xff] %vm279, %v1264
      %1273 = vst.msk [vmem:[%s197 + $0x30] sm:$0xff] %vm279, %v1265
      %1274 = vst.msk [vmem:[%s197 + $0x38] sm:$0xff] %vm279, %v1266
      %p1275 = scmp.lt.s32.totalorder %s15, 1
      %s1276 = scalar_select %p1275, %s15, 1
      %s1277 = smul.addr %s1276, 8
      %s1278 = smul.addr %s1277, 8
      %s1279 = scalar_lea.vmem %s4, %s1278
      // Predicated region
      $region37: #{down_forward.7} parent=35 // pred_check
        %p1280 = pneg %p122
      $region38: #{down_forward.7} parent=35 // pred_check_branch
        %1282 = sbr.rel (%p1280) target = $region40
      $region39: #{down_forward.7} parent=35 // pred_region
        _
      $region40: #{down_forward.7} parent=35 // pred_fallthru
        _
    $region36: #{down_forward.7} parent=5 // pred_fallthru
      _
    %p1283 = scmp.le.s32.totalorder 2, %s10
    // Predicated region
    $region41: #{down_forward.7} parent=5 // pred_check
      %p1284 = pneg %p1283
    $region42: #{down_forward.7} parent=5 // pred_check_branch
      %1286 = sbr.rel (%p1284) target = $region44
    $region43: #{down_forward.7} parent=5 // pred_region
      %s1287 = ssub.s32 %s10, 2
      // Predicated region
      $region45: #{down_forward.7} parent=43 // pred_check
        %p1288 = pneg %p128
      $region46: #{down_forward.7} parent=43 // pred_check_branch
        %1290 = sbr.rel (%p1288) target = $region48
      $region47: #{down_forward.7} parent=43 // pred_region
        %p1291 = scmp.lt.s32.totalorder %s16, 1
        %s1292 = scalar_select %p1291, %s16, 1
        %s1293 = smul.addr %s1292, 8
        %s1294 = smul.addr %s1293, 8
        %s1295 = scalar_lea.vmem %s4, %s1294
      $region48: #{down_forward.7} parent=43 // pred_fallthru
        _
    $region44: #{down_forward.7} parent=5 // pred_fallthru
      _
  $region6: #{down_forward.7} parent=0 // loop_footer
    %s14 = sadd.s32 1, %s10
  $region7: #{down_forward.7} parent=0 // loop_footer_branch
    %9 = sbr.rel target = $region3
  $region8: #{down_forward.7} parent=0 // loop_exit
    _

// kernel: down_forward.9
$region0: #{down_forward.9}
  #allocation0 [shape = 'u32[]', space=smem, size = 0x4, offset = 0x4, fixed_abs, tag = 'smem constant byte address 0x4 - core index']
  #allocation1 [shape = 'u32[144,128]{1,0:T(1,128)}', space=vmem, size = 0x12000, scoped, tag = 'internal scratch']
  %s0 = inlined_call_operand.vmem [shape: f32[2,32], index: 0, kind: input, shape index: {}]
  %s1 = inlined_call_operand.vmem [shape: bf16[32,8], index: 1, kind: input, shape index: {}]
  %s2 = inlined_call_operand.vmem [shape: f32[1,8], index: 2, kind: input, shape index: {}]
  %s3 = inlined_call_operand.vmem [shape: f32[2,48], index: 3, kind: input, shape index: {}]
  %s4 = inlined_call_operand.vmem [shape: bf16[48,8], index: 4, kind: input, shape index: {}]
  %s5 = inlined_call_operand.vmem [shape: f32[1,8], index: 5, kind: input, shape index: {}]
  %s6 = inlined_call_operand.vmem [shape: f32[2,8], index: 6, kind: output, shape index: {}]
  %s7 = sld [smem:[#allocation0]]
  $region34: #{down_forward.9} parent=0
    _
  %s9 = ssub.s32 1, %s7
  %s10 = scalar_select 0, %s9, %s7
  // Predicated region
  $region2: #{down_forward.9} parent=0 // pred_check
    _
  $region3: #{down_forward.9} parent=0 // pred_check_branch
    %12 = sbr.rel (0) target = $region5
  $region4: #{down_forward.9} parent=0 // pred_region
    _
  $region5: #{down_forward.9} parent=0 // pred_fallthru
    _
  // Predicated region
  $region6: #{down_forward.9} parent=0 // pred_check
    _
  $region7: #{down_forward.9} parent=0 // pred_check_branch
    %14 = sbr.rel (0) target = $region9
  $region8: #{down_forward.9} parent=0 // pred_region
    _
  $region9: #{down_forward.9} parent=0 // pred_fallthru
    _
  // Predicated region
  $region10: #{down_forward.9} parent=0 // pred_check
    _
  $region11: #{down_forward.9} parent=0 // pred_check_branch
    %16 = sbr.rel (0) target = $region13
  $region12: #{down_forward.9} parent=0 // pred_region
    _
  $region13: #{down_forward.9} parent=0 // pred_fallthru
    _
  // Predicated region
  $region14: #{down_forward.9} parent=0 // pred_check
    _
  $region15: #{down_forward.9} parent=0 // pred_check_branch
    %18 = sbr.rel (0) target = $region17
  $region16: #{down_forward.9} parent=0 // pred_region
    _
  $region17: #{down_forward.9} parent=0 // pred_fallthru
    _
  // Predicated region
  $region18: #{down_forward.9} parent=0 // pred_check
    _
  $region19: #{down_forward.9} parent=0 // pred_check_branch
    %20 = sbr.rel (0) target = $region21
  $region20: #{down_forward.9} parent=0 // pred_region
    _
  $region21: #{down_forward.9} parent=0 // pred_fallthru
    _
  // Predicated region
  $region22: #{down_forward.9} parent=0 // pred_check
    _
  $region23: #{down_forward.9} parent=0 // pred_check_branch
    %22 = sbr.rel (0) target = $region25
  $region24: #{down_forward.9} parent=0 // pred_region
    _
  $region25: #{down_forward.9} parent=0 // pred_fallthru
    _
  %v24 = vld [vmem:[%s0] sm:$0x3]
  %v25 = vld [vmem:[%s3] sm:$0x3]
  %v26 = vxor.u32 %v24, 2147483648
  %v27 = vmul.f32 %v26, 1.442695
  %v28 = vpow.pop %v27
  %v29 = vadd.f32 %v28, 1.0
  %v30 = vrcp.pop %v29
  %v31 = vmul.f32 1.0, %v30
  %v32 = vmul.f32 %v24, %v31
  %v33 = vpack.c.bf16 %v32, %v32
  %v34 = vxor.u32 %v25, 2147483648
  %v35 = vmul.f32 %v34, 1.442695
  %v36 = vpow.pop %v35
  %v37 = vadd.f32 %v36, 1.0
  %v38 = vrcp.pop %v37
  %v39 = vmul.f32 1.0, %v38
  %v40 = vmul.f32 %v25, %v39
  %v41 = vpack.c.bf16 %v40, %v40
  %v42 = vld [vmem:[%s1] sm:$0xf]
  %v43 = vld [vmem:[%s1 + $0x4] sm:$0xf]
  %v44 = vld [vmem:[%s1 + $0x8] sm:$0xf]
  %v45 = vld [vmem:[%s1 + $0xc] sm:$0xf]
  %v46 = vld [vmem:[%s4] sm:$0xf]
  %v47 = vld [vmem:[%s4 + $0x4] sm:$0xf]
  %v48 = vld [vmem:[%s4 + $0x8] sm:$0xf]
  %v49 = vld [vmem:[%s4 + $0xc] sm:$0xf]
  %v50 = vld [vmem:[%s4 + $0x10] sm:$0xf]
  %v51 = vld [vmem:[%s4 + $0x14] sm:$0xf]
  %v58 = vunpack.c.l.b16 %v46
  %v59 = vunpack.c.l.b16 %v47
  %v60 = vunpack.c.l.b16 %v48
  %v61 = vunpack.c.l.b16 %v49
  %v62 = vunpack.c.l.b16 %v50
  %v63 = vunpack.c.l.b16 %v51
  %v64 = vpack.c.b16 %v59, %v58
  %v65 = vpack.c.b16 %v61, %v60
  %v66 = vpack.c.b16 %v63, %v62
  %vm70 = vcmask 392192
  %v72 = vsel %vm70, %v41, 0
  %74 = vmatprep.subr.bf16.mxu0 0
  %75 = vmatpush1.bf16.msra.mxu0 %v64
  %76 = vmatprep.subr.bf16.mxu0 0
  %77 = vmatpush1.bf16.msra.mxu0 %v65
  %78 = vmatprep.subr.bf16.mxu0 0
  %79 = vmatpush1.bf16.msra.mxu0 %v66
  %80 = vmatprep.subr.bf16.mxu0 0
  %81 = vmatpush1.bf16.msra.mxu0 0
  %82 = vmatprep.subr.bf16.mxu0 0
  %83 = vmatpush1.bf16.msra.mxu0 0
  %84 = vmatprep.subr.bf16.mxu0 0
  %85 = vmatpush1.bf16.msra.mxu0 0
  %86 = vmatprep.subr.bf16.mxu0 0
  %87 = vmatpush1.bf16.msra.mxu0 0
  %88 = vmatprep.subr.bf16.mxu0 0
  %89 = vmatpush1.bf16.msra.mxu0 0
  %90 = vmatprep.subr.bf16.mxu0 0
  %91 = vmatpush1.bf16.msra.mxu0 0
  %92 = vmatprep.subr.bf16.mxu0 0
  %93 = vmatpush1.bf16.msra.mxu0 0
  %94 = vmatprep.subr.bf16.mxu0 0
  %95 = vmatpush1.bf16.msra.mxu0 0
  %96 = vmatprep.subr.bf16.mxu0 0
  %97 = vmatpush1.bf16.msra.mxu0 0
  %98 = vmatprep.subr.bf16.mxu0 0
  %99 = vmatpush1.bf16.msra.mxu0 0
  %100 = vmatprep.subr.bf16.mxu0 0
  %101 = vmatpush1.bf16.msra.mxu0 0
  %102 = vmatprep.subr.bf16.mxu0 0
  %103 = vmatpush1.bf16.msra.mxu0 0
  %104 = vmatprep.subr.bf16.mxu0 0
  %105 = vmatpush1.bf16.msra.mxu0 0
  %106 = vmatprep.mubr.bf16.mxu0 0
  %107 = vmatmul.mubr.bf16.gmra.mrb[0].mxu0 %v72
  %v108 = vpop.f32.mrb[0].mxu0
  %v109 = vadd.f32 0.0, %v108
  %v110 = vpop.f32.mrb[0].mxu0
  %v111 = vpop.f32.mrb[0].mxu0
  %v112 = vpop.f32.mrb[0].mxu0
  %113 = vdwg.mxu0
  %v118 = vunpack.c.l.b16 %v42
  %v119 = vunpack.c.l.b16 %v43
  %v120 = vunpack.c.l.b16 %v44
  %v121 = vunpack.c.l.b16 %v45
  %v122 = vpack.c.b16 %v119, %v118
  %v123 = vpack.c.b16 %v121, %v120
  %vm126 = vcmask 261120
  %v128 = vsel %vm126, %v33, 0
  %130 = vmatprep.subr.bf16.mxu0 0
  %131 = vmatpush1.bf16.msra.mxu0 %v122
  %132 = vmatprep.subr.bf16.mxu0 0
  %133 = vmatpush1.bf16.msra.mxu0 %v123
  %134 = vmatprep.subr.bf16.mxu0 0
  %135 = vmatpush1.bf16.msra.mxu0 0
  %136 = vmatprep.subr.bf16.mxu0 0
  %137 = vmatpush1.bf16.msra.mxu0 0
  %138 = vmatprep.subr.bf16.mxu0 0
  %139 = vmatpush1.bf16.msra.mxu0 0
  %140 = vmatprep.subr.bf16.mxu0 0
  %141 = vmatpush1.bf16.msra.mxu0 0
  %142 = vmatprep.subr.bf16.mxu0 0
  %143 = vmatpush1.bf16.msra.mxu0 0
  %144 = vmatprep.subr.bf16.mxu0 0
  %145 = vmatpush1.bf16.msra.mxu0 0
  %146 = vmatprep.subr.bf16.mxu0 0
  %147 = vmatpush1.bf16.msra.mxu0 0
  %148 = vmatprep.subr.bf16.mxu0 0
  %149 = vmatpush1.bf16.msra.mxu0 0
  %150 = vmatprep.subr.bf16.mxu0 0
  %151 = vmatpush1.bf16.msra.mxu0 0
  %152 = vmatprep.subr.bf16.mxu0 0
  %153 = vmatpush1.bf16.msra.mxu0 0
  %154 = vmatprep.subr.bf16.mxu0 0
  %155 = vmatpush1.bf16.msra.mxu0 0
  %156 = vmatprep.subr.bf16.mxu0 0
  %157 = vmatpush1.bf16.msra.mxu0 0
  %158 = vmatprep.subr.bf16.mxu0 0
  %159 = vmatpush1.bf16.msra.mxu0 0
  %160 = vmatprep.subr.bf16.mxu0 0
  %161 = vmatpush1.bf16.msra.mxu0 0
  %162 = vmatprep.mubr.bf16.mxu0 0
  %163 = vmatmul.mubr.bf16.gmra.mrb[0].mxu0 %v128
  %v164 = vpop.f32.mrb[0].mxu0
  %v165 = vadd.f32 %v109, %v164
  %v166 = vpop.f32.mrb[0].mxu0
  %v167 = vpop.f32.mrb[0].mxu0
  %v168 = vpop.f32.mrb[0].mxu0
  %169 = vdwg.mxu0
  %v170 = vld [vmem:[%s2] sm:$0x1]
  %v172 = vlaneseq
  %v173 = vshrl.u32 %v172, 7
  %v174 = vsub.s32 0, %v173
  %v175 = vrot.slane %v170, %v174
  %v177 = vadd.f32 %v165, %v175
  %v178 = vld [vmem:[%s5] sm:$0x1]
  %v180 = vlaneseq
  %v181 = vshrl.u32 %v180, 7
  %v182 = vsub.s32 0, %v181
  %v183 = vrot.slane %v178, %v182
  %v185 = vadd.f32 %v177, %v183
  %vm186 = vcmask 58368
  %187 = vst.msk [vmem:[%s6] sm:$0x3] %vm186, %v185
  // Predicated region
  $region26: #{down_forward.9} parent=0 // pred_check
    _
  $region27: #{down_forward.9} parent=0 // pred_check_branch
    %189 = sbr.rel (0) target = $region29
  $region28: #{down_forward.9} parent=0 // pred_region
    _
  $region29: #{down_forward.9} parent=0 // pred_fallthru
    _
  // Predicated region
  $region30: #{down_forward.9} parent=0 // pred_check
    _
  $region31: #{down_forward.9} parent=0 // pred_check_branch
    %191 = sbr.rel (0) target = $region33
  $region32: #{down_forward.9} parent=0 // pred_region
    _
  $region33: #{down_forward.9} parent=0 // pred_fallthru
    _

// kernel: down_forward.11
$region0: #{down_forward.11}
  #allocation0 [shape = 'u32[]', space=smem, size = 0x4, offset = 0x4, fixed_abs, tag = 'smem constant byte address 0x4 - core index']
  #allocation1 [shape = 'u32[144,128]{1,0:T(1,128)}', space=vmem, size = 0x12000, scoped, tag = 'internal scratch']
  %s0 = inlined_call_operand.vmem [shape: f32[2,10,10,8], index: 0, kind: input, shape index: {}]
  %s1 = inlined_call_operand.vmem [shape: bf16[9,8,8], index: 1, kind: input, shape index: {}]
  %s2 = inlined_call_operand.vmem [shape: f32[1,8], index: 2, kind: input, shape index: {}]
  %s3 = inlined_call_operand.vmem [shape: f32[1,8], index: 3, kind: input, shape index: {}]
  %s4 = inlined_call_operand.vmem [shape: f32[2,1,8], index: 4, kind: input, shape index: {}]
  %s5 = inlined_call_operand.vmem [shape: f32[2,8,8,8], index: 5, kind: output, shape index: {}]
  %s6 = sld [smem:[#allocation0]]
  $region53: #{down_forward.11} parent=0
    _
  %s8 = ssub.s32 1, %s6
  %s9 = scalar_select 0, %s8, %s6
  loop: start=0, step=1, limit=4
  $region2: #{down_forward.11} parent=0 // loop_pre_header
    _
  $region3: #{down_forward.11} parent=0 // loop_header
    %s11 = sphi 0, %s15
    %p12 = scmp.ge.s32.totalorder %s11, 4
    %s21 = sphi 0, %s23
    %s24 = sphi 0, %s21
    %s25 = sphi 0, %s24
    %s41 = sphi 0, %s25
    %s45 = sphi 0, %s45
    %s47 = sphi 0, %s45
    %s48 = sphi 0, %s47
    %s62 = sphi 0, %s48
    %s66 = sphi 0, %s66
    %s68 = sphi 0, %s66
    %s69 = sphi 0, %s68
    %s83 = sphi 0, %s69
    %s87 = sphi 0, %s87
    %s89 = sphi 0, %s87
    %s90 = sphi 0, %s89
    %s104 = sphi 0, %s90
    %s110 = sphi 0, %s112
    %s113 = sphi 0, %s110
    %s114 = sphi 0, %s113
    %s130 = sphi 0, %s114
    %s136 = sphi 0, %s138
    %s139 = sphi 0, %s136
    %s140 = sphi 0, %s139
    %s156 = sphi 0, %s140
  $region4: #{down_forward.11} parent=0 // loop_header_branch
    %14 = sbr.rel (%p12) target = $region8
  $region5: #{down_forward.11} parent=0 // loop_body
    %s16 = ssub.s32 %s11, 1
    %s17 = ssub.s32 %s11, 2
    %s18 = sadd.s32 %s11, 1
    %s19 = ssub.s32 %s11, %s18
    %p20 = scmp.eq.s32.totalorder %s19, 0
    %s22 = sadd.s32 %s21, 1
    %s23 = scalar_select %p20, %s21, %s22
    %p26 = pneg %p20
    %p27 = scmp.eq.s32.totalorder %s11, 1
    %p28 = por %p26, %p27
    %p29 = scmp.ne.s32.totalorder %s21, %s24
    %p30 = scmp.eq.s32.totalorder %s11, 0
    %p31 = por %p29, %p30
    %p32 = scmp.ne.s32.totalorder %s21, %s24
    %p33 = scmp.eq.s32.totalorder %s16, 1
    %p34 = por %p32, %p33
    %p35 = scmp.ne.s32.totalorder %s24, %s25
    %p36 = scmp.eq.s32.totalorder %s16, 0
    %p37 = por %p35, %p36
    %p38 = scmp.ne.s32.totalorder %s24, %s25
    %p39 = scmp.eq.s32.totalorder %s17, 1
    %p40 = por %p38, %p39
    %p42 = scmp.ne.s32.totalorder %s25, %s41
    %p43 = scmp.eq.s32.totalorder %s17, 0
    %p44 = por %p42, %p43
    %s46 = sadd.s32 %s45, 1
    %p49 = scmp.eq.s32.totalorder %s11, 1
    %p50 = scmp.ne.s32.totalorder %s45, %s47
    %p51 = scmp.eq.s32.totalorder %s11, 0
    %p52 = por %p50, %p51
    %p53 = scmp.ne.s32.totalorder %s45, %s47
    %p54 = scmp.eq.s32.totalorder %s16, 1
    %p55 = por %p53, %p54
    %p56 = scmp.ne.s32.totalorder %s47, %s48
    %p57 = scmp.eq.s32.totalorder %s16, 0
    %p58 = por %p56, %p57
    %p59 = scmp.ne.s32.totalorder %s47, %s48
    %p60 = scmp.eq.s32.totalorder %s17, 1
    %p61 = por %p59, %p60
    %p63 = scmp.ne.s32.totalorder %s48, %s62
    %p64 = scmp.eq.s32.totalorder %s17, 0
    %p65 = por %p63, %p64
    %s67 = sadd.s32 %s66, 1
    %p70 = scmp.eq.s32.totalorder %s11, 1
    %p71 = scmp.ne.s32.totalorder %s66, %s68
    %p72 = scmp.eq.s32.totalorder %s11, 0
    %p73 = por %p71, %p72
    %p74 = scmp.ne.s32.totalorder %s66, %s68
    %p75 = scmp.eq.s32.totalorder %s16, 1
    %p76 = por %p74, %p75
    %p77 = scmp.ne.s32.totalorder %s68, %s69
    %p78 = scmp.eq.s32.totalorder %s16, 0
    %p79 = por %p77, %p78
    %p80 = scmp.ne.s32.totalorder %s68, %s69
    %p81 = scmp.eq.s32.totalorder %s17, 1
    %p82 = por %p80, %p81
    %p84 = scmp.ne.s32.totalorder %s69, %s83
    %p85 = scmp.eq.s32.totalorder %s17, 0
    %p86 = por %p84, %p85
    %s88 = sadd.s32 %s87, 1
    %p91 = scmp.eq.s32.totalorder %s11, 1
    %p92 = scmp.ne.s32.totalorder %s87, %s89
    %p93 = scmp.eq.s32.totalorder %s11, 0
    %p94 = por %p92, %p93
    %p95 = scmp.ne.s32.totalorder %s87, %s89
    %p96 = scmp.eq.s32.totalorder %s16, 1
    %p97 = por %p95, %p96
    %p98 = scmp.ne.s32.totalorder %s89, %s90
    %p99 = scmp.eq.s32.totalorder %s16, 0
    %p100 = por %p98, %p99
    %p101 = scmp.ne.s32.totalorder %s89, %s90
    %p102 = scmp.eq.s32.totalorder %s17, 1
    %p103 = por %p101, %p102
    %p105 = scmp.ne.s32.totalorder %s90, %s104
    %p106 = scmp.eq.s32.totalorder %s17, 0
    %p107 = por %p105, %p106
    %s108 = ssub.s32 %s11, %s18
    %p109 = scmp.eq.s32.totalorder %s108, 0
    %s111 = sadd.s32 %s110, 1
    %s112 = scalar_select %p109, %s110, %s111
    %p115 = pneg %p109
    %p116 = scmp.eq.s32.totalorder %s11, 1
    %p117 = por %p115, %p116
    %p118 = scmp.ne.s32.totalorder %s110, %s113
    %p119 = scmp.eq.s32.totalorder %s11, 0
    %p120 = por %p118, %p119
    %p121 = scmp.ne.s32.totalorder %s110, %s113
    %p122 = scmp.eq.s32.totalorder %s16, 1
    %p123 = por %p121, %p122
    %p124 = scmp.ne.s32.totalorder %s113, %s114
    %p125 = scmp.eq.s32.totalorder %s16, 0
    %p126 = por %p124, %p125
    %p127 = scmp.ne.s32.totalorder %s113, %s114
    %p128 = scmp.eq.s32.totalorder %s17, 1
    %p129 = por %p127, %p128
    %p131 = scmp.ne.s32.totalorder %s114, %s130
    %p132 = scmp.eq.s32.totalorder %s17, 0
    %p133 = por %p131, %p132
    %s134 = ssub.s32 %s11, %s18
    %p135 = scmp.eq.s32.totalorder %s134, 0
    %s137 = sadd.s32 %s136, 1
    %s138 = scalar_select %p135, %s136, %s137
    %p141 = pneg %p135
    %p142 = scmp.eq.s32.totalorder %s11, 1
    %p143 = por %p141, %p142
    %p144 = scmp.ne.s32.totalorder %s136, %s139
    %p145 = scmp.eq.s32.totalorder %s11, 0
    %p146 = por %p144, %p145
    %p147 = scmp.ne.s32.totalorder %s136, %s139
    %p148 = scmp.eq.s32.totalorder %s16, 1
    %p149 = por %p147, %p148
    %p150 = scmp.ne.s32.totalorder %s139, %s140
    %p151 = scmp.eq.s32.totalorder %s16, 0
    %p152 = por %p150, %p151
    %p153 = scmp.ne.s32.totalorder %s139, %s140
    %p154 = scmp.eq.s32.totalorder %s17, 1
    %p155 = por %p153, %p154
    %p157 = scmp.ne.s32.totalorder %s140, %s156
    %p158 = scmp.eq.s32.totalorder %s17, 0
    %p159 = por %p157, %p158
    %p160 = scmp.le.s32.totalorder 1, %s11
    %p161 = scmp.lt.s32.totalorder %s11, 3
    %p162 = pnand %p160, %p161
    %p163 = pneg %p162
    // Predicated region
    $region9: #{down_forward.11} parent=5 // pred_check
      _
    $region10: #{down_forward.11} parent=5 // pred_check_branch
      %165 = sbr.rel (%p162) target = $region12
    $region11: #{down_forward.11} parent=5 // pred_region
      %s166 = ssub.s32 %s11, 1
      // Predicated region
      $region13: #{down_forward.11} parent=11 // pred_check
        %p167 = pneg %p58
      $region14: #{down_forward.11} parent=11 // pred_check_branch
        %169 = sbr.rel (%p167) target = $region16
      $region15: #{down_forward.11} parent=11 // pred_region
        _
      $region16: #{down_forward.11} parent=11 // pred_fallthru
        _
      // Predicated region
      $region17: #{down_forward.11} parent=11 // pred_check
        %p170 = pneg %p79
      $region18: #{down_forward.11} parent=11 // pred_check_branch
        %172 = sbr.rel (%p170) target = $region20
      $region19: #{down_forward.11} parent=11 // pred_region
        _
      $region20: #{down_forward.11} parent=11 // pred_fallthru
        _
      // Predicated region
      $region21: #{down_forward.11} parent=11 // pred_check
        %p173 = pneg %p100
      $region22: #{down_forward.11} parent=11 // pred_check_branch
        %175 = sbr.rel (%p173) target = $region24
      $region23: #{down_forward.11} parent=11 // pred_region
        _
      $region24: #{down_forward.11} parent=11 // pred_fallthru
        _
    $region12: #{down_forward.11} parent=5 // pred_fallthru
      _
    %p176 = scmp.lt.s32.totalorder %s11, 2
    // Predicated region
    $region25: #{down_forward.11} parent=5 // pred_check
      %p177 = pneg %p176
    $region26: #{down_forward.11} parent=5 // pred_check_branch
      %179 = sbr.rel (%p177) target = $region28
    $region27: #{down_forward.11} parent=5 // pred_region
      // Predicated region
      $region29: #{down_forward.11} parent=27 // pred_check
        %p180 = pneg %p31
      $region30: #{down_forward.11} parent=27 // pred_check_branch
        %182 = sbr.rel (%p180) target = $region32
      $region31: #{down_forward.11} parent=27 // pred_region
        %p183 = scmp.lt.s32.totalorder %s11, 1
        %s184 = scalar_select %p183, %s11, 1
        %s185 = smul.addr %s184, 20
        %s186 = smul.addr %s185, 8
        %s187 = scalar_lea.vmem %s0, %s186
      $region32: #{down_forward.11} parent=27 // pred_fallthru
        _
      // Predicated region
      $region33: #{down_forward.11} parent=27 // pred_check
        %p188 = pneg %p120
      $region34: #{down_forward.11} parent=27 // pred_check_branch
        %190 = sbr.rel (%p188) target = $region36
      $region35: #{down_forward.11} parent=27 // pred_region
        %p191 = scmp.lt.s32.totalorder %s11, 1
        %s192 = scalar_select %p191, %s11, 1
        %s193 = scalar_lea.vmem %s4, %s192
      $region36: #{down_forward.11} parent=27 // pred_fallthru
        _
    $region28: #{down_forward.11} parent=5 // pred_fallthru
      _
    %p194 = scmp.le.s32.totalorder 1, %s11
    %p195 = scmp.lt.s32.totalorder %s11, 3
    %p196 = pnand %p194, %p195
    %p197 = pneg %p196
    // Predicated region
    $region37: #{down_forward.11} parent=5 // pred_check
      _
    $region38: #{down_forward.11} parent=5 // pred_check_branch
      %199 = sbr.rel (%p196) target = $region40
    $region39: #{down_forward.11} parent=5 // pred_region
      %s200 = ssub.s32 %s11, 1
      %p201 = scmp.lt.s32.totalorder %s16, 1
      %s202 = scalar_select %p201, %s16, 1
      %s203 = smul.addr %s202, 20
      %s204 = smul.addr %s203, 8
      %s205 = scalar_lea.vmem %s0, %s204
      %p206 = pneg %p37
      %p207 = pneg %p34
      %p208 = pneg %p58
      %p209 = pneg %p55
      %p210 = pneg %p79
      %p211 = pneg %p76
      %p212 = pneg %p100
      %p213 = pneg %p97
      %p214 = scmp.lt.s32.totalorder %s16, 1
      %s215 = scalar_select %p214, %s16, 1
      %s216 = scalar_lea.vmem %s4, %s215
      %p217 = pneg %p126
      %p218 = pneg %p123
      %p219 = pneg %p152
      %p220 = pneg %p149
      %p221 = scmp.lt.s32.totalorder %s16, 1
      %s222 = scalar_select %p221, %s16, 1
      %s223 = smul.addr %s222, 8
      %s224 = smul.addr %s223, 8
      %s225 = scalar_lea.vmem %s5, %s224
      %p226 = scmp.lt.s32.totalorder %s16, 1
      %s227 = scalar_select %p226, %s16, 1
      %s228 = smul.addr %s227, 20
      %s229 = smul.addr %s228, 8
      %s230 = scalar_lea.vmem %s0, %s229
      %p231 = scmp.lt.s32.totalorder %s16, 1
      %s232 = scalar_select %p231, %s16, 1
      %s233 = scalar_lea.vmem %s4, %s232
      %p234 = scmp.lt.s32.totalorder %s16, 1
      %s235 = scalar_select %p234, %s16, 1
      %s236 = smul.addr %s235, 8
      %s237 = smul.addr %s236, 8
      %s238 = scalar_lea.vmem %s5, %s237
      %v240 = vld [vmem:[%s230] sm:$0xff]
      %v241 = vld [vmem:[%s230 + $0x8] sm:$0x3]
      %v242 = vld [vmem:[%s230 + $0x10] sm:$0xff]
      %v243 = vld [vmem:[%s230 + $0x18] sm:$0x3]
      %v244 = vld [vmem:[%s230 + $0x20] sm:$0xff]
      %v245 = vld [vmem:[%s230 + $0x28] sm:$0x3]
      %v246 = vld [vmem:[%s230 + $0x30] sm:$0xff]
      %v247 = vld [vmem:[%s230 + $0x38] sm:$0x3]
      %v248 = vld [vmem:[%s230 + $0x40] sm:$0xff]
      %v249 = vld [vmem:[%s230 + $0x48] sm:$0x3]
      %v250 = vld [vmem:[%s230 + $0x50] sm:$0xff]
      %v251 = vld [vmem:[%s230 + $0x58] sm:$0x3]
      %v252 = vld [vmem:[%s230 + $0x60] sm:$0xff]
      %v253 = vld [vmem:[%s230 + $0x68] sm:$0x3]
      %v254 = vld [vmem:[%s230 + $0x70] sm:$0xff]
      %v255 = vld [vmem:[%s230 + $0x78] sm:$0x3]
      %v256 = vld [vmem:[%s230 + $0x80] sm:$0xff]
      %v257 = vld [vmem:[%s230 + $0x88] sm:$0x3]
      %v258 = vld [vmem:[%s230 + $0x90] sm:$0xff]
      %v259 = vld [vmem:[%s230 + $0x98] sm:$0x3]
      %v260 = vpack.c.bf16 %v242, %v240
      %v261 = vpack.c.bf16 %v246, %v244
      %v262 = vpack.c.bf16 %v250, %v248
      %v263 = vpack.c.bf16 %v254, %v252
      %v264 = vld [vmem:[%s1] sm:$0xf]
      %vm281 = vcmask 1046528
      %v282 = vrot.slane %v240, 1
      %v283 = vrot.slane %v241, 1
      %v284 = vsel %vm281, %v282, %v283
      %v285 = vrot.slane %v242, 1
      %v286 = vrot.slane %v243, 1
      %v287 = vsel %vm281, %v285, %v286
      %v288 = vrot.slane %v244, 1
      %v289 = vrot.slane %v245, 1
      %v290 = vsel %vm281, %v288, %v289
      %v291 = vrot.slane %v246, 1
      %v292 = vrot.slane %v247, 1
      %v293 = vsel %vm281, %v291, %v292
      %v294 = vrot.slane %v248, 1
      %v295 = vrot.slane %v249, 1
      %v296 = vsel %vm281, %v294, %v295
      %v297 = vrot.slane %v250, 1
      %v298 = vrot.slane %v251, 1
      %v299 = vsel %vm281, %v297, %v298
      %v300 = vrot.slane %v252, 1
      %v301 = vrot.slane %v253, 1
      %v302 = vsel %vm281, %v300, %v301
      %v303 = vrot.slane %v254, 1
      %v304 = vrot.slane %v255, 1
      %v305 = vsel %vm281, %v303, %v304
      %v314 = vpack.c.bf16 %v287, %v284
      %v315 = vpack.c.bf16 %v293, %v290
      %v316 = vpack.c.bf16 %v299, %v296
      %v317 = vpack.c.bf16 %v305, %v302
      %s318 = scalar_lea.vmem %s1, 4
      %v319 = vld [vmem:[%s318] sm:$0xf]
      %vm320 = vcmask 64512
      %v322 = vsel %vm320, %v314, 0
      %v325 = vsel %vm320, %v315, 0
      %v328 = vsel %vm320, %v316, 0
      %v331 = vsel %vm320, %v317, 0
      %vm333 = vcmask 1043456
      %v335 = vsel %vm333, %v319, 0
      %337 = vmatprep.subr.bf16.mxu0 0
      %338 = vmatpush1.bf16.msra.mxu0 %v335
      %339 = vmatprep.subr.bf16.mxu0 0
      %340 = vmatpush1.bf16.msra.mxu0 0
      %341 = vmatprep.subr.bf16.mxu0 0
      %342 = vmatpush1.bf16.msra.mxu0 0
      %343 = vmatprep.subr.bf16.mxu0 0
      %344 = vmatpush1.bf16.msra.mxu0 0
      %345 = vmatprep.subr.bf16.mxu0 0
      %346 = vmatpush1.bf16.msra.mxu0 0
      %347 = vmatprep.subr.bf16.mxu0 0
      %348 = vmatpush1.bf16.msra.mxu0 0
      %349 = vmatprep.subr.bf16.mxu0 0
      %350 = vmatpush1.bf16.msra.mxu0 0
      %351 = vmatprep.subr.bf16.mxu0 0
      %352 = vmatpush1.bf16.msra.mxu0 0
      %353 = vmatprep.subr.bf16.mxu0 0
      %354 = vmatpush1.bf16.msra.mxu0 0
      %355 = vmatprep.subr.bf16.mxu0 0
      %356 = vmatpush1.bf16.msra.mxu0 0
      %357 = vmatprep.subr.bf16.mxu0 0
      %358 = vmatpush1.bf16.msra.mxu0 0
      %359 = vmatprep.subr.bf16.mxu0 0
      %360 = vmatpush1.bf16.msra.mxu0 0
      %361 = vmatprep.subr.bf16.mxu0 0
      %362 = vmatpush1.bf16.msra.mxu0 0
      %363 = vmatprep.subr.bf16.mxu0 0
      %364 = vmatpush1.bf16.msra.mxu0 0
      %365 = vmatprep.subr.bf16.mxu0 0
      %366 = vmatpush1.bf16.msra.mxu0 0
      %367 = vmatprep.subr.bf16.mxu0 0
      %368 = vmatpush1.bf16.msra.mxu0 0
      %369 = vmatprep.mubr.bf16.mxu0 0
      %370 = vmatmul.mubr.bf16.gmra.mrb[0].mxu0 %v322
      %v371 = vpop.f32.mrb[0].mxu0
      %v372 = vadd.f32 0.0, %v371
      %v373 = vpop.f32.mrb[0].mxu0
      %v374 = vpop.f32.mrb[0].mxu0
      %v375 = vadd.f32 0.0, %v374
      %v376 = vpop.f32.mrb[0].mxu0
      %377 = vmatprep.mubr.bf16.mxu0 0
      %378 = vmatmul.mubr.bf16.gmra.mrb[0].mxu0 %v325
      %v379 = vpop.f32.mrb[0].mxu0
      %v380 = vadd.f32 0.0, %v379
      %v381 = vpop.f32.mrb[0].mxu0
      %v382 = vpop.f32.mrb[0].mxu0
      %v383 = vadd.f32 0.0, %v382
      %v384 = vpop.f32.mrb[0].mxu0
      %385 = vmatprep.mubr.bf16.mxu0 0
      %386 = vmatmul.mubr.bf16.gmra.mrb[0].mxu0 %v328
      %v387 = vpop.f32.mrb[0].mxu0
      %v388 = vadd.f32 0.0, %v387
      %v389 = vpop.f32.mrb[0].mxu0
      %v390 = vpop.f32.mrb[0].mxu0
      %v391 = vadd.f32 0.0, %v390
      %v392 = vpop.f32.mrb[0].mxu0
      %393 = vmatprep.mubr.bf16.mxu0 0
      %394 = vmatmul.mubr.bf16.gmra.mrb[0].mxu0 %v331
      %v395 = vpop.f32.mrb[0].mxu0
      %v396 = vadd.f32 0.0, %v395
      %v397 = vpop.f32.mrb[0].mxu0
      %v398 = vpop.f32.mrb[0].mxu0
      %v399 = vadd.f32 0.0, %v398
      %v400 = vpop.f32.mrb[0].mxu0
      %401 = vdwg.mxu0
      %v403 = vsel %vm320, %v260, 0
      %v406 = vsel %vm320, %v261, 0
      %v409 = vsel %vm320, %v262, 0
      %v412 = vsel %vm320, %v263, 0
      %v415 = vsel %vm333, %v264, 0
      %417 = vmatprep.subr.bf16.mxu0 0
      %418 = vmatpush1.bf16.msra.mxu0 %v415
      %419 = vmatprep.subr.bf16.mxu0 0
      %420 = vmatpush1.bf16.msra.mxu0 0
      %421 = vmatprep.subr.bf16.mxu0 0
      %422 = vmatpush1.bf16.msra.mxu0 0
      %423 = vmatprep.subr.bf16.mxu0 0
      %424 = vmatpush1.bf16.msra.mxu0 0
      %425 = vmatprep.subr.bf16.mxu0 0
      %426 = vmatpush1.bf16.msra.mxu0 0
      %427 = vmatprep.subr.bf16.mxu0 0
      %428 = vmatpush1.bf16.msra.mxu0 0
      %429 = vmatprep.subr.bf16.mxu0 0
      %430 = vmatpush1.bf16.msra.mxu0 0
      %431 = vmatprep.subr.bf16.mxu0 0
      %432 = vmatpush1.bf16.msra.mxu0 0
      %433 = vmatprep.subr.bf16.mxu0 0
      %434 = vmatpush1.bf16.msra.mxu0 0
      %435 = vmatprep.subr.bf16.mxu0 0
      %436 = vmatpush1.bf16.msra.mxu0 0
      %437 = vmatprep.subr.bf16.mxu0 0
      %438 = vmatpush1.bf16.msra.mxu0 0
      %439 = vmatprep.subr.bf16.mxu0 0
      %440 = vmatpush1.bf16.msra.mxu0 0
      %441 = vmatprep.subr.bf16.mxu0 0
      %442 = vmatpush1.bf16.msra.mxu0 0
      %443 = vmatprep.subr.bf16.mxu0 0
      %444 = vmatpush1.bf16.msra.mxu0 0
      %445 = vmatprep.subr.bf16.mxu0 0
      %446 = vmatpush1.bf16.msra.mxu0 0
      %447 = vmatprep.subr.bf16.mxu0 0
      %448 = vmatpush1.bf16.msra.mxu0 0
      %449 = vmatprep.mubr.bf16.mxu0 0
      %450 = vmatmul.mubr.bf16.gmra.mrb[0].mxu0 %v403
      %v451 = vpop.f32.mrb[0].mxu0
      %v452 = vadd.f32 %v372, %v451
      %v453 = vpop.f32.mrb[0].mxu0
      %v454 = vpop.f32.mrb[0].mxu0
      %v455 = vadd.f32 %v375, %v454
      %v456 = vpop.f32.mrb[0].mxu0
      %457 = vmatprep.mubr.bf16.mxu0 0
      %458 = vmatmul.mubr.bf16.gmra.mrb[0].mxu0 %v406
      %v459 = vpop.f32.mrb[0].mxu0
      %v460 = vadd.f32 %v380, %v459
      %v461 = vpop.f32.mrb[0].mxu0
      %v462 = vpop.f32.mrb[0].mxu0
      %v463 = vadd.f32 %v383, %v462
      %v464 = vpop.f32.mrb[0].mxu0
      %465 = vmatprep.mubr.bf16.mxu0 0
      %466 = vmatmul.mubr.bf16.gmra.mrb[0].mxu0 %v409
      %v467 = vpop.f32.mrb[0].mxu0
      %v468 = vadd.f32 %v388, %v467
      %v469 = vpop.f32.mrb[0].mxu0
      %v470 = vpop.f32.mrb[0].mxu0
      %v471 = vadd.f32 %v391, %v470
      %v472 = vpop.f32.mrb[0].mxu0
      %473 = vmatprep.mubr.bf16.mxu0 0
      %474 = vmatmul.mubr.bf16.gmra.mrb[0].mxu0 %v412
      %v475 = vpop.f32.mrb[0].mxu0
      %v476 = vadd.f32 %v396, %v475
      %v477 = vpop.f32.mrb[0].mxu0
      %v478 = vpop.f32.mrb[0].mxu0
      %v479 = vadd.f32 %v399, %v478
      %v480 = vpop.f32.mrb[0].mxu0
      %481 = vdwg.mxu0
      %vm482 = vcmask 1045504
      %v483 = vrot.slane %v240, 2
      %v484 = vrot.slane %v241, 2
      %v485 = vsel %vm482, %v483, %v484
      %v486 = vrot.slane %v242, 2
      %v487 = vrot.slane %v243, 2
      %v488 = vsel %vm482, %v486, %v487
      %v489 = vrot.slane %v244, 2
      %v490 = vrot.slane %v245, 2
      %v491 = vsel %vm482, %v489, %v490
      %v492 = vrot.slane %v246, 2
      %v493 = vrot.slane %v247, 2
      %v494 = vsel %vm482, %v492, %v493
      %v495 = vrot.slane %v248, 2
      %v496 = vrot.slane %v249, 2
      %v497 = vsel %vm482, %v495, %v496
      %v498 = vrot.slane %v250, 2
      %v499 = vrot.slane %v251, 2
      %v500 = vsel %vm482, %v498, %v499
      %v501 = vrot.slane %v252, 2
      %v502 = vrot.slane %v253, 2
      %v503 = vsel %vm482, %v501, %v502
      %v504 = vrot.slane %v254, 2
      %v505 = vrot.slane %v255, 2
      %v506 = vsel %vm482, %v504, %v505
      %v515 = vpack.c.bf16 %v488, %v485
      %v516 = vpack.c.bf16 %v494, %v491
      %v517 = vpack.c.bf16 %v500, %v497
      %v518 = vpack.c.bf16 %v506, %v503
      %s519 = scalar_lea.vmem %s1, 8
      %v520 = vld [vmem:[%s519] sm:$0xf]
      %v522 = vsel %vm320, %v515, 0
      %v525 = vsel %vm320, %v516, 0
      %v528 = vsel %vm320, %v517, 0
      %v531 = vsel %vm320, %v518, 0
      %v534 = vsel %vm333, %v520, 0
      %536 = vmatprep.subr.bf16.mxu0 0
      %537 = vmatpush1.bf16.msra.mxu0 %v534
      %538 = vmatprep.subr.bf16.mxu0 0
      %539 = vmatpush1.bf16.msra.mxu0 0
      %540 = vmatprep.subr.bf16.mxu0 0
      %541 = vmatpush1.bf16.msra.mxu0 0
      %542 = vmatprep.subr.bf16.mxu0 0
      %543 = vmatpush1.bf16.msra.mxu0 0
      %544 = vmatprep.subr.bf16.mxu0 0
      %545 = vmatpush1.bf16.msra.mxu0 0
      %546 = vmatprep.subr.bf16.mxu0 0
      %547 = vmatpush1.bf16.msra.mxu0 0
      %548 = vmatprep.subr.bf16.mxu0 0
      %549 = vmatpush1.bf16.msra.mxu0 0
      %550 = vmatprep.subr.bf16.mxu0 0
      %551 = vmatpush1.bf16.msra.mxu0 0
      %552 = vmatprep.subr.bf16.mxu0 0
      %553 = vmatpush1.bf16.msra.mxu0 0
      %554 = vmatprep.subr.bf16.mxu0 0
      %555 = vmatpush1.bf16.msra.mxu0 0
      %556 = vmatprep.subr.bf16.mxu0 0
      %557 = vmatpush1.bf16.msra.mxu0 0
      %558 = vmatprep.subr.bf16.mxu0 0
      %559 = vmatpush1.bf16.msra.mxu0 0
      %560 = vmatprep.subr.bf16.mxu0 0
      %561 = vmatpush1.bf16.msra.mxu0 0
      %562 = vmatprep.subr.bf16.mxu0 0
      %563 = vmatpush1.bf16.msra.mxu0 0
      %564 = vmatprep.subr.bf16.mxu0 0
      %565 = vmatpush1.bf16.msra.mxu0 0
      %566 = vmatprep.subr.bf16.mxu0 0
      %567 = vmatpush1.bf16.msra.mxu0 0
      %568 = vmatprep.mubr.bf16.mxu0 0
      %569 = vmatmul.mubr.bf16.gmra.mrb[0].mxu0 %v522
      %v570 = vpop.f32.mrb[0].mxu0
      %v571 = vadd.f32 0.0, %v570
      %v572 = vpop.f32.mrb[0].mxu0
      %v573 = vpop.f32.mrb[0].mxu0
      %v574 = vadd.f32 0.0, %v573
      %v575 = vpop.f32.mrb[0].mxu0
      %576 = vmatprep.mubr.bf16.mxu0 0
      %577 = vmatmul.mubr.bf16.gmra.mrb[0].mxu0 %v525
      %v578 = vpop.f32.mrb[0].mxu0
      %v579 = vadd.f32 0.0, %v578
      %v580 = vpop.f32.mrb[0].mxu0
      %v581 = vpop.f32.mrb[0].mxu0
      %v582 = vadd.f32 0.0, %v581
      %v583 = vpop.f32.mrb[0].mxu0
      %584 = vmatprep.mubr.bf16.mxu0 0
      %585 = vmatmul.mubr.bf16.gmra.mrb[0].mxu0 %v528
      %v586 = vpop.f32.mrb[0].mxu0
      %v587 = vadd.f32 0.0, %v586
      %v588 = vpop.f32.mrb[0].mxu0
      %v589 = vpop.f32.mrb[0].mxu0
      %v590 = vadd.f32 0.0, %v589
      %v591 = vpop.f32.mrb[0].mxu0
      %592 = vmatprep.mubr.bf16.mxu0 0
      %593 = vmatmul.mubr.bf16.gmra.mrb[0].mxu0 %v531
      %v594 = vpop.f32.mrb[0].mxu0
      %v595 = vadd.f32 0.0, %v594
      %v596 = vpop.f32.mrb[0].mxu0
      %v597 = vpop.f32.mrb[0].mxu0
      %v598 = vadd.f32 0.0, %v597
      %v599 = vpop.f32.mrb[0].mxu0
      %600 = vdwg.mxu0
      %v601 = vadd.f32 %v452, %v571
      %v602 = vadd.f32 %v455, %v574
      %v603 = vadd.f32 %v460, %v579
      %v604 = vadd.f32 %v463, %v582
      %v605 = vadd.f32 %v468, %v587
      %v606 = vadd.f32 %v471, %v590
      %v607 = vadd.f32 %v476, %v595
      %v608 = vadd.f32 %v479, %v598
      %v609 = vpack.c.bf16 %v244, %v242
      %v610 = vpack.c.bf16 %v248, %v246
      %v611 = vpack.c.bf16 %v252, %v250
      %v612 = vpack.c.bf16 %v256, %v254
      %s613 = scalar_lea.vmem %s1, 12
      %v614 = vld [vmem:[%s613] sm:$0xf]
      %v616 = vsel %vm320, %v609, 0
      %v619 = vsel %vm320, %v610, 0
      %v622 = vsel %vm320, %v611, 0
      %v625 = vsel %vm320, %v612, 0
      %v628 = vsel %vm333, %v614, 0
      %630 = vmatprep.subr.bf16.mxu0 0
      %631 = vmatpush1.bf16.msra.mxu0 %v628
      %632 = vmatprep.subr.bf16.mxu0 0
      %633 = vmatpush1.bf16.msra.mxu0 0
      %634 = vmatprep.subr.bf16.mxu0 0
      %635 = vmatpush1.bf16.msra.mxu0 0
      %636 = vmatprep.subr.bf16.mxu0 0
      %637 = vmatpush1.bf16.msra.mxu0 0
      %638 = vmatprep.subr.bf16.mxu0 0
      %639 = vmatpush1.bf16.msra.mxu0 0
      %640 = vmatprep.subr.bf16.mxu0 0
      %641 = vmatpush1.bf16.msra.mxu0 0
      %642 = vmatprep.subr.bf16.mxu0 0
      %643 = vmatpush1.bf16.msra.mxu0 0
      %644 = vmatprep.subr.bf16.mxu0 0
      %645 = vmatpush1.bf16.msra.mxu0 0
      %646 = vmatprep.subr.bf16.mxu0 0
      %647 = vmatpush1.bf16.msra.mxu0 0
      %648 = vmatprep.subr.bf16.mxu0 0
      %649 = vmatpush1.bf16.msra.mxu0 0
      %650 = vmatprep.subr.bf16.mxu0 0
      %651 = vmatpush1.bf16.msra.mxu0 0
      %652 = vmatprep.subr.bf16.mxu0 0
      %653 = vmatpush1.bf16.msra.mxu0 0
      %654 = vmatprep.subr.bf16.mxu0 0
      %655 = vmatpush1.bf16.msra.mxu0 0
      %656 = vmatprep.subr.bf16.mxu0 0
      %657 = vmatpush1.bf16.msra.mxu0 0
      %658 = vmatprep.subr.bf16.mxu0 0
      %659 = vmatpush1.bf16.msra.mxu0 0
      %660 = vmatprep.subr.bf16.mxu0 0
      %661 = vmatpush1.bf16.msra.mxu0 0
      %662 = vmatprep.mubr.bf16.mxu0 0
      %663 = vmatmul.mubr.bf16.gmra.mrb[0].mxu0 %v616
      %v664 = vpop.f32.mrb[0].mxu0
      %v665 = vadd.f32 0.0, %v664
      %v666 = vpop.f32.mrb[0].mxu0
      %v667 = vpop.f32.mrb[0].mxu0
      %v668 = vadd.f32 0.0, %v667
      %v669 = vpop.f32.mrb[0].mxu0
      %670 = vmatprep.mubr.bf16.mxu0 0
      %671 = vmatmul.mubr.bf16.gmra.mrb[0].mxu0 %v619
      %v672 = vpop.f32.mrb[0].mxu0
      %v673 = vadd.f32 0.0, %v672
      %v674 = vpop.f32.mrb[0].mxu0
      %v675 = vpop.f32.mrb[0].mxu0
      %v676 = vadd.f32 0.0, %v675
      %v677 = vpop.f32.mrb[0].mxu0
      %678 = vmatprep.mubr.bf16.mxu0 0
      %679 = vmatmul.mubr.bf16.gmra.mrb[0].mxu0 %v622
      %v680 = vpop.f32.mrb[0].mxu0
      %v681 = vadd.f32 0.0, %v680
      %v682 = vpop.f32.mrb[0].mxu0
      %v683 = vpop.f32.mrb[0].mxu0
      %v684 = vadd.f32 0.0, %v683
      %v685 = vpop.f32.mrb[0].mxu0
      %686 = vmatprep.mubr.bf16.mxu0 0
      %687 = vmatmul.mubr.bf16.gmra.mrb[0].mxu0 %v625
      %v688 = vpop.f32.mrb[0].mxu0
      %v689 = vadd.f32 0.0, %v688
      %v690 = vpop.f32.mrb[0].mxu0
      %v691 = vpop.f32.mrb[0].mxu0
      %v692 = vadd.f32 0.0, %v691
      %v693 = vpop.f32.mrb[0].mxu0
      %694 = vdwg.mxu0
      %v695 = vadd.f32 %v601, %v665
      %v696 = vadd.f32 %v602, %v668
      %v697 = vadd.f32 %v603, %v673
      %v698 = vadd.f32 %v604, %v676
      %v699 = vadd.f32 %v605, %v681
      %v700 = vadd.f32 %v606, %v684
      %v701 = vadd.f32 %v607, %v689
      %v702 = vadd.f32 %v608, %v692
      %v705 = vrot.slane %v256, 1
      %v706 = vrot.slane %v257, 1
      %v707 = vsel %vm281, %v705, %v706
      %v709 = vpack.c.bf16 %v290, %v287
      %v710 = vpack.c.bf16 %v296, %v293
      %v711 = vpack.c.bf16 %v302, %v299
      %v712 = vpack.c.bf16 %v707, %v305
      %s713 = scalar_lea.vmem %s1, 16
      %v714 = vld [vmem:[%s713] sm:$0xf]
      %v716 = vsel %vm320, %v709, 0
      %v719 = vsel %vm320, %v710, 0
      %v722 = vsel %vm320, %v711, 0
      %v725 = vsel %vm320, %v712, 0
      %v728 = vsel %vm333, %v714, 0
      %730 = vmatprep.subr.bf16.mxu0 0
      %731 = vmatpush1.bf16.msra.mxu0 %v728
      %732 = vmatprep.subr.bf16.mxu0 0
      %733 = vmatpush1.bf16.msra.mxu0 0
      %734 = vmatprep.subr.bf16.mxu0 0
      %735 = vmatpush1.bf16.msra.mxu0 0
      %736 = vmatprep.subr.bf16.mxu0 0
      %737 = vmatpush1.bf16.msra.mxu0 0
      %738 = vmatprep.subr.bf16.mxu0 0
      %739 = vmatpush1.bf16.msra.mxu0 0
      %740 = vmatprep.subr.bf16.mxu0 0
      %741 = vmatpush1.bf16.msra.mxu0 0
      %742 = vmatprep.subr.bf16.mxu0 0
      %743 = vmatpush1.bf16.msra.mxu0 0
      %744 = vmatprep.subr.bf16.mxu0 0
      %745 = vmatpush1.bf16.msra.mxu0 0
      %746 = vmatprep.subr.bf16.mxu0 0
      %747 = vmatpush1.bf16.msra.mxu0 0
      %748 = vmatprep.subr.bf16.mxu0 0
      %749 = vmatpush1.bf16.msra.mxu0 0
      %750 = vmatprep.subr.bf16.mxu0 0
      %751 = vmatpush1.bf16.msra.mxu0 0
      %752 = vmatprep.subr.bf16.mxu0 0
      %753 = vmatpush1.bf16.msra.mxu0 0
      %754 = vmatprep.subr.bf16.mxu0 0
      %755 = vmatpush1.bf16.msra.mxu0 0
      %756 = vmatprep.subr.bf16.mxu0 0
      %757 = vmatpush1.bf16.msra.mxu0 0
      %758 = vmatprep.subr.bf16.mxu0 0
      %759 = vmatpush1.bf16.msra.mxu0 0
      %760 = vmatprep.subr.bf16.mxu0 0
      %761 = vmatpush1.bf16.msra.mxu0 0
      %762 = vmatprep.mubr.bf16.mxu0 0
      %763 = vmatmul.mubr.bf16.gmra.mrb[0].mxu0 %v716
      %v764 = vpop.f32.mrb[0].mxu0
      %v765 = vadd.f32 0.0, %v764
      %v766 = vpop.f32.mrb[0].mxu0
      %v767 = vpop.f32.mrb[0].mxu0
      %v768 = vadd.f32 0.0, %v767
      %v769 = vpop.f32.mrb[0].mxu0
      %770 = vmatprep.mubr.bf16.mxu0 0
      %771 = vmatmul.mubr.bf16.gmra.mrb[0].mxu0 %v719
      %v772 = vpop.f32.mrb[0].mxu0
      %v773 = vadd.f32 0.0, %v772
      %v774 = vpop.f32.mrb[0].mxu0
      %v775 = vpop.f32.mrb[0].mxu0
      %v776 = vadd.f32 0.0, %v775
      %v777 = vpop.f32.mrb[0].mxu0
      %778 = vmatprep.mubr.bf16.mxu0 0
      %779 = vmatmul.mubr.bf16.gmra.mrb[0].mxu0 %v722
      %v780 = vpop.f32.mrb[0].mxu0
      %v781 = vadd.f32 0.0, %v780
      %v782 = vpop.f32.mrb[0].mxu0
      %v783 = vpop.f32.mrb[0].mxu0
      %v784 = vadd.f32 0.0, %v783
      %v785 = vpop.f32.mrb[0].mxu0
      %786 = vmatprep.mubr.bf16.mxu0 0
      %787 = vmatmul.mubr.bf16.gmra.mrb[0].mxu0 %v725
      %v788 = vpop.f32.mrb[0].mxu0
      %v789 = vadd.f32 0.0, %v788
      %v790 = vpop.f32.mrb[0].mxu0
      %v791 = vpop.f32.mrb[0].mxu0
      %v792 = vadd.f32 0.0, %v791
      %v793 = vpop.f32.mrb[0].mxu0
      %794 = vdwg.mxu0
      %v795 = vadd.f32 %v695, %v765
      %v796 = vadd.f32 %v696, %v768
      %v797 = vadd.f32 %v697, %v773
      %v798 = vadd.f32 %v698, %v776
      %v799 = vadd.f32 %v699, %v781
      %v800 = vadd.f32 %v700, %v784
      %v801 = vadd.f32 %v701, %v789
      %v802 = vadd.f32 %v702, %v792
      %v803 = vrot.slane %v256, 2
      %v804 = vrot.slane %v257, 2
      %v805 = vsel %vm482, %v803, %v804
      %v807 = vpack.c.bf16 %v491, %v488
      %v808 = vpack.c.bf16 %v497, %v494
      %v809 = vpack.c.bf16 %v503, %v500
      %v810 = vpack.c.bf16 %v805, %v506
      %s811 = scalar_lea.vmem %s1, 20
      %v812 = vld [vmem:[%s811] sm:$0xf]
      %v814 = vsel %vm320, %v807, 0
      %v817 = vsel %vm320, %v808, 0
      %v820 = vsel %vm320, %v809, 0
      %v823 = vsel %vm320, %v810, 0
      %v826 = vsel %vm333, %v812, 0
      %828 = vmatprep.subr.bf16.mxu0 0
      %829 = vmatpush1.bf16.msra.mxu0 %v826
      %830 = vmatprep.subr.bf16.mxu0 0
      %831 = vmatpush1.bf16.msra.mxu0 0
      %832 = vmatprep.subr.bf16.mxu0 0
      %833 = vmatpush1.bf16.msra.mxu0 0
      %834 = vmatprep.subr.bf16.mxu0 0
      %835 = vmatpush1.bf16.msra.mxu0 0
      %836 = vmatprep.subr.bf16.mxu0 0
      %837 = vmatpush1.bf16.msra.mxu0 0
      %838 = vmatprep.subr.bf16.mxu0 0
      %839 = vmatpush1.bf16.msra.mxu0 0
      %840 = vmatprep.subr.bf16.mxu0 0
      %841 = vmatpush1.bf16.msra.mxu0 0
      %842 = vmatprep.subr.bf16.mxu0 0
      %843 = vmatpush1.bf16.msra.mxu0 0
      %844 = vmatprep.subr.bf16.mxu0 0
      %845 = vmatpush1.bf16.msra.mxu0 0
      %846 = vmatprep.subr.bf16.mxu0 0
      %847 = vmatpush1.bf16.msra.mxu0 0
      %848 = vmatprep.subr.bf16.mxu0 0
      %849 = vmatpush1.bf16.msra.mxu0 0
      %850 = vmatprep.subr.bf16.mxu0 0
      %851 = vmatpush1.bf16.msra.mxu0 0
      %852 = vmatprep.subr.bf16.mxu0 0
      %853 = vmatpush1.bf16.msra.mxu0 0
      %854 = vmatprep.subr.bf16.mxu0 0
      %855 = vmatpush1.bf16.msra.mxu0 0
      %856 = vmatprep.subr.bf16.mxu0 0
      %857 = vmatpush1.bf16.msra.mxu0 0
      %858 = vmatprep.subr.bf16.mxu0 0
      %859 = vmatpush1.bf16.msra.mxu0 0
      %860 = vmatprep.mubr.bf16.mxu0 0
      %861 = vmatmul.mubr.bf16.gmra.mrb[0].mxu0 %v814
      %v862 = vpop.f32.mrb[0].mxu0
      %v863 = vadd.f32 0.0, %v862
      %v864 = vpop.f32.mrb[0].mxu0
      %v865 = vpop.f32.mrb[0].mxu0
      %v866 = vadd.f32 0.0, %v865
      %v867 = vpop.f32.mrb[0].mxu0
      %868 = vmatprep.mubr.bf16.mxu0 0
      %869 = vmatmul.mubr.bf16.gmra.mrb[0].mxu0 %v817
      %v870 = vpop.f32.mrb[0].mxu0
      %v871 = vadd.f32 0.0, %v870
      %v872 = vpop.f32.mrb[0].mxu0
      %v873 = vpop.f32.mrb[0].mxu0
      %v874 = vadd.f32 0.0, %v873
      %v875 = vpop.f32.mrb[0].mxu0
      %876 = vmatprep.mubr.bf16.mxu0 0
      %877 = vmatmul.mubr.bf16.gmra.mrb[0].mxu0 %v820
      %v878 = vpop.f32.mrb[0].mxu0
      %v879 = vadd.f32 0.0, %v878
      %v880 = vpop.f32.mrb[0].mxu0
      %v881 = vpop.f32.mrb[0].mxu0
      %v882 = vadd.f32 0.0, %v881
      %v883 = vpop.f32.mrb[0].mxu0
      %884 = vmatprep.mubr.bf16.mxu0 0
      %885 = vmatmul.mubr.bf16.gmra.mrb[0].mxu0 %v823
      %v886 = vpop.f32.mrb[0].mxu0
      %v887 = vadd.f32 0.0, %v886
      %v888 = vpop.f32.mrb[0].mxu0
      %v889 = vpop.f32.mrb[0].mxu0
      %v890 = vadd.f32 0.0, %v889
      %v891 = vpop.f32.mrb[0].mxu0
      %892 = vdwg.mxu0
      %v893 = vadd.f32 %v795, %v863
      %v894 = vadd.f32 %v796, %v866
      %v895 = vadd.f32 %v797, %v871
      %v896 = vadd.f32 %v798, %v874
      %v897 = vadd.f32 %v799, %v879
      %v898 = vadd.f32 %v800, %v882
      %v899 = vadd.f32 %v801, %v887
      %v900 = vadd.f32 %v802, %v890
      %v901 = vpack.c.bf16 %v258, %v256
      %s902 = scalar_lea.vmem %s1, 24
      %v903 = vld [vmem:[%s902] sm:$0xf]
      %v905 = vsel %vm320, %v901, 0
      %v908 = vsel %vm333, %v903, 0
      %910 = vmatprep.subr.bf16.mxu0 0
      %911 = vmatpush1.bf16.msra.mxu0 %v908
      %912 = vmatprep.subr.bf16.mxu0 0
      %913 = vmatpush1.bf16.msra.mxu0 0
      %914 = vmatprep.subr.bf16.mxu0 0
      %915 = vmatpush1.bf16.msra.mxu0 0
      %916 = vmatprep.subr.bf16.mxu0 0
      %917 = vmatpush1.bf16.msra.mxu0 0
      %918 = vmatprep.subr.bf16.mxu0 0
      %919 = vmatpush1.bf16.msra.mxu0 0
      %920 = vmatprep.subr.bf16.mxu0 0
      %921 = vmatpush1.bf16.msra.mxu0 0
      %922 = vmatprep.subr.bf16.mxu0 0
      %923 = vmatpush1.bf16.msra.mxu0 0
      %924 = vmatprep.subr.bf16.mxu0 0
      %925 = vmatpush1.bf16.msra.mxu0 0
      %926 = vmatprep.subr.bf16.mxu0 0
      %927 = vmatpush1.bf16.msra.mxu0 0
      %928 = vmatprep.subr.bf16.mxu0 0
      %929 = vmatpush1.bf16.msra.mxu0 0
      %930 = vmatprep.subr.bf16.mxu0 0
      %931 = vmatpush1.bf16.msra.mxu0 0
      %932 = vmatprep.subr.bf16.mxu0 0
      %933 = vmatpush1.bf16.msra.mxu0 0
      %934 = vmatprep.subr.bf16.mxu0 0
      %935 = vmatpush1.bf16.msra.mxu0 0
      %936 = vmatprep.subr.bf16.mxu0 0
      %937 = vmatpush1.bf16.msra.mxu0 0
      %938 = vmatprep.subr.bf16.mxu0 0
      %939 = vmatpush1.bf16.msra.mxu0 0
      %940 = vmatprep.subr.bf16.mxu0 0
      %941 = vmatpush1.bf16.msra.mxu0 0
      %942 = vmatprep.mubr.bf16.mxu0 0
      %943 = vmatmul.mubr.bf16.gmra.mrb[0].mxu0 %v406
      %v944 = vpop.f32.mrb[0].mxu0
      %v945 = vadd.f32 0.0, %v944
      %v946 = vpop.f32.mrb[0].mxu0
      %v947 = vpop.f32.mrb[0].mxu0
      %v948 = vadd.f32 0.0, %v947
      %v949 = vpop.f32.mrb[0].mxu0
      %950 = vmatprep.mubr.bf16.mxu0 0
      %951 = vmatmul.mubr.bf16.gmra.mrb[0].mxu0 %v409
      %v952 = vpop.f32.mrb[0].mxu0
      %v953 = vadd.f32 0.0, %v952
      %v954 = vpop.f32.mrb[0].mxu0
      %v955 = vpop.f32.mrb[0].mxu0
      %v956 = vadd.f32 0.0, %v955
      %v957 = vpop.f32.mrb[0].mxu0
      %958 = vmatprep.mubr.bf16.mxu0 0
      %959 = vmatmul.mubr.bf16.gmra.mrb[0].mxu0 %v412
      %v960 = vpop.f32.mrb[0].mxu0
      %v961 = vadd.f32 0.0, %v960
      %v962 = vpop.f32.mrb[0].mxu0
      %v963 = vpop.f32.mrb[0].mxu0
      %v964 = vadd.f32 0.0, %v963
      %v965 = vpop.f32.mrb[0].mxu0
      %966 = vmatprep.mubr.bf16.mxu0 0
      %967 = vmatmul.mubr.bf16.gmra.mrb[0].mxu0 %v905
      %v968 = vpop.f32.mrb[0].mxu0
      %v969 = vadd.f32 0.0, %v968
      %v970 = vpop.f32.mrb[0].mxu0
      %v971 = vpop.f32.mrb[0].mxu0
      %v972 = vadd.f32 0.0, %v971
      %v973 = vpop.f32.mrb[0].mxu0
      %974 = vdwg.mxu0
      %v975 = vadd.f32 %v893, %v945
      %v976 = vadd.f32 %v894, %v948
      %v977 = vadd.f32 %v895, %v953
      %v978 = vadd.f32 %v896, %v956
      %v979 = vadd.f32 %v897, %v961
      %v980 = vadd.f32 %v898, %v964
      %v981 = vadd.f32 %v899, %v969
      %v982 = vadd.f32 %v900, %v972
      %v985 = vrot.slane %v258, 1
      %v986 = vrot.slane %v259, 1
      %v987 = vsel %vm281, %v985, %v986
      %v989 = vpack.c.bf16 %v987, %v707
      %s990 = scalar_lea.vmem %s1, 28
      %v991 = vld [vmem:[%s990] sm:$0xf]
      %v993 = vsel %vm320, %v989, 0
      %v996 = vsel %vm333, %v991, 0
      %998 = vmatprep.subr.bf16.mxu0 0
      %999 = vmatpush1.bf16.msra.mxu0 %v996
      %1000 = vmatprep.subr.bf16.mxu0 0
      %1001 = vmatpush1.bf16.msra.mxu0 0
      %1002 = vmatprep.subr.bf16.mxu0 0
      %1003 = vmatpush1.bf16.msra.mxu0 0
      %1004 = vmatprep.subr.bf16.mxu0 0
      %1005 = vmatpush1.bf16.msra.mxu0 0
      %1006 = vmatprep.subr.bf16.mxu0 0
      %1007 = vmatpush1.bf16.msra.mxu0 0
      %1008 = vmatprep.subr.bf16.mxu0 0
      %1009 = vmatpush1.bf16.msra.mxu0 0
      %1010 = vmatprep.subr.bf16.mxu0 0
      %1011 = vmatpush1.bf16.msra.mxu0 0
      %1012 = vmatprep.subr.bf16.mxu0 0
      %1013 = vmatpush1.bf16.msra.mxu0 0
      %1014 = vmatprep.subr.bf16.mxu0 0
      %1015 = vmatpush1.bf16.msra.mxu0 0
      %1016 = vmatprep.subr.bf16.mxu0 0
      %1017 = vmatpush1.bf16.msra.mxu0 0
      %1018 = vmatprep.subr.bf16.mxu0 0
      %1019 = vmatpush1.bf16.msra.mxu0 0
      %1020 = vmatprep.subr.bf16.mxu0 0
      %1021 = vmatpush1.bf16.msra.mxu0 0
      %1022 = vmatprep.subr.bf16.mxu0 0
      %1023 = vmatpush1.bf16.msra.mxu0 0
      %1024 = vmatprep.subr.bf16.mxu0 0
      %1025 = vmatpush1.bf16.msra.mxu0 0
      %1026 = vmatprep.subr.bf16.mxu0 0
      %1027 = vmatpush1.bf16.msra.mxu0 0
      %1028 = vmatprep.subr.bf16.mxu0 0
      %1029 = vmatpush1.bf16.msra.mxu0 0
      %1030 = vmatprep.mubr.bf16.mxu0 0
      %1031 = vmatmul.mubr.bf16.gmra.mrb[0].mxu0 %v325
      %v1032 = vpop.f32.mrb[0].mxu0
      %v1033 = vadd.f32 0.0, %v1032
      %v1034 = vpop.f32.mrb[0].mxu0
      %v1035 = vpop.f32.mrb[0].mxu0
      %v1036 = vadd.f32 0.0, %v1035
      %v1037 = vpop.f32.mrb[0].mxu0
      %1038 = vmatprep.mubr.bf16.mxu0 0
      %1039 = vmatmul.mubr.bf16.gmra.mrb[0].mxu0 %v328
      %v1040 = vpop.f32.mrb[0].mxu0
      %v1041 = vadd.f32 0.0, %v1040
      %v1042 = vpop.f32.mrb[0].mxu0
      %v1043 = vpop.f32.mrb[0].mxu0
      %v1044 = vadd.f32 0.0, %v1043
      %v1045 = vpop.f32.mrb[0].mxu0
      %1046 = vmatprep.mubr.bf16.mxu0 0
      %1047 = vmatmul.mubr.bf16.gmra.mrb[0].mxu0 %v331
      %v1048 = vpop.f32.mrb[0].mxu0
      %v1049 = vadd.f32 0.0, %v1048
      %v1050 = vpop.f32.mrb[0].mxu0
      %v1051 = vpop.f32.mrb[0].mxu0
      %v1052 = vadd.f32 0.0, %v1051
      %v1053 = vpop.f32.mrb[0].mxu0
      %1054 = vmatprep.mubr.bf16.mxu0 0
      %1055 = vmatmul.mubr.bf16.gmra.mrb[0].mxu0 %v993
      %v1056 = vpop.f32.mrb[0].mxu0
      %v1057 = vadd.f32 0.0, %v1056
      %v1058 = vpop.f32.mrb[0].mxu0
      %v1059 = vpop.f32.mrb[0].mxu0
      %v1060 = vadd.f32 0.0, %v1059
      %v1061 = vpop.f32.mrb[0].mxu0
      %1062 = vdwg.mxu0
      %v1063 = vadd.f32 %v975, %v1033
      %v1064 = vadd.f32 %v976, %v1036
      %v1065 = vadd.f32 %v977, %v1041
      %v1066 = vadd.f32 %v978, %v1044
      %v1067 = vadd.f32 %v979, %v1049
      %v1068 = vadd.f32 %v980, %v1052
      %v1069 = vadd.f32 %v981, %v1057
      %v1070 = vadd.f32 %v982, %v1060
      %v1071 = vrot.slane %v258, 2
      %v1072 = vrot.slane %v259, 2
      %v1073 = vsel %vm482, %v1071, %v1072
      %v1075 = vpack.c.bf16 %v1073, %v805
      %s1076 = scalar_lea.vmem %s1, 32
      %v1077 = vld [vmem:[%s1076] sm:$0xf]
      %v1079 = vsel %vm320, %v1075, 0
      %v1082 = vsel %vm333, %v1077, 0
      %1084 = vmatprep.subr.bf16.mxu0 0
      %1085 = vmatpush1.bf16.msra.mxu0 %v1082
      %1086 = vmatprep.subr.bf16.mxu0 0
      %1087 = vmatpush1.bf16.msra.mxu0 0
      %1088 = vmatprep.subr.bf16.mxu0 0
      %1089 = vmatpush1.bf16.msra.mxu0 0
      %1090 = vmatprep.subr.bf16.mxu0 0
      %1091 = vmatpush1.bf16.msra.mxu0 0
      %1092 = vmatprep.subr.bf16.mxu0 0
      %1093 = vmatpush1.bf16.msra.mxu0 0
      %1094 = vmatprep.subr.bf16.mxu0 0
      %1095 = vmatpush1.bf16.msra.mxu0 0
      %1096 = vmatprep.subr.bf16.mxu0 0
      %1097 = vmatpush1.bf16.msra.mxu0 0
      %1098 = vmatprep.subr.bf16.mxu0 0
      %1099 = vmatpush1.bf16.msra.mxu0 0
      %1100 = vmatprep.subr.bf16.mxu0 0
      %1101 = vmatpush1.bf16.msra.mxu0 0
      %1102 = vmatprep.subr.bf16.mxu0 0
      %1103 = vmatpush1.bf16.msra.mxu0 0
      %1104 = vmatprep.subr.bf16.mxu0 0
      %1105 = vmatpush1.bf16.msra.mxu0 0
      %1106 = vmatprep.subr.bf16.mxu0 0
      %1107 = vmatpush1.bf16.msra.mxu0 0
      %1108 = vmatprep.subr.bf16.mxu0 0
      %1109 = vmatpush1.bf16.msra.mxu0 0
      %1110 = vmatprep.subr.bf16.mxu0 0
      %1111 = vmatpush1.bf16.msra.mxu0 0
      %1112 = vmatprep.subr.bf16.mxu0 0
      %1113 = vmatpush1.bf16.msra.mxu0 0
      %1114 = vmatprep.subr.bf16.mxu0 0
      %1115 = vmatpush1.bf16.msra.mxu0 0
      %1116 = vmatprep.mubr.bf16.mxu0 0
      %1117 = vmatmul.mubr.bf16.gmra.mrb[0].mxu0 %v525
      %v1118 = vpop.f32.mrb[0].mxu0
      %v1119 = vadd.f32 0.0, %v1118
      %v1120 = vpop.f32.mrb[0].mxu0
      %v1121 = vpop.f32.mrb[0].mxu0
      %v1122 = vadd.f32 0.0, %v1121
      %v1123 = vpop.f32.mrb[0].mxu0
      %1124 = vmatprep.mubr.bf16.mxu0 0
      %1125 = vmatmul.mubr.bf16.gmra.mrb[0].mxu0 %v528
      %v1126 = vpop.f32.mrb[0].mxu0
      %v1127 = vadd.f32 0.0, %v1126
      %v1128 = vpop.f32.mrb[0].mxu0
      %v1129 = vpop.f32.mrb[0].mxu0
      %v1130 = vadd.f32 0.0, %v1129
      %v1131 = vpop.f32.mrb[0].mxu0
      %1132 = vmatprep.mubr.bf16.mxu0 0
      %1133 = vmatmul.mubr.bf16.gmra.mrb[0].mxu0 %v531
      %v1134 = vpop.f32.mrb[0].mxu0
      %v1135 = vadd.f32 0.0, %v1134
      %v1136 = vpop.f32.mrb[0].mxu0
      %v1137 = vpop.f32.mrb[0].mxu0
      %v1138 = vadd.f32 0.0, %v1137
      %v1139 = vpop.f32.mrb[0].mxu0
      %1140 = vmatprep.mubr.bf16.mxu0 0
      %1141 = vmatmul.mubr.bf16.gmra.mrb[0].mxu0 %v1079
      %v1142 = vpop.f32.mrb[0].mxu0
      %v1143 = vadd.f32 0.0, %v1142
      %v1144 = vpop.f32.mrb[0].mxu0
      %v1145 = vpop.f32.mrb[0].mxu0
      %v1146 = vadd.f32 0.0, %v1145
      %v1147 = vpop.f32.mrb[0].mxu0
      %1148 = vdwg.mxu0
      %v1149 = vadd.f32 %v1063, %v1119
      %v1150 = vadd.f32 %v1064, %v1122
      %v1151 = vadd.f32 %v1065, %v1127
      %v1152 = vadd.f32 %v1066, %v1130
      %v1153 = vadd.f32 %v1067, %v1135
      %v1154 = vadd.f32 %v1068, %v1138
      %v1155 = vadd.f32 %v1069, %v1143
      %v1156 = vadd.f32 %v1070, %v1146
      %v1157 = vsel %vm320, %v1149, 0.0
      %v1158 = vsel %vm320, %v1150, 0.0
      %v1159 = vadd.f32 %v1157, %v1158
      %v1160 = vsel %vm320, %v1151, 0.0
      %v1161 = vadd.f32 %v1159, %v1160
      %v1162 = vsel %vm320, %v1152, 0.0
      %v1163 = vadd.f32 %v1161, %v1162
      %v1164 = vsel %vm320, %v1153, 0.0
      %v1165 = vadd.f32 %v1163, %v1164
      %v1166 = vsel %vm320, %v1154, 0.0
      %v1167 = vadd.f32 %v1165, %v1166
      %v1168 = vsel %vm320, %v1155, 0.0
      %v1169 = vadd.f32 %v1167, %v1168
      %v1170 = vsel %vm320, %v1156, 0.0
      %v1171 = vadd.f32 %v1169, %v1170
      %1172 = vadd.xlane.f32.xlu0 %v1171
      %v1173 = vpop.xlane.xlu0 %1172
      %v1174 = vrot.slane %v1173, 4
      %v1175 = vadd.f32 %v1173, %v1174
      %v1176 = vrot.slane %v1175, 2
      %v1177 = vadd.f32 %v1175, %v1176
      %v1178 = vrot.slane %v1177, 1
      %v1179 = vadd.f32 %v1177, %v1178
      %s1180 = vtos %v1179
      %v1181 = vstv %s1180
      %v1182 = vmul.f32 %v1149, %v1149
      %v1183 = vmul.f32 %v1150, %v1150
      %v1184 = vmul.f32 %v1151, %v1151
      %v1185 = vmul.f32 %v1152, %v1152
      %v1186 = vmul.f32 %v1153, %v1153
      %v1187 = vmul.f32 %v1154, %v1154
      %v1188 = vmul.f32 %v1155, %v1155
      %v1189 = vmul.f32 %v1156, %v1156
      %v1190 = vsel %vm320, %v1182, 0.0
      %v1191 = vsel %vm320, %v1183, 0.0
      %v1192 = vadd.f32 %v1190, %v1191
      %v1193 = vsel %vm320, %v1184, 0.0
      %v1194 = vadd.f32 %v1192, %v1193
      %v1195 = vsel %vm320, %v1185, 0.0
      %v1196 = vadd.f32 %v1194, %v1195
      %v1197 = vsel %vm320, %v1186, 0.0
      %v1198 = vadd.f32 %v1196, %v1197
      %v1199 = vsel %vm320, %v1187, 0.0
      %v1200 = vadd.f32 %v1198, %v1199
      %v1201 = vsel %vm320, %v1188, 0.0
      %v1202 = vadd.f32 %v1200, %v1201
      %v1203 = vsel %vm320, %v1189, 0.0
      %v1204 = vadd.f32 %v1202, %v1203
      %1205 = vadd.xlane.f32.xlu0 %v1204
      %v1206 = vpop.xlane.xlu0 %1205
      %v1207 = vrot.slane %v1206, 4
      %v1208 = vadd.f32 %v1206, %v1207
      %v1209 = vrot.slane %v1208, 2
      %v1210 = vadd.f32 %v1208, %v1209
      %v1211 = vrot.slane %v1210, 1
      %v1212 = vadd.f32 %v1210, %v1211
      %s1213 = vtos %v1212
      %v1214 = vstv %s1213
      %v1215 = vmul.f32 %v1181, 0.001953125
      %v1216 = vmul.f32 %v1214, 0.001953125
      %v1217 = vmul.f32 %v1215, %v1215
      %v1218 = vsub.f32 %v1216, %v1217
      %v1219 = vmax.f32 %v1218, 0.0
      %v1220 = vsub.f32 %v1149, %v1215
      %v1221 = vsub.f32 %v1150, %v1215
      %v1222 = vsub.f32 %v1151, %v1215
      %v1223 = vsub.f32 %v1152, %v1215
      %v1224 = vsub.f32 %v1153, %v1215
      %v1225 = vsub.f32 %v1154, %v1215
      %v1226 = vsub.f32 %v1155, %v1215
      %v1227 = vsub.f32 %v1156, %v1215
      %v1228 = vadd.f32 %v1219, 1e-05
      %v1229 = vrsqrt.pop %v1228
      %v1230 = vmul.f32 %v1220, %v1229
      %v1231 = vmul.f32 %v1221, %v1229
      %v1232 = vmul.f32 %v1222, %v1229
      %v1233 = vmul.f32 %v1223, %v1229
      %v1234 = vmul.f32 %v1224, %v1229
      %v1235 = vmul.f32 %v1225, %v1229
      %v1236 = vmul.f32 %v1226, %v1229
      %v1237 = vmul.f32 %v1227, %v1229
      %v1238 = vld [vmem:[%s2] sm:$0x1]
      %v1240 = vlaneseq
      %v1241 = vshrl.u32 %v1240, 7
      %v1242 = vsub.s32 0, %v1241
      %v1243 = vrot.slane %v1238, %v1242
      %v1245 = vmul.f32 %v1230, %v1243
      %v1246 = vmul.f32 %v1231, %v1243
      %v1247 = vmul.f32 %v1232, %v1243
      %v1248 = vmul.f32 %v1233, %v1243
      %v1249 = vmul.f32 %v1234, %v1243
      %v1250 = vmul.f32 %v1235, %v1243
      %v1251 = vmul.f32 %v1236, %v1243
      %v1252 = vmul.f32 %v1237, %v1243
      %v1253 = vld [vmem:[%s3] sm:$0x1]
      %v1255 = vlaneseq
      %v1256 = vshrl.u32 %v1255, 7
      %v1257 = vsub.s32 0, %v1256
      %v1258 = vrot.slane %v1253, %v1257
      %v1260 = vadd.f32 %v1245, %v1258
      %v1261 = vadd.f32 %v1246, %v1258
      %v1262 = vadd.f32 %v1247, %v1258
      %v1263 = vadd.f32 %v1248, %v1258
      %v1264 = vadd.f32 %v1249, %v1258
      %v1265 = vadd.f32 %v1250, %v1258
      %v1266 = vadd.f32 %v1251, %v1258
      %v1267 = vadd.f32 %v1252, %v1258
      %v1268 = vld [vmem:[%s233] sm:$0x1]
      %v1270 = vlaneseq
      %v1271 = vshrl.u32 %v1270, 7
      %v1272 = vsub.s32 0, %v1271
      %v1273 = vrot.slane %v1268, %v1272
      %v1275 = vadd.f32 %v1260, %v1273
      %v1276 = vadd.f32 %v1261, %v1273
      %v1277 = vadd.f32 %v1262, %v1273
      %v1278 = vadd.f32 %v1263, %v1273
      %v1279 = vadd.f32 %v1264, %v1273
      %v1280 = vadd.f32 %v1265, %v1273
      %v1281 = vadd.f32 %v1266, %v1273
      %v1282 = vadd.f32 %v1267, %v1273
      %1283 = vst.msk [vmem:[%s238] sm:$0xff] %vm320, %v1275
      %1284 = vst.msk [vmem:[%s238 + $0x8] sm:$0xff] %vm320, %v1276
      %1285 = vst.msk [vmem:[%s238 + $0x10] sm:$0xff] %vm320, %v1277
      %1286 = vst.msk [vmem:[%s238 + $0x18] sm:$0xff] %vm320, %v1278
      %1287 = vst.msk [vmem:[%s238 + $0x20] sm:$0xff] %vm320, %v1279
      %1288 = vst.msk [vmem:[%s238 + $0x28] sm:$0xff] %vm320, %v1280
      %1289 = vst.msk [vmem:[%s238 + $0x30] sm:$0xff] %vm320, %v1281
      %1290 = vst.msk [vmem:[%s238 + $0x38] sm:$0xff] %vm320, %v1282
      %p1291 = scmp.lt.s32.totalorder %s16, 1
      %s1292 = scalar_select %p1291, %s16, 1
      %s1293 = smul.addr %s1292, 8
      %s1294 = smul.addr %s1293, 8
      %s1295 = scalar_lea.vmem %s5, %s1294
      // Predicated region
      $region41: #{down_forward.11} parent=39 // pred_check
        %p1296 = pneg %p149
      $region42: #{down_forward.11} parent=39 // pred_check_branch
        %1298 = sbr.rel (%p1296) target = $region44
      $region43: #{down_forward.11} parent=39 // pred_region
        _
      $region44: #{down_forward.11} parent=39 // pred_fallthru
        _
    $region40: #{down_forward.11} parent=5 // pred_fallthru
      _
    %p1299 = scmp.le.s32.totalorder 2, %s11
    // Predicated region
    $region45: #{down_forward.11} parent=5 // pred_check
      %p1300 = pneg %p1299
    $region46: #{down_forward.11} parent=5 // pred_check_branch
      %1302 = sbr.rel (%p1300) target = $region48
    $region47: #{down_forward.11} parent=5 // pred_region
      %s1303 = ssub.s32 %s11, 2
      // Predicated region
      $region49: #{down_forward.11} parent=47 // pred_check
        %p1304 = pneg %p155
      $region50: #{down_forward.11} parent=47 // pred_check_branch
        %1306 = sbr.rel (%p1304) target = $region52
      $region51: #{down_forward.11} parent=47 // pred_region
        %p1307 = scmp.lt.s32.totalorder %s17, 1
        %s1308 = scalar_select %p1307, %s17, 1
        %s1309 = smul.addr %s1308, 8
        %s1310 = smul.addr %s1309, 8
        %s1311 = scalar_lea.vmem %s5, %s1310
      $region52: #{down_forward.11} parent=47 // pred_fallthru
        _
    $region48: #{down_forward.11} parent=5 // pred_fallthru
      _
  $region6: #{down_forward.11} parent=0 // loop_footer
    %s15 = sadd.s32 1, %s11
  $region7: #{down_forward.11} parent=0 // loop_footer_branch
    %10 = sbr.rel target = $region3
  $region8: #{down_forward.11} parent=0 // loop_exit
    _

</llo_original>
